<compile_context>
chip_gen: v7x
topology: tpu7x:2x2x1
jax: 0.10.0
libtpu: 0.0.40
codegen_flags: <defaults>
</compile_context>

<pallas_src>
import jax
import jax.numpy as jnp
from jax.experimental import pallas as pl
from jax.experimental.pallas import tpu as pltpu

EPS = 1e-5


def _fill_im2col(pad_ref, patches_ref, H, W):
    """Accumulate the 9 taps of a 3x3 / stride-1 / pad-1 conv into a
    K-concatenated (N*H*W, 9*C) VMEM operand for a single MXU matmul."""
    N = pad_ref.shape[0]
    C = pad_ref.shape[3]
    for k in range(9):
        dy, dx = divmod(k, 3)
        tap = pad_ref[:, dy:dy + H, dx:dx + W, :].reshape(N * H * W, C)
        patches_ref[:, k * C:(k + 1) * C] = tap


def _bn_scale_bias(flat, gamma, beta):
    """Training-mode BatchNorm folded into per-channel scale/bias.

    One pass over the data for statistics (sum and sum-of-squares, f32
    accumulation), then y = x * scale + bias (2 VALU ops per element)."""
    inv_n = 1.0 / flat.shape[0]
    s = jnp.sum(flat, axis=0, keepdims=True)
    ss = jnp.sum(flat * flat, axis=0, keepdims=True)
    mean = s * inv_n
    var = ss * inv_n - mean * mean          # biased variance (train-mode BN)
    scale = gamma * jax.lax.rsqrt(var + EPS)
    bias = beta - mean * scale
    return scale, bias


def basic_block_kernel(x_ref, w1_ref, g1_ref, b1_ref, w2_ref, g2_ref, b2_ref,
                       o_ref, pad_ref, patches_ref):
    N, Hp, Wp, C = pad_ref.shape
    H, W = Hp - 2, Wp - 2

    # ---- zero only the 1-pixel halo of the padded scratch (done once; the
    # interior is fully overwritten below and the halo stays zero for both convs)
    zrow = jnp.zeros((N, 1, Wp, C), jnp.float32)
    zcol = jnp.zeros((N, Hp, 1, C), jnp.float32)
    pad_ref[:, 0:1, :, :] = zrow
    pad_ref[:, Hp - 1:Hp, :, :] = zrow
    pad_ref[:, :, 0:1, :] = zcol
    pad_ref[:, :, Wp - 1:Wp, :] = zcol

    # ---- conv1 -> bn1 -> relu  (in-kernel padding; single im2col matmul)
    pad_ref[:, 1:H + 1, 1:W + 1, :] = x_ref[...]
    _fill_im2col(pad_ref, patches_ref, H, W)
    h = jnp.dot(patches_ref[...], w1_ref[...],
                preferred_element_type=jnp.float32)
    sc1, bi1 = _bn_scale_bias(h, g1_ref[...], b1_ref[...])
    h = jnp.maximum(h * sc1 + bi1, 0.0)

    # ---- conv2 -> bn2  (reuse the same padded scratch; halo is still zero)
    pad_ref[:, 1:H + 1, 1:W + 1, :] = h.reshape(N, H, W, C)
    _fill_im2col(pad_ref, patches_ref, H, W)
    h2 = jnp.dot(patches_ref[...], w2_ref[...],
                 preferred_element_type=jnp.float32)
    sc2, bi2 = _bn_scale_bias(h2, g2_ref[...], b2_ref[...])
    h2 = h2 * sc2 + bi2

    # ---- residual add straight from the unpadded input, then relu
    identity = x_ref[...].reshape(N * H * W, C)
    y = jnp.maximum(h2 + identity, 0.0)
    o_ref[...] = y.reshape(N, H, W, C)


@jax.jit
def basic_block(x_nchw, w1, g1, b1, w2, g2, b2):
    """x_nchw: (N, C, H, W);  w1/w2: (3, 3, Cin, Cout) HWIO;  g*/b*: (C,)."""
    N, C, H, W = x_nchw.shape
    Cout = w1.shape[-1]
    assert Cout == C, "identity residual path requires Cin == Cout (stride=1)"

    # NCHW -> NHWC at the boundary only (PyTorch interface preserved).
    x_nhwc = jnp.transpose(x_nchw, (0, 2, 3, 1)).astype(jnp.float32)
    # (3,3,Cin,Cout) -> (9*Cin, Cout); row index (3*ky+kx)*Cin + cin matches the
    # k-major / channel-minor ordering of the in-kernel im2col slab.
    w1f = w1.reshape(9 * C, Cout).astype(jnp.float32)
    w2f = w2.reshape(9 * Cout, Cout).astype(jnp.float32)

    out_nhwc = pl.pallas_call(
        basic_block_kernel,
        out_shape=jax.ShapeDtypeStruct((N, H, W, Cout), jnp.float32),
        in_specs=[pl.BlockSpec(memory_space=pltpu.MemorySpace.VMEM)] * 7,
        out_specs=pl.BlockSpec(memory_space=pltpu.MemorySpace.VMEM),
        scratch_shapes=[
            pltpu.VMEM((N, H + 2, W + 2, Cout), jnp.float32),   # padded activation
            pltpu.VMEM((N * H * W, 9 * C), jnp.float32),        # im2col patch slab
        ],
        compiler_params=pltpu.CompilerParams(
            vmem_limit_bytes=32 * 1024 * 1024),
    )(x_nhwc, w1f,
      g1.reshape(1, -1).astype(jnp.float32),
      b1.reshape(1, -1).astype(jnp.float32),
      w2f,
      g2.reshape(1, -1).astype(jnp.float32),
      b2.reshape(1, -1).astype(jnp.float32))

    return jnp.transpose(out_nhwc, (0, 3, 1, 2))


def _reference(x_nchw, w1, g1, b1, w2, g2, b2):
    """Pure-JAX reference mirroring the PyTorch forward (training-mode BN)."""
    def conv(x, w):
        return jax.lax.conv_general_dilated(
            x, w, window_strides=(1, 1), padding=((1, 1), (1, 1)),
            dimension_numbers=("NCHW", "HWIO", "NCHW"))

    def bn(x, g, b):
        mean = x.mean(axis=(0, 2, 3), keepdims=True)
        var = ((x - mean) ** 2).mean(axis=(0, 2, 3), keepdims=True)
        return ((x - mean) * jax.lax.rsqrt(var + EPS)
                * g.reshape(1, -1, 1, 1) + b.reshape(1, -1, 1, 1))

    out = jnp.maximum(bn(conv(x_nchw, w1), g1, b1), 0.0)
    out = bn(conv(out, w2), g2, b2)
    return jnp.maximum(out + x_nchw, 0.0)


if __name__ == "__main__":
    # small shapes consistent with BasicBlock(inplanes=8, planes=8, stride=1)
    N, C, H, W = 2, 8, 16, 16

    key = jax.random.PRNGKey(0)
    kx, kw1, kw2, kg1, kb1, kg2, kb2 = jax.random.split(key, 7)

    x = jax.random.normal(kx, (N, C, H, W), dtype=jnp.float32)
    fan_in = 9 * C
    w1 = jax.random.normal(kw1, (3, 3, C, C), dtype=jnp.float32) / jnp.sqrt(fan_in)
    w2 = jax.random.normal(kw2, (3, 3, C, C), dtype=jnp.float32) / jnp.sqrt(fan_in)
    g1 = 1.0 + 0.1 * jax.random.normal(kg1, (C,), dtype=jnp.float32)
    b1 = 0.1 * jax.random.normal(kb1, (C,), dtype=jnp.float32)
    g2 = 1.0 + 0.1 * jax.random.normal(kg2, (C,), dtype=jnp.float32)
    b2 = 0.1 * jax.random.normal(kb2, (C,), dtype=jnp.float32)

    out = basic_block(x, w1, g1, b1, w2, g2, b2)
    out = jax.block_until_ready(out)

    ref = _reference(x, w1, g1, b1, w2, g2, b2)
    assert out.shape == (N, C, H, W)
    assert jnp.max(jnp.abs(out - ref)) < 2e-4, "mismatch vs. reference"

    print("KERNEL_OK")
</pallas_src>

<mosaic_0001>
module attributes {stable_mosaic.version = 11 : i64} {
  func.func @basic_block_kernel(%arg0: memref<2x16x16x8xf32, #tpu.memory_space<vmem>>, %arg1: memref<72x8xf32, #tpu.memory_space<vmem>>, %arg2: memref<1x8xf32, #tpu.memory_space<vmem>>, %arg3: memref<1x8xf32, #tpu.memory_space<vmem>>, %arg4: memref<72x8xf32, #tpu.memory_space<vmem>>, %arg5: memref<1x8xf32, #tpu.memory_space<vmem>>, %arg6: memref<1x8xf32, #tpu.memory_space<vmem>>, %arg7: memref<2x16x16x8xf32, #tpu.memory_space<vmem>>, %arg8: memref<2x18x18x8xf32, #tpu.memory_space<vmem>>, %arg9: memref<512x72xf32, #tpu.memory_space<vmem>>) attributes {dimension_semantics = [], scalar_prefetch = 0 : i64, scratch_operands = 2 : i64, tpu.core_type = #tpu.core_type<tc>} {
    %cst = arith.constant 0.000000e+00 : f32
    %0 = vector.broadcast %cst : f32 to vector<2x1x18x8xf32>
    %cst_0 = arith.constant 0.000000e+00 : f32
    %1 = vector.broadcast %cst_0 : f32 to vector<2x18x1x8xf32>
    %c0 = arith.constant 0 : index
    %c0_1 = arith.constant 0 : index
    %c0_2 = arith.constant 0 : index
    %c0_3 = arith.constant 0 : index
    %2 = vector.load %arg8[%c0, %c0_1, %c0_2, %c0_3] : memref<2x18x18x8xf32, #tpu.memory_space<vmem>>, vector<2x1x18x8xf32>
    tpu.vector_store %arg8[%c0, %c0_1, %c0_2, %c0_3], %0 {strides = array<i32>} : memref<2x18x18x8xf32, #tpu.memory_space<vmem>>, vector<2x1x18x8xf32>,
    %c0_4 = arith.constant 0 : index
    %c17 = arith.constant 17 : index
    %c0_5 = arith.constant 0 : index
    %c0_6 = arith.constant 0 : index
    %3 = vector.load %arg8[%c0_4, %c17, %c0_5, %c0_6] : memref<2x18x18x8xf32, #tpu.memory_space<vmem>>, vector<2x1x18x8xf32>
    tpu.vector_store %arg8[%c0_4, %c17, %c0_5, %c0_6], %0 {strides = array<i32>} : memref<2x18x18x8xf32, #tpu.memory_space<vmem>>, vector<2x1x18x8xf32>,
    %c0_7 = arith.constant 0 : index
    %c0_8 = arith.constant 0 : index
    %c0_9 = arith.constant 0 : index
    %c0_10 = arith.constant 0 : index
    %4 = vector.load %arg8[%c0_7, %c0_8, %c0_9, %c0_10] : memref<2x18x18x8xf32, #tpu.memory_space<vmem>>, vector<2x18x1x8xf32>
    tpu.vector_store %arg8[%c0_7, %c0_8, %c0_9, %c0_10], %1 {strides = array<i32>} : memref<2x18x18x8xf32, #tpu.memory_space<vmem>>, vector<2x18x1x8xf32>,
    %c0_11 = arith.constant 0 : index
    %c0_12 = arith.constant 0 : index
    %c17_13 = arith.constant 17 : index
    %c0_14 = arith.constant 0 : index
    %5 = vector.load %arg8[%c0_11, %c0_12, %c17_13, %c0_14] : memref<2x18x18x8xf32, #tpu.memory_space<vmem>>, vector<2x18x1x8xf32>
    tpu.vector_store %arg8[%c0_11, %c0_12, %c17_13, %c0_14], %1 {strides = array<i32>} : memref<2x18x18x8xf32, #tpu.memory_space<vmem>>, vector<2x18x1x8xf32>,
    %c0_15 = arith.constant 0 : index
    %c0_16 = arith.constant 0 : index
    %c0_17 = arith.constant 0 : index
    %c0_18 = arith.constant 0 : index
    %6 = vector.load %arg0[%c0_15, %c0_16, %c0_17, %c0_18] : memref<2x16x16x8xf32, #tpu.memory_space<vmem>>, vector<2x16x16x8xf32>
    %c0_19 = arith.constant 0 : index
    %c1 = arith.constant 1 : index
    %c1_20 = arith.constant 1 : index
    %c0_21 = arith.constant 0 : index
    %7 = vector.load %arg8[%c0_19, %c1, %c1_20, %c0_21] : memref<2x18x18x8xf32, #tpu.memory_space<vmem>>, vector<2x16x16x8xf32>
    tpu.vector_store %arg8[%c0_19, %c1, %c1_20, %c0_21], %6 {strides = array<i32>} : memref<2x18x18x8xf32, #tpu.memory_space<vmem>>, vector<2x16x16x8xf32>,
    %c0_22 = arith.constant 0 : index
    %c0_23 = arith.constant 0 : index
    %c0_24 = arith.constant 0 : index
    %c0_25 = arith.constant 0 : index
    %8 = vector.load %arg8[%c0_22, %c0_23, %c0_24, %c0_25] : memref<2x18x18x8xf32, #tpu.memory_space<vmem>>, vector<2x16x16x8xf32>
    %9 = vector.shape_cast %8 : vector<2x16x16x8xf32> to vector<512x8xf32>
    %c0_26 = arith.constant 0 : index
    %c0_27 = arith.constant 0 : index
    %10 = vector.load %arg9[%c0_26, %c0_27] : memref<512x72xf32, #tpu.memory_space<vmem>>, vector<512x8xf32>
    tpu.vector_store %arg9[%c0_26, %c0_27], %9 {strides = array<i32>} : memref<512x72xf32, #tpu.memory_space<vmem>>, vector<512x8xf32>,
    %c0_28 = arith.constant 0 : index
    %c0_29 = arith.constant 0 : index
    %c1_30 = arith.constant 1 : index
    %c0_31 = arith.constant 0 : index
    %11 = vector.load %arg8[%c0_28, %c0_29, %c1_30, %c0_31] : memref<2x18x18x8xf32, #tpu.memory_space<vmem>>, vector<2x16x16x8xf32>
    %12 = vector.shape_cast %11 : vector<2x16x16x8xf32> to vector<512x8xf32>
    %c0_32 = arith.constant 0 : index
    %c8 = arith.constant 8 : index
    %13 = vector.load %arg9[%c0_32, %c8] : memref<512x72xf32, #tpu.memory_space<vmem>>, vector<512x8xf32>
    tpu.vector_store %arg9[%c0_32, %c8], %12 {strides = array<i32>} : memref<512x72xf32, #tpu.memory_space<vmem>>, vector<512x8xf32>,
    %c0_33 = arith.constant 0 : index
    %c0_34 = arith.constant 0 : index
    %c2 = arith.constant 2 : index
    %c0_35 = arith.constant 0 : index
    %14 = vector.load %arg8[%c0_33, %c0_34, %c2, %c0_35] : memref<2x18x18x8xf32, #tpu.memory_space<vmem>>, vector<2x16x16x8xf32>
    %15 = vector.shape_cast %14 : vector<2x16x16x8xf32> to vector<512x8xf32>
    %c0_36 = arith.constant 0 : index
    %c16 = arith.constant 16 : index
    %16 = vector.load %arg9[%c0_36, %c16] : memref<512x72xf32, #tpu.memory_space<vmem>>, vector<512x8xf32>
    tpu.vector_store %arg9[%c0_36, %c16], %15 {strides = array<i32>} : memref<512x72xf32, #tpu.memory_space<vmem>>, vector<512x8xf32>,
    %c0_37 = arith.constant 0 : index
    %c1_38 = arith.constant 1 : index
    %c0_39 = arith.constant 0 : index
    %c0_40 = arith.constant 0 : index
    %17 = vector.load %arg8[%c0_37, %c1_38, %c0_39, %c0_40] : memref<2x18x18x8xf32, #tpu.memory_space<vmem>>, vector<2x16x16x8xf32>
    %18 = vector.shape_cast %17 : vector<2x16x16x8xf32> to vector<512x8xf32>
    %c0_41 = arith.constant 0 : index
    %c24 = arith.constant 24 : index
    %19 = vector.load %arg9[%c0_41, %c24] : memref<512x72xf32, #tpu.memory_space<vmem>>, vector<512x8xf32>
    tpu.vector_store %arg9[%c0_41, %c24], %18 {strides = array<i32>} : memref<512x72xf32, #tpu.memory_space<vmem>>, vector<512x8xf32>,
    %c0_42 = arith.constant 0 : index
    %c1_43 = arith.constant 1 : index
    %c1_44 = arith.constant 1 : index
    %c0_45 = arith.constant 0 : index
    %20 = vector.load %arg8[%c0_42, %c1_43, %c1_44, %c0_45] : memref<2x18x18x8xf32, #tpu.memory_space<vmem>>, vector<2x16x16x8xf32>
    %21 = vector.shape_cast %20 : vector<2x16x16x8xf32> to vector<512x8xf32>
    %c0_46 = arith.constant 0 : index
    %c32 = arith.constant 32 : index
    %22 = vector.load %arg9[%c0_46, %c32] : memref<512x72xf32, #tpu.memory_space<vmem>>, vector<512x8xf32>
    tpu.vector_store %arg9[%c0_46, %c32], %21 {strides = array<i32>} : memref<512x72xf32, #tpu.memory_space<vmem>>, vector<512x8xf32>,
    %c0_47 = arith.constant 0 : index
    %c1_48 = arith.constant 1 : index
    %c2_49 = arith.constant 2 : index
    %c0_50 = arith.constant 0 : index
    %23 = vector.load %arg8[%c0_47, %c1_48, %c2_49, %c0_50] : memref<2x18x18x8xf32, #tpu.memory_space<vmem>>, vector<2x16x16x8xf32>
    %24 = vector.shape_cast %23 : vector<2x16x16x8xf32> to vector<512x8xf32>
    %c0_51 = arith.constant 0 : index
    %c40 = arith.constant 40 : index
    %25 = vector.load %arg9[%c0_51, %c40] : memref<512x72xf32, #tpu.memory_space<vmem>>, vector<512x8xf32>
    tpu.vector_store %arg9[%c0_51, %c40], %24 {strides = array<i32>} : memref<512x72xf32, #tpu.memory_space<vmem>>, vector<512x8xf32>,
    %c0_52 = arith.constant 0 : index
    %c2_53 = arith.constant 2 : index
    %c0_54 = arith.constant 0 : index
    %c0_55 = arith.constant 0 : index
    %26 = vector.load %arg8[%c0_52, %c2_53, %c0_54, %c0_55] : memref<2x18x18x8xf32, #tpu.memory_space<vmem>>, vector<2x16x16x8xf32>
    %27 = vector.shape_cast %26 : vector<2x16x16x8xf32> to vector<512x8xf32>
    %c0_56 = arith.constant 0 : index
    %c48 = arith.constant 48 : index
    %28 = vector.load %arg9[%c0_56, %c48] : memref<512x72xf32, #tpu.memory_space<vmem>>, vector<512x8xf32>
    tpu.vector_store %arg9[%c0_56, %c48], %27 {strides = array<i32>} : memref<512x72xf32, #tpu.memory_space<vmem>>, vector<512x8xf32>,
    %c0_57 = arith.constant 0 : index
    %c2_58 = arith.constant 2 : index
    %c1_59 = arith.constant 1 : index
    %c0_60 = arith.constant 0 : index
    %29 = vector.load %arg8[%c0_57, %c2_58, %c1_59, %c0_60] : memref<2x18x18x8xf32, #tpu.memory_space<vmem>>, vector<2x16x16x8xf32>
    %30 = vector.shape_cast %29 : vector<2x16x16x8xf32> to vector<512x8xf32>
    %c0_61 = arith.constant 0 : index
    %c56 = arith.constant 56 : index
    %31 = vector.load %arg9[%c0_61, %c56] : memref<512x72xf32, #tpu.memory_space<vmem>>, vector<512x8xf32>
    tpu.vector_store %arg9[%c0_61, %c56], %30 {strides = array<i32>} : memref<512x72xf32, #tpu.memory_space<vmem>>, vector<512x8xf32>,
    %c0_62 = arith.constant 0 : index
    %c2_63 = arith.constant 2 : index
    %c2_64 = arith.constant 2 : index
    %c0_65 = arith.constant 0 : index
    %32 = vector.load %arg8[%c0_62, %c2_63, %c2_64, %c0_65] : memref<2x18x18x8xf32, #tpu.memory_space<vmem>>, vector<2x16x16x8xf32>
    %33 = vector.shape_cast %32 : vector<2x16x16x8xf32> to vector<512x8xf32>
    %c0_66 = arith.constant 0 : index
    %c64 = arith.constant 64 : index
    %34 = vector.load %arg9[%c0_66, %c64] : memref<512x72xf32, #tpu.memory_space<vmem>>, vector<512x8xf32>
    tpu.vector_store %arg9[%c0_66, %c64], %33 {strides = array<i32>} : memref<512x72xf32, #tpu.memory_space<vmem>>, vector<512x8xf32>,
    %c0_67 = arith.constant 0 : index
    %c0_68 = arith.constant 0 : index
    %35 = vector.load %arg9[%c0_67, %c0_68] : memref<512x72xf32, #tpu.memory_space<vmem>>, vector<512x72xf32>
    %c0_69 = arith.constant 0 : index
    %c0_70 = arith.constant 0 : index
    %36 = vector.load %arg1[%c0_69, %c0_70] : memref<72x8xf32, #tpu.memory_space<vmem>>, vector<72x8xf32>
    %cst_71 = arith.constant dense<0.000000e+00> : vector<512x8xf32>
    %37 = tpu.matmul %35, %36, %cst_71 {dimension_numbers = #tpu.dot_dimension_numbers<[1], [0], [0], [1], [0, 0, 1, 1], [], []>} : vector<512x72xf32>, vector<72x8xf32>, vector<512x8xf32> -> vector<512x8xf32>
    %c0_72 = arith.constant 0 : index
    %c0_73 = arith.constant 0 : index
    %38 = vector.load %arg2[%c0_72, %c0_73] : memref<1x8xf32, #tpu.memory_space<vmem>>, vector<1x8xf32>
    %c0_74 = arith.constant 0 : index
    %c0_75 = arith.constant 0 : index
    %39 = vector.load %arg3[%c0_74, %c0_75] : memref<1x8xf32, #tpu.memory_space<vmem>>, vector<1x8xf32>
    %cst_76 = arith.constant dense<0.000000e+00> : vector<8xf32>
    %40 = vector.multi_reduction <add>, %37, %cst_76 [0] : vector<512x8xf32> to vector<8xf32>
    %41 = vector.shape_cast %40 : vector<8xf32> to vector<1x8xf32>
    %42 = arith.mulf %37, %37 : vector<512x8xf32>
    %cst_77 = arith.constant dense<0.000000e+00> : vector<8xf32>
    %43 = vector.multi_reduction <add>, %42, %cst_77 [0] : vector<512x8xf32> to vector<8xf32>
    %44 = vector.shape_cast %43 : vector<8xf32> to vector<1x8xf32>
    %cst_78 = arith.constant 0.001953125 : f32
    %45 = vector.broadcast %cst_78 : f32 to vector<1x8xf32>
    %46 = arith.mulf %41, %45 : vector<1x8xf32>
    %cst_79 = arith.constant 0.001953125 : f32
    %47 = vector.broadcast %cst_79 : f32 to vector<1x8xf32>
    %48 = arith.mulf %44, %47 : vector<1x8xf32>
    %49 = arith.mulf %46, %46 : vector<1x8xf32>
    %50 = arith.subf %48, %49 : vector<1x8xf32>
    %cst_80 = arith.constant 9.99999974E-6 : f32
    %51 = vector.broadcast %cst_80 : f32 to vector<1x8xf32>
    %52 = arith.addf %50, %51 : vector<1x8xf32>
    %53 = math.rsqrt %52 : vector<1x8xf32>
    %54 = arith.mulf %38, %53 : vector<1x8xf32>
    %55 = arith.mulf %46, %54 : vector<1x8xf32>
    %56 = arith.subf %39, %55 : vector<1x8xf32>
    %57 = vector.broadcast %54 : vector<1x8xf32> to vector<512x8xf32>
    %58 = arith.mulf %37, %57 : vector<512x8xf32>
    %59 = vector.broadcast %56 : vector<1x8xf32> to vector<512x8xf32>
    %60 = arith.addf %58, %59 : vector<512x8xf32>
    %cst_81 = arith.constant 0.000000e+00 : f32
    %61 = vector.broadcast %cst_81 : f32 to vector<512x8xf32>
    %62 = arith.maximumf %60, %61 : vector<512x8xf32>
    %63 = vector.shape_cast %62 : vector<512x8xf32> to vector<2x16x16x8xf32>
    %c0_82 = arith.constant 0 : index
    %c1_83 = arith.constant 1 : index
    %c1_84 = arith.constant 1 : index
    %c0_85 = arith.constant 0 : index
    %64 = vector.load %arg8[%c0_82, %c1_83, %c1_84, %c0_85] : memref<2x18x18x8xf32, #tpu.memory_space<vmem>>, vector<2x16x16x8xf32>
    tpu.vector_store %arg8[%c0_82, %c1_83, %c1_84, %c0_85], %63 {strides = array<i32>} : memref<2x18x18x8xf32, #tpu.memory_space<vmem>>, vector<2x16x16x8xf32>,
    %c0_86 = arith.constant 0 : index
    %c0_87 = arith.constant 0 : index
    %c0_88 = arith.constant 0 : index
    %c0_89 = arith.constant 0 : index
    %65 = vector.load %arg8[%c0_86, %c0_87, %c0_88, %c0_89] : memref<2x18x18x8xf32, #tpu.memory_space<vmem>>, vector<2x16x16x8xf32>
    %66 = vector.shape_cast %65 : vector<2x16x16x8xf32> to vector<512x8xf32>
    %c0_90 = arith.constant 0 : index
    %c0_91 = arith.constant 0 : index
    %67 = vector.load %arg9[%c0_90, %c0_91] : memref<512x72xf32, #tpu.memory_space<vmem>>, vector<512x8xf32>
    tpu.vector_store %arg9[%c0_90, %c0_91], %66 {strides = array<i32>} : memref<512x72xf32, #tpu.memory_space<vmem>>, vector<512x8xf32>,
    %c0_92 = arith.constant 0 : index
    %c0_93 = arith.constant 0 : index
    %c1_94 = arith.constant 1 : index
    %c0_95 = arith.constant 0 : index
    %68 = vector.load %arg8[%c0_92, %c0_93, %c1_94, %c0_95] : memref<2x18x18x8xf32, #tpu.memory_space<vmem>>, vector<2x16x16x8xf32>
    %69 = vector.shape_cast %68 : vector<2x16x16x8xf32> to vector<512x8xf32>
    %c0_96 = arith.constant 0 : index
    %c8_97 = arith.constant 8 : index
    %70 = vector.load %arg9[%c0_96, %c8_97] : memref<512x72xf32, #tpu.memory_space<vmem>>, vector<512x8xf32>
    tpu.vector_store %arg9[%c0_96, %c8_97], %69 {strides = array<i32>} : memref<512x72xf32, #tpu.memory_space<vmem>>, vector<512x8xf32>,
    %c0_98 = arith.constant 0 : index
    %c0_99 = arith.constant 0 : index
    %c2_100 = arith.constant 2 : index
    %c0_101 = arith.constant 0 : index
    %71 = vector.load %arg8[%c0_98, %c0_99, %c2_100, %c0_101] : memref<2x18x18x8xf32, #tpu.memory_space<vmem>>, vector<2x16x16x8xf32>
    %72 = vector.shape_cast %71 : vector<2x16x16x8xf32> to vector<512x8xf32>
    %c0_102 = arith.constant 0 : index
    %c16_103 = arith.constant 16 : index
    %73 = vector.load %arg9[%c0_102, %c16_103] : memref<512x72xf32, #tpu.memory_space<vmem>>, vector<512x8xf32>
    tpu.vector_store %arg9[%c0_102, %c16_103], %72 {strides = array<i32>} : memref<512x72xf32, #tpu.memory_space<vmem>>, vector<512x8xf32>,
    %c0_104 = arith.constant 0 : index
    %c1_105 = arith.constant 1 : index
    %c0_106 = arith.constant 0 : index
    %c0_107 = arith.constant 0 : index
    %74 = vector.load %arg8[%c0_104, %c1_105, %c0_106, %c0_107] : memref<2x18x18x8xf32, #tpu.memory_space<vmem>>, vector<2x16x16x8xf32>
    %75 = vector.shape_cast %74 : vector<2x16x16x8xf32> to vector<512x8xf32>
    %c0_108 = arith.constant 0 : index
    %c24_109 = arith.constant 24 : index
    %76 = vector.load %arg9[%c0_108, %c24_109] : memref<512x72xf32, #tpu.memory_space<vmem>>, vector<512x8xf32>
    tpu.vector_store %arg9[%c0_108, %c24_109], %75 {strides = array<i32>} : memref<512x72xf32, #tpu.memory_space<vmem>>, vector<512x8xf32>,
    %c0_110 = arith.constant 0 : index
    %c1_111 = arith.constant 1 : index
    %c1_112 = arith.constant 1 : index
    %c0_113 = arith.constant 0 : index
    %77 = vector.load %arg8[%c0_110, %c1_111, %c1_112, %c0_113] : memref<2x18x18x8xf32, #tpu.memory_space<vmem>>, vector<2x16x16x8xf32>
    %78 = vector.shape_cast %77 : vector<2x16x16x8xf32> to vector<512x8xf32>
    %c0_114 = arith.constant 0 : index
    %c32_115 = arith.constant 32 : index
    %79 = vector.load %arg9[%c0_114, %c32_115] : memref<512x72xf32, #tpu.memory_space<vmem>>, vector<512x8xf32>
    tpu.vector_store %arg9[%c0_114, %c32_115], %78 {strides = array<i32>} : memref<512x72xf32, #tpu.memory_space<vmem>>, vector<512x8xf32>,
    %c0_116 = arith.constant 0 : index
    %c1_117 = arith.constant 1 : index
    %c2_118 = arith.constant 2 : index
    %c0_119 = arith.constant 0 : index
    %80 = vector.load %arg8[%c0_116, %c1_117, %c2_118, %c0_119] : memref<2x18x18x8xf32, #tpu.memory_space<vmem>>, vector<2x16x16x8xf32>
    %81 = vector.shape_cast %80 : vector<2x16x16x8xf32> to vector<512x8xf32>
    %c0_120 = arith.constant 0 : index
    %c40_121 = arith.constant 40 : index
    %82 = vector.load %arg9[%c0_120, %c40_121] : memref<512x72xf32, #tpu.memory_space<vmem>>, vector<512x8xf32>
    tpu.vector_store %arg9[%c0_120, %c40_121], %81 {strides = array<i32>} : memref<512x72xf32, #tpu.memory_space<vmem>>, vector<512x8xf32>,
    %c0_122 = arith.constant 0 : index
    %c2_123 = arith.constant 2 : index
    %c0_124 = arith.constant 0 : index
    %c0_125 = arith.constant 0 : index
    %83 = vector.load %arg8[%c0_122, %c2_123, %c0_124, %c0_125] : memref<2x18x18x8xf32, #tpu.memory_space<vmem>>, vector<2x16x16x8xf32>
    %84 = vector.shape_cast %83 : vector<2x16x16x8xf32> to vector<512x8xf32>
    %c0_126 = arith.constant 0 : index
    %c48_127 = arith.constant 48 : index
    %85 = vector.load %arg9[%c0_126, %c48_127] : memref<512x72xf32, #tpu.memory_space<vmem>>, vector<512x8xf32>
    tpu.vector_store %arg9[%c0_126, %c48_127], %84 {strides = array<i32>} : memref<512x72xf32, #tpu.memory_space<vmem>>, vector<512x8xf32>,
    %c0_128 = arith.constant 0 : index
    %c2_129 = arith.constant 2 : index
    %c1_130 = arith.constant 1 : index
    %c0_131 = arith.constant 0 : index
    %86 = vector.load %arg8[%c0_128, %c2_129, %c1_130, %c0_131] : memref<2x18x18x8xf32, #tpu.memory_space<vmem>>, vector<2x16x16x8xf32>
    %87 = vector.shape_cast %86 : vector<2x16x16x8xf32> to vector<512x8xf32>
    %c0_132 = arith.constant 0 : index
    %c56_133 = arith.constant 56 : index
    %88 = vector.load %arg9[%c0_132, %c56_133] : memref<512x72xf32, #tpu.memory_space<vmem>>, vector<512x8xf32>
    tpu.vector_store %arg9[%c0_132, %c56_133], %87 {strides = array<i32>} : memref<512x72xf32, #tpu.memory_space<vmem>>, vector<512x8xf32>,
    %c0_134 = arith.constant 0 : index
    %c2_135 = arith.constant 2 : index
    %c2_136 = arith.constant 2 : index
    %c0_137 = arith.constant 0 : index
    %89 = vector.load %arg8[%c0_134, %c2_135, %c2_136, %c0_137] : memref<2x18x18x8xf32, #tpu.memory_space<vmem>>, vector<2x16x16x8xf32>
    %90 = vector.shape_cast %89 : vector<2x16x16x8xf32> to vector<512x8xf32>
    %c0_138 = arith.constant 0 : index
    %c64_139 = arith.constant 64 : index
    %91 = vector.load %arg9[%c0_138, %c64_139] : memref<512x72xf32, #tpu.memory_space<vmem>>, vector<512x8xf32>
    tpu.vector_store %arg9[%c0_138, %c64_139], %90 {strides = array<i32>} : memref<512x72xf32, #tpu.memory_space<vmem>>, vector<512x8xf32>,
    %c0_140 = arith.constant 0 : index
    %c0_141 = arith.constant 0 : index
    %92 = vector.load %arg9[%c0_140, %c0_141] : memref<512x72xf32, #tpu.memory_space<vmem>>, vector<512x72xf32>
    %c0_142 = arith.constant 0 : index
    %c0_143 = arith.constant 0 : index
    %93 = vector.load %arg4[%c0_142, %c0_143] : memref<72x8xf32, #tpu.memory_space<vmem>>, vector<72x8xf32>
    %cst_144 = arith.constant dense<0.000000e+00> : vector<512x8xf32>
    %94 = tpu.matmul %92, %93, %cst_144 {dimension_numbers = #tpu.dot_dimension_numbers<[1], [0], [0], [1], [0, 0, 1, 1], [], []>} : vector<512x72xf32>, vector<72x8xf32>, vector<512x8xf32> -> vector<512x8xf32>
    %c0_145 = arith.constant 0 : index
    %c0_146 = arith.constant 0 : index
    %95 = vector.load %arg5[%c0_145, %c0_146] : memref<1x8xf32, #tpu.memory_space<vmem>>, vector<1x8xf32>
    %c0_147 = arith.constant 0 : index
    %c0_148 = arith.constant 0 : index
    %96 = vector.load %arg6[%c0_147, %c0_148] : memref<1x8xf32, #tpu.memory_space<vmem>>, vector<1x8xf32>
    %cst_149 = arith.constant dense<0.000000e+00> : vector<8xf32>
    %97 = vector.multi_reduction <add>, %94, %cst_149 [0] : vector<512x8xf32> to vector<8xf32>
    %98 = vector.shape_cast %97 : vector<8xf32> to vector<1x8xf32>
    %99 = arith.mulf %94, %94 : vector<512x8xf32>
    %cst_150 = arith.constant dense<0.000000e+00> : vector<8xf32>
    %100 = vector.multi_reduction <add>, %99, %cst_150 [0] : vector<512x8xf32> to vector<8xf32>
    %101 = vector.shape_cast %100 : vector<8xf32> to vector<1x8xf32>
    %cst_151 = arith.constant 0.001953125 : f32
    %102 = vector.broadcast %cst_151 : f32 to vector<1x8xf32>
    %103 = arith.mulf %98, %102 : vector<1x8xf32>
    %cst_152 = arith.constant 0.001953125 : f32
    %104 = vector.broadcast %cst_152 : f32 to vector<1x8xf32>
    %105 = arith.mulf %101, %104 : vector<1x8xf32>
    %106 = arith.mulf %103, %103 : vector<1x8xf32>
    %107 = arith.subf %105, %106 : vector<1x8xf32>
    %cst_153 = arith.constant 9.99999974E-6 : f32
    %108 = vector.broadcast %cst_153 : f32 to vector<1x8xf32>
    %109 = arith.addf %107, %108 : vector<1x8xf32>
    %110 = math.rsqrt %109 : vector<1x8xf32>
    %111 = arith.mulf %95, %110 : vector<1x8xf32>
    %112 = arith.mulf %103, %111 : vector<1x8xf32>
    %113 = arith.subf %96, %112 : vector<1x8xf32>
    %114 = vector.broadcast %111 : vector<1x8xf32> to vector<512x8xf32>
    %115 = arith.mulf %94, %114 : vector<512x8xf32>
    %116 = vector.broadcast %113 : vector<1x8xf32> to vector<512x8xf32>
    %117 = arith.addf %115, %116 : vector<512x8xf32>
    %c0_154 = arith.constant 0 : index
    %c0_155 = arith.constant 0 : index
    %c0_156 = arith.constant 0 : index
    %c0_157 = arith.constant 0 : index
    %118 = vector.load %arg0[%c0_154, %c0_155, %c0_156, %c0_157] : memref<2x16x16x8xf32, #tpu.memory_space<vmem>>, vector<2x16x16x8xf32>
    %119 = vector.shape_cast %118 : vector<2x16x16x8xf32> to vector<512x8xf32>
    %120 = arith.addf %117, %119 : vector<512x8xf32>
    %cst_158 = arith.constant 0.000000e+00 : f32
    %121 = vector.broadcast %cst_158 : f32 to vector<512x8xf32>
    %122 = arith.maximumf %120, %121 : vector<512x8xf32>
    %123 = vector.shape_cast %122 : vector<512x8xf32> to vector<2x16x16x8xf32>
    %c0_159 = arith.constant 0 : index
    %c0_160 = arith.constant 0 : index
    %c0_161 = arith.constant 0 : index
    %c0_162 = arith.constant 0 : index
    %124 = vector.load %arg7[%c0_159, %c0_160, %c0_161, %c0_162] : memref<2x16x16x8xf32, #tpu.memory_space<vmem>>, vector<2x16x16x8xf32>
    tpu.vector_store %arg7[%c0_159, %c0_160, %c0_161, %c0_162], %123 {strides = array<i32>} : memref<2x16x16x8xf32, #tpu.memory_space<vmem>>, vector<2x16x16x8xf32>,
    return
  }
}

</mosaic_0001>

<llo_original>
// kernel: basic_block.1
$region0: #{basic_block.1}
  #allocation0 [shape = 'u32[]', space=smem, size = 0x4, offset = 0x4, fixed_abs, tag = 'smem constant byte address 0x4 - core index']
  #allocation1 [shape = 'u32[144,128]{1,0:T(1,128)}', space=vmem, size = 0x12000, scoped, tag = 'internal scratch']
  #allocation2 [shape = 'f32[2,18,18,8]{3,2,1,0:T(8,128)}', space=vmem, size = 0x6c000, scoped, tag = 'scratch operand']
  #allocation3 [shape = 'f32[512,72]{1,0:T(8,128)}', space=vmem, size = 0x40000, scoped, tag = 'scratch operand']
  %s0 = inlined_call_operand.vmem [shape: f32[2,16,16,8], index: 0, kind: input, shape index: {}]
  %s1 = inlined_call_operand.vmem [shape: f32[72,8], index: 1, kind: input, shape index: {}]
  %s2 = inlined_call_operand.vmem [shape: f32[1,8], index: 2, kind: input, shape index: {}]
  %s3 = inlined_call_operand.vmem [shape: f32[1,8], index: 3, kind: input, shape index: {}]
  %s4 = inlined_call_operand.vmem [shape: f32[72,8], index: 4, kind: input, shape index: {}]
  %s5 = inlined_call_operand.vmem [shape: f32[1,8], index: 5, kind: input, shape index: {}]
  %s6 = inlined_call_operand.vmem [shape: f32[1,8], index: 6, kind: input, shape index: {}]
  %s7 = inlined_call_operand.vmem [shape: f32[2,16,16,8], index: 7, kind: output, shape index: {}]
  %s8 = sld [smem:[#allocation0]]
  $region38: #{basic_block.1} parent=0
    _
  %s10 = ssub.s32 1, %s8
  %s11 = scalar_select 0, %s10, %s8
  // Predicated region
  $region2: #{basic_block.1} parent=0 // pred_check
    _
  $region3: #{basic_block.1} parent=0 // pred_check_branch
    %13 = sbr.rel (0) target = $region5
  $region4: #{basic_block.1} parent=0 // pred_region
    _
  $region5: #{basic_block.1} parent=0 // pred_fallthru
    _
  // Predicated region
  $region6: #{basic_block.1} parent=0 // pred_check
    _
  $region7: #{basic_block.1} parent=0 // pred_check_branch
    %15 = sbr.rel (0) target = $region9
  $region8: #{basic_block.1} parent=0 // pred_region
    _
  $region9: #{basic_block.1} parent=0 // pred_fallthru
    _
  // Predicated region
  $region10: #{basic_block.1} parent=0 // pred_check
    _
  $region11: #{basic_block.1} parent=0 // pred_check_branch
    %17 = sbr.rel (0) target = $region13
  $region12: #{basic_block.1} parent=0 // pred_region
    _
  $region13: #{basic_block.1} parent=0 // pred_fallthru
    _
  // Predicated region
  $region14: #{basic_block.1} parent=0 // pred_check
    _
  $region15: #{basic_block.1} parent=0 // pred_check_branch
    %19 = sbr.rel (0) target = $region17
  $region16: #{basic_block.1} parent=0 // pred_region
    _
  $region17: #{basic_block.1} parent=0 // pred_fallthru
    _
  // Predicated region
  $region18: #{basic_block.1} parent=0 // pred_check
    _
  $region19: #{basic_block.1} parent=0 // pred_check_branch
    %21 = sbr.rel (0) target = $region21
  $region20: #{basic_block.1} parent=0 // pred_region
    _
  $region21: #{basic_block.1} parent=0 // pred_fallthru
    _
  // Predicated region
  $region22: #{basic_block.1} parent=0 // pred_check
    _
  $region23: #{basic_block.1} parent=0 // pred_check_branch
    %23 = sbr.rel (0) target = $region25
  $region24: #{basic_block.1} parent=0 // pred_region
    _
  $region25: #{basic_block.1} parent=0 // pred_fallthru
    _
  // Predicated region
  $region26: #{basic_block.1} parent=0 // pred_check
    _
  $region27: #{basic_block.1} parent=0 // pred_check_branch
    %25 = sbr.rel (0) target = $region29
  $region28: #{basic_block.1} parent=0 // pred_region
    _
  $region29: #{basic_block.1} parent=0 // pred_fallthru
    _
  %vm26 = vcmask 64512
  %27 = vst.msk [vmem:[#allocation2] sm:$0xff] %vm26, 0.0
  %28 = vst.msk [vmem:[#allocation2 + $0x8] sm:$0xff] %vm26, 0.0
  %vm29 = vcmask 58368
  %30 = vst.msk [vmem:[#allocation2 + $0x10] sm:$0x3] %vm29, 0.0
  %31 = vst.msk [vmem:[#allocation2 + $0x1b0] sm:$0xff] %vm26, 0.0
  %32 = vst.msk [vmem:[#allocation2 + $0x1b8] sm:$0xff] %vm26, 0.0
  %33 = vst.msk [vmem:[#allocation2 + $0x1c0] sm:$0x3] %vm29, 0.0
  %s34 = scalar_lea.vmem [#allocation2], 408
  %35 = vst.msk [vmem:[%s34] sm:$0xff] %vm26, 0.0
  %36 = vst.msk [vmem:[%s34 + $0x8] sm:$0xff] %vm26, 0.0
  %37 = vst.msk [vmem:[%s34 + $0x10] sm:$0x3] %vm29, 0.0
  %38 = vst.msk [vmem:[%s34 + $0x1b0] sm:$0xff] %vm26, 0.0
  %39 = vst.msk [vmem:[%s34 + $0x1b8] sm:$0xff] %vm26, 0.0
  %40 = vst.msk [vmem:[%s34 + $0x1c0] sm:$0x3] %vm29, 0.0
  %vm41 = vcmask 57344
  %42 = vst.msk [vmem:[#allocation2] sm:$0x1] %vm41, 0.0
  %43 = vst.msk [vmem:[#allocation2 + $0x18] sm:$0x1] %vm41, 0.0
  %44 = vst.msk [vmem:[#allocation2 + $0x30] sm:$0x1] %vm41, 0.0
  %45 = vst.msk [vmem:[#allocation2 + $0x48] sm:$0x1] %vm41, 0.0
  %46 = vst.msk [vmem:[#allocation2 + $0x60] sm:$0x1] %vm41, 0.0
  %47 = vst.msk [vmem:[#allocation2 + $0x78] sm:$0x1] %vm41, 0.0
  %48 = vst.msk [vmem:[#allocation2 + $0x90] sm:$0x1] %vm41, 0.0
  %49 = vst.msk [vmem:[#allocation2 + $0xa8] sm:$0x1] %vm41, 0.0
  %50 = vst.msk [vmem:[#allocation2 + $0xc0] sm:$0x1] %vm41, 0.0
  %51 = vst.msk [vmem:[#allocation2 + $0xd8] sm:$0x1] %vm41, 0.0
  %52 = vst.msk [vmem:[#allocation2 + $0xf0] sm:$0x1] %vm41, 0.0
  %53 = vst.msk [vmem:[#allocation2 + $0x108] sm:$0x1] %vm41, 0.0
  %54 = vst.msk [vmem:[#allocation2 + $0x120] sm:$0x1] %vm41, 0.0
  %55 = vst.msk [vmem:[#allocation2 + $0x138] sm:$0x1] %vm41, 0.0
  %56 = vst.msk [vmem:[#allocation2 + $0x150] sm:$0x1] %vm41, 0.0
  %57 = vst.msk [vmem:[#allocation2 + $0x168] sm:$0x1] %vm41, 0.0
  %58 = vst.msk [vmem:[#allocation2 + $0x180] sm:$0x1] %vm41, 0.0
  %59 = vst.msk [vmem:[#allocation2 + $0x198] sm:$0x1] %vm41, 0.0
  %60 = vst.msk [vmem:[#allocation2 + $0x1b0] sm:$0x1] %vm41, 0.0
  %61 = vst.msk [vmem:[#allocation2 + $0x1c8] sm:$0x1] %vm41, 0.0
  %62 = vst.msk [vmem:[#allocation2 + $0x1e0] sm:$0x1] %vm41, 0.0
  %63 = vst.msk [vmem:[#allocation2 + $0x1f8] sm:$0x1] %vm41, 0.0
  %64 = vst.msk [vmem:[#allocation2 + $0x210] sm:$0x1] %vm41, 0.0
  %65 = vst.msk [vmem:[#allocation2 + $0x228] sm:$0x1] %vm41, 0.0
  %66 = vst.msk [vmem:[#allocation2 + $0x240] sm:$0x1] %vm41, 0.0
  %67 = vst.msk [vmem:[#allocation2 + $0x258] sm:$0x1] %vm41, 0.0
  %68 = vst.msk [vmem:[#allocation2 + $0x270] sm:$0x1] %vm41, 0.0
  %69 = vst.msk [vmem:[#allocation2 + $0x288] sm:$0x1] %vm41, 0.0
  %70 = vst.msk [vmem:[#allocation2 + $0x2a0] sm:$0x1] %vm41, 0.0
  %71 = vst.msk [vmem:[#allocation2 + $0x2b8] sm:$0x1] %vm41, 0.0
  %72 = vst.msk [vmem:[#allocation2 + $0x2d0] sm:$0x1] %vm41, 0.0
  %73 = vst.msk [vmem:[#allocation2 + $0x2e8] sm:$0x1] %vm41, 0.0
  %74 = vst.msk [vmem:[#allocation2 + $0x300] sm:$0x1] %vm41, 0.0
  %75 = vst.msk [vmem:[#allocation2 + $0x318] sm:$0x1] %vm41, 0.0
  %76 = vst.msk [vmem:[#allocation2 + $0x330] sm:$0x1] %vm41, 0.0
  %77 = vst.msk [vmem:[#allocation2 + $0x348] sm:$0x1] %vm41, 0.0
  %78 = vst.msk [vmem:[#allocation2 + $0x11] sm:$0x1] %vm41, 0.0
  %79 = vst.msk [vmem:[#allocation2 + $0x29] sm:$0x1] %vm41, 0.0
  %80 = vst.msk [vmem:[#allocation2 + $0x41] sm:$0x1] %vm41, 0.0
  %81 = vst.msk [vmem:[#allocation2 + $0x59] sm:$0x1] %vm41, 0.0
  %82 = vst.msk [vmem:[#allocation2 + $0x71] sm:$0x1] %vm41, 0.0
  %83 = vst.msk [vmem:[#allocation2 + $0x89] sm:$0x1] %vm41, 0.0
  %84 = vst.msk [vmem:[#allocation2 + $0xa1] sm:$0x1] %vm41, 0.0
  %85 = vst.msk [vmem:[#allocation2 + $0xb9] sm:$0x1] %vm41, 0.0
  %86 = vst.msk [vmem:[#allocation2 + $0xd1] sm:$0x1] %vm41, 0.0
  %87 = vst.msk [vmem:[#allocation2 + $0xe9] sm:$0x1] %vm41, 0.0
  %88 = vst.msk [vmem:[#allocation2 + $0x101] sm:$0x1] %vm41, 0.0
  %89 = vst.msk [vmem:[#allocation2 + $0x119] sm:$0x1] %vm41, 0.0
  %90 = vst.msk [vmem:[#allocation2 + $0x131] sm:$0x1] %vm41, 0.0
  %91 = vst.msk [vmem:[#allocation2 + $0x149] sm:$0x1] %vm41, 0.0
  %92 = vst.msk [vmem:[#allocation2 + $0x161] sm:$0x1] %vm41, 0.0
  %93 = vst.msk [vmem:[#allocation2 + $0x179] sm:$0x1] %vm41, 0.0
  %94 = vst.msk [vmem:[#allocation2 + $0x191] sm:$0x1] %vm41, 0.0
  %95 = vst.msk [vmem:[#allocation2 + $0x1a9] sm:$0x1] %vm41, 0.0
  %96 = vst.msk [vmem:[#allocation2 + $0x1c1] sm:$0x1] %vm41, 0.0
  %97 = vst.msk [vmem:[#allocation2 + $0x1d9] sm:$0x1] %vm41, 0.0
  %98 = vst.msk [vmem:[#allocation2 + $0x1f1] sm:$0x1] %vm41, 0.0
  %99 = vst.msk [vmem:[#allocation2 + $0x209] sm:$0x1] %vm41, 0.0
  %100 = vst.msk [vmem:[#allocation2 + $0x221] sm:$0x1] %vm41, 0.0
  %101 = vst.msk [vmem:[#allocation2 + $0x239] sm:$0x1] %vm41, 0.0
  %102 = vst.msk [vmem:[#allocation2 + $0x251] sm:$0x1] %vm41, 0.0
  %103 = vst.msk [vmem:[#allocation2 + $0x269] sm:$0x1] %vm41, 0.0
  %104 = vst.msk [vmem:[#allocation2 + $0x281] sm:$0x1] %vm41, 0.0
  %105 = vst.msk [vmem:[#allocation2 + $0x299] sm:$0x1] %vm41, 0.0
  %106 = vst.msk [vmem:[#allocation2 + $0x2b1] sm:$0x1] %vm41, 0.0
  %107 = vst.msk [vmem:[#allocation2 + $0x2c9] sm:$0x1] %vm41, 0.0
  %108 = vst.msk [vmem:[#allocation2 + $0x2e1] sm:$0x1] %vm41, 0.0
  %109 = vst.msk [vmem:[#allocation2 + $0x2f9] sm:$0x1] %vm41, 0.0
  %110 = vst.msk [vmem:[#allocation2 + $0x311] sm:$0x1] %vm41, 0.0
  %111 = vst.msk [vmem:[#allocation2 + $0x329] sm:$0x1] %vm41, 0.0
  %112 = vst.msk [vmem:[#allocation2 + $0x341] sm:$0x1] %vm41, 0.0
  %113 = vst.msk [vmem:[#allocation2 + $0x359] sm:$0x1] %vm41, 0.0
  %v114 = vld [vmem:[%s0] sm:$0xff]
  %v115 = vld [vmem:[%s0 + $0x8] sm:$0xff]
  %v116 = vld [vmem:[%s0 + $0x10] sm:$0xff]
  %v117 = vld [vmem:[%s0 + $0x18] sm:$0xff]
  %v118 = vld [vmem:[%s0 + $0x20] sm:$0xff]
  %v119 = vld [vmem:[%s0 + $0x28] sm:$0xff]
  %v120 = vld [vmem:[%s0 + $0x30] sm:$0xff]
  %v121 = vld [vmem:[%s0 + $0x38] sm:$0xff]
  %v122 = vld [vmem:[%s0 + $0x40] sm:$0xff]
  %v123 = vld [vmem:[%s0 + $0x48] sm:$0xff]
  %v124 = vld [vmem:[%s0 + $0x50] sm:$0xff]
  %v125 = vld [vmem:[%s0 + $0x58] sm:$0xff]
  %v126 = vld [vmem:[%s0 + $0x60] sm:$0xff]
  %v127 = vld [vmem:[%s0 + $0x68] sm:$0xff]
  %v128 = vld [vmem:[%s0 + $0x70] sm:$0xff]
  %v129 = vld [vmem:[%s0 + $0x78] sm:$0xff]
  %v130 = vld [vmem:[%s0 + $0x80] sm:$0xff]
  %v131 = vld [vmem:[%s0 + $0x88] sm:$0xff]
  %v132 = vld [vmem:[%s0 + $0x90] sm:$0xff]
  %v133 = vld [vmem:[%s0 + $0x98] sm:$0xff]
  %v134 = vld [vmem:[%s0 + $0xa0] sm:$0xff]
  %v135 = vld [vmem:[%s0 + $0xa8] sm:$0xff]
  %v136 = vld [vmem:[%s0 + $0xb0] sm:$0xff]
  %v137 = vld [vmem:[%s0 + $0xb8] sm:$0xff]
  %v138 = vld [vmem:[%s0 + $0xc0] sm:$0xff]
  %v139 = vld [vmem:[%s0 + $0xc8] sm:$0xff]
  %v140 = vld [vmem:[%s0 + $0xd0] sm:$0xff]
  %v141 = vld [vmem:[%s0 + $0xd8] sm:$0xff]
  %v142 = vld [vmem:[%s0 + $0xe0] sm:$0xff]
  %v143 = vld [vmem:[%s0 + $0xe8] sm:$0xff]
  %v144 = vld [vmem:[%s0 + $0xf0] sm:$0xff]
  %v145 = vld [vmem:[%s0 + $0xf8] sm:$0xff]
  %v146 = vld [vmem:[%s0 + $0x100] sm:$0xff]
  %v147 = vld [vmem:[%s0 + $0x108] sm:$0xff]
  %v148 = vld [vmem:[%s0 + $0x110] sm:$0xff]
  %v149 = vld [vmem:[%s0 + $0x118] sm:$0xff]
  %v150 = vld [vmem:[%s0 + $0x120] sm:$0xff]
  %v151 = vld [vmem:[%s0 + $0x128] sm:$0xff]
  %v152 = vld [vmem:[%s0 + $0x130] sm:$0xff]
  %v153 = vld [vmem:[%s0 + $0x138] sm:$0xff]
  %v154 = vld [vmem:[%s0 + $0x140] sm:$0xff]
  %v155 = vld [vmem:[%s0 + $0x148] sm:$0xff]
  %v156 = vld [vmem:[%s0 + $0x150] sm:$0xff]
  %v157 = vld [vmem:[%s0 + $0x158] sm:$0xff]
  %v158 = vld [vmem:[%s0 + $0x160] sm:$0xff]
  %v159 = vld [vmem:[%s0 + $0x168] sm:$0xff]
  %v160 = vld [vmem:[%s0 + $0x170] sm:$0xff]
  %v161 = vld [vmem:[%s0 + $0x178] sm:$0xff]
  %v162 = vld [vmem:[%s0 + $0x180] sm:$0xff]
  %v163 = vld [vmem:[%s0 + $0x188] sm:$0xff]
  %v164 = vld [vmem:[%s0 + $0x190] sm:$0xff]
  %v165 = vld [vmem:[%s0 + $0x198] sm:$0xff]
  %v166 = vld [vmem:[%s0 + $0x1a0] sm:$0xff]
  %v167 = vld [vmem:[%s0 + $0x1a8] sm:$0xff]
  %v168 = vld [vmem:[%s0 + $0x1b0] sm:$0xff]
  %v169 = vld [vmem:[%s0 + $0x1b8] sm:$0xff]
  %v170 = vld [vmem:[%s0 + $0x1c0] sm:$0xff]
  %v171 = vld [vmem:[%s0 + $0x1c8] sm:$0xff]
  %v172 = vld [vmem:[%s0 + $0x1d0] sm:$0xff]
  %v173 = vld [vmem:[%s0 + $0x1d8] sm:$0xff]
  %v174 = vld [vmem:[%s0 + $0x1e0] sm:$0xff]
  %v175 = vld [vmem:[%s0 + $0x1e8] sm:$0xff]
  %v176 = vld [vmem:[%s0 + $0x1f0] sm:$0xff]
  %v177 = vld [vmem:[%s0 + $0x1f8] sm:$0xff]
  %s178 = scalar_lea.vmem [#allocation2], 24
  %179 = vst.msk [vmem:[%s178 + $0x1] sm:$0xff] %vm26, %v114
  %180 = vst.msk [vmem:[%s178 + $0x9] sm:$0xff] %vm26, %v115
  %181 = vst.msk [vmem:[%s178 + $0x19] sm:$0xff] %vm26, %v116
  %182 = vst.msk [vmem:[%s178 + $0x21] sm:$0xff] %vm26, %v117
  %183 = vst.msk [vmem:[%s178 + $0x31] sm:$0xff] %vm26, %v118
  %184 = vst.msk [vmem:[%s178 + $0x39] sm:$0xff] %vm26, %v119
  %185 = vst.msk [vmem:[%s178 + $0x49] sm:$0xff] %vm26, %v120
  %186 = vst.msk [vmem:[%s178 + $0x51] sm:$0xff] %vm26, %v121
  %187 = vst.msk [vmem:[%s178 + $0x61] sm:$0xff] %vm26, %v122
  %188 = vst.msk [vmem:[%s178 + $0x69] sm:$0xff] %vm26, %v123
  %189 = vst.msk [vmem:[%s178 + $0x79] sm:$0xff] %vm26, %v124
  %190 = vst.msk [vmem:[%s178 + $0x81] sm:$0xff] %vm26, %v125
  %191 = vst.msk [vmem:[%s178 + $0x91] sm:$0xff] %vm26, %v126
  %192 = vst.msk [vmem:[%s178 + $0x99] sm:$0xff] %vm26, %v127
  %193 = vst.msk [vmem:[%s178 + $0xa9] sm:$0xff] %vm26, %v128
  %194 = vst.msk [vmem:[%s178 + $0xb1] sm:$0xff] %vm26, %v129
  %195 = vst.msk [vmem:[%s178 + $0xc1] sm:$0xff] %vm26, %v130
  %196 = vst.msk [vmem:[%s178 + $0xc9] sm:$0xff] %vm26, %v131
  %197 = vst.msk [vmem:[%s178 + $0xd9] sm:$0xff] %vm26, %v132
  %198 = vst.msk [vmem:[%s178 + $0xe1] sm:$0xff] %vm26, %v133
  %199 = vst.msk [vmem:[%s178 + $0xf1] sm:$0xff] %vm26, %v134
  %200 = vst.msk [vmem:[%s178 + $0xf9] sm:$0xff] %vm26, %v135
  %201 = vst.msk [vmem:[%s178 + $0x109] sm:$0xff] %vm26, %v136
  %202 = vst.msk [vmem:[%s178 + $0x111] sm:$0xff] %vm26, %v137
  %203 = vst.msk [vmem:[%s178 + $0x121] sm:$0xff] %vm26, %v138
  %204 = vst.msk [vmem:[%s178 + $0x129] sm:$0xff] %vm26, %v139
  %205 = vst.msk [vmem:[%s178 + $0x139] sm:$0xff] %vm26, %v140
  %206 = vst.msk [vmem:[%s178 + $0x141] sm:$0xff] %vm26, %v141
  %207 = vst.msk [vmem:[%s178 + $0x151] sm:$0xff] %vm26, %v142
  %208 = vst.msk [vmem:[%s178 + $0x159] sm:$0xff] %vm26, %v143
  %209 = vst.msk [vmem:[%s178 + $0x169] sm:$0xff] %vm26, %v144
  %210 = vst.msk [vmem:[%s178 + $0x171] sm:$0xff] %vm26, %v145
  %211 = vst.msk [vmem:[%s178 + $0x1b1] sm:$0xff] %vm26, %v146
  %212 = vst.msk [vmem:[%s178 + $0x1b9] sm:$0xff] %vm26, %v147
  %213 = vst.msk [vmem:[%s178 + $0x1c9] sm:$0xff] %vm26, %v148
  %214 = vst.msk [vmem:[%s178 + $0x1d1] sm:$0xff] %vm26, %v149
  %215 = vst.msk [vmem:[%s178 + $0x1e1] sm:$0xff] %vm26, %v150
  %216 = vst.msk [vmem:[%s178 + $0x1e9] sm:$0xff] %vm26, %v151
  %217 = vst.msk [vmem:[%s178 + $0x1f9] sm:$0xff] %vm26, %v152
  %218 = vst.msk [vmem:[%s178 + $0x201] sm:$0xff] %vm26, %v153
  %219 = vst.msk [vmem:[%s178 + $0x211] sm:$0xff] %vm26, %v154
  %220 = vst.msk [vmem:[%s178 + $0x219] sm:$0xff] %vm26, %v155
  %221 = vst.msk [vmem:[%s178 + $0x229] sm:$0xff] %vm26, %v156
  %222 = vst.msk [vmem:[%s178 + $0x231] sm:$0xff] %vm26, %v157
  %223 = vst.msk [vmem:[%s178 + $0x241] sm:$0xff] %vm26, %v158
  %224 = vst.msk [vmem:[%s178 + $0x249] sm:$0xff] %vm26, %v159
  %225 = vst.msk [vmem:[%s178 + $0x259] sm:$0xff] %vm26, %v160
  %226 = vst.msk [vmem:[%s178 + $0x261] sm:$0xff] %vm26, %v161
  %227 = vst.msk [vmem:[%s178 + $0x271] sm:$0xff] %vm26, %v162
  %228 = vst.msk [vmem:[%s178 + $0x279] sm:$0xff] %vm26, %v163
  %229 = vst.msk [vmem:[%s178 + $0x289] sm:$0xff] %vm26, %v164
  %230 = vst.msk [vmem:[%s178 + $0x291] sm:$0xff] %vm26, %v165
  %231 = vst.msk [vmem:[%s178 + $0x2a1] sm:$0xff] %vm26, %v166
  %232 = vst.msk [vmem:[%s178 + $0x2a9] sm:$0xff] %vm26, %v167
  %233 = vst.msk [vmem:[%s178 + $0x2b9] sm:$0xff] %vm26, %v168
  %234 = vst.msk [vmem:[%s178 + $0x2c1] sm:$0xff] %vm26, %v169
  %235 = vst.msk [vmem:[%s178 + $0x2d1] sm:$0xff] %vm26, %v170
  %236 = vst.msk [vmem:[%s178 + $0x2d9] sm:$0xff] %vm26, %v171
  %237 = vst.msk [vmem:[%s178 + $0x2e9] sm:$0xff] %vm26, %v172
  %238 = vst.msk [vmem:[%s178 + $0x2f1] sm:$0xff] %vm26, %v173
  %239 = vst.msk [vmem:[%s178 + $0x301] sm:$0xff] %vm26, %v174
  %240 = vst.msk [vmem:[%s178 + $0x309] sm:$0xff] %vm26, %v175
  %241 = vst.msk [vmem:[%s178 + $0x319] sm:$0xff] %vm26, %v176
  %242 = vst.msk [vmem:[%s178 + $0x321] sm:$0xff] %vm26, %v177
  %v243 = vld [vmem:[#allocation2] sm:$0xff]
  %v244 = vld [vmem:[#allocation2 + $0x8] sm:$0xff]
  %v245 = vld [vmem:[#allocation2 + $0x18] sm:$0xff]
  %v246 = vld [vmem:[#allocation2 + $0x20] sm:$0xff]
  %v247 = vld [vmem:[#allocation2 + $0x30] sm:$0xff]
  %v248 = vld [vmem:[#allocation2 + $0x38] sm:$0xff]
  %v249 = vld [vmem:[#allocation2 + $0x48] sm:$0xff]
  %v250 = vld [vmem:[#allocation2 + $0x50] sm:$0xff]
  %v251 = vld [vmem:[#allocation2 + $0x60] sm:$0xff]
  %v252 = vld [vmem:[#allocation2 + $0x68] sm:$0xff]
  %v253 = vld [vmem:[#allocation2 + $0x78] sm:$0xff]
  %v254 = vld [vmem:[#allocation2 + $0x80] sm:$0xff]
  %v255 = vld [vmem:[#allocation2 + $0x90] sm:$0xff]
  %v256 = vld [vmem:[#allocation2 + $0x98] sm:$0xff]
  %v257 = vld [vmem:[#allocation2 + $0xa8] sm:$0xff]
  %v258 = vld [vmem:[#allocation2 + $0xb0] sm:$0xff]
  %v259 = vld [vmem:[#allocation2 + $0xc0] sm:$0xff]
  %v260 = vld [vmem:[#allocation2 + $0xc8] sm:$0xff]
  %v261 = vld [vmem:[#allocation2 + $0xd8] sm:$0xff]
  %v262 = vld [vmem:[#allocation2 + $0xe0] sm:$0xff]
  %v263 = vld [vmem:[#allocation2 + $0xf0] sm:$0xff]
  %v264 = vld [vmem:[#allocation2 + $0xf8] sm:$0xff]
  %v265 = vld [vmem:[#allocation2 + $0x108] sm:$0xff]
  %v266 = vld [vmem:[#allocation2 + $0x110] sm:$0xff]
  %v267 = vld [vmem:[#allocation2 + $0x120] sm:$0xff]
  %v268 = vld [vmem:[#allocation2 + $0x128] sm:$0xff]
  %v269 = vld [vmem:[#allocation2 + $0x138] sm:$0xff]
  %v270 = vld [vmem:[#allocation2 + $0x140] sm:$0xff]
  %v271 = vld [vmem:[#allocation2 + $0x150] sm:$0xff]
  %v272 = vld [vmem:[#allocation2 + $0x158] sm:$0xff]
  %v273 = vld [vmem:[#allocation2 + $0x168] sm:$0xff]
  %v274 = vld [vmem:[#allocation2 + $0x170] sm:$0xff]
  %v275 = vld [vmem:[#allocation2 + $0x1b0] sm:$0xff]
  %v276 = vld [vmem:[#allocation2 + $0x1b8] sm:$0xff]
  %v277 = vld [vmem:[#allocation2 + $0x1c8] sm:$0xff]
  %v278 = vld [vmem:[#allocation2 + $0x1d0] sm:$0xff]
  %v279 = vld [vmem:[#allocation2 + $0x1e0] sm:$0xff]
  %v280 = vld [vmem:[#allocation2 + $0x1e8] sm:$0xff]
  %v281 = vld [vmem:[#allocation2 + $0x1f8] sm:$0xff]
  %v282 = vld [vmem:[#allocation2 + $0x200] sm:$0xff]
  %v283 = vld [vmem:[#allocation2 + $0x210] sm:$0xff]
  %v284 = vld [vmem:[#allocation2 + $0x218] sm:$0xff]
  %v285 = vld [vmem:[#allocation2 + $0x228] sm:$0xff]
  %v286 = vld [vmem:[#allocation2 + $0x230] sm:$0xff]
  %v287 = vld [vmem:[#allocation2 + $0x240] sm:$0xff]
  %v288 = vld [vmem:[#allocation2 + $0x248] sm:$0xff]
  %v289 = vld [vmem:[#allocation2 + $0x258] sm:$0xff]
  %v290 = vld [vmem:[#allocation2 + $0x260] sm:$0xff]
  %v291 = vld [vmem:[#allocation2 + $0x270] sm:$0xff]
  %v292 = vld [vmem:[#allocation2 + $0x278] sm:$0xff]
  %v293 = vld [vmem:[#allocation2 + $0x288] sm:$0xff]
  %v294 = vld [vmem:[#allocation2 + $0x290] sm:$0xff]
  %v295 = vld [vmem:[#allocation2 + $0x2a0] sm:$0xff]
  %v296 = vld [vmem:[#allocation2 + $0x2a8] sm:$0xff]
  %v297 = vld [vmem:[#allocation2 + $0x2b8] sm:$0xff]
  %v298 = vld [vmem:[#allocation2 + $0x2c0] sm:$0xff]
  %v299 = vld [vmem:[#allocation2 + $0x2d0] sm:$0xff]
  %v300 = vld [vmem:[#allocation2 + $0x2d8] sm:$0xff]
  %v301 = vld [vmem:[#allocation2 + $0x2e8] sm:$0xff]
  %v302 = vld [vmem:[#allocation2 + $0x2f0] sm:$0xff]
  %v303 = vld [vmem:[#allocation2 + $0x300] sm:$0xff]
  %v304 = vld [vmem:[#allocation2 + $0x308] sm:$0xff]
  %v305 = vld [vmem:[#allocation2 + $0x318] sm:$0xff]
  %v306 = vld [vmem:[#allocation2 + $0x320] sm:$0xff]
  %307 = vst.msk [vmem:[#allocation3] sm:$0xff] %vm26, %v243
  %308 = vst.msk [vmem:[#allocation3 + $0x8] sm:$0xff] %vm26, %v244
  %309 = vst.msk [vmem:[#allocation3 + $0x10] sm:$0xff] %vm26, %v245
  %310 = vst.msk [vmem:[#allocation3 + $0x18] sm:$0xff] %vm26, %v246
  %311 = vst.msk [vmem:[#allocation3 + $0x20] sm:$0xff] %vm26, %v247
  %312 = vst.msk [vmem:[#allocation3 + $0x28] sm:$0xff] %vm26, %v248
  %313 = vst.msk [vmem:[#allocation3 + $0x30] sm:$0xff] %vm26, %v249
  %314 = vst.msk [vmem:[#allocation3 + $0x38] sm:$0xff] %vm26, %v250
  %315 = vst.msk [vmem:[#allocation3 + $0x40] sm:$0xff] %vm26, %v251
  %316 = vst.msk [vmem:[#allocation3 + $0x48] sm:$0xff] %vm26, %v252
  %317 = vst.msk [vmem:[#allocation3 + $0x50] sm:$0xff] %vm26, %v253
  %318 = vst.msk [vmem:[#allocation3 + $0x58] sm:$0xff] %vm26, %v254
  %319 = vst.msk [vmem:[#allocation3 + $0x60] sm:$0xff] %vm26, %v255
  %320 = vst.msk [vmem:[#allocation3 + $0x68] sm:$0xff] %vm26, %v256
  %321 = vst.msk [vmem:[#allocation3 + $0x70] sm:$0xff] %vm26, %v257
  %322 = vst.msk [vmem:[#allocation3 + $0x78] sm:$0xff] %vm26, %v258
  %323 = vst.msk [vmem:[#allocation3 + $0x80] sm:$0xff] %vm26, %v259
  %324 = vst.msk [vmem:[#allocation3 + $0x88] sm:$0xff] %vm26, %v260
  %325 = vst.msk [vmem:[#allocation3 + $0x90] sm:$0xff] %vm26, %v261
  %326 = vst.msk [vmem:[#allocation3 + $0x98] sm:$0xff] %vm26, %v262
  %327 = vst.msk [vmem:[#allocation3 + $0xa0] sm:$0xff] %vm26, %v263
  %328 = vst.msk [vmem:[#allocation3 + $0xa8] sm:$0xff] %vm26, %v264
  %329 = vst.msk [vmem:[#allocation3 + $0xb0] sm:$0xff] %vm26, %v265
  %330 = vst.msk [vmem:[#allocation3 + $0xb8] sm:$0xff] %vm26, %v266
  %331 = vst.msk [vmem:[#allocation3 + $0xc0] sm:$0xff] %vm26, %v267
  %332 = vst.msk [vmem:[#allocation3 + $0xc8] sm:$0xff] %vm26, %v268
  %333 = vst.msk [vmem:[#allocation3 + $0xd0] sm:$0xff] %vm26, %v269
  %334 = vst.msk [vmem:[#allocation3 + $0xd8] sm:$0xff] %vm26, %v270
  %335 = vst.msk [vmem:[#allocation3 + $0xe0] sm:$0xff] %vm26, %v271
  %336 = vst.msk [vmem:[#allocation3 + $0xe8] sm:$0xff] %vm26, %v272
  %337 = vst.msk [vmem:[#allocation3 + $0xf0] sm:$0xff] %vm26, %v273
  %338 = vst.msk [vmem:[#allocation3 + $0xf8] sm:$0xff] %vm26, %v274
  %339 = vst.msk [vmem:[#allocation3 + $0x100] sm:$0xff] %vm26, %v275
  %340 = vst.msk [vmem:[#allocation3 + $0x108] sm:$0xff] %vm26, %v276
  %341 = vst.msk [vmem:[#allocation3 + $0x110] sm:$0xff] %vm26, %v277
  %342 = vst.msk [vmem:[#allocation3 + $0x118] sm:$0xff] %vm26, %v278
  %343 = vst.msk [vmem:[#allocation3 + $0x120] sm:$0xff] %vm26, %v279
  %344 = vst.msk [vmem:[#allocation3 + $0x128] sm:$0xff] %vm26, %v280
  %345 = vst.msk [vmem:[#allocation3 + $0x130] sm:$0xff] %vm26, %v281
  %346 = vst.msk [vmem:[#allocation3 + $0x138] sm:$0xff] %vm26, %v282
  %347 = vst.msk [vmem:[#allocation3 + $0x140] sm:$0xff] %vm26, %v283
  %348 = vst.msk [vmem:[#allocation3 + $0x148] sm:$0xff] %vm26, %v284
  %349 = vst.msk [vmem:[#allocation3 + $0x150] sm:$0xff] %vm26, %v285
  %350 = vst.msk [vmem:[#allocation3 + $0x158] sm:$0xff] %vm26, %v286
  %351 = vst.msk [vmem:[#allocation3 + $0x160] sm:$0xff] %vm26, %v287
  %352 = vst.msk [vmem:[#allocation3 + $0x168] sm:$0xff] %vm26, %v288
  %353 = vst.msk [vmem:[#allocation3 + $0x170] sm:$0xff] %vm26, %v289
  %354 = vst.msk [vmem:[#allocation3 + $0x178] sm:$0xff] %vm26, %v290
  %355 = vst.msk [vmem:[#allocation3 + $0x180] sm:$0xff] %vm26, %v291
  %356 = vst.msk [vmem:[#allocation3 + $0x188] sm:$0xff] %vm26, %v292
  %357 = vst.msk [vmem:[#allocation3 + $0x190] sm:$0xff] %vm26, %v293
  %358 = vst.msk [vmem:[#allocation3 + $0x198] sm:$0xff] %vm26, %v294
  %359 = vst.msk [vmem:[#allocation3 + $0x1a0] sm:$0xff] %vm26, %v295
  %360 = vst.msk [vmem:[#allocation3 + $0x1a8] sm:$0xff] %vm26, %v296
  %361 = vst.msk [vmem:[#allocation3 + $0x1b0] sm:$0xff] %vm26, %v297
  %362 = vst.msk [vmem:[#allocation3 + $0x1b8] sm:$0xff] %vm26, %v298
  %363 = vst.msk [vmem:[#allocation3 + $0x1c0] sm:$0xff] %vm26, %v299
  %364 = vst.msk [vmem:[#allocation3 + $0x1c8] sm:$0xff] %vm26, %v300
  %365 = vst.msk [vmem:[#allocation3 + $0x1d0] sm:$0xff] %vm26, %v301
  %366 = vst.msk [vmem:[#allocation3 + $0x1d8] sm:$0xff] %vm26, %v302
  %367 = vst.msk [vmem:[#allocation3 + $0x1e0] sm:$0xff] %vm26, %v303
  %368 = vst.msk [vmem:[#allocation3 + $0x1e8] sm:$0xff] %vm26, %v304
  %369 = vst.msk [vmem:[#allocation3 + $0x1f0] sm:$0xff] %vm26, %v305
  %370 = vst.msk [vmem:[#allocation3 + $0x1f8] sm:$0xff] %vm26, %v306
  %v371 = vld [vmem:[#allocation2 + $0x1] sm:$0xff]
  %v372 = vld [vmem:[#allocation2 + $0x9] sm:$0xff]
  %v373 = vld [vmem:[#allocation2 + $0x19] sm:$0xff]
  %v374 = vld [vmem:[#allocation2 + $0x21] sm:$0xff]
  %v375 = vld [vmem:[#allocation2 + $0x31] sm:$0xff]
  %v376 = vld [vmem:[#allocation2 + $0x39] sm:$0xff]
  %v377 = vld [vmem:[#allocation2 + $0x49] sm:$0xff]
  %v378 = vld [vmem:[#allocation2 + $0x51] sm:$0xff]
  %v379 = vld [vmem:[#allocation2 + $0x61] sm:$0xff]
  %v380 = vld [vmem:[#allocation2 + $0x69] sm:$0xff]
  %v381 = vld [vmem:[#allocation2 + $0x79] sm:$0xff]
  %v382 = vld [vmem:[#allocation2 + $0x81] sm:$0xff]
  %v383 = vld [vmem:[#allocation2 + $0x91] sm:$0xff]
  %v384 = vld [vmem:[#allocation2 + $0x99] sm:$0xff]
  %v385 = vld [vmem:[#allocation2 + $0xa9] sm:$0xff]
  %v386 = vld [vmem:[#allocation2 + $0xb1] sm:$0xff]
  %v387 = vld [vmem:[#allocation2 + $0xc1] sm:$0xff]
  %v388 = vld [vmem:[#allocation2 + $0xc9] sm:$0xff]
  %v389 = vld [vmem:[#allocation2 + $0xd9] sm:$0xff]
  %v390 = vld [vmem:[#allocation2 + $0xe1] sm:$0xff]
  %v391 = vld [vmem:[#allocation2 + $0xf1] sm:$0xff]
  %v392 = vld [vmem:[#allocation2 + $0xf9] sm:$0xff]
  %v393 = vld [vmem:[#allocation2 + $0x109] sm:$0xff]
  %v394 = vld [vmem:[#allocation2 + $0x111] sm:$0xff]
  %v395 = vld [vmem:[#allocation2 + $0x121] sm:$0xff]
  %v396 = vld [vmem:[#allocation2 + $0x129] sm:$0xff]
  %v397 = vld [vmem:[#allocation2 + $0x139] sm:$0xff]
  %v398 = vld [vmem:[#allocation2 + $0x141] sm:$0xff]
  %v399 = vld [vmem:[#allocation2 + $0x151] sm:$0xff]
  %v400 = vld [vmem:[#allocation2 + $0x159] sm:$0xff]
  %v401 = vld [vmem:[#allocation2 + $0x169] sm:$0xff]
  %v402 = vld [vmem:[#allocation2 + $0x171] sm:$0xff]
  %v403 = vld [vmem:[#allocation2 + $0x1b1] sm:$0xff]
  %v404 = vld [vmem:[#allocation2 + $0x1b9] sm:$0xff]
  %v405 = vld [vmem:[#allocation2 + $0x1c9] sm:$0xff]
  %v406 = vld [vmem:[#allocation2 + $0x1d1] sm:$0xff]
  %v407 = vld [vmem:[#allocation2 + $0x1e1] sm:$0xff]
  %v408 = vld [vmem:[#allocation2 + $0x1e9] sm:$0xff]
  %v409 = vld [vmem:[#allocation2 + $0x1f9] sm:$0xff]
  %v410 = vld [vmem:[#allocation2 + $0x201] sm:$0xff]
  %v411 = vld [vmem:[#allocation2 + $0x211] sm:$0xff]
  %v412 = vld [vmem:[#allocation2 + $0x219] sm:$0xff]
  %v413 = vld [vmem:[#allocation2 + $0x229] sm:$0xff]
  %v414 = vld [vmem:[#allocation2 + $0x231] sm:$0xff]
  %v415 = vld [vmem:[#allocation2 + $0x241] sm:$0xff]
  %v416 = vld [vmem:[#allocation2 + $0x249] sm:$0xff]
  %v417 = vld [vmem:[#allocation2 + $0x259] sm:$0xff]
  %v418 = vld [vmem:[#allocation2 + $0x261] sm:$0xff]
  %v419 = vld [vmem:[#allocation2 + $0x271] sm:$0xff]
  %v420 = vld [vmem:[#allocation2 + $0x279] sm:$0xff]
  %v421 = vld [vmem:[#allocation2 + $0x289] sm:$0xff]
  %v422 = vld [vmem:[#allocation2 + $0x291] sm:$0xff]
  %v423 = vld [vmem:[#allocation2 + $0x2a1] sm:$0xff]
  %v424 = vld [vmem:[#allocation2 + $0x2a9] sm:$0xff]
  %v425 = vld [vmem:[#allocation2 + $0x2b9] sm:$0xff]
  %v426 = vld [vmem:[#allocation2 + $0x2c1] sm:$0xff]
  %v427 = vld [vmem:[#allocation2 + $0x2d1] sm:$0xff]
  %v428 = vld [vmem:[#allocation2 + $0x2d9] sm:$0xff]
  %v429 = vld [vmem:[#allocation2 + $0x2e9] sm:$0xff]
  %v430 = vld [vmem:[#allocation2 + $0x2f1] sm:$0xff]
  %v431 = vld [vmem:[#allocation2 + $0x301] sm:$0xff]
  %v432 = vld [vmem:[#allocation2 + $0x309] sm:$0xff]
  %v433 = vld [vmem:[#allocation2 + $0x319] sm:$0xff]
  %v434 = vld [vmem:[#allocation2 + $0x321] sm:$0xff]
  %499 = vrot.lane.b32.xlu0 %v371, 8
  %v500 = vpop.permute.xlu0 %499
  %501 = vrot.lane.b32.xlu0 %v372, 8
  %v502 = vpop.permute.xlu0 %501
  %503 = vrot.lane.b32.xlu0 %v373, 8
  %v504 = vpop.permute.xlu0 %503
  %505 = vrot.lane.b32.xlu0 %v374, 8
  %v506 = vpop.permute.xlu0 %505
  %507 = vrot.lane.b32.xlu0 %v375, 8
  %v508 = vpop.permute.xlu0 %507
  %509 = vrot.lane.b32.xlu0 %v376, 8
  %v510 = vpop.permute.xlu0 %509
  %511 = vrot.lane.b32.xlu0 %v377, 8
  %v512 = vpop.permute.xlu0 %511
  %513 = vrot.lane.b32.xlu0 %v378, 8
  %v514 = vpop.permute.xlu0 %513
  %515 = vrot.lane.b32.xlu0 %v379, 8
  %v516 = vpop.permute.xlu0 %515
  %517 = vrot.lane.b32.xlu0 %v380, 8
  %v518 = vpop.permute.xlu0 %517
  %519 = vrot.lane.b32.xlu0 %v381, 8
  %v520 = vpop.permute.xlu0 %519
  %521 = vrot.lane.b32.xlu0 %v382, 8
  %v522 = vpop.permute.xlu0 %521
  %523 = vrot.lane.b32.xlu0 %v383, 8
  %v524 = vpop.permute.xlu0 %523
  %525 = vrot.lane.b32.xlu0 %v384, 8
  %v526 = vpop.permute.xlu0 %525
  %527 = vrot.lane.b32.xlu0 %v385, 8
  %v528 = vpop.permute.xlu0 %527
  %529 = vrot.lane.b32.xlu0 %v386, 8
  %v530 = vpop.permute.xlu0 %529
  %531 = vrot.lane.b32.xlu0 %v387, 8
  %v532 = vpop.permute.xlu0 %531
  %533 = vrot.lane.b32.xlu0 %v388, 8
  %v534 = vpop.permute.xlu0 %533
  %535 = vrot.lane.b32.xlu0 %v389, 8
  %v536 = vpop.permute.xlu0 %535
  %537 = vrot.lane.b32.xlu0 %v390, 8
  %v538 = vpop.permute.xlu0 %537
  %539 = vrot.lane.b32.xlu0 %v391, 8
  %v540 = vpop.permute.xlu0 %539
  %541 = vrot.lane.b32.xlu0 %v392, 8
  %v542 = vpop.permute.xlu0 %541
  %543 = vrot.lane.b32.xlu0 %v393, 8
  %v544 = vpop.permute.xlu0 %543
  %545 = vrot.lane.b32.xlu0 %v394, 8
  %v546 = vpop.permute.xlu0 %545
  %547 = vrot.lane.b32.xlu0 %v395, 8
  %v548 = vpop.permute.xlu0 %547
  %549 = vrot.lane.b32.xlu0 %v396, 8
  %v550 = vpop.permute.xlu0 %549
  %551 = vrot.lane.b32.xlu0 %v397, 8
  %v552 = vpop.permute.xlu0 %551
  %553 = vrot.lane.b32.xlu0 %v398, 8
  %v554 = vpop.permute.xlu0 %553
  %555 = vrot.lane.b32.xlu0 %v399, 8
  %v556 = vpop.permute.xlu0 %555
  %557 = vrot.lane.b32.xlu0 %v400, 8
  %v558 = vpop.permute.xlu0 %557
  %559 = vrot.lane.b32.xlu0 %v401, 8
  %v560 = vpop.permute.xlu0 %559
  %561 = vrot.lane.b32.xlu0 %v402, 8
  %v562 = vpop.permute.xlu0 %561
  %563 = vrot.lane.b32.xlu0 %v403, 8
  %v564 = vpop.permute.xlu0 %563
  %565 = vrot.lane.b32.xlu0 %v404, 8
  %v566 = vpop.permute.xlu0 %565
  %567 = vrot.lane.b32.xlu0 %v405, 8
  %v568 = vpop.permute.xlu0 %567
  %569 = vrot.lane.b32.xlu0 %v406, 8
  %v570 = vpop.permute.xlu0 %569
  %571 = vrot.lane.b32.xlu0 %v407, 8
  %v572 = vpop.permute.xlu0 %571
  %573 = vrot.lane.b32.xlu0 %v408, 8
  %v574 = vpop.permute.xlu0 %573
  %575 = vrot.lane.b32.xlu0 %v409, 8
  %v576 = vpop.permute.xlu0 %575
  %577 = vrot.lane.b32.xlu0 %v410, 8
  %v578 = vpop.permute.xlu0 %577
  %579 = vrot.lane.b32.xlu0 %v411, 8
  %v580 = vpop.permute.xlu0 %579
  %581 = vrot.lane.b32.xlu0 %v412, 8
  %v582 = vpop.permute.xlu0 %581
  %583 = vrot.lane.b32.xlu0 %v413, 8
  %v584 = vpop.permute.xlu0 %583
  %585 = vrot.lane.b32.xlu0 %v414, 8
  %v586 = vpop.permute.xlu0 %585
  %587 = vrot.lane.b32.xlu0 %v415, 8
  %v588 = vpop.permute.xlu0 %587
  %589 = vrot.lane.b32.xlu0 %v416, 8
  %v590 = vpop.permute.xlu0 %589
  %591 = vrot.lane.b32.xlu0 %v417, 8
  %v592 = vpop.permute.xlu0 %591
  %593 = vrot.lane.b32.xlu0 %v418, 8
  %v594 = vpop.permute.xlu0 %593
  %595 = vrot.lane.b32.xlu0 %v419, 8
  %v596 = vpop.permute.xlu0 %595
  %597 = vrot.lane.b32.xlu0 %v420, 8
  %v598 = vpop.permute.xlu0 %597
  %599 = vrot.lane.b32.xlu0 %v421, 8
  %v600 = vpop.permute.xlu0 %599
  %601 = vrot.lane.b32.xlu0 %v422, 8
  %v602 = vpop.permute.xlu0 %601
  %603 = vrot.lane.b32.xlu0 %v423, 8
  %v604 = vpop.permute.xlu0 %603
  %605 = vrot.lane.b32.xlu0 %v424, 8
  %v606 = vpop.permute.xlu0 %605
  %607 = vrot.lane.b32.xlu0 %v425, 8
  %v608 = vpop.permute.xlu0 %607
  %609 = vrot.lane.b32.xlu0 %v426, 8
  %v610 = vpop.permute.xlu0 %609
  %611 = vrot.lane.b32.xlu0 %v427, 8
  %v612 = vpop.permute.xlu0 %611
  %613 = vrot.lane.b32.xlu0 %v428, 8
  %v614 = vpop.permute.xlu0 %613
  %615 = vrot.lane.b32.xlu0 %v429, 8
  %v616 = vpop.permute.xlu0 %615
  %617 = vrot.lane.b32.xlu0 %v430, 8
  %v618 = vpop.permute.xlu0 %617
  %619 = vrot.lane.b32.xlu0 %v431, 8
  %v620 = vpop.permute.xlu0 %619
  %621 = vrot.lane.b32.xlu0 %v432, 8
  %v622 = vpop.permute.xlu0 %621
  %623 = vrot.lane.b32.xlu0 %v433, 8
  %v624 = vpop.permute.xlu0 %623
  %625 = vrot.lane.b32.xlu0 %v434, 8
  %v626 = vpop.permute.xlu0 %625
  %vm691 = vcmask 130112
  %692 = vst.msk [vmem:[#allocation3] sm:$0xff] %vm691, %v500
  %693 = vst.msk [vmem:[#allocation3 + $0x8] sm:$0xff] %vm691, %v502
  %694 = vst.msk [vmem:[#allocation3 + $0x10] sm:$0xff] %vm691, %v504
  %695 = vst.msk [vmem:[#allocation3 + $0x18] sm:$0xff] %vm691, %v506
  %696 = vst.msk [vmem:[#allocation3 + $0x20] sm:$0xff] %vm691, %v508
  %697 = vst.msk [vmem:[#allocation3 + $0x28] sm:$0xff] %vm691, %v510
  %698 = vst.msk [vmem:[#allocation3 + $0x30] sm:$0xff] %vm691, %v512
  %699 = vst.msk [vmem:[#allocation3 + $0x38] sm:$0xff] %vm691, %v514
  %700 = vst.msk [vmem:[#allocation3 + $0x40] sm:$0xff] %vm691, %v516
  %701 = vst.msk [vmem:[#allocation3 + $0x48] sm:$0xff] %vm691, %v518
  %702 = vst.msk [vmem:[#allocation3 + $0x50] sm:$0xff] %vm691, %v520
  %703 = vst.msk [vmem:[#allocation3 + $0x58] sm:$0xff] %vm691, %v522
  %704 = vst.msk [vmem:[#allocation3 + $0x60] sm:$0xff] %vm691, %v524
  %705 = vst.msk [vmem:[#allocation3 + $0x68] sm:$0xff] %vm691, %v526
  %706 = vst.msk [vmem:[#allocation3 + $0x70] sm:$0xff] %vm691, %v528
  %707 = vst.msk [vmem:[#allocation3 + $0x78] sm:$0xff] %vm691, %v530
  %708 = vst.msk [vmem:[#allocation3 + $0x80] sm:$0xff] %vm691, %v532
  %709 = vst.msk [vmem:[#allocation3 + $0x88] sm:$0xff] %vm691, %v534
  %710 = vst.msk [vmem:[#allocation3 + $0x90] sm:$0xff] %vm691, %v536
  %711 = vst.msk [vmem:[#allocation3 + $0x98] sm:$0xff] %vm691, %v538
  %712 = vst.msk [vmem:[#allocation3 + $0xa0] sm:$0xff] %vm691, %v540
  %713 = vst.msk [vmem:[#allocation3 + $0xa8] sm:$0xff] %vm691, %v542
  %714 = vst.msk [vmem:[#allocation3 + $0xb0] sm:$0xff] %vm691, %v544
  %715 = vst.msk [vmem:[#allocation3 + $0xb8] sm:$0xff] %vm691, %v546
  %716 = vst.msk [vmem:[#allocation3 + $0xc0] sm:$0xff] %vm691, %v548
  %717 = vst.msk [vmem:[#allocation3 + $0xc8] sm:$0xff] %vm691, %v550
  %718 = vst.msk [vmem:[#allocation3 + $0xd0] sm:$0xff] %vm691, %v552
  %719 = vst.msk [vmem:[#allocation3 + $0xd8] sm:$0xff] %vm691, %v554
  %720 = vst.msk [vmem:[#allocation3 + $0xe0] sm:$0xff] %vm691, %v556
  %721 = vst.msk [vmem:[#allocation3 + $0xe8] sm:$0xff] %vm691, %v558
  %722 = vst.msk [vmem:[#allocation3 + $0xf0] sm:$0xff] %vm691, %v560
  %723 = vst.msk [vmem:[#allocation3 + $0xf8] sm:$0xff] %vm691, %v562
  %724 = vst.msk [vmem:[#allocation3 + $0x100] sm:$0xff] %vm691, %v564
  %725 = vst.msk [vmem:[#allocation3 + $0x108] sm:$0xff] %vm691, %v566
  %726 = vst.msk [vmem:[#allocation3 + $0x110] sm:$0xff] %vm691, %v568
  %727 = vst.msk [vmem:[#allocation3 + $0x118] sm:$0xff] %vm691, %v570
  %728 = vst.msk [vmem:[#allocation3 + $0x120] sm:$0xff] %vm691, %v572
  %729 = vst.msk [vmem:[#allocation3 + $0x128] sm:$0xff] %vm691, %v574
  %730 = vst.msk [vmem:[#allocation3 + $0x130] sm:$0xff] %vm691, %v576
  %731 = vst.msk [vmem:[#allocation3 + $0x138] sm:$0xff] %vm691, %v578
  %732 = vst.msk [vmem:[#allocation3 + $0x140] sm:$0xff] %vm691, %v580
  %733 = vst.msk [vmem:[#allocation3 + $0x148] sm:$0xff] %vm691, %v582
  %734 = vst.msk [vmem:[#allocation3 + $0x150] sm:$0xff] %vm691, %v584
  %735 = vst.msk [vmem:[#allocation3 + $0x158] sm:$0xff] %vm691, %v586
  %736 = vst.msk [vmem:[#allocation3 + $0x160] sm:$0xff] %vm691, %v588
  %737 = vst.msk [vmem:[#allocation3 + $0x168] sm:$0xff] %vm691, %v590
  %738 = vst.msk [vmem:[#allocation3 + $0x170] sm:$0xff] %vm691, %v592
  %739 = vst.msk [vmem:[#allocation3 + $0x178] sm:$0xff] %vm691, %v594
  %740 = vst.msk [vmem:[#allocation3 + $0x180] sm:$0xff] %vm691, %v596
  %741 = vst.msk [vmem:[#allocation3 + $0x188] sm:$0xff] %vm691, %v598
  %742 = vst.msk [vmem:[#allocation3 + $0x190] sm:$0xff] %vm691, %v600
  %743 = vst.msk [vmem:[#allocation3 + $0x198] sm:$0xff] %vm691, %v602
  %744 = vst.msk [vmem:[#allocation3 + $0x1a0] sm:$0xff] %vm691, %v604
  %745 = vst.msk [vmem:[#allocation3 + $0x1a8] sm:$0xff] %vm691, %v606
  %746 = vst.msk [vmem:[#allocation3 + $0x1b0] sm:$0xff] %vm691, %v608
  %747 = vst.msk [vmem:[#allocation3 + $0x1b8] sm:$0xff] %vm691, %v610
  %748 = vst.msk [vmem:[#allocation3 + $0x1c0] sm:$0xff] %vm691, %v612
  %749 = vst.msk [vmem:[#allocation3 + $0x1c8] sm:$0xff] %vm691, %v614
  %750 = vst.msk [vmem:[#allocation3 + $0x1d0] sm:$0xff] %vm691, %v616
  %751 = vst.msk [vmem:[#allocation3 + $0x1d8] sm:$0xff] %vm691, %v618
  %752 = vst.msk [vmem:[#allocation3 + $0x1e0] sm:$0xff] %vm691, %v620
  %753 = vst.msk [vmem:[#allocation3 + $0x1e8] sm:$0xff] %vm691, %v622
  %754 = vst.msk [vmem:[#allocation3 + $0x1f0] sm:$0xff] %vm691, %v624
  %755 = vst.msk [vmem:[#allocation3 + $0x1f8] sm:$0xff] %vm691, %v626
  %v756 = vld [vmem:[#allocation2 + $0x2] sm:$0xff]
  %v757 = vld [vmem:[#allocation2 + $0xa] sm:$0xff]
  %v758 = vld [vmem:[#allocation2 + $0x1a] sm:$0xff]
  %v759 = vld [vmem:[#allocation2 + $0x22] sm:$0xff]
  %v760 = vld [vmem:[#allocation2 + $0x32] sm:$0xff]
  %v761 = vld [vmem:[#allocation2 + $0x3a] sm:$0xff]
  %v762 = vld [vmem:[#allocation2 + $0x4a] sm:$0xff]
  %v763 = vld [vmem:[#allocation2 + $0x52] sm:$0xff]
  %v764 = vld [vmem:[#allocation2 + $0x62] sm:$0xff]
  %v765 = vld [vmem:[#allocation2 + $0x6a] sm:$0xff]
  %v766 = vld [vmem:[#allocation2 + $0x7a] sm:$0xff]
  %v767 = vld [vmem:[#allocation2 + $0x82] sm:$0xff]
  %v768 = vld [vmem:[#allocation2 + $0x92] sm:$0xff]
  %v769 = vld [vmem:[#allocation2 + $0x9a] sm:$0xff]
  %v770 = vld [vmem:[#allocation2 + $0xaa] sm:$0xff]
  %v771 = vld [vmem:[#allocation2 + $0xb2] sm:$0xff]
  %v772 = vld [vmem:[#allocation2 + $0xc2] sm:$0xff]
  %v773 = vld [vmem:[#allocation2 + $0xca] sm:$0xff]
  %v774 = vld [vmem:[#allocation2 + $0xda] sm:$0xff]
  %v775 = vld [vmem:[#allocation2 + $0xe2] sm:$0xff]
  %v776 = vld [vmem:[#allocation2 + $0xf2] sm:$0xff]
  %v777 = vld [vmem:[#allocation2 + $0xfa] sm:$0xff]
  %v778 = vld [vmem:[#allocation2 + $0x10a] sm:$0xff]
  %v779 = vld [vmem:[#allocation2 + $0x112] sm:$0xff]
  %v780 = vld [vmem:[#allocation2 + $0x122] sm:$0xff]
  %v781 = vld [vmem:[#allocation2 + $0x12a] sm:$0xff]
  %v782 = vld [vmem:[#allocation2 + $0x13a] sm:$0xff]
  %v783 = vld [vmem:[#allocation2 + $0x142] sm:$0xff]
  %v784 = vld [vmem:[#allocation2 + $0x152] sm:$0xff]
  %v785 = vld [vmem:[#allocation2 + $0x15a] sm:$0xff]
  %v786 = vld [vmem:[#allocation2 + $0x16a] sm:$0xff]
  %v787 = vld [vmem:[#allocation2 + $0x172] sm:$0xff]
  %v788 = vld [vmem:[#allocation2 + $0x1b2] sm:$0xff]
  %v789 = vld [vmem:[#allocation2 + $0x1ba] sm:$0xff]
  %v790 = vld [vmem:[#allocation2 + $0x1ca] sm:$0xff]
  %v791 = vld [vmem:[#allocation2 + $0x1d2] sm:$0xff]
  %v792 = vld [vmem:[#allocation2 + $0x1e2] sm:$0xff]
  %v793 = vld [vmem:[#allocation2 + $0x1ea] sm:$0xff]
  %v794 = vld [vmem:[#allocation2 + $0x1fa] sm:$0xff]
  %v795 = vld [vmem:[#allocation2 + $0x202] sm:$0xff]
  %v796 = vld [vmem:[#allocation2 + $0x212] sm:$0xff]
  %v797 = vld [vmem:[#allocation2 + $0x21a] sm:$0xff]
  %v798 = vld [vmem:[#allocation2 + $0x22a] sm:$0xff]
  %v799 = vld [vmem:[#allocation2 + $0x232] sm:$0xff]
  %v800 = vld [vmem:[#allocation2 + $0x242] sm:$0xff]
  %v801 = vld [vmem:[#allocation2 + $0x24a] sm:$0xff]
  %v802 = vld [vmem:[#allocation2 + $0x25a] sm:$0xff]
  %v803 = vld [vmem:[#allocation2 + $0x262] sm:$0xff]
  %v804 = vld [vmem:[#allocation2 + $0x272] sm:$0xff]
  %v805 = vld [vmem:[#allocation2 + $0x27a] sm:$0xff]
  %v806 = vld [vmem:[#allocation2 + $0x28a] sm:$0xff]
  %v807 = vld [vmem:[#allocation2 + $0x292] sm:$0xff]
  %v808 = vld [vmem:[#allocation2 + $0x2a2] sm:$0xff]
  %v809 = vld [vmem:[#allocation2 + $0x2aa] sm:$0xff]
  %v810 = vld [vmem:[#allocation2 + $0x2ba] sm:$0xff]
  %v811 = vld [vmem:[#allocation2 + $0x2c2] sm:$0xff]
  %v812 = vld [vmem:[#allocation2 + $0x2d2] sm:$0xff]
  %v813 = vld [vmem:[#allocation2 + $0x2da] sm:$0xff]
  %v814 = vld [vmem:[#allocation2 + $0x2ea] sm:$0xff]
  %v815 = vld [vmem:[#allocation2 + $0x2f2] sm:$0xff]
  %v816 = vld [vmem:[#allocation2 + $0x302] sm:$0xff]
  %v817 = vld [vmem:[#allocation2 + $0x30a] sm:$0xff]
  %v818 = vld [vmem:[#allocation2 + $0x31a] sm:$0xff]
  %v819 = vld [vmem:[#allocation2 + $0x322] sm:$0xff]
  %884 = vrot.lane.b32.xlu0 %v756, 16
  %v885 = vpop.permute.xlu0 %884
  %886 = vrot.lane.b32.xlu0 %v757, 16
  %v887 = vpop.permute.xlu0 %886
  %888 = vrot.lane.b32.xlu0 %v758, 16
  %v889 = vpop.permute.xlu0 %888
  %890 = vrot.lane.b32.xlu0 %v759, 16
  %v891 = vpop.permute.xlu0 %890
  %892 = vrot.lane.b32.xlu0 %v760, 16
  %v893 = vpop.permute.xlu0 %892
  %894 = vrot.lane.b32.xlu0 %v761, 16
  %v895 = vpop.permute.xlu0 %894
  %896 = vrot.lane.b32.xlu0 %v762, 16
  %v897 = vpop.permute.xlu0 %896
  %898 = vrot.lane.b32.xlu0 %v763, 16
  %v899 = vpop.permute.xlu0 %898
  %900 = vrot.lane.b32.xlu0 %v764, 16
  %v901 = vpop.permute.xlu0 %900
  %902 = vrot.lane.b32.xlu0 %v765, 16
  %v903 = vpop.permute.xlu0 %902
  %904 = vrot.lane.b32.xlu0 %v766, 16
  %v905 = vpop.permute.xlu0 %904
  %906 = vrot.lane.b32.xlu0 %v767, 16
  %v907 = vpop.permute.xlu0 %906
  %908 = vrot.lane.b32.xlu0 %v768, 16
  %v909 = vpop.permute.xlu0 %908
  %910 = vrot.lane.b32.xlu0 %v769, 16
  %v911 = vpop.permute.xlu0 %910
  %912 = vrot.lane.b32.xlu0 %v770, 16
  %v913 = vpop.permute.xlu0 %912
  %914 = vrot.lane.b32.xlu0 %v771, 16
  %v915 = vpop.permute.xlu0 %914
  %916 = vrot.lane.b32.xlu0 %v772, 16
  %v917 = vpop.permute.xlu0 %916
  %918 = vrot.lane.b32.xlu0 %v773, 16
  %v919 = vpop.permute.xlu0 %918
  %920 = vrot.lane.b32.xlu0 %v774, 16
  %v921 = vpop.permute.xlu0 %920
  %922 = vrot.lane.b32.xlu0 %v775, 16
  %v923 = vpop.permute.xlu0 %922
  %924 = vrot.lane.b32.xlu0 %v776, 16
  %v925 = vpop.permute.xlu0 %924
  %926 = vrot.lane.b32.xlu0 %v777, 16
  %v927 = vpop.permute.xlu0 %926
  %928 = vrot.lane.b32.xlu0 %v778, 16
  %v929 = vpop.permute.xlu0 %928
  %930 = vrot.lane.b32.xlu0 %v779, 16
  %v931 = vpop.permute.xlu0 %930
  %932 = vrot.lane.b32.xlu0 %v780, 16
  %v933 = vpop.permute.xlu0 %932
  %934 = vrot.lane.b32.xlu0 %v781, 16
  %v935 = vpop.permute.xlu0 %934
  %936 = vrot.lane.b32.xlu0 %v782, 16
  %v937 = vpop.permute.xlu0 %936
  %938 = vrot.lane.b32.xlu0 %v783, 16
  %v939 = vpop.permute.xlu0 %938
  %940 = vrot.lane.b32.xlu0 %v784, 16
  %v941 = vpop.permute.xlu0 %940
  %942 = vrot.lane.b32.xlu0 %v785, 16
  %v943 = vpop.permute.xlu0 %942
  %944 = vrot.lane.b32.xlu0 %v786, 16
  %v945 = vpop.permute.xlu0 %944
  %946 = vrot.lane.b32.xlu0 %v787, 16
  %v947 = vpop.permute.xlu0 %946
  %948 = vrot.lane.b32.xlu0 %v788, 16
  %v949 = vpop.permute.xlu0 %948
  %950 = vrot.lane.b32.xlu0 %v789, 16
  %v951 = vpop.permute.xlu0 %950
  %952 = vrot.lane.b32.xlu0 %v790, 16
  %v953 = vpop.permute.xlu0 %952
  %954 = vrot.lane.b32.xlu0 %v791, 16
  %v955 = vpop.permute.xlu0 %954
  %956 = vrot.lane.b32.xlu0 %v792, 16
  %v957 = vpop.permute.xlu0 %956
  %958 = vrot.lane.b32.xlu0 %v793, 16
  %v959 = vpop.permute.xlu0 %958
  %960 = vrot.lane.b32.xlu0 %v794, 16
  %v961 = vpop.permute.xlu0 %960
  %962 = vrot.lane.b32.xlu0 %v795, 16
  %v963 = vpop.permute.xlu0 %962
  %964 = vrot.lane.b32.xlu0 %v796, 16
  %v965 = vpop.permute.xlu0 %964
  %966 = vrot.lane.b32.xlu0 %v797, 16
  %v967 = vpop.permute.xlu0 %966
  %968 = vrot.lane.b32.xlu0 %v798, 16
  %v969 = vpop.permute.xlu0 %968
  %970 = vrot.lane.b32.xlu0 %v799, 16
  %v971 = vpop.permute.xlu0 %970
  %972 = vrot.lane.b32.xlu0 %v800, 16
  %v973 = vpop.permute.xlu0 %972
  %974 = vrot.lane.b32.xlu0 %v801, 16
  %v975 = vpop.permute.xlu0 %974
  %976 = vrot.lane.b32.xlu0 %v802, 16
  %v977 = vpop.permute.xlu0 %976
  %978 = vrot.lane.b32.xlu0 %v803, 16
  %v979 = vpop.permute.xlu0 %978
  %980 = vrot.lane.b32.xlu0 %v804, 16
  %v981 = vpop.permute.xlu0 %980
  %982 = vrot.lane.b32.xlu0 %v805, 16
  %v983 = vpop.permute.xlu0 %982
  %984 = vrot.lane.b32.xlu0 %v806, 16
  %v985 = vpop.permute.xlu0 %984
  %986 = vrot.lane.b32.xlu0 %v807, 16
  %v987 = vpop.permute.xlu0 %986
  %988 = vrot.lane.b32.xlu0 %v808, 16
  %v989 = vpop.permute.xlu0 %988
  %990 = vrot.lane.b32.xlu0 %v809, 16
  %v991 = vpop.permute.xlu0 %990
  %992 = vrot.lane.b32.xlu0 %v810, 16
  %v993 = vpop.permute.xlu0 %992
  %994 = vrot.lane.b32.xlu0 %v811, 16
  %v995 = vpop.permute.xlu0 %994
  %996 = vrot.lane.b32.xlu0 %v812, 16
  %v997 = vpop.permute.xlu0 %996
  %998 = vrot.lane.b32.xlu0 %v813, 16
  %v999 = vpop.permute.xlu0 %998
  %1000 = vrot.lane.b32.xlu0 %v814, 16
  %v1001 = vpop.permute.xlu0 %1000
  %1002 = vrot.lane.b32.xlu0 %v815, 16
  %v1003 = vpop.permute.xlu0 %1002
  %1004 = vrot.lane.b32.xlu0 %v816, 16
  %v1005 = vpop.permute.xlu0 %1004
  %1006 = vrot.lane.b32.xlu0 %v817, 16
  %v1007 = vpop.permute.xlu0 %1006
  %1008 = vrot.lane.b32.xlu0 %v818, 16
  %v1009 = vpop.permute.xlu0 %1008
  %1010 = vrot.lane.b32.xlu0 %v819, 16
  %v1011 = vpop.permute.xlu0 %1010
  %vm1076 = vcmask 195712
  %1077 = vst.msk [vmem:[#allocation3] sm:$0xff] %vm1076, %v885
  %1078 = vst.msk [vmem:[#allocation3 + $0x8] sm:$0xff] %vm1076, %v887
  %1079 = vst.msk [vmem:[#allocation3 + $0x10] sm:$0xff] %vm1076, %v889
  %1080 = vst.msk [vmem:[#allocation3 + $0x18] sm:$0xff] %vm1076, %v891
  %1081 = vst.msk [vmem:[#allocation3 + $0x20] sm:$0xff] %vm1076, %v893
  %1082 = vst.msk [vmem:[#allocation3 + $0x28] sm:$0xff] %vm1076, %v895
  %1083 = vst.msk [vmem:[#allocation3 + $0x30] sm:$0xff] %vm1076, %v897
  %1084 = vst.msk [vmem:[#allocation3 + $0x38] sm:$0xff] %vm1076, %v899
  %1085 = vst.msk [vmem:[#allocation3 + $0x40] sm:$0xff] %vm1076, %v901
  %1086 = vst.msk [vmem:[#allocation3 + $0x48] sm:$0xff] %vm1076, %v903
  %1087 = vst.msk [vmem:[#allocation3 + $0x50] sm:$0xff] %vm1076, %v905
  %1088 = vst.msk [vmem:[#allocation3 + $0x58] sm:$0xff] %vm1076, %v907
  %1089 = vst.msk [vmem:[#allocation3 + $0x60] sm:$0xff] %vm1076, %v909
  %1090 = vst.msk [vmem:[#allocation3 + $0x68] sm:$0xff] %vm1076, %v911
  %1091 = vst.msk [vmem:[#allocation3 + $0x70] sm:$0xff] %vm1076, %v913
  %1092 = vst.msk [vmem:[#allocation3 + $0x78] sm:$0xff] %vm1076, %v915
  %1093 = vst.msk [vmem:[#allocation3 + $0x80] sm:$0xff] %vm1076, %v917
  %1094 = vst.msk [vmem:[#allocation3 + $0x88] sm:$0xff] %vm1076, %v919
  %1095 = vst.msk [vmem:[#allocation3 + $0x90] sm:$0xff] %vm1076, %v921
  %1096 = vst.msk [vmem:[#allocation3 + $0x98] sm:$0xff] %vm1076, %v923
  %1097 = vst.msk [vmem:[#allocation3 + $0xa0] sm:$0xff] %vm1076, %v925
  %1098 = vst.msk [vmem:[#allocation3 + $0xa8] sm:$0xff] %vm1076, %v927
  %1099 = vst.msk [vmem:[#allocation3 + $0xb0] sm:$0xff] %vm1076, %v929
  %1100 = vst.msk [vmem:[#allocation3 + $0xb8] sm:$0xff] %vm1076, %v931
  %1101 = vst.msk [vmem:[#allocation3 + $0xc0] sm:$0xff] %vm1076, %v933
  %1102 = vst.msk [vmem:[#allocation3 + $0xc8] sm:$0xff] %vm1076, %v935
  %1103 = vst.msk [vmem:[#allocation3 + $0xd0] sm:$0xff] %vm1076, %v937
  %1104 = vst.msk [vmem:[#allocation3 + $0xd8] sm:$0xff] %vm1076, %v939
  %1105 = vst.msk [vmem:[#allocation3 + $0xe0] sm:$0xff] %vm1076, %v941
  %1106 = vst.msk [vmem:[#allocation3 + $0xe8] sm:$0xff] %vm1076, %v943
  %1107 = vst.msk [vmem:[#allocation3 + $0xf0] sm:$0xff] %vm1076, %v945
  %1108 = vst.msk [vmem:[#allocation3 + $0xf8] sm:$0xff] %vm1076, %v947
  %1109 = vst.msk [vmem:[#allocation3 + $0x100] sm:$0xff] %vm1076, %v949
  %1110 = vst.msk [vmem:[#allocation3 + $0x108] sm:$0xff] %vm1076, %v951
  %1111 = vst.msk [vmem:[#allocation3 + $0x110] sm:$0xff] %vm1076, %v953
  %1112 = vst.msk [vmem:[#allocation3 + $0x118] sm:$0xff] %vm1076, %v955
  %1113 = vst.msk [vmem:[#allocation3 + $0x120] sm:$0xff] %vm1076, %v957
  %1114 = vst.msk [vmem:[#allocation3 + $0x128] sm:$0xff] %vm1076, %v959
  %1115 = vst.msk [vmem:[#allocation3 + $0x130] sm:$0xff] %vm1076, %v961
  %1116 = vst.msk [vmem:[#allocation3 + $0x138] sm:$0xff] %vm1076, %v963
  %1117 = vst.msk [vmem:[#allocation3 + $0x140] sm:$0xff] %vm1076, %v965
  %1118 = vst.msk [vmem:[#allocation3 + $0x148] sm:$0xff] %vm1076, %v967
  %1119 = vst.msk [vmem:[#allocation3 + $0x150] sm:$0xff] %vm1076, %v969
  %1120 = vst.msk [vmem:[#allocation3 + $0x158] sm:$0xff] %vm1076, %v971
  %1121 = vst.msk [vmem:[#allocation3 + $0x160] sm:$0xff] %vm1076, %v973
  %1122 = vst.msk [vmem:[#allocation3 + $0x168] sm:$0xff] %vm1076, %v975
  %1123 = vst.msk [vmem:[#allocation3 + $0x170] sm:$0xff] %vm1076, %v977
  %1124 = vst.msk [vmem:[#allocation3 + $0x178] sm:$0xff] %vm1076, %v979
  %1125 = vst.msk [vmem:[#allocation3 + $0x180] sm:$0xff] %vm1076, %v981
  %1126 = vst.msk [vmem:[#allocation3 + $0x188] sm:$0xff] %vm1076, %v983
  %1127 = vst.msk [vmem:[#allocation3 + $0x190] sm:$0xff] %vm1076, %v985
  %1128 = vst.msk [vmem:[#allocation3 + $0x198] sm:$0xff] %vm1076, %v987
  %1129 = vst.msk [vmem:[#allocation3 + $0x1a0] sm:$0xff] %vm1076, %v989
  %1130 = vst.msk [vmem:[#allocation3 + $0x1a8] sm:$0xff] %vm1076, %v991
  %1131 = vst.msk [vmem:[#allocation3 + $0x1b0] sm:$0xff] %vm1076, %v993
  %1132 = vst.msk [vmem:[#allocation3 + $0x1b8] sm:$0xff] %vm1076, %v995
  %1133 = vst.msk [vmem:[#allocation3 + $0x1c0] sm:$0xff] %vm1076, %v997
  %1134 = vst.msk [vmem:[#allocation3 + $0x1c8] sm:$0xff] %vm1076, %v999
  %1135 = vst.msk [vmem:[#allocation3 + $0x1d0] sm:$0xff] %vm1076, %v1001
  %1136 = vst.msk [vmem:[#allocation3 + $0x1d8] sm:$0xff] %vm1076, %v1003
  %1137 = vst.msk [vmem:[#allocation3 + $0x1e0] sm:$0xff] %vm1076, %v1005
  %1138 = vst.msk [vmem:[#allocation3 + $0x1e8] sm:$0xff] %vm1076, %v1007
  %1139 = vst.msk [vmem:[#allocation3 + $0x1f0] sm:$0xff] %vm1076, %v1009
  %1140 = vst.msk [vmem:[#allocation3 + $0x1f8] sm:$0xff] %vm1076, %v1011
  %v1141 = vld [vmem:[%s178] sm:$0xff]
  %v1142 = vld [vmem:[%s178 + $0x8] sm:$0xff]
  %v1143 = vld [vmem:[%s178 + $0x18] sm:$0xff]
  %v1144 = vld [vmem:[%s178 + $0x20] sm:$0xff]
  %v1145 = vld [vmem:[%s178 + $0x30] sm:$0xff]
  %v1146 = vld [vmem:[%s178 + $0x38] sm:$0xff]
  %v1147 = vld [vmem:[%s178 + $0x48] sm:$0xff]
  %v1148 = vld [vmem:[%s178 + $0x50] sm:$0xff]
  %v1149 = vld [vmem:[%s178 + $0x60] sm:$0xff]
  %v1150 = vld [vmem:[%s178 + $0x68] sm:$0xff]
  %v1151 = vld [vmem:[%s178 + $0x78] sm:$0xff]
  %v1152 = vld [vmem:[%s178 + $0x80] sm:$0xff]
  %v1153 = vld [vmem:[%s178 + $0x90] sm:$0xff]
  %v1154 = vld [vmem:[%s178 + $0x98] sm:$0xff]
  %v1155 = vld [vmem:[%s178 + $0xa8] sm:$0xff]
  %v1156 = vld [vmem:[%s178 + $0xb0] sm:$0xff]
  %v1157 = vld [vmem:[%s178 + $0xc0] sm:$0xff]
  %v1158 = vld [vmem:[%s178 + $0xc8] sm:$0xff]
  %v1159 = vld [vmem:[%s178 + $0xd8] sm:$0xff]
  %v1160 = vld [vmem:[%s178 + $0xe0] sm:$0xff]
  %v1161 = vld [vmem:[%s178 + $0xf0] sm:$0xff]
  %v1162 = vld [vmem:[%s178 + $0xf8] sm:$0xff]
  %v1163 = vld [vmem:[%s178 + $0x108] sm:$0xff]
  %v1164 = vld [vmem:[%s178 + $0x110] sm:$0xff]
  %v1165 = vld [vmem:[%s178 + $0x120] sm:$0xff]
  %v1166 = vld [vmem:[%s178 + $0x128] sm:$0xff]
  %v1167 = vld [vmem:[%s178 + $0x138] sm:$0xff]
  %v1168 = vld [vmem:[%s178 + $0x140] sm:$0xff]
  %v1169 = vld [vmem:[%s178 + $0x150] sm:$0xff]
  %v1170 = vld [vmem:[%s178 + $0x158] sm:$0xff]
  %v1171 = vld [vmem:[%s178 + $0x168] sm:$0xff]
  %v1172 = vld [vmem:[%s178 + $0x170] sm:$0xff]
  %v1173 = vld [vmem:[%s178 + $0x1b0] sm:$0xff]
  %v1174 = vld [vmem:[%s178 + $0x1b8] sm:$0xff]
  %v1175 = vld [vmem:[%s178 + $0x1c8] sm:$0xff]
  %v1176 = vld [vmem:[%s178 + $0x1d0] sm:$0xff]
  %v1177 = vld [vmem:[%s178 + $0x1e0] sm:$0xff]
  %v1178 = vld [vmem:[%s178 + $0x1e8] sm:$0xff]
  %v1179 = vld [vmem:[%s178 + $0x1f8] sm:$0xff]
  %v1180 = vld [vmem:[%s178 + $0x200] sm:$0xff]
  %v1181 = vld [vmem:[%s178 + $0x210] sm:$0xff]
  %v1182 = vld [vmem:[%s178 + $0x218] sm:$0xff]
  %v1183 = vld [vmem:[%s178 + $0x228] sm:$0xff]
  %v1184 = vld [vmem:[%s178 + $0x230] sm:$0xff]
  %v1185 = vld [vmem:[%s178 + $0x240] sm:$0xff]
  %v1186 = vld [vmem:[%s178 + $0x248] sm:$0xff]
  %v1187 = vld [vmem:[%s178 + $0x258] sm:$0xff]
  %v1188 = vld [vmem:[%s178 + $0x260] sm:$0xff]
  %v1189 = vld [vmem:[%s178 + $0x270] sm:$0xff]
  %v1190 = vld [vmem:[%s178 + $0x278] sm:$0xff]
  %v1191 = vld [vmem:[%s178 + $0x288] sm:$0xff]
  %v1192 = vld [vmem:[%s178 + $0x290] sm:$0xff]
  %v1193 = vld [vmem:[%s178 + $0x2a0] sm:$0xff]
  %v1194 = vld [vmem:[%s178 + $0x2a8] sm:$0xff]
  %v1195 = vld [vmem:[%s178 + $0x2b8] sm:$0xff]
  %v1196 = vld [vmem:[%s178 + $0x2c0] sm:$0xff]
  %v1197 = vld [vmem:[%s178 + $0x2d0] sm:$0xff]
  %v1198 = vld [vmem:[%s178 + $0x2d8] sm:$0xff]
  %v1199 = vld [vmem:[%s178 + $0x2e8] sm:$0xff]
  %v1200 = vld [vmem:[%s178 + $0x2f0] sm:$0xff]
  %v1201 = vld [vmem:[%s178 + $0x300] sm:$0xff]
  %v1202 = vld [vmem:[%s178 + $0x308] sm:$0xff]
  %v1203 = vld [vmem:[%s178 + $0x318] sm:$0xff]
  %v1204 = vld [vmem:[%s178 + $0x320] sm:$0xff]
  %1269 = vrot.lane.b32.xlu0 %v1141, 24
  %v1270 = vpop.permute.xlu0 %1269
  %1271 = vrot.lane.b32.xlu0 %v1142, 24
  %v1272 = vpop.permute.xlu0 %1271
  %1273 = vrot.lane.b32.xlu0 %v1143, 24
  %v1274 = vpop.permute.xlu0 %1273
  %1275 = vrot.lane.b32.xlu0 %v1144, 24
  %v1276 = vpop.permute.xlu0 %1275
  %1277 = vrot.lane.b32.xlu0 %v1145, 24
  %v1278 = vpop.permute.xlu0 %1277
  %1279 = vrot.lane.b32.xlu0 %v1146, 24
  %v1280 = vpop.permute.xlu0 %1279
  %1281 = vrot.lane.b32.xlu0 %v1147, 24
  %v1282 = vpop.permute.xlu0 %1281
  %1283 = vrot.lane.b32.xlu0 %v1148, 24
  %v1284 = vpop.permute.xlu0 %1283
  %1285 = vrot.lane.b32.xlu0 %v1149, 24
  %v1286 = vpop.permute.xlu0 %1285
  %1287 = vrot.lane.b32.xlu0 %v1150, 24
  %v1288 = vpop.permute.xlu0 %1287
  %1289 = vrot.lane.b32.xlu0 %v1151, 24
  %v1290 = vpop.permute.xlu0 %1289
  %1291 = vrot.lane.b32.xlu0 %v1152, 24
  %v1292 = vpop.permute.xlu0 %1291
  %1293 = vrot.lane.b32.xlu0 %v1153, 24
  %v1294 = vpop.permute.xlu0 %1293
  %1295 = vrot.lane.b32.xlu0 %v1154, 24
  %v1296 = vpop.permute.xlu0 %1295
  %1297 = vrot.lane.b32.xlu0 %v1155, 24
  %v1298 = vpop.permute.xlu0 %1297
  %1299 = vrot.lane.b32.xlu0 %v1156, 24
  %v1300 = vpop.permute.xlu0 %1299
  %1301 = vrot.lane.b32.xlu0 %v1157, 24
  %v1302 = vpop.permute.xlu0 %1301
  %1303 = vrot.lane.b32.xlu0 %v1158, 24
  %v1304 = vpop.permute.xlu0 %1303
  %1305 = vrot.lane.b32.xlu0 %v1159, 24
  %v1306 = vpop.permute.xlu0 %1305
  %1307 = vrot.lane.b32.xlu0 %v1160, 24
  %v1308 = vpop.permute.xlu0 %1307
  %1309 = vrot.lane.b32.xlu0 %v1161, 24
  %v1310 = vpop.permute.xlu0 %1309
  %1311 = vrot.lane.b32.xlu0 %v1162, 24
  %v1312 = vpop.permute.xlu0 %1311
  %1313 = vrot.lane.b32.xlu0 %v1163, 24
  %v1314 = vpop.permute.xlu0 %1313
  %1315 = vrot.lane.b32.xlu0 %v1164, 24
  %v1316 = vpop.permute.xlu0 %1315
  %1317 = vrot.lane.b32.xlu0 %v1165, 24
  %v1318 = vpop.permute.xlu0 %1317
  %1319 = vrot.lane.b32.xlu0 %v1166, 24
  %v1320 = vpop.permute.xlu0 %1319
  %1321 = vrot.lane.b32.xlu0 %v1167, 24
  %v1322 = vpop.permute.xlu0 %1321
  %1323 = vrot.lane.b32.xlu0 %v1168, 24
  %v1324 = vpop.permute.xlu0 %1323
  %1325 = vrot.lane.b32.xlu0 %v1169, 24
  %v1326 = vpop.permute.xlu0 %1325
  %1327 = vrot.lane.b32.xlu0 %v1170, 24
  %v1328 = vpop.permute.xlu0 %1327
  %1329 = vrot.lane.b32.xlu0 %v1171, 24
  %v1330 = vpop.permute.xlu0 %1329
  %1331 = vrot.lane.b32.xlu0 %v1172, 24
  %v1332 = vpop.permute.xlu0 %1331
  %1333 = vrot.lane.b32.xlu0 %v1173, 24
  %v1334 = vpop.permute.xlu0 %1333
  %1335 = vrot.lane.b32.xlu0 %v1174, 24
  %v1336 = vpop.permute.xlu0 %1335
  %1337 = vrot.lane.b32.xlu0 %v1175, 24
  %v1338 = vpop.permute.xlu0 %1337
  %1339 = vrot.lane.b32.xlu0 %v1176, 24
  %v1340 = vpop.permute.xlu0 %1339
  %1341 = vrot.lane.b32.xlu0 %v1177, 24
  %v1342 = vpop.permute.xlu0 %1341
  %1343 = vrot.lane.b32.xlu0 %v1178, 24
  %v1344 = vpop.permute.xlu0 %1343
  %1345 = vrot.lane.b32.xlu0 %v1179, 24
  %v1346 = vpop.permute.xlu0 %1345
  %1347 = vrot.lane.b32.xlu0 %v1180, 24
  %v1348 = vpop.permute.xlu0 %1347
  %1349 = vrot.lane.b32.xlu0 %v1181, 24
  %v1350 = vpop.permute.xlu0 %1349
  %1351 = vrot.lane.b32.xlu0 %v1182, 24
  %v1352 = vpop.permute.xlu0 %1351
  %1353 = vrot.lane.b32.xlu0 %v1183, 24
  %v1354 = vpop.permute.xlu0 %1353
  %1355 = vrot.lane.b32.xlu0 %v1184, 24
  %v1356 = vpop.permute.xlu0 %1355
  %1357 = vrot.lane.b32.xlu0 %v1185, 24
  %v1358 = vpop.permute.xlu0 %1357
  %1359 = vrot.lane.b32.xlu0 %v1186, 24
  %v1360 = vpop.permute.xlu0 %1359
  %1361 = vrot.lane.b32.xlu0 %v1187, 24
  %v1362 = vpop.permute.xlu0 %1361
  %1363 = vrot.lane.b32.xlu0 %v1188, 24
  %v1364 = vpop.permute.xlu0 %1363
  %1365 = vrot.lane.b32.xlu0 %v1189, 24
  %v1366 = vpop.permute.xlu0 %1365
  %1367 = vrot.lane.b32.xlu0 %v1190, 24
  %v1368 = vpop.permute.xlu0 %1367
  %1369 = vrot.lane.b32.xlu0 %v1191, 24
  %v1370 = vpop.permute.xlu0 %1369
  %1371 = vrot.lane.b32.xlu0 %v1192, 24
  %v1372 = vpop.permute.xlu0 %1371
  %1373 = vrot.lane.b32.xlu0 %v1193, 24
  %v1374 = vpop.permute.xlu0 %1373
  %1375 = vrot.lane.b32.xlu0 %v1194, 24
  %v1376 = vpop.permute.xlu0 %1375
  %1377 = vrot.lane.b32.xlu0 %v1195, 24
  %v1378 = vpop.permute.xlu0 %1377
  %1379 = vrot.lane.b32.xlu0 %v1196, 24
  %v1380 = vpop.permute.xlu0 %1379
  %1381 = vrot.lane.b32.xlu0 %v1197, 24
  %v1382 = vpop.permute.xlu0 %1381
  %1383 = vrot.lane.b32.xlu0 %v1198, 24
  %v1384 = vpop.permute.xlu0 %1383
  %1385 = vrot.lane.b32.xlu0 %v1199, 24
  %v1386 = vpop.permute.xlu0 %1385
  %1387 = vrot.lane.b32.xlu0 %v1200, 24
  %v1388 = vpop.permute.xlu0 %1387
  %1389 = vrot.lane.b32.xlu0 %v1201, 24
  %v1390 = vpop.permute.xlu0 %1389
  %1391 = vrot.lane.b32.xlu0 %v1202, 24
  %v1392 = vpop.permute.xlu0 %1391
  %1393 = vrot.lane.b32.xlu0 %v1203, 24
  %v1394 = vpop.permute.xlu0 %1393
  %1395 = vrot.lane.b32.xlu0 %v1204, 24
  %v1396 = vpop.permute.xlu0 %1395
  %vm1461 = vcmask 261312
  %1462 = vst.msk [vmem:[#allocation3] sm:$0xff] %vm1461, %v1270
  %1463 = vst.msk [vmem:[#allocation3 + $0x8] sm:$0xff] %vm1461, %v1272
  %1464 = vst.msk [vmem:[#allocation3 + $0x10] sm:$0xff] %vm1461, %v1274
  %1465 = vst.msk [vmem:[#allocation3 + $0x18] sm:$0xff] %vm1461, %v1276
  %1466 = vst.msk [vmem:[#allocation3 + $0x20] sm:$0xff] %vm1461, %v1278
  %1467 = vst.msk [vmem:[#allocation3 + $0x28] sm:$0xff] %vm1461, %v1280
  %1468 = vst.msk [vmem:[#allocation3 + $0x30] sm:$0xff] %vm1461, %v1282
  %1469 = vst.msk [vmem:[#allocation3 + $0x38] sm:$0xff] %vm1461, %v1284
  %1470 = vst.msk [vmem:[#allocation3 + $0x40] sm:$0xff] %vm1461, %v1286
  %1471 = vst.msk [vmem:[#allocation3 + $0x48] sm:$0xff] %vm1461, %v1288
  %1472 = vst.msk [vmem:[#allocation3 + $0x50] sm:$0xff] %vm1461, %v1290
  %1473 = vst.msk [vmem:[#allocation3 + $0x58] sm:$0xff] %vm1461, %v1292
  %1474 = vst.msk [vmem:[#allocation3 + $0x60] sm:$0xff] %vm1461, %v1294
  %1475 = vst.msk [vmem:[#allocation3 + $0x68] sm:$0xff] %vm1461, %v1296
  %1476 = vst.msk [vmem:[#allocation3 + $0x70] sm:$0xff] %vm1461, %v1298
  %1477 = vst.msk [vmem:[#allocation3 + $0x78] sm:$0xff] %vm1461, %v1300
  %1478 = vst.msk [vmem:[#allocation3 + $0x80] sm:$0xff] %vm1461, %v1302
  %1479 = vst.msk [vmem:[#allocation3 + $0x88] sm:$0xff] %vm1461, %v1304
  %1480 = vst.msk [vmem:[#allocation3 + $0x90] sm:$0xff] %vm1461, %v1306
  %1481 = vst.msk [vmem:[#allocation3 + $0x98] sm:$0xff] %vm1461, %v1308
  %1482 = vst.msk [vmem:[#allocation3 + $0xa0] sm:$0xff] %vm1461, %v1310
  %1483 = vst.msk [vmem:[#allocation3 + $0xa8] sm:$0xff] %vm1461, %v1312
  %1484 = vst.msk [vmem:[#allocation3 + $0xb0] sm:$0xff] %vm1461, %v1314
  %1485 = vst.msk [vmem:[#allocation3 + $0xb8] sm:$0xff] %vm1461, %v1316
  %1486 = vst.msk [vmem:[#allocation3 + $0xc0] sm:$0xff] %vm1461, %v1318
  %1487 = vst.msk [vmem:[#allocation3 + $0xc8] sm:$0xff] %vm1461, %v1320
  %1488 = vst.msk [vmem:[#allocation3 + $0xd0] sm:$0xff] %vm1461, %v1322
  %1489 = vst.msk [vmem:[#allocation3 + $0xd8] sm:$0xff] %vm1461, %v1324
  %1490 = vst.msk [vmem:[#allocation3 + $0xe0] sm:$0xff] %vm1461, %v1326
  %1491 = vst.msk [vmem:[#allocation3 + $0xe8] sm:$0xff] %vm1461, %v1328
  %1492 = vst.msk [vmem:[#allocation3 + $0xf0] sm:$0xff] %vm1461, %v1330
  %1493 = vst.msk [vmem:[#allocation3 + $0xf8] sm:$0xff] %vm1461, %v1332
  %1494 = vst.msk [vmem:[#allocation3 + $0x100] sm:$0xff] %vm1461, %v1334
  %1495 = vst.msk [vmem:[#allocation3 + $0x108] sm:$0xff] %vm1461, %v1336
  %1496 = vst.msk [vmem:[#allocation3 + $0x110] sm:$0xff] %vm1461, %v1338
  %1497 = vst.msk [vmem:[#allocation3 + $0x118] sm:$0xff] %vm1461, %v1340
  %1498 = vst.msk [vmem:[#allocation3 + $0x120] sm:$0xff] %vm1461, %v1342
  %1499 = vst.msk [vmem:[#allocation3 + $0x128] sm:$0xff] %vm1461, %v1344
  %1500 = vst.msk [vmem:[#allocation3 + $0x130] sm:$0xff] %vm1461, %v1346
  %1501 = vst.msk [vmem:[#allocation3 + $0x138] sm:$0xff] %vm1461, %v1348
  %1502 = vst.msk [vmem:[#allocation3 + $0x140] sm:$0xff] %vm1461, %v1350
  %1503 = vst.msk [vmem:[#allocation3 + $0x148] sm:$0xff] %vm1461, %v1352
  %1504 = vst.msk [vmem:[#allocation3 + $0x150] sm:$0xff] %vm1461, %v1354
  %1505 = vst.msk [vmem:[#allocation3 + $0x158] sm:$0xff] %vm1461, %v1356
  %1506 = vst.msk [vmem:[#allocation3 + $0x160] sm:$0xff] %vm1461, %v1358
  %1507 = vst.msk [vmem:[#allocation3 + $0x168] sm:$0xff] %vm1461, %v1360
  %1508 = vst.msk [vmem:[#allocation3 + $0x170] sm:$0xff] %vm1461, %v1362
  %1509 = vst.msk [vmem:[#allocation3 + $0x178] sm:$0xff] %vm1461, %v1364
  %1510 = vst.msk [vmem:[#allocation3 + $0x180] sm:$0xff] %vm1461, %v1366
  %1511 = vst.msk [vmem:[#allocation3 + $0x188] sm:$0xff] %vm1461, %v1368
  %1512 = vst.msk [vmem:[#allocation3 + $0x190] sm:$0xff] %vm1461, %v1370
  %1513 = vst.msk [vmem:[#allocation3 + $0x198] sm:$0xff] %vm1461, %v1372
  %1514 = vst.msk [vmem:[#allocation3 + $0x1a0] sm:$0xff] %vm1461, %v1374
  %1515 = vst.msk [vmem:[#allocation3 + $0x1a8] sm:$0xff] %vm1461, %v1376
  %1516 = vst.msk [vmem:[#allocation3 + $0x1b0] sm:$0xff] %vm1461, %v1378
  %1517 = vst.msk [vmem:[#allocation3 + $0x1b8] sm:$0xff] %vm1461, %v1380
  %1518 = vst.msk [vmem:[#allocation3 + $0x1c0] sm:$0xff] %vm1461, %v1382
  %1519 = vst.msk [vmem:[#allocation3 + $0x1c8] sm:$0xff] %vm1461, %v1384
  %1520 = vst.msk [vmem:[#allocation3 + $0x1d0] sm:$0xff] %vm1461, %v1386
  %1521 = vst.msk [vmem:[#allocation3 + $0x1d8] sm:$0xff] %vm1461, %v1388
  %1522 = vst.msk [vmem:[#allocation3 + $0x1e0] sm:$0xff] %vm1461, %v1390
  %1523 = vst.msk [vmem:[#allocation3 + $0x1e8] sm:$0xff] %vm1461, %v1392
  %1524 = vst.msk [vmem:[#allocation3 + $0x1f0] sm:$0xff] %vm1461, %v1394
  %1525 = vst.msk [vmem:[#allocation3 + $0x1f8] sm:$0xff] %vm1461, %v1396
  %v1526 = vld [vmem:[%s178 + $0x1] sm:$0xff]
  %v1527 = vld [vmem:[%s178 + $0x9] sm:$0xff]
  %v1528 = vld [vmem:[%s178 + $0x19] sm:$0xff]
  %v1529 = vld [vmem:[%s178 + $0x21] sm:$0xff]
  %v1530 = vld [vmem:[%s178 + $0x31] sm:$0xff]
  %v1531 = vld [vmem:[%s178 + $0x39] sm:$0xff]
  %v1532 = vld [vmem:[%s178 + $0x49] sm:$0xff]
  %v1533 = vld [vmem:[%s178 + $0x51] sm:$0xff]
  %v1534 = vld [vmem:[%s178 + $0x61] sm:$0xff]
  %v1535 = vld [vmem:[%s178 + $0x69] sm:$0xff]
  %v1536 = vld [vmem:[%s178 + $0x79] sm:$0xff]
  %v1537 = vld [vmem:[%s178 + $0x81] sm:$0xff]
  %v1538 = vld [vmem:[%s178 + $0x91] sm:$0xff]
  %v1539 = vld [vmem:[%s178 + $0x99] sm:$0xff]
  %v1540 = vld [vmem:[%s178 + $0xa9] sm:$0xff]
  %v1541 = vld [vmem:[%s178 + $0xb1] sm:$0xff]
  %v1542 = vld [vmem:[%s178 + $0xc1] sm:$0xff]
  %v1543 = vld [vmem:[%s178 + $0xc9] sm:$0xff]
  %v1544 = vld [vmem:[%s178 + $0xd9] sm:$0xff]
  %v1545 = vld [vmem:[%s178 + $0xe1] sm:$0xff]
  %v1546 = vld [vmem:[%s178 + $0xf1] sm:$0xff]
  %v1547 = vld [vmem:[%s178 + $0xf9] sm:$0xff]
  %v1548 = vld [vmem:[%s178 + $0x109] sm:$0xff]
  %v1549 = vld [vmem:[%s178 + $0x111] sm:$0xff]
  %v1550 = vld [vmem:[%s178 + $0x121] sm:$0xff]
  %v1551 = vld [vmem:[%s178 + $0x129] sm:$0xff]
  %v1552 = vld [vmem:[%s178 + $0x139] sm:$0xff]
  %v1553 = vld [vmem:[%s178 + $0x141] sm:$0xff]
  %v1554 = vld [vmem:[%s178 + $0x151] sm:$0xff]
  %v1555 = vld [vmem:[%s178 + $0x159] sm:$0xff]
  %v1556 = vld [vmem:[%s178 + $0x169] sm:$0xff]
  %v1557 = vld [vmem:[%s178 + $0x171] sm:$0xff]
  %v1558 = vld [vmem:[%s178 + $0x1b1] sm:$0xff]
  %v1559 = vld [vmem:[%s178 + $0x1b9] sm:$0xff]
  %v1560 = vld [vmem:[%s178 + $0x1c9] sm:$0xff]
  %v1561 = vld [vmem:[%s178 + $0x1d1] sm:$0xff]
  %v1562 = vld [vmem:[%s178 + $0x1e1] sm:$0xff]
  %v1563 = vld [vmem:[%s178 + $0x1e9] sm:$0xff]
  %v1564 = vld [vmem:[%s178 + $0x1f9] sm:$0xff]
  %v1565 = vld [vmem:[%s178 + $0x201] sm:$0xff]
  %v1566 = vld [vmem:[%s178 + $0x211] sm:$0xff]
  %v1567 = vld [vmem:[%s178 + $0x219] sm:$0xff]
  %v1568 = vld [vmem:[%s178 + $0x229] sm:$0xff]
  %v1569 = vld [vmem:[%s178 + $0x231] sm:$0xff]
  %v1570 = vld [vmem:[%s178 + $0x241] sm:$0xff]
  %v1571 = vld [vmem:[%s178 + $0x249] sm:$0xff]
  %v1572 = vld [vmem:[%s178 + $0x259] sm:$0xff]
  %v1573 = vld [vmem:[%s178 + $0x261] sm:$0xff]
  %v1574 = vld [vmem:[%s178 + $0x271] sm:$0xff]
  %v1575 = vld [vmem:[%s178 + $0x279] sm:$0xff]
  %v1576 = vld [vmem:[%s178 + $0x289] sm:$0xff]
  %v1577 = vld [vmem:[%s178 + $0x291] sm:$0xff]
  %v1578 = vld [vmem:[%s178 + $0x2a1] sm:$0xff]
  %v1579 = vld [vmem:[%s178 + $0x2a9] sm:$0xff]
  %v1580 = vld [vmem:[%s178 + $0x2b9] sm:$0xff]
  %v1581 = vld [vmem:[%s178 + $0x2c1] sm:$0xff]
  %v1582 = vld [vmem:[%s178 + $0x2d1] sm:$0xff]
  %v1583 = vld [vmem:[%s178 + $0x2d9] sm:$0xff]
  %v1584 = vld [vmem:[%s178 + $0x2e9] sm:$0xff]
  %v1585 = vld [vmem:[%s178 + $0x2f1] sm:$0xff]
  %v1586 = vld [vmem:[%s178 + $0x301] sm:$0xff]
  %v1587 = vld [vmem:[%s178 + $0x309] sm:$0xff]
  %v1588 = vld [vmem:[%s178 + $0x319] sm:$0xff]
  %v1589 = vld [vmem:[%s178 + $0x321] sm:$0xff]
  %1654 = vrot.lane.b32.xlu0 %v1526, 32
  %v1655 = vpop.permute.xlu0 %1654
  %1656 = vrot.lane.b32.xlu0 %v1527, 32
  %v1657 = vpop.permute.xlu0 %1656
  %1658 = vrot.lane.b32.xlu0 %v1528, 32
  %v1659 = vpop.permute.xlu0 %1658
  %1660 = vrot.lane.b32.xlu0 %v1529, 32
  %v1661 = vpop.permute.xlu0 %1660
  %1662 = vrot.lane.b32.xlu0 %v1530, 32
  %v1663 = vpop.permute.xlu0 %1662
  %1664 = vrot.lane.b32.xlu0 %v1531, 32
  %v1665 = vpop.permute.xlu0 %1664
  %1666 = vrot.lane.b32.xlu0 %v1532, 32
  %v1667 = vpop.permute.xlu0 %1666
  %1668 = vrot.lane.b32.xlu0 %v1533, 32
  %v1669 = vpop.permute.xlu0 %1668
  %1670 = vrot.lane.b32.xlu0 %v1534, 32
  %v1671 = vpop.permute.xlu0 %1670
  %1672 = vrot.lane.b32.xlu0 %v1535, 32
  %v1673 = vpop.permute.xlu0 %1672
  %1674 = vrot.lane.b32.xlu0 %v1536, 32
  %v1675 = vpop.permute.xlu0 %1674
  %1676 = vrot.lane.b32.xlu0 %v1537, 32
  %v1677 = vpop.permute.xlu0 %1676
  %1678 = vrot.lane.b32.xlu0 %v1538, 32
  %v1679 = vpop.permute.xlu0 %1678
  %1680 = vrot.lane.b32.xlu0 %v1539, 32
  %v1681 = vpop.permute.xlu0 %1680
  %1682 = vrot.lane.b32.xlu0 %v1540, 32
  %v1683 = vpop.permute.xlu0 %1682
  %1684 = vrot.lane.b32.xlu0 %v1541, 32
  %v1685 = vpop.permute.xlu0 %1684
  %1686 = vrot.lane.b32.xlu0 %v1542, 32
  %v1687 = vpop.permute.xlu0 %1686
  %1688 = vrot.lane.b32.xlu0 %v1543, 32
  %v1689 = vpop.permute.xlu0 %1688
  %1690 = vrot.lane.b32.xlu0 %v1544, 32
  %v1691 = vpop.permute.xlu0 %1690
  %1692 = vrot.lane.b32.xlu0 %v1545, 32
  %v1693 = vpop.permute.xlu0 %1692
  %1694 = vrot.lane.b32.xlu0 %v1546, 32
  %v1695 = vpop.permute.xlu0 %1694
  %1696 = vrot.lane.b32.xlu0 %v1547, 32
  %v1697 = vpop.permute.xlu0 %1696
  %1698 = vrot.lane.b32.xlu0 %v1548, 32
  %v1699 = vpop.permute.xlu0 %1698
  %1700 = vrot.lane.b32.xlu0 %v1549, 32
  %v1701 = vpop.permute.xlu0 %1700
  %1702 = vrot.lane.b32.xlu0 %v1550, 32
  %v1703 = vpop.permute.xlu0 %1702
  %1704 = vrot.lane.b32.xlu0 %v1551, 32
  %v1705 = vpop.permute.xlu0 %1704
  %1706 = vrot.lane.b32.xlu0 %v1552, 32
  %v1707 = vpop.permute.xlu0 %1706
  %1708 = vrot.lane.b32.xlu0 %v1553, 32
  %v1709 = vpop.permute.xlu0 %1708
  %1710 = vrot.lane.b32.xlu0 %v1554, 32
  %v1711 = vpop.permute.xlu0 %1710
  %1712 = vrot.lane.b32.xlu0 %v1555, 32
  %v1713 = vpop.permute.xlu0 %1712
  %1714 = vrot.lane.b32.xlu0 %v1556, 32
  %v1715 = vpop.permute.xlu0 %1714
  %1716 = vrot.lane.b32.xlu0 %v1557, 32
  %v1717 = vpop.permute.xlu0 %1716
  %1718 = vrot.lane.b32.xlu0 %v1558, 32
  %v1719 = vpop.permute.xlu0 %1718
  %1720 = vrot.lane.b32.xlu0 %v1559, 32
  %v1721 = vpop.permute.xlu0 %1720
  %1722 = vrot.lane.b32.xlu0 %v1560, 32
  %v1723 = vpop.permute.xlu0 %1722
  %1724 = vrot.lane.b32.xlu0 %v1561, 32
  %v1725 = vpop.permute.xlu0 %1724
  %1726 = vrot.lane.b32.xlu0 %v1562, 32
  %v1727 = vpop.permute.xlu0 %1726
  %1728 = vrot.lane.b32.xlu0 %v1563, 32
  %v1729 = vpop.permute.xlu0 %1728
  %1730 = vrot.lane.b32.xlu0 %v1564, 32
  %v1731 = vpop.permute.xlu0 %1730
  %1732 = vrot.lane.b32.xlu0 %v1565, 32
  %v1733 = vpop.permute.xlu0 %1732
  %1734 = vrot.lane.b32.xlu0 %v1566, 32
  %v1735 = vpop.permute.xlu0 %1734
  %1736 = vrot.lane.b32.xlu0 %v1567, 32
  %v1737 = vpop.permute.xlu0 %1736
  %1738 = vrot.lane.b32.xlu0 %v1568, 32
  %v1739 = vpop.permute.xlu0 %1738
  %1740 = vrot.lane.b32.xlu0 %v1569, 32
  %v1741 = vpop.permute.xlu0 %1740
  %1742 = vrot.lane.b32.xlu0 %v1570, 32
  %v1743 = vpop.permute.xlu0 %1742
  %1744 = vrot.lane.b32.xlu0 %v1571, 32
  %v1745 = vpop.permute.xlu0 %1744
  %1746 = vrot.lane.b32.xlu0 %v1572, 32
  %v1747 = vpop.permute.xlu0 %1746
  %1748 = vrot.lane.b32.xlu0 %v1573, 32
  %v1749 = vpop.permute.xlu0 %1748
  %1750 = vrot.lane.b32.xlu0 %v1574, 32
  %v1751 = vpop.permute.xlu0 %1750
  %1752 = vrot.lane.b32.xlu0 %v1575, 32
  %v1753 = vpop.permute.xlu0 %1752
  %1754 = vrot.lane.b32.xlu0 %v1576, 32
  %v1755 = vpop.permute.xlu0 %1754
  %1756 = vrot.lane.b32.xlu0 %v1577, 32
  %v1757 = vpop.permute.xlu0 %1756
  %1758 = vrot.lane.b32.xlu0 %v1578, 32
  %v1759 = vpop.permute.xlu0 %1758
  %1760 = vrot.lane.b32.xlu0 %v1579, 32
  %v1761 = vpop.permute.xlu0 %1760
  %1762 = vrot.lane.b32.xlu0 %v1580, 32
  %v1763 = vpop.permute.xlu0 %1762
  %1764 = vrot.lane.b32.xlu0 %v1581, 32
  %v1765 = vpop.permute.xlu0 %1764
  %1766 = vrot.lane.b32.xlu0 %v1582, 32
  %v1767 = vpop.permute.xlu0 %1766
  %1768 = vrot.lane.b32.xlu0 %v1583, 32
  %v1769 = vpop.permute.xlu0 %1768
  %1770 = vrot.lane.b32.xlu0 %v1584, 32
  %v1771 = vpop.permute.xlu0 %1770
  %1772 = vrot.lane.b32.xlu0 %v1585, 32
  %v1773 = vpop.permute.xlu0 %1772
  %1774 = vrot.lane.b32.xlu0 %v1586, 32
  %v1775 = vpop.permute.xlu0 %1774
  %1776 = vrot.lane.b32.xlu0 %v1587, 32
  %v1777 = vpop.permute.xlu0 %1776
  %1778 = vrot.lane.b32.xlu0 %v1588, 32
  %v1779 = vpop.permute.xlu0 %1778
  %1780 = vrot.lane.b32.xlu0 %v1589, 32
  %v1781 = vpop.permute.xlu0 %1780
  %vm1846 = vcmask 326912
  %1847 = vst.msk [vmem:[#allocation3] sm:$0xff] %vm1846, %v1655
  %1848 = vst.msk [vmem:[#allocation3 + $0x8] sm:$0xff] %vm1846, %v1657
  %1849 = vst.msk [vmem:[#allocation3 + $0x10] sm:$0xff] %vm1846, %v1659
  %1850 = vst.msk [vmem:[#allocation3 + $0x18] sm:$0xff] %vm1846, %v1661
  %1851 = vst.msk [vmem:[#allocation3 + $0x20] sm:$0xff] %vm1846, %v1663
  %1852 = vst.msk [vmem:[#allocation3 + $0x28] sm:$0xff] %vm1846, %v1665
  %1853 = vst.msk [vmem:[#allocation3 + $0x30] sm:$0xff] %vm1846, %v1667
  %1854 = vst.msk [vmem:[#allocation3 + $0x38] sm:$0xff] %vm1846, %v1669
  %1855 = vst.msk [vmem:[#allocation3 + $0x40] sm:$0xff] %vm1846, %v1671
  %1856 = vst.msk [vmem:[#allocation3 + $0x48] sm:$0xff] %vm1846, %v1673
  %1857 = vst.msk [vmem:[#allocation3 + $0x50] sm:$0xff] %vm1846, %v1675
  %1858 = vst.msk [vmem:[#allocation3 + $0x58] sm:$0xff] %vm1846, %v1677
  %1859 = vst.msk [vmem:[#allocation3 + $0x60] sm:$0xff] %vm1846, %v1679
  %1860 = vst.msk [vmem:[#allocation3 + $0x68] sm:$0xff] %vm1846, %v1681
  %1861 = vst.msk [vmem:[#allocation3 + $0x70] sm:$0xff] %vm1846, %v1683
  %1862 = vst.msk [vmem:[#allocation3 + $0x78] sm:$0xff] %vm1846, %v1685
  %1863 = vst.msk [vmem:[#allocation3 + $0x80] sm:$0xff] %vm1846, %v1687
  %1864 = vst.msk [vmem:[#allocation3 + $0x88] sm:$0xff] %vm1846, %v1689
  %1865 = vst.msk [vmem:[#allocation3 + $0x90] sm:$0xff] %vm1846, %v1691
  %1866 = vst.msk [vmem:[#allocation3 + $0x98] sm:$0xff] %vm1846, %v1693
  %1867 = vst.msk [vmem:[#allocation3 + $0xa0] sm:$0xff] %vm1846, %v1695
  %1868 = vst.msk [vmem:[#allocation3 + $0xa8] sm:$0xff] %vm1846, %v1697
  %1869 = vst.msk [vmem:[#allocation3 + $0xb0] sm:$0xff] %vm1846, %v1699
  %1870 = vst.msk [vmem:[#allocation3 + $0xb8] sm:$0xff] %vm1846, %v1701
  %1871 = vst.msk [vmem:[#allocation3 + $0xc0] sm:$0xff] %vm1846, %v1703
  %1872 = vst.msk [vmem:[#allocation3 + $0xc8] sm:$0xff] %vm1846, %v1705
  %1873 = vst.msk [vmem:[#allocation3 + $0xd0] sm:$0xff] %vm1846, %v1707
  %1874 = vst.msk [vmem:[#allocation3 + $0xd8] sm:$0xff] %vm1846, %v1709
  %1875 = vst.msk [vmem:[#allocation3 + $0xe0] sm:$0xff] %vm1846, %v1711
  %1876 = vst.msk [vmem:[#allocation3 + $0xe8] sm:$0xff] %vm1846, %v1713
  %1877 = vst.msk [vmem:[#allocation3 + $0xf0] sm:$0xff] %vm1846, %v1715
  %1878 = vst.msk [vmem:[#allocation3 + $0xf8] sm:$0xff] %vm1846, %v1717
  %1879 = vst.msk [vmem:[#allocation3 + $0x100] sm:$0xff] %vm1846, %v1719
  %1880 = vst.msk [vmem:[#allocation3 + $0x108] sm:$0xff] %vm1846, %v1721
  %1881 = vst.msk [vmem:[#allocation3 + $0x110] sm:$0xff] %vm1846, %v1723
  %1882 = vst.msk [vmem:[#allocation3 + $0x118] sm:$0xff] %vm1846, %v1725
  %1883 = vst.msk [vmem:[#allocation3 + $0x120] sm:$0xff] %vm1846, %v1727
  %1884 = vst.msk [vmem:[#allocation3 + $0x128] sm:$0xff] %vm1846, %v1729
  %1885 = vst.msk [vmem:[#allocation3 + $0x130] sm:$0xff] %vm1846, %v1731
  %1886 = vst.msk [vmem:[#allocation3 + $0x138] sm:$0xff] %vm1846, %v1733
  %1887 = vst.msk [vmem:[#allocation3 + $0x140] sm:$0xff] %vm1846, %v1735
  %1888 = vst.msk [vmem:[#allocation3 + $0x148] sm:$0xff] %vm1846, %v1737
  %1889 = vst.msk [vmem:[#allocation3 + $0x150] sm:$0xff] %vm1846, %v1739
  %1890 = vst.msk [vmem:[#allocation3 + $0x158] sm:$0xff] %vm1846, %v1741
  %1891 = vst.msk [vmem:[#allocation3 + $0x160] sm:$0xff] %vm1846, %v1743
  %1892 = vst.msk [vmem:[#allocation3 + $0x168] sm:$0xff] %vm1846, %v1745
  %1893 = vst.msk [vmem:[#allocation3 + $0x170] sm:$0xff] %vm1846, %v1747
  %1894 = vst.msk [vmem:[#allocation3 + $0x178] sm:$0xff] %vm1846, %v1749
  %1895 = vst.msk [vmem:[#allocation3 + $0x180] sm:$0xff] %vm1846, %v1751
  %1896 = vst.msk [vmem:[#allocation3 + $0x188] sm:$0xff] %vm1846, %v1753
  %1897 = vst.msk [vmem:[#allocation3 + $0x190] sm:$0xff] %vm1846, %v1755
  %1898 = vst.msk [vmem:[#allocation3 + $0x198] sm:$0xff] %vm1846, %v1757
  %1899 = vst.msk [vmem:[#allocation3 + $0x1a0] sm:$0xff] %vm1846, %v1759
  %1900 = vst.msk [vmem:[#allocation3 + $0x1a8] sm:$0xff] %vm1846, %v1761
  %1901 = vst.msk [vmem:[#allocation3 + $0x1b0] sm:$0xff] %vm1846, %v1763
  %1902 = vst.msk [vmem:[#allocation3 + $0x1b8] sm:$0xff] %vm1846, %v1765
  %1903 = vst.msk [vmem:[#allocation3 + $0x1c0] sm:$0xff] %vm1846, %v1767
  %1904 = vst.msk [vmem:[#allocation3 + $0x1c8] sm:$0xff] %vm1846, %v1769
  %1905 = vst.msk [vmem:[#allocation3 + $0x1d0] sm:$0xff] %vm1846, %v1771
  %1906 = vst.msk [vmem:[#allocation3 + $0x1d8] sm:$0xff] %vm1846, %v1773
  %1907 = vst.msk [vmem:[#allocation3 + $0x1e0] sm:$0xff] %vm1846, %v1775
  %1908 = vst.msk [vmem:[#allocation3 + $0x1e8] sm:$0xff] %vm1846, %v1777
  %1909 = vst.msk [vmem:[#allocation3 + $0x1f0] sm:$0xff] %vm1846, %v1779
  %1910 = vst.msk [vmem:[#allocation3 + $0x1f8] sm:$0xff] %vm1846, %v1781
  %v1911 = vld [vmem:[%s178 + $0x2] sm:$0xff]
  %v1912 = vld [vmem:[%s178 + $0xa] sm:$0xff]
  %v1913 = vld [vmem:[%s178 + $0x1a] sm:$0xff]
  %v1914 = vld [vmem:[%s178 + $0x22] sm:$0xff]
  %v1915 = vld [vmem:[%s178 + $0x32] sm:$0xff]
  %v1916 = vld [vmem:[%s178 + $0x3a] sm:$0xff]
  %v1917 = vld [vmem:[%s178 + $0x4a] sm:$0xff]
  %v1918 = vld [vmem:[%s178 + $0x52] sm:$0xff]
  %v1919 = vld [vmem:[%s178 + $0x62] sm:$0xff]
  %v1920 = vld [vmem:[%s178 + $0x6a] sm:$0xff]
  %v1921 = vld [vmem:[%s178 + $0x7a] sm:$0xff]
  %v1922 = vld [vmem:[%s178 + $0x82] sm:$0xff]
  %v1923 = vld [vmem:[%s178 + $0x92] sm:$0xff]
  %v1924 = vld [vmem:[%s178 + $0x9a] sm:$0xff]
  %v1925 = vld [vmem:[%s178 + $0xaa] sm:$0xff]
  %v1926 = vld [vmem:[%s178 + $0xb2] sm:$0xff]
  %v1927 = vld [vmem:[%s178 + $0xc2] sm:$0xff]
  %v1928 = vld [vmem:[%s178 + $0xca] sm:$0xff]
  %v1929 = vld [vmem:[%s178 + $0xda] sm:$0xff]
  %v1930 = vld [vmem:[%s178 + $0xe2] sm:$0xff]
  %v1931 = vld [vmem:[%s178 + $0xf2] sm:$0xff]
  %v1932 = vld [vmem:[%s178 + $0xfa] sm:$0xff]
  %v1933 = vld [vmem:[%s178 + $0x10a] sm:$0xff]
  %v1934 = vld [vmem:[%s178 + $0x112] sm:$0xff]
  %v1935 = vld [vmem:[%s178 + $0x122] sm:$0xff]
  %v1936 = vld [vmem:[%s178 + $0x12a] sm:$0xff]
  %v1937 = vld [vmem:[%s178 + $0x13a] sm:$0xff]
  %v1938 = vld [vmem:[%s178 + $0x142] sm:$0xff]
  %v1939 = vld [vmem:[%s178 + $0x152] sm:$0xff]
  %v1940 = vld [vmem:[%s178 + $0x15a] sm:$0xff]
  %v1941 = vld [vmem:[%s178 + $0x16a] sm:$0xff]
  %v1942 = vld [vmem:[%s178 + $0x172] sm:$0xff]
  %v1943 = vld [vmem:[%s178 + $0x1b2] sm:$0xff]
  %v1944 = vld [vmem:[%s178 + $0x1ba] sm:$0xff]
  %v1945 = vld [vmem:[%s178 + $0x1ca] sm:$0xff]
  %v1946 = vld [vmem:[%s178 + $0x1d2] sm:$0xff]
  %v1947 = vld [vmem:[%s178 + $0x1e2] sm:$0xff]
  %v1948 = vld [vmem:[%s178 + $0x1ea] sm:$0xff]
  %v1949 = vld [vmem:[%s178 + $0x1fa] sm:$0xff]
  %v1950 = vld [vmem:[%s178 + $0x202] sm:$0xff]
  %v1951 = vld [vmem:[%s178 + $0x212] sm:$0xff]
  %v1952 = vld [vmem:[%s178 + $0x21a] sm:$0xff]
  %v1953 = vld [vmem:[%s178 + $0x22a] sm:$0xff]
  %v1954 = vld [vmem:[%s178 + $0x232] sm:$0xff]
  %v1955 = vld [vmem:[%s178 + $0x242] sm:$0xff]
  %v1956 = vld [vmem:[%s178 + $0x24a] sm:$0xff]
  %v1957 = vld [vmem:[%s178 + $0x25a] sm:$0xff]
  %v1958 = vld [vmem:[%s178 + $0x262] sm:$0xff]
  %v1959 = vld [vmem:[%s178 + $0x272] sm:$0xff]
  %v1960 = vld [vmem:[%s178 + $0x27a] sm:$0xff]
  %v1961 = vld [vmem:[%s178 + $0x28a] sm:$0xff]
  %v1962 = vld [vmem:[%s178 + $0x292] sm:$0xff]
  %v1963 = vld [vmem:[%s178 + $0x2a2] sm:$0xff]
  %v1964 = vld [vmem:[%s178 + $0x2aa] sm:$0xff]
  %v1965 = vld [vmem:[%s178 + $0x2ba] sm:$0xff]
  %v1966 = vld [vmem:[%s178 + $0x2c2] sm:$0xff]
  %v1967 = vld [vmem:[%s178 + $0x2d2] sm:$0xff]
  %v1968 = vld [vmem:[%s178 + $0x2da] sm:$0xff]
  %v1969 = vld [vmem:[%s178 + $0x2ea] sm:$0xff]
  %v1970 = vld [vmem:[%s178 + $0x2f2] sm:$0xff]
  %v1971 = vld [vmem:[%s178 + $0x302] sm:$0xff]
  %v1972 = vld [vmem:[%s178 + $0x30a] sm:$0xff]
  %v1973 = vld [vmem:[%s178 + $0x31a] sm:$0xff]
  %v1974 = vld [vmem:[%s178 + $0x322] sm:$0xff]
  %2039 = vrot.lane.b32.xlu0 %v1911, 40
  %v2040 = vpop.permute.xlu0 %2039
  %2041 = vrot.lane.b32.xlu0 %v1912, 40
  %v2042 = vpop.permute.xlu0 %2041
  %2043 = vrot.lane.b32.xlu0 %v1913, 40
  %v2044 = vpop.permute.xlu0 %2043
  %2045 = vrot.lane.b32.xlu0 %v1914, 40
  %v2046 = vpop.permute.xlu0 %2045
  %2047 = vrot.lane.b32.xlu0 %v1915, 40
  %v2048 = vpop.permute.xlu0 %2047
  %2049 = vrot.lane.b32.xlu0 %v1916, 40
  %v2050 = vpop.permute.xlu0 %2049
  %2051 = vrot.lane.b32.xlu0 %v1917, 40
  %v2052 = vpop.permute.xlu0 %2051
  %2053 = vrot.lane.b32.xlu0 %v1918, 40
  %v2054 = vpop.permute.xlu0 %2053
  %2055 = vrot.lane.b32.xlu0 %v1919, 40
  %v2056 = vpop.permute.xlu0 %2055
  %2057 = vrot.lane.b32.xlu0 %v1920, 40
  %v2058 = vpop.permute.xlu0 %2057
  %2059 = vrot.lane.b32.xlu0 %v1921, 40
  %v2060 = vpop.permute.xlu0 %2059
  %2061 = vrot.lane.b32.xlu0 %v1922, 40
  %v2062 = vpop.permute.xlu0 %2061
  %2063 = vrot.lane.b32.xlu0 %v1923, 40
  %v2064 = vpop.permute.xlu0 %2063
  %2065 = vrot.lane.b32.xlu0 %v1924, 40
  %v2066 = vpop.permute.xlu0 %2065
  %2067 = vrot.lane.b32.xlu0 %v1925, 40
  %v2068 = vpop.permute.xlu0 %2067
  %2069 = vrot.lane.b32.xlu0 %v1926, 40
  %v2070 = vpop.permute.xlu0 %2069
  %2071 = vrot.lane.b32.xlu0 %v1927, 40
  %v2072 = vpop.permute.xlu0 %2071
  %2073 = vrot.lane.b32.xlu0 %v1928, 40
  %v2074 = vpop.permute.xlu0 %2073
  %2075 = vrot.lane.b32.xlu0 %v1929, 40
  %v2076 = vpop.permute.xlu0 %2075
  %2077 = vrot.lane.b32.xlu0 %v1930, 40
  %v2078 = vpop.permute.xlu0 %2077
  %2079 = vrot.lane.b32.xlu0 %v1931, 40
  %v2080 = vpop.permute.xlu0 %2079
  %2081 = vrot.lane.b32.xlu0 %v1932, 40
  %v2082 = vpop.permute.xlu0 %2081
  %2083 = vrot.lane.b32.xlu0 %v1933, 40
  %v2084 = vpop.permute.xlu0 %2083
  %2085 = vrot.lane.b32.xlu0 %v1934, 40
  %v2086 = vpop.permute.xlu0 %2085
  %2087 = vrot.lane.b32.xlu0 %v1935, 40
  %v2088 = vpop.permute.xlu0 %2087
  %2089 = vrot.lane.b32.xlu0 %v1936, 40
  %v2090 = vpop.permute.xlu0 %2089
  %2091 = vrot.lane.b32.xlu0 %v1937, 40
  %v2092 = vpop.permute.xlu0 %2091
  %2093 = vrot.lane.b32.xlu0 %v1938, 40
  %v2094 = vpop.permute.xlu0 %2093
  %2095 = vrot.lane.b32.xlu0 %v1939, 40
  %v2096 = vpop.permute.xlu0 %2095
  %2097 = vrot.lane.b32.xlu0 %v1940, 40
  %v2098 = vpop.permute.xlu0 %2097
  %2099 = vrot.lane.b32.xlu0 %v1941, 40
  %v2100 = vpop.permute.xlu0 %2099
  %2101 = vrot.lane.b32.xlu0 %v1942, 40
  %v2102 = vpop.permute.xlu0 %2101
  %2103 = vrot.lane.b32.xlu0 %v1943, 40
  %v2104 = vpop.permute.xlu0 %2103
  %2105 = vrot.lane.b32.xlu0 %v1944, 40
  %v2106 = vpop.permute.xlu0 %2105
  %2107 = vrot.lane.b32.xlu0 %v1945, 40
  %v2108 = vpop.permute.xlu0 %2107
  %2109 = vrot.lane.b32.xlu0 %v1946, 40
  %v2110 = vpop.permute.xlu0 %2109
  %2111 = vrot.lane.b32.xlu0 %v1947, 40
  %v2112 = vpop.permute.xlu0 %2111
  %2113 = vrot.lane.b32.xlu0 %v1948, 40
  %v2114 = vpop.permute.xlu0 %2113
  %2115 = vrot.lane.b32.xlu0 %v1949, 40
  %v2116 = vpop.permute.xlu0 %2115
  %2117 = vrot.lane.b32.xlu0 %v1950, 40
  %v2118 = vpop.permute.xlu0 %2117
  %2119 = vrot.lane.b32.xlu0 %v1951, 40
  %v2120 = vpop.permute.xlu0 %2119
  %2121 = vrot.lane.b32.xlu0 %v1952, 40
  %v2122 = vpop.permute.xlu0 %2121
  %2123 = vrot.lane.b32.xlu0 %v1953, 40
  %v2124 = vpop.permute.xlu0 %2123
  %2125 = vrot.lane.b32.xlu0 %v1954, 40
  %v2126 = vpop.permute.xlu0 %2125
  %2127 = vrot.lane.b32.xlu0 %v1955, 40
  %v2128 = vpop.permute.xlu0 %2127
  %2129 = vrot.lane.b32.xlu0 %v1956, 40
  %v2130 = vpop.permute.xlu0 %2129
  %2131 = vrot.lane.b32.xlu0 %v1957, 40
  %v2132 = vpop.permute.xlu0 %2131
  %2133 = vrot.lane.b32.xlu0 %v1958, 40
  %v2134 = vpop.permute.xlu0 %2133
  %2135 = vrot.lane.b32.xlu0 %v1959, 40
  %v2136 = vpop.permute.xlu0 %2135
  %2137 = vrot.lane.b32.xlu0 %v1960, 40
  %v2138 = vpop.permute.xlu0 %2137
  %2139 = vrot.lane.b32.xlu0 %v1961, 40
  %v2140 = vpop.permute.xlu0 %2139
  %2141 = vrot.lane.b32.xlu0 %v1962, 40
  %v2142 = vpop.permute.xlu0 %2141
  %2143 = vrot.lane.b32.xlu0 %v1963, 40
  %v2144 = vpop.permute.xlu0 %2143
  %2145 = vrot.lane.b32.xlu0 %v1964, 40
  %v2146 = vpop.permute.xlu0 %2145
  %2147 = vrot.lane.b32.xlu0 %v1965, 40
  %v2148 = vpop.permute.xlu0 %2147
  %2149 = vrot.lane.b32.xlu0 %v1966, 40
  %v2150 = vpop.permute.xlu0 %2149
  %2151 = vrot.lane.b32.xlu0 %v1967, 40
  %v2152 = vpop.permute.xlu0 %2151
  %2153 = vrot.lane.b32.xlu0 %v1968, 40
  %v2154 = vpop.permute.xlu0 %2153
  %2155 = vrot.lane.b32.xlu0 %v1969, 40
  %v2156 = vpop.permute.xlu0 %2155
  %2157 = vrot.lane.b32.xlu0 %v1970, 40
  %v2158 = vpop.permute.xlu0 %2157
  %2159 = vrot.lane.b32.xlu0 %v1971, 40
  %v2160 = vpop.permute.xlu0 %2159
  %2161 = vrot.lane.b32.xlu0 %v1972, 40
  %v2162 = vpop.permute.xlu0 %2161
  %2163 = vrot.lane.b32.xlu0 %v1973, 40
  %v2164 = vpop.permute.xlu0 %2163
  %2165 = vrot.lane.b32.xlu0 %v1974, 40
  %v2166 = vpop.permute.xlu0 %2165
  %vm2231 = vcmask 392512
  %2232 = vst.msk [vmem:[#allocation3] sm:$0xff] %vm2231, %v2040
  %2233 = vst.msk [vmem:[#allocation3 + $0x8] sm:$0xff] %vm2231, %v2042
  %2234 = vst.msk [vmem:[#allocation3 + $0x10] sm:$0xff] %vm2231, %v2044
  %2235 = vst.msk [vmem:[#allocation3 + $0x18] sm:$0xff] %vm2231, %v2046
  %2236 = vst.msk [vmem:[#allocation3 + $0x20] sm:$0xff] %vm2231, %v2048
  %2237 = vst.msk [vmem:[#allocation3 + $0x28] sm:$0xff] %vm2231, %v2050
  %2238 = vst.msk [vmem:[#allocation3 + $0x30] sm:$0xff] %vm2231, %v2052
  %2239 = vst.msk [vmem:[#allocation3 + $0x38] sm:$0xff] %vm2231, %v2054
  %2240 = vst.msk [vmem:[#allocation3 + $0x40] sm:$0xff] %vm2231, %v2056
  %2241 = vst.msk [vmem:[#allocation3 + $0x48] sm:$0xff] %vm2231, %v2058
  %2242 = vst.msk [vmem:[#allocation3 + $0x50] sm:$0xff] %vm2231, %v2060
  %2243 = vst.msk [vmem:[#allocation3 + $0x58] sm:$0xff] %vm2231, %v2062
  %2244 = vst.msk [vmem:[#allocation3 + $0x60] sm:$0xff] %vm2231, %v2064
  %2245 = vst.msk [vmem:[#allocation3 + $0x68] sm:$0xff] %vm2231, %v2066
  %2246 = vst.msk [vmem:[#allocation3 + $0x70] sm:$0xff] %vm2231, %v2068
  %2247 = vst.msk [vmem:[#allocation3 + $0x78] sm:$0xff] %vm2231, %v2070
  %2248 = vst.msk [vmem:[#allocation3 + $0x80] sm:$0xff] %vm2231, %v2072
  %2249 = vst.msk [vmem:[#allocation3 + $0x88] sm:$0xff] %vm2231, %v2074
  %2250 = vst.msk [vmem:[#allocation3 + $0x90] sm:$0xff] %vm2231, %v2076
  %2251 = vst.msk [vmem:[#allocation3 + $0x98] sm:$0xff] %vm2231, %v2078
  %2252 = vst.msk [vmem:[#allocation3 + $0xa0] sm:$0xff] %vm2231, %v2080
  %2253 = vst.msk [vmem:[#allocation3 + $0xa8] sm:$0xff] %vm2231, %v2082
  %2254 = vst.msk [vmem:[#allocation3 + $0xb0] sm:$0xff] %vm2231, %v2084
  %2255 = vst.msk [vmem:[#allocation3 + $0xb8] sm:$0xff] %vm2231, %v2086
  %2256 = vst.msk [vmem:[#allocation3 + $0xc0] sm:$0xff] %vm2231, %v2088
  %2257 = vst.msk [vmem:[#allocation3 + $0xc8] sm:$0xff] %vm2231, %v2090
  %2258 = vst.msk [vmem:[#allocation3 + $0xd0] sm:$0xff] %vm2231, %v2092
  %2259 = vst.msk [vmem:[#allocation3 + $0xd8] sm:$0xff] %vm2231, %v2094
  %2260 = vst.msk [vmem:[#allocation3 + $0xe0] sm:$0xff] %vm2231, %v2096
  %2261 = vst.msk [vmem:[#allocation3 + $0xe8] sm:$0xff] %vm2231, %v2098
  %2262 = vst.msk [vmem:[#allocation3 + $0xf0] sm:$0xff] %vm2231, %v2100
  %2263 = vst.msk [vmem:[#allocation3 + $0xf8] sm:$0xff] %vm2231, %v2102
  %2264 = vst.msk [vmem:[#allocation3 + $0x100] sm:$0xff] %vm2231, %v2104
  %2265 = vst.msk [vmem:[#allocation3 + $0x108] sm:$0xff] %vm2231, %v2106
  %2266 = vst.msk [vmem:[#allocation3 + $0x110] sm:$0xff] %vm2231, %v2108
  %2267 = vst.msk [vmem:[#allocation3 + $0x118] sm:$0xff] %vm2231, %v2110
  %2268 = vst.msk [vmem:[#allocation3 + $0x120] sm:$0xff] %vm2231, %v2112
  %2269 = vst.msk [vmem:[#allocation3 + $0x128] sm:$0xff] %vm2231, %v2114
  %2270 = vst.msk [vmem:[#allocation3 + $0x130] sm:$0xff] %vm2231, %v2116
  %2271 = vst.msk [vmem:[#allocation3 + $0x138] sm:$0xff] %vm2231, %v2118
  %2272 = vst.msk [vmem:[#allocation3 + $0x140] sm:$0xff] %vm2231, %v2120
  %2273 = vst.msk [vmem:[#allocation3 + $0x148] sm:$0xff] %vm2231, %v2122
  %2274 = vst.msk [vmem:[#allocation3 + $0x150] sm:$0xff] %vm2231, %v2124
  %2275 = vst.msk [vmem:[#allocation3 + $0x158] sm:$0xff] %vm2231, %v2126
  %2276 = vst.msk [vmem:[#allocation3 + $0x160] sm:$0xff] %vm2231, %v2128
  %2277 = vst.msk [vmem:[#allocation3 + $0x168] sm:$0xff] %vm2231, %v2130
  %2278 = vst.msk [vmem:[#allocation3 + $0x170] sm:$0xff] %vm2231, %v2132
  %2279 = vst.msk [vmem:[#allocation3 + $0x178] sm:$0xff] %vm2231, %v2134
  %2280 = vst.msk [vmem:[#allocation3 + $0x180] sm:$0xff] %vm2231, %v2136
  %2281 = vst.msk [vmem:[#allocation3 + $0x188] sm:$0xff] %vm2231, %v2138
  %2282 = vst.msk [vmem:[#allocation3 + $0x190] sm:$0xff] %vm2231, %v2140
  %2283 = vst.msk [vmem:[#allocation3 + $0x198] sm:$0xff] %vm2231, %v2142
  %2284 = vst.msk [vmem:[#allocation3 + $0x1a0] sm:$0xff] %vm2231, %v2144
  %2285 = vst.msk [vmem:[#allocation3 + $0x1a8] sm:$0xff] %vm2231, %v2146
  %2286 = vst.msk [vmem:[#allocation3 + $0x1b0] sm:$0xff] %vm2231, %v2148
  %2287 = vst.msk [vmem:[#allocation3 + $0x1b8] sm:$0xff] %vm2231, %v2150
  %2288 = vst.msk [vmem:[#allocation3 + $0x1c0] sm:$0xff] %vm2231, %v2152
  %2289 = vst.msk [vmem:[#allocation3 + $0x1c8] sm:$0xff] %vm2231, %v2154
  %2290 = vst.msk [vmem:[#allocation3 + $0x1d0] sm:$0xff] %vm2231, %v2156
  %2291 = vst.msk [vmem:[#allocation3 + $0x1d8] sm:$0xff] %vm2231, %v2158
  %2292 = vst.msk [vmem:[#allocation3 + $0x1e0] sm:$0xff] %vm2231, %v2160
  %2293 = vst.msk [vmem:[#allocation3 + $0x1e8] sm:$0xff] %vm2231, %v2162
  %2294 = vst.msk [vmem:[#allocation3 + $0x1f0] sm:$0xff] %vm2231, %v2164
  %2295 = vst.msk [vmem:[#allocation3 + $0x1f8] sm:$0xff] %vm2231, %v2166
  %s2296 = scalar_lea.vmem [#allocation2], 48
  %v2297 = vld [vmem:[%s2296] sm:$0xff]
  %v2298 = vld [vmem:[%s2296 + $0x8] sm:$0xff]
  %v2299 = vld [vmem:[%s2296 + $0x18] sm:$0xff]
  %v2300 = vld [vmem:[%s2296 + $0x20] sm:$0xff]
  %v2301 = vld [vmem:[%s2296 + $0x30] sm:$0xff]
  %v2302 = vld [vmem:[%s2296 + $0x38] sm:$0xff]
  %v2303 = vld [vmem:[%s2296 + $0x48] sm:$0xff]
  %v2304 = vld [vmem:[%s2296 + $0x50] sm:$0xff]
  %v2305 = vld [vmem:[%s2296 + $0x60] sm:$0xff]
  %v2306 = vld [vmem:[%s2296 + $0x68] sm:$0xff]
  %v2307 = vld [vmem:[%s2296 + $0x78] sm:$0xff]
  %v2308 = vld [vmem:[%s2296 + $0x80] sm:$0xff]
  %v2309 = vld [vmem:[%s2296 + $0x90] sm:$0xff]
  %v2310 = vld [vmem:[%s2296 + $0x98] sm:$0xff]
  %v2311 = vld [vmem:[%s2296 + $0xa8] sm:$0xff]
  %v2312 = vld [vmem:[%s2296 + $0xb0] sm:$0xff]
  %v2313 = vld [vmem:[%s2296 + $0xc0] sm:$0xff]
  %v2314 = vld [vmem:[%s2296 + $0xc8] sm:$0xff]
  %v2315 = vld [vmem:[%s2296 + $0xd8] sm:$0xff]
  %v2316 = vld [vmem:[%s2296 + $0xe0] sm:$0xff]
  %v2317 = vld [vmem:[%s2296 + $0xf0] sm:$0xff]
  %v2318 = vld [vmem:[%s2296 + $0xf8] sm:$0xff]
  %v2319 = vld [vmem:[%s2296 + $0x108] sm:$0xff]
  %v2320 = vld [vmem:[%s2296 + $0x110] sm:$0xff]
  %v2321 = vld [vmem:[%s2296 + $0x120] sm:$0xff]
  %v2322 = vld [vmem:[%s2296 + $0x128] sm:$0xff]
  %v2323 = vld [vmem:[%s2296 + $0x138] sm:$0xff]
  %v2324 = vld [vmem:[%s2296 + $0x140] sm:$0xff]
  %v2325 = vld [vmem:[%s2296 + $0x150] sm:$0xff]
  %v2326 = vld [vmem:[%s2296 + $0x158] sm:$0xff]
  %v2327 = vld [vmem:[%s2296 + $0x168] sm:$0xff]
  %v2328 = vld [vmem:[%s2296 + $0x170] sm:$0xff]
  %v2329 = vld [vmem:[%s2296 + $0x1b0] sm:$0xff]
  %v2330 = vld [vmem:[%s2296 + $0x1b8] sm:$0xff]
  %v2331 = vld [vmem:[%s2296 + $0x1c8] sm:$0xff]
  %v2332 = vld [vmem:[%s2296 + $0x1d0] sm:$0xff]
  %v2333 = vld [vmem:[%s2296 + $0x1e0] sm:$0xff]
  %v2334 = vld [vmem:[%s2296 + $0x1e8] sm:$0xff]
  %v2335 = vld [vmem:[%s2296 + $0x1f8] sm:$0xff]
  %v2336 = vld [vmem:[%s2296 + $0x200] sm:$0xff]
  %v2337 = vld [vmem:[%s2296 + $0x210] sm:$0xff]
  %v2338 = vld [vmem:[%s2296 + $0x218] sm:$0xff]
  %v2339 = vld [vmem:[%s2296 + $0x228] sm:$0xff]
  %v2340 = vld [vmem:[%s2296 + $0x230] sm:$0xff]
  %v2341 = vld [vmem:[%s2296 + $0x240] sm:$0xff]
  %v2342 = vld [vmem:[%s2296 + $0x248] sm:$0xff]
  %v2343 = vld [vmem:[%s2296 + $0x258] sm:$0xff]
  %v2344 = vld [vmem:[%s2296 + $0x260] sm:$0xff]
  %v2345 = vld [vmem:[%s2296 + $0x270] sm:$0xff]
  %v2346 = vld [vmem:[%s2296 + $0x278] sm:$0xff]
  %v2347 = vld [vmem:[%s2296 + $0x288] sm:$0xff]
  %v2348 = vld [vmem:[%s2296 + $0x290] sm:$0xff]
  %v2349 = vld [vmem:[%s2296 + $0x2a0] sm:$0xff]
  %v2350 = vld [vmem:[%s2296 + $0x2a8] sm:$0xff]
  %v2351 = vld [vmem:[%s2296 + $0x2b8] sm:$0xff]
  %v2352 = vld [vmem:[%s2296 + $0x2c0] sm:$0xff]
  %v2353 = vld [vmem:[%s2296 + $0x2d0] sm:$0xff]
  %v2354 = vld [vmem:[%s2296 + $0x2d8] sm:$0xff]
  %v2355 = vld [vmem:[%s2296 + $0x2e8] sm:$0xff]
  %v2356 = vld [vmem:[%s2296 + $0x2f0] sm:$0xff]
  %v2357 = vld [vmem:[%s2296 + $0x300] sm:$0xff]
  %v2358 = vld [vmem:[%s2296 + $0x308] sm:$0xff]
  %v2359 = vld [vmem:[%s2296 + $0x318] sm:$0xff]
  %v2360 = vld [vmem:[%s2296 + $0x320] sm:$0xff]
  %2425 = vrot.lane.b32.xlu0 %v2297, 48
  %v2426 = vpop.permute.xlu0 %2425
  %2427 = vrot.lane.b32.xlu0 %v2298, 48
  %v2428 = vpop.permute.xlu0 %2427
  %2429 = vrot.lane.b32.xlu0 %v2299, 48
  %v2430 = vpop.permute.xlu0 %2429
  %2431 = vrot.lane.b32.xlu0 %v2300, 48
  %v2432 = vpop.permute.xlu0 %2431
  %2433 = vrot.lane.b32.xlu0 %v2301, 48
  %v2434 = vpop.permute.xlu0 %2433
  %2435 = vrot.lane.b32.xlu0 %v2302, 48
  %v2436 = vpop.permute.xlu0 %2435
  %2437 = vrot.lane.b32.xlu0 %v2303, 48
  %v2438 = vpop.permute.xlu0 %2437
  %2439 = vrot.lane.b32.xlu0 %v2304, 48
  %v2440 = vpop.permute.xlu0 %2439
  %2441 = vrot.lane.b32.xlu0 %v2305, 48
  %v2442 = vpop.permute.xlu0 %2441
  %2443 = vrot.lane.b32.xlu0 %v2306, 48
  %v2444 = vpop.permute.xlu0 %2443
  %2445 = vrot.lane.b32.xlu0 %v2307, 48
  %v2446 = vpop.permute.xlu0 %2445
  %2447 = vrot.lane.b32.xlu0 %v2308, 48
  %v2448 = vpop.permute.xlu0 %2447
  %2449 = vrot.lane.b32.xlu0 %v2309, 48
  %v2450 = vpop.permute.xlu0 %2449
  %2451 = vrot.lane.b32.xlu0 %v2310, 48
  %v2452 = vpop.permute.xlu0 %2451
  %2453 = vrot.lane.b32.xlu0 %v2311, 48
  %v2454 = vpop.permute.xlu0 %2453
  %2455 = vrot.lane.b32.xlu0 %v2312, 48
  %v2456 = vpop.permute.xlu0 %2455
  %2457 = vrot.lane.b32.xlu0 %v2313, 48
  %v2458 = vpop.permute.xlu0 %2457
  %2459 = vrot.lane.b32.xlu0 %v2314, 48
  %v2460 = vpop.permute.xlu0 %2459
  %2461 = vrot.lane.b32.xlu0 %v2315, 48
  %v2462 = vpop.permute.xlu0 %2461
  %2463 = vrot.lane.b32.xlu0 %v2316, 48
  %v2464 = vpop.permute.xlu0 %2463
  %2465 = vrot.lane.b32.xlu0 %v2317, 48
  %v2466 = vpop.permute.xlu0 %2465
  %2467 = vrot.lane.b32.xlu0 %v2318, 48
  %v2468 = vpop.permute.xlu0 %2467
  %2469 = vrot.lane.b32.xlu0 %v2319, 48
  %v2470 = vpop.permute.xlu0 %2469
  %2471 = vrot.lane.b32.xlu0 %v2320, 48
  %v2472 = vpop.permute.xlu0 %2471
  %2473 = vrot.lane.b32.xlu0 %v2321, 48
  %v2474 = vpop.permute.xlu0 %2473
  %2475 = vrot.lane.b32.xlu0 %v2322, 48
  %v2476 = vpop.permute.xlu0 %2475
  %2477 = vrot.lane.b32.xlu0 %v2323, 48
  %v2478 = vpop.permute.xlu0 %2477
  %2479 = vrot.lane.b32.xlu0 %v2324, 48
  %v2480 = vpop.permute.xlu0 %2479
  %2481 = vrot.lane.b32.xlu0 %v2325, 48
  %v2482 = vpop.permute.xlu0 %2481
  %2483 = vrot.lane.b32.xlu0 %v2326, 48
  %v2484 = vpop.permute.xlu0 %2483
  %2485 = vrot.lane.b32.xlu0 %v2327, 48
  %v2486 = vpop.permute.xlu0 %2485
  %2487 = vrot.lane.b32.xlu0 %v2328, 48
  %v2488 = vpop.permute.xlu0 %2487
  %2489 = vrot.lane.b32.xlu0 %v2329, 48
  %v2490 = vpop.permute.xlu0 %2489
  %2491 = vrot.lane.b32.xlu0 %v2330, 48
  %v2492 = vpop.permute.xlu0 %2491
  %2493 = vrot.lane.b32.xlu0 %v2331, 48
  %v2494 = vpop.permute.xlu0 %2493
  %2495 = vrot.lane.b32.xlu0 %v2332, 48
  %v2496 = vpop.permute.xlu0 %2495
  %2497 = vrot.lane.b32.xlu0 %v2333, 48
  %v2498 = vpop.permute.xlu0 %2497
  %2499 = vrot.lane.b32.xlu0 %v2334, 48
  %v2500 = vpop.permute.xlu0 %2499
  %2501 = vrot.lane.b32.xlu0 %v2335, 48
  %v2502 = vpop.permute.xlu0 %2501
  %2503 = vrot.lane.b32.xlu0 %v2336, 48
  %v2504 = vpop.permute.xlu0 %2503
  %2505 = vrot.lane.b32.xlu0 %v2337, 48
  %v2506 = vpop.permute.xlu0 %2505
  %2507 = vrot.lane.b32.xlu0 %v2338, 48
  %v2508 = vpop.permute.xlu0 %2507
  %2509 = vrot.lane.b32.xlu0 %v2339, 48
  %v2510 = vpop.permute.xlu0 %2509
  %2511 = vrot.lane.b32.xlu0 %v2340, 48
  %v2512 = vpop.permute.xlu0 %2511
  %2513 = vrot.lane.b32.xlu0 %v2341, 48
  %v2514 = vpop.permute.xlu0 %2513
  %2515 = vrot.lane.b32.xlu0 %v2342, 48
  %v2516 = vpop.permute.xlu0 %2515
  %2517 = vrot.lane.b32.xlu0 %v2343, 48
  %v2518 = vpop.permute.xlu0 %2517
  %2519 = vrot.lane.b32.xlu0 %v2344, 48
  %v2520 = vpop.permute.xlu0 %2519
  %2521 = vrot.lane.b32.xlu0 %v2345, 48
  %v2522 = vpop.permute.xlu0 %2521
  %2523 = vrot.lane.b32.xlu0 %v2346, 48
  %v2524 = vpop.permute.xlu0 %2523
  %2525 = vrot.lane.b32.xlu0 %v2347, 48
  %v2526 = vpop.permute.xlu0 %2525
  %2527 = vrot.lane.b32.xlu0 %v2348, 48
  %v2528 = vpop.permute.xlu0 %2527
  %2529 = vrot.lane.b32.xlu0 %v2349, 48
  %v2530 = vpop.permute.xlu0 %2529
  %2531 = vrot.lane.b32.xlu0 %v2350, 48
  %v2532 = vpop.permute.xlu0 %2531
  %2533 = vrot.lane.b32.xlu0 %v2351, 48
  %v2534 = vpop.permute.xlu0 %2533
  %2535 = vrot.lane.b32.xlu0 %v2352, 48
  %v2536 = vpop.permute.xlu0 %2535
  %2537 = vrot.lane.b32.xlu0 %v2353, 48
  %v2538 = vpop.permute.xlu0 %2537
  %2539 = vrot.lane.b32.xlu0 %v2354, 48
  %v2540 = vpop.permute.xlu0 %2539
  %2541 = vrot.lane.b32.xlu0 %v2355, 48
  %v2542 = vpop.permute.xlu0 %2541
  %2543 = vrot.lane.b32.xlu0 %v2356, 48
  %v2544 = vpop.permute.xlu0 %2543
  %2545 = vrot.lane.b32.xlu0 %v2357, 48
  %v2546 = vpop.permute.xlu0 %2545
  %2547 = vrot.lane.b32.xlu0 %v2358, 48
  %v2548 = vpop.permute.xlu0 %2547
  %2549 = vrot.lane.b32.xlu0 %v2359, 48
  %v2550 = vpop.permute.xlu0 %2549
  %2551 = vrot.lane.b32.xlu0 %v2360, 48
  %v2552 = vpop.permute.xlu0 %2551
  %vm2617 = vcmask 458112
  %2618 = vst.msk [vmem:[#allocation3] sm:$0xff] %vm2617, %v2426
  %2619 = vst.msk [vmem:[#allocation3 + $0x8] sm:$0xff] %vm2617, %v2428
  %2620 = vst.msk [vmem:[#allocation3 + $0x10] sm:$0xff] %vm2617, %v2430
  %2621 = vst.msk [vmem:[#allocation3 + $0x18] sm:$0xff] %vm2617, %v2432
  %2622 = vst.msk [vmem:[#allocation3 + $0x20] sm:$0xff] %vm2617, %v2434
  %2623 = vst.msk [vmem:[#allocation3 + $0x28] sm:$0xff] %vm2617, %v2436
  %2624 = vst.msk [vmem:[#allocation3 + $0x30] sm:$0xff] %vm2617, %v2438
  %2625 = vst.msk [vmem:[#allocation3 + $0x38] sm:$0xff] %vm2617, %v2440
  %2626 = vst.msk [vmem:[#allocation3 + $0x40] sm:$0xff] %vm2617, %v2442
  %2627 = vst.msk [vmem:[#allocation3 + $0x48] sm:$0xff] %vm2617, %v2444
  %2628 = vst.msk [vmem:[#allocation3 + $0x50] sm:$0xff] %vm2617, %v2446
  %2629 = vst.msk [vmem:[#allocation3 + $0x58] sm:$0xff] %vm2617, %v2448
  %2630 = vst.msk [vmem:[#allocation3 + $0x60] sm:$0xff] %vm2617, %v2450
  %2631 = vst.msk [vmem:[#allocation3 + $0x68] sm:$0xff] %vm2617, %v2452
  %2632 = vst.msk [vmem:[#allocation3 + $0x70] sm:$0xff] %vm2617, %v2454
  %2633 = vst.msk [vmem:[#allocation3 + $0x78] sm:$0xff] %vm2617, %v2456
  %2634 = vst.msk [vmem:[#allocation3 + $0x80] sm:$0xff] %vm2617, %v2458
  %2635 = vst.msk [vmem:[#allocation3 + $0x88] sm:$0xff] %vm2617, %v2460
  %2636 = vst.msk [vmem:[#allocation3 + $0x90] sm:$0xff] %vm2617, %v2462
  %2637 = vst.msk [vmem:[#allocation3 + $0x98] sm:$0xff] %vm2617, %v2464
  %2638 = vst.msk [vmem:[#allocation3 + $0xa0] sm:$0xff] %vm2617, %v2466
  %2639 = vst.msk [vmem:[#allocation3 + $0xa8] sm:$0xff] %vm2617, %v2468
  %2640 = vst.msk [vmem:[#allocation3 + $0xb0] sm:$0xff] %vm2617, %v2470
  %2641 = vst.msk [vmem:[#allocation3 + $0xb8] sm:$0xff] %vm2617, %v2472
  %2642 = vst.msk [vmem:[#allocation3 + $0xc0] sm:$0xff] %vm2617, %v2474
  %2643 = vst.msk [vmem:[#allocation3 + $0xc8] sm:$0xff] %vm2617, %v2476
  %2644 = vst.msk [vmem:[#allocation3 + $0xd0] sm:$0xff] %vm2617, %v2478
  %2645 = vst.msk [vmem:[#allocation3 + $0xd8] sm:$0xff] %vm2617, %v2480
  %2646 = vst.msk [vmem:[#allocation3 + $0xe0] sm:$0xff] %vm2617, %v2482
  %2647 = vst.msk [vmem:[#allocation3 + $0xe8] sm:$0xff] %vm2617, %v2484
  %2648 = vst.msk [vmem:[#allocation3 + $0xf0] sm:$0xff] %vm2617, %v2486
  %2649 = vst.msk [vmem:[#allocation3 + $0xf8] sm:$0xff] %vm2617, %v2488
  %2650 = vst.msk [vmem:[#allocation3 + $0x100] sm:$0xff] %vm2617, %v2490
  %2651 = vst.msk [vmem:[#allocation3 + $0x108] sm:$0xff] %vm2617, %v2492
  %2652 = vst.msk [vmem:[#allocation3 + $0x110] sm:$0xff] %vm2617, %v2494
  %2653 = vst.msk [vmem:[#allocation3 + $0x118] sm:$0xff] %vm2617, %v2496
  %2654 = vst.msk [vmem:[#allocation3 + $0x120] sm:$0xff] %vm2617, %v2498
  %2655 = vst.msk [vmem:[#allocation3 + $0x128] sm:$0xff] %vm2617, %v2500
  %2656 = vst.msk [vmem:[#allocation3 + $0x130] sm:$0xff] %vm2617, %v2502
  %2657 = vst.msk [vmem:[#allocation3 + $0x138] sm:$0xff] %vm2617, %v2504
  %2658 = vst.msk [vmem:[#allocation3 + $0x140] sm:$0xff] %vm2617, %v2506
  %2659 = vst.msk [vmem:[#allocation3 + $0x148] sm:$0xff] %vm2617, %v2508
  %2660 = vst.msk [vmem:[#allocation3 + $0x150] sm:$0xff] %vm2617, %v2510
  %2661 = vst.msk [vmem:[#allocation3 + $0x158] sm:$0xff] %vm2617, %v2512
  %2662 = vst.msk [vmem:[#allocation3 + $0x160] sm:$0xff] %vm2617, %v2514
  %2663 = vst.msk [vmem:[#allocation3 + $0x168] sm:$0xff] %vm2617, %v2516
  %2664 = vst.msk [vmem:[#allocation3 + $0x170] sm:$0xff] %vm2617, %v2518
  %2665 = vst.msk [vmem:[#allocation3 + $0x178] sm:$0xff] %vm2617, %v2520
  %2666 = vst.msk [vmem:[#allocation3 + $0x180] sm:$0xff] %vm2617, %v2522
  %2667 = vst.msk [vmem:[#allocation3 + $0x188] sm:$0xff] %vm2617, %v2524
  %2668 = vst.msk [vmem:[#allocation3 + $0x190] sm:$0xff] %vm2617, %v2526
  %2669 = vst.msk [vmem:[#allocation3 + $0x198] sm:$0xff] %vm2617, %v2528
  %2670 = vst.msk [vmem:[#allocation3 + $0x1a0] sm:$0xff] %vm2617, %v2530
  %2671 = vst.msk [vmem:[#allocation3 + $0x1a8] sm:$0xff] %vm2617, %v2532
  %2672 = vst.msk [vmem:[#allocation3 + $0x1b0] sm:$0xff] %vm2617, %v2534
  %2673 = vst.msk [vmem:[#allocation3 + $0x1b8] sm:$0xff] %vm2617, %v2536
  %2674 = vst.msk [vmem:[#allocation3 + $0x1c0] sm:$0xff] %vm2617, %v2538
  %2675 = vst.msk [vmem:[#allocation3 + $0x1c8] sm:$0xff] %vm2617, %v2540
  %2676 = vst.msk [vmem:[#allocation3 + $0x1d0] sm:$0xff] %vm2617, %v2542
  %2677 = vst.msk [vmem:[#allocation3 + $0x1d8] sm:$0xff] %vm2617, %v2544
  %2678 = vst.msk [vmem:[#allocation3 + $0x1e0] sm:$0xff] %vm2617, %v2546
  %2679 = vst.msk [vmem:[#allocation3 + $0x1e8] sm:$0xff] %vm2617, %v2548
  %2680 = vst.msk [vmem:[#allocation3 + $0x1f0] sm:$0xff] %vm2617, %v2550
  %2681 = vst.msk [vmem:[#allocation3 + $0x1f8] sm:$0xff] %vm2617, %v2552
  %v2682 = vld [vmem:[%s2296 + $0x1] sm:$0xff]
  %v2683 = vld [vmem:[%s2296 + $0x9] sm:$0xff]
  %v2684 = vld [vmem:[%s2296 + $0x19] sm:$0xff]
  %v2685 = vld [vmem:[%s2296 + $0x21] sm:$0xff]
  %v2686 = vld [vmem:[%s2296 + $0x31] sm:$0xff]
  %v2687 = vld [vmem:[%s2296 + $0x39] sm:$0xff]
  %v2688 = vld [vmem:[%s2296 + $0x49] sm:$0xff]
  %v2689 = vld [vmem:[%s2296 + $0x51] sm:$0xff]
  %v2690 = vld [vmem:[%s2296 + $0x61] sm:$0xff]
  %v2691 = vld [vmem:[%s2296 + $0x69] sm:$0xff]
  %v2692 = vld [vmem:[%s2296 + $0x79] sm:$0xff]
  %v2693 = vld [vmem:[%s2296 + $0x81] sm:$0xff]
  %v2694 = vld [vmem:[%s2296 + $0x91] sm:$0xff]
  %v2695 = vld [vmem:[%s2296 + $0x99] sm:$0xff]
  %v2696 = vld [vmem:[%s2296 + $0xa9] sm:$0xff]
  %v2697 = vld [vmem:[%s2296 + $0xb1] sm:$0xff]
  %v2698 = vld [vmem:[%s2296 + $0xc1] sm:$0xff]
  %v2699 = vld [vmem:[%s2296 + $0xc9] sm:$0xff]
  %v2700 = vld [vmem:[%s2296 + $0xd9] sm:$0xff]
  %v2701 = vld [vmem:[%s2296 + $0xe1] sm:$0xff]
  %v2702 = vld [vmem:[%s2296 + $0xf1] sm:$0xff]
  %v2703 = vld [vmem:[%s2296 + $0xf9] sm:$0xff]
  %v2704 = vld [vmem:[%s2296 + $0x109] sm:$0xff]
  %v2705 = vld [vmem:[%s2296 + $0x111] sm:$0xff]
  %v2706 = vld [vmem:[%s2296 + $0x121] sm:$0xff]
  %v2707 = vld [vmem:[%s2296 + $0x129] sm:$0xff]
  %v2708 = vld [vmem:[%s2296 + $0x139] sm:$0xff]
  %v2709 = vld [vmem:[%s2296 + $0x141] sm:$0xff]
  %v2710 = vld [vmem:[%s2296 + $0x151] sm:$0xff]
  %v2711 = vld [vmem:[%s2296 + $0x159] sm:$0xff]
  %v2712 = vld [vmem:[%s2296 + $0x169] sm:$0xff]
  %v2713 = vld [vmem:[%s2296 + $0x171] sm:$0xff]
  %v2714 = vld [vmem:[%s2296 + $0x1b1] sm:$0xff]
  %v2715 = vld [vmem:[%s2296 + $0x1b9] sm:$0xff]
  %v2716 = vld [vmem:[%s2296 + $0x1c9] sm:$0xff]
  %v2717 = vld [vmem:[%s2296 + $0x1d1] sm:$0xff]
  %v2718 = vld [vmem:[%s2296 + $0x1e1] sm:$0xff]
  %v2719 = vld [vmem:[%s2296 + $0x1e9] sm:$0xff]
  %v2720 = vld [vmem:[%s2296 + $0x1f9] sm:$0xff]
  %v2721 = vld [vmem:[%s2296 + $0x201] sm:$0xff]
  %v2722 = vld [vmem:[%s2296 + $0x211] sm:$0xff]
  %v2723 = vld [vmem:[%s2296 + $0x219] sm:$0xff]
  %v2724 = vld [vmem:[%s2296 + $0x229] sm:$0xff]
  %v2725 = vld [vmem:[%s2296 + $0x231] sm:$0xff]
  %v2726 = vld [vmem:[%s2296 + $0x241] sm:$0xff]
  %v2727 = vld [vmem:[%s2296 + $0x249] sm:$0xff]
  %v2728 = vld [vmem:[%s2296 + $0x259] sm:$0xff]
  %v2729 = vld [vmem:[%s2296 + $0x261] sm:$0xff]
  %v2730 = vld [vmem:[%s2296 + $0x271] sm:$0xff]
  %v2731 = vld [vmem:[%s2296 + $0x279] sm:$0xff]
  %v2732 = vld [vmem:[%s2296 + $0x289] sm:$0xff]
  %v2733 = vld [vmem:[%s2296 + $0x291] sm:$0xff]
  %v2734 = vld [vmem:[%s2296 + $0x2a1] sm:$0xff]
  %v2735 = vld [vmem:[%s2296 + $0x2a9] sm:$0xff]
  %v2736 = vld [vmem:[%s2296 + $0x2b9] sm:$0xff]
  %v2737 = vld [vmem:[%s2296 + $0x2c1] sm:$0xff]
  %v2738 = vld [vmem:[%s2296 + $0x2d1] sm:$0xff]
  %v2739 = vld [vmem:[%s2296 + $0x2d9] sm:$0xff]
  %v2740 = vld [vmem:[%s2296 + $0x2e9] sm:$0xff]
  %v2741 = vld [vmem:[%s2296 + $0x2f1] sm:$0xff]
  %v2742 = vld [vmem:[%s2296 + $0x301] sm:$0xff]
  %v2743 = vld [vmem:[%s2296 + $0x309] sm:$0xff]
  %v2744 = vld [vmem:[%s2296 + $0x319] sm:$0xff]
  %v2745 = vld [vmem:[%s2296 + $0x321] sm:$0xff]
  %2810 = vrot.lane.b32.xlu0 %v2682, 56
  %v2811 = vpop.permute.xlu0 %2810
  %2812 = vrot.lane.b32.xlu0 %v2683, 56
  %v2813 = vpop.permute.xlu0 %2812
  %2814 = vrot.lane.b32.xlu0 %v2684, 56
  %v2815 = vpop.permute.xlu0 %2814
  %2816 = vrot.lane.b32.xlu0 %v2685, 56
  %v2817 = vpop.permute.xlu0 %2816
  %2818 = vrot.lane.b32.xlu0 %v2686, 56
  %v2819 = vpop.permute.xlu0 %2818
  %2820 = vrot.lane.b32.xlu0 %v2687, 56
  %v2821 = vpop.permute.xlu0 %2820
  %2822 = vrot.lane.b32.xlu0 %v2688, 56
  %v2823 = vpop.permute.xlu0 %2822
  %2824 = vrot.lane.b32.xlu0 %v2689, 56
  %v2825 = vpop.permute.xlu0 %2824
  %2826 = vrot.lane.b32.xlu0 %v2690, 56
  %v2827 = vpop.permute.xlu0 %2826
  %2828 = vrot.lane.b32.xlu0 %v2691, 56
  %v2829 = vpop.permute.xlu0 %2828
  %2830 = vrot.lane.b32.xlu0 %v2692, 56
  %v2831 = vpop.permute.xlu0 %2830
  %2832 = vrot.lane.b32.xlu0 %v2693, 56
  %v2833 = vpop.permute.xlu0 %2832
  %2834 = vrot.lane.b32.xlu0 %v2694, 56
  %v2835 = vpop.permute.xlu0 %2834
  %2836 = vrot.lane.b32.xlu0 %v2695, 56
  %v2837 = vpop.permute.xlu0 %2836
  %2838 = vrot.lane.b32.xlu0 %v2696, 56
  %v2839 = vpop.permute.xlu0 %2838
  %2840 = vrot.lane.b32.xlu0 %v2697, 56
  %v2841 = vpop.permute.xlu0 %2840
  %2842 = vrot.lane.b32.xlu0 %v2698, 56
  %v2843 = vpop.permute.xlu0 %2842
  %2844 = vrot.lane.b32.xlu0 %v2699, 56
  %v2845 = vpop.permute.xlu0 %2844
  %2846 = vrot.lane.b32.xlu0 %v2700, 56
  %v2847 = vpop.permute.xlu0 %2846
  %2848 = vrot.lane.b32.xlu0 %v2701, 56
  %v2849 = vpop.permute.xlu0 %2848
  %2850 = vrot.lane.b32.xlu0 %v2702, 56
  %v2851 = vpop.permute.xlu0 %2850
  %2852 = vrot.lane.b32.xlu0 %v2703, 56
  %v2853 = vpop.permute.xlu0 %2852
  %2854 = vrot.lane.b32.xlu0 %v2704, 56
  %v2855 = vpop.permute.xlu0 %2854
  %2856 = vrot.lane.b32.xlu0 %v2705, 56
  %v2857 = vpop.permute.xlu0 %2856
  %2858 = vrot.lane.b32.xlu0 %v2706, 56
  %v2859 = vpop.permute.xlu0 %2858
  %2860 = vrot.lane.b32.xlu0 %v2707, 56
  %v2861 = vpop.permute.xlu0 %2860
  %2862 = vrot.lane.b32.xlu0 %v2708, 56
  %v2863 = vpop.permute.xlu0 %2862
  %2864 = vrot.lane.b32.xlu0 %v2709, 56
  %v2865 = vpop.permute.xlu0 %2864
  %2866 = vrot.lane.b32.xlu0 %v2710, 56
  %v2867 = vpop.permute.xlu0 %2866
  %2868 = vrot.lane.b32.xlu0 %v2711, 56
  %v2869 = vpop.permute.xlu0 %2868
  %2870 = vrot.lane.b32.xlu0 %v2712, 56
  %v2871 = vpop.permute.xlu0 %2870
  %2872 = vrot.lane.b32.xlu0 %v2713, 56
  %v2873 = vpop.permute.xlu0 %2872
  %2874 = vrot.lane.b32.xlu0 %v2714, 56
  %v2875 = vpop.permute.xlu0 %2874
  %2876 = vrot.lane.b32.xlu0 %v2715, 56
  %v2877 = vpop.permute.xlu0 %2876
  %2878 = vrot.lane.b32.xlu0 %v2716, 56
  %v2879 = vpop.permute.xlu0 %2878
  %2880 = vrot.lane.b32.xlu0 %v2717, 56
  %v2881 = vpop.permute.xlu0 %2880
  %2882 = vrot.lane.b32.xlu0 %v2718, 56
  %v2883 = vpop.permute.xlu0 %2882
  %2884 = vrot.lane.b32.xlu0 %v2719, 56
  %v2885 = vpop.permute.xlu0 %2884
  %2886 = vrot.lane.b32.xlu0 %v2720, 56
  %v2887 = vpop.permute.xlu0 %2886
  %2888 = vrot.lane.b32.xlu0 %v2721, 56
  %v2889 = vpop.permute.xlu0 %2888
  %2890 = vrot.lane.b32.xlu0 %v2722, 56
  %v2891 = vpop.permute.xlu0 %2890
  %2892 = vrot.lane.b32.xlu0 %v2723, 56
  %v2893 = vpop.permute.xlu0 %2892
  %2894 = vrot.lane.b32.xlu0 %v2724, 56
  %v2895 = vpop.permute.xlu0 %2894
  %2896 = vrot.lane.b32.xlu0 %v2725, 56
  %v2897 = vpop.permute.xlu0 %2896
  %2898 = vrot.lane.b32.xlu0 %v2726, 56
  %v2899 = vpop.permute.xlu0 %2898
  %2900 = vrot.lane.b32.xlu0 %v2727, 56
  %v2901 = vpop.permute.xlu0 %2900
  %2902 = vrot.lane.b32.xlu0 %v2728, 56
  %v2903 = vpop.permute.xlu0 %2902
  %2904 = vrot.lane.b32.xlu0 %v2729, 56
  %v2905 = vpop.permute.xlu0 %2904
  %2906 = vrot.lane.b32.xlu0 %v2730, 56
  %v2907 = vpop.permute.xlu0 %2906
  %2908 = vrot.lane.b32.xlu0 %v2731, 56
  %v2909 = vpop.permute.xlu0 %2908
  %2910 = vrot.lane.b32.xlu0 %v2732, 56
  %v2911 = vpop.permute.xlu0 %2910
  %2912 = vrot.lane.b32.xlu0 %v2733, 56
  %v2913 = vpop.permute.xlu0 %2912
  %2914 = vrot.lane.b32.xlu0 %v2734, 56
  %v2915 = vpop.permute.xlu0 %2914
  %2916 = vrot.lane.b32.xlu0 %v2735, 56
  %v2917 = vpop.permute.xlu0 %2916
  %2918 = vrot.lane.b32.xlu0 %v2736, 56
  %v2919 = vpop.permute.xlu0 %2918
  %2920 = vrot.lane.b32.xlu0 %v2737, 56
  %v2921 = vpop.permute.xlu0 %2920
  %2922 = vrot.lane.b32.xlu0 %v2738, 56
  %v2923 = vpop.permute.xlu0 %2922
  %2924 = vrot.lane.b32.xlu0 %v2739, 56
  %v2925 = vpop.permute.xlu0 %2924
  %2926 = vrot.lane.b32.xlu0 %v2740, 56
  %v2927 = vpop.permute.xlu0 %2926
  %2928 = vrot.lane.b32.xlu0 %v2741, 56
  %v2929 = vpop.permute.xlu0 %2928
  %2930 = vrot.lane.b32.xlu0 %v2742, 56
  %v2931 = vpop.permute.xlu0 %2930
  %2932 = vrot.lane.b32.xlu0 %v2743, 56
  %v2933 = vpop.permute.xlu0 %2932
  %2934 = vrot.lane.b32.xlu0 %v2744, 56
  %v2935 = vpop.permute.xlu0 %2934
  %2936 = vrot.lane.b32.xlu0 %v2745, 56
  %v2937 = vpop.permute.xlu0 %2936
  %vm3002 = vcmask 523712
  %3003 = vst.msk [vmem:[#allocation3] sm:$0xff] %vm3002, %v2811
  %3004 = vst.msk [vmem:[#allocation3 + $0x8] sm:$0xff] %vm3002, %v2813
  %3005 = vst.msk [vmem:[#allocation3 + $0x10] sm:$0xff] %vm3002, %v2815
  %3006 = vst.msk [vmem:[#allocation3 + $0x18] sm:$0xff] %vm3002, %v2817
  %3007 = vst.msk [vmem:[#allocation3 + $0x20] sm:$0xff] %vm3002, %v2819
  %3008 = vst.msk [vmem:[#allocation3 + $0x28] sm:$0xff] %vm3002, %v2821
  %3009 = vst.msk [vmem:[#allocation3 + $0x30] sm:$0xff] %vm3002, %v2823
  %3010 = vst.msk [vmem:[#allocation3 + $0x38] sm:$0xff] %vm3002, %v2825
  %3011 = vst.msk [vmem:[#allocation3 + $0x40] sm:$0xff] %vm3002, %v2827
  %3012 = vst.msk [vmem:[#allocation3 + $0x48] sm:$0xff] %vm3002, %v2829
  %3013 = vst.msk [vmem:[#allocation3 + $0x50] sm:$0xff] %vm3002, %v2831
  %3014 = vst.msk [vmem:[#allocation3 + $0x58] sm:$0xff] %vm3002, %v2833
  %3015 = vst.msk [vmem:[#allocation3 + $0x60] sm:$0xff] %vm3002, %v2835
  %3016 = vst.msk [vmem:[#allocation3 + $0x68] sm:$0xff] %vm3002, %v2837
  %3017 = vst.msk [vmem:[#allocation3 + $0x70] sm:$0xff] %vm3002, %v2839
  %3018 = vst.msk [vmem:[#allocation3 + $0x78] sm:$0xff] %vm3002, %v2841
  %3019 = vst.msk [vmem:[#allocation3 + $0x80] sm:$0xff] %vm3002, %v2843
  %3020 = vst.msk [vmem:[#allocation3 + $0x88] sm:$0xff] %vm3002, %v2845
  %3021 = vst.msk [vmem:[#allocation3 + $0x90] sm:$0xff] %vm3002, %v2847
  %3022 = vst.msk [vmem:[#allocation3 + $0x98] sm:$0xff] %vm3002, %v2849
  %3023 = vst.msk [vmem:[#allocation3 + $0xa0] sm:$0xff] %vm3002, %v2851
  %3024 = vst.msk [vmem:[#allocation3 + $0xa8] sm:$0xff] %vm3002, %v2853
  %3025 = vst.msk [vmem:[#allocation3 + $0xb0] sm:$0xff] %vm3002, %v2855
  %3026 = vst.msk [vmem:[#allocation3 + $0xb8] sm:$0xff] %vm3002, %v2857
  %3027 = vst.msk [vmem:[#allocation3 + $0xc0] sm:$0xff] %vm3002, %v2859
  %3028 = vst.msk [vmem:[#allocation3 + $0xc8] sm:$0xff] %vm3002, %v2861
  %3029 = vst.msk [vmem:[#allocation3 + $0xd0] sm:$0xff] %vm3002, %v2863
  %3030 = vst.msk [vmem:[#allocation3 + $0xd8] sm:$0xff] %vm3002, %v2865
  %3031 = vst.msk [vmem:[#allocation3 + $0xe0] sm:$0xff] %vm3002, %v2867
  %3032 = vst.msk [vmem:[#allocation3 + $0xe8] sm:$0xff] %vm3002, %v2869
  %3033 = vst.msk [vmem:[#allocation3 + $0xf0] sm:$0xff] %vm3002, %v2871
  %3034 = vst.msk [vmem:[#allocation3 + $0xf8] sm:$0xff] %vm3002, %v2873
  %3035 = vst.msk [vmem:[#allocation3 + $0x100] sm:$0xff] %vm3002, %v2875
  %3036 = vst.msk [vmem:[#allocation3 + $0x108] sm:$0xff] %vm3002, %v2877
  %3037 = vst.msk [vmem:[#allocation3 + $0x110] sm:$0xff] %vm3002, %v2879
  %3038 = vst.msk [vmem:[#allocation3 + $0x118] sm:$0xff] %vm3002, %v2881
  %3039 = vst.msk [vmem:[#allocation3 + $0x120] sm:$0xff] %vm3002, %v2883
  %3040 = vst.msk [vmem:[#allocation3 + $0x128] sm:$0xff] %vm3002, %v2885
  %3041 = vst.msk [vmem:[#allocation3 + $0x130] sm:$0xff] %vm3002, %v2887
  %3042 = vst.msk [vmem:[#allocation3 + $0x138] sm:$0xff] %vm3002, %v2889
  %3043 = vst.msk [vmem:[#allocation3 + $0x140] sm:$0xff] %vm3002, %v2891
  %3044 = vst.msk [vmem:[#allocation3 + $0x148] sm:$0xff] %vm3002, %v2893
  %3045 = vst.msk [vmem:[#allocation3 + $0x150] sm:$0xff] %vm3002, %v2895
  %3046 = vst.msk [vmem:[#allocation3 + $0x158] sm:$0xff] %vm3002, %v2897
  %3047 = vst.msk [vmem:[#allocation3 + $0x160] sm:$0xff] %vm3002, %v2899
  %3048 = vst.msk [vmem:[#allocation3 + $0x168] sm:$0xff] %vm3002, %v2901
  %3049 = vst.msk [vmem:[#allocation3 + $0x170] sm:$0xff] %vm3002, %v2903
  %3050 = vst.msk [vmem:[#allocation3 + $0x178] sm:$0xff] %vm3002, %v2905
  %3051 = vst.msk [vmem:[#allocation3 + $0x180] sm:$0xff] %vm3002, %v2907
  %3052 = vst.msk [vmem:[#allocation3 + $0x188] sm:$0xff] %vm3002, %v2909
  %3053 = vst.msk [vmem:[#allocation3 + $0x190] sm:$0xff] %vm3002, %v2911
  %3054 = vst.msk [vmem:[#allocation3 + $0x198] sm:$0xff] %vm3002, %v2913
  %3055 = vst.msk [vmem:[#allocation3 + $0x1a0] sm:$0xff] %vm3002, %v2915
  %3056 = vst.msk [vmem:[#allocation3 + $0x1a8] sm:$0xff] %vm3002, %v2917
  %3057 = vst.msk [vmem:[#allocation3 + $0x1b0] sm:$0xff] %vm3002, %v2919
  %3058 = vst.msk [vmem:[#allocation3 + $0x1b8] sm:$0xff] %vm3002, %v2921
  %3059 = vst.msk [vmem:[#allocation3 + $0x1c0] sm:$0xff] %vm3002, %v2923
  %3060 = vst.msk [vmem:[#allocation3 + $0x1c8] sm:$0xff] %vm3002, %v2925
  %3061 = vst.msk [vmem:[#allocation3 + $0x1d0] sm:$0xff] %vm3002, %v2927
  %3062 = vst.msk [vmem:[#allocation3 + $0x1d8] sm:$0xff] %vm3002, %v2929
  %3063 = vst.msk [vmem:[#allocation3 + $0x1e0] sm:$0xff] %vm3002, %v2931
  %3064 = vst.msk [vmem:[#allocation3 + $0x1e8] sm:$0xff] %vm3002, %v2933
  %3065 = vst.msk [vmem:[#allocation3 + $0x1f0] sm:$0xff] %vm3002, %v2935
  %3066 = vst.msk [vmem:[#allocation3 + $0x1f8] sm:$0xff] %vm3002, %v2937
  %v3067 = vld [vmem:[%s2296 + $0x2] sm:$0xff]
  %v3068 = vld [vmem:[%s2296 + $0xa] sm:$0xff]
  %v3069 = vld [vmem:[%s2296 + $0x1a] sm:$0xff]
  %v3070 = vld [vmem:[%s2296 + $0x22] sm:$0xff]
  %v3071 = vld [vmem:[%s2296 + $0x32] sm:$0xff]
  %v3072 = vld [vmem:[%s2296 + $0x3a] sm:$0xff]
  %v3073 = vld [vmem:[%s2296 + $0x4a] sm:$0xff]
  %v3074 = vld [vmem:[%s2296 + $0x52] sm:$0xff]
  %v3075 = vld [vmem:[%s2296 + $0x62] sm:$0xff]
  %v3076 = vld [vmem:[%s2296 + $0x6a] sm:$0xff]
  %v3077 = vld [vmem:[%s2296 + $0x7a] sm:$0xff]
  %v3078 = vld [vmem:[%s2296 + $0x82] sm:$0xff]
  %v3079 = vld [vmem:[%s2296 + $0x92] sm:$0xff]
  %v3080 = vld [vmem:[%s2296 + $0x9a] sm:$0xff]
  %v3081 = vld [vmem:[%s2296 + $0xaa] sm:$0xff]
  %v3082 = vld [vmem:[%s2296 + $0xb2] sm:$0xff]
  %v3083 = vld [vmem:[%s2296 + $0xc2] sm:$0xff]
  %v3084 = vld [vmem:[%s2296 + $0xca] sm:$0xff]
  %v3085 = vld [vmem:[%s2296 + $0xda] sm:$0xff]
  %v3086 = vld [vmem:[%s2296 + $0xe2] sm:$0xff]
  %v3087 = vld [vmem:[%s2296 + $0xf2] sm:$0xff]
  %v3088 = vld [vmem:[%s2296 + $0xfa] sm:$0xff]
  %v3089 = vld [vmem:[%s2296 + $0x10a] sm:$0xff]
  %v3090 = vld [vmem:[%s2296 + $0x112] sm:$0xff]
  %v3091 = vld [vmem:[%s2296 + $0x122] sm:$0xff]
  %v3092 = vld [vmem:[%s2296 + $0x12a] sm:$0xff]
  %v3093 = vld [vmem:[%s2296 + $0x13a] sm:$0xff]
  %v3094 = vld [vmem:[%s2296 + $0x142] sm:$0xff]
  %v3095 = vld [vmem:[%s2296 + $0x152] sm:$0xff]
  %v3096 = vld [vmem:[%s2296 + $0x15a] sm:$0xff]
  %v3097 = vld [vmem:[%s2296 + $0x16a] sm:$0xff]
  %v3098 = vld [vmem:[%s2296 + $0x172] sm:$0xff]
  %v3099 = vld [vmem:[%s2296 + $0x1b2] sm:$0xff]
  %v3100 = vld [vmem:[%s2296 + $0x1ba] sm:$0xff]
  %v3101 = vld [vmem:[%s2296 + $0x1ca] sm:$0xff]
  %v3102 = vld [vmem:[%s2296 + $0x1d2] sm:$0xff]
  %v3103 = vld [vmem:[%s2296 + $0x1e2] sm:$0xff]
  %v3104 = vld [vmem:[%s2296 + $0x1ea] sm:$0xff]
  %v3105 = vld [vmem:[%s2296 + $0x1fa] sm:$0xff]
  %v3106 = vld [vmem:[%s2296 + $0x202] sm:$0xff]
  %v3107 = vld [vmem:[%s2296 + $0x212] sm:$0xff]
  %v3108 = vld [vmem:[%s2296 + $0x21a] sm:$0xff]
  %v3109 = vld [vmem:[%s2296 + $0x22a] sm:$0xff]
  %v3110 = vld [vmem:[%s2296 + $0x232] sm:$0xff]
  %v3111 = vld [vmem:[%s2296 + $0x242] sm:$0xff]
  %v3112 = vld [vmem:[%s2296 + $0x24a] sm:$0xff]
  %v3113 = vld [vmem:[%s2296 + $0x25a] sm:$0xff]
  %v3114 = vld [vmem:[%s2296 + $0x262] sm:$0xff]
  %v3115 = vld [vmem:[%s2296 + $0x272] sm:$0xff]
  %v3116 = vld [vmem:[%s2296 + $0x27a] sm:$0xff]
  %v3117 = vld [vmem:[%s2296 + $0x28a] sm:$0xff]
  %v3118 = vld [vmem:[%s2296 + $0x292] sm:$0xff]
  %v3119 = vld [vmem:[%s2296 + $0x2a2] sm:$0xff]
  %v3120 = vld [vmem:[%s2296 + $0x2aa] sm:$0xff]
  %v3121 = vld [vmem:[%s2296 + $0x2ba] sm:$0xff]
  %v3122 = vld [vmem:[%s2296 + $0x2c2] sm:$0xff]
  %v3123 = vld [vmem:[%s2296 + $0x2d2] sm:$0xff]
  %v3124 = vld [vmem:[%s2296 + $0x2da] sm:$0xff]
  %v3125 = vld [vmem:[%s2296 + $0x2ea] sm:$0xff]
  %v3126 = vld [vmem:[%s2296 + $0x2f2] sm:$0xff]
  %v3127 = vld [vmem:[%s2296 + $0x302] sm:$0xff]
  %v3128 = vld [vmem:[%s2296 + $0x30a] sm:$0xff]
  %v3129 = vld [vmem:[%s2296 + $0x31a] sm:$0xff]
  %v3130 = vld [vmem:[%s2296 + $0x322] sm:$0xff]
  %3195 = vrot.lane.b32.xlu0 %v3067, 64
  %v3196 = vpop.permute.xlu0 %3195
  %3197 = vrot.lane.b32.xlu0 %v3068, 64
  %v3198 = vpop.permute.xlu0 %3197
  %3199 = vrot.lane.b32.xlu0 %v3069, 64
  %v3200 = vpop.permute.xlu0 %3199
  %3201 = vrot.lane.b32.xlu0 %v3070, 64
  %v3202 = vpop.permute.xlu0 %3201
  %3203 = vrot.lane.b32.xlu0 %v3071, 64
  %v3204 = vpop.permute.xlu0 %3203
  %3205 = vrot.lane.b32.xlu0 %v3072, 64
  %v3206 = vpop.permute.xlu0 %3205
  %3207 = vrot.lane.b32.xlu0 %v3073, 64
  %v3208 = vpop.permute.xlu0 %3207
  %3209 = vrot.lane.b32.xlu0 %v3074, 64
  %v3210 = vpop.permute.xlu0 %3209
  %3211 = vrot.lane.b32.xlu0 %v3075, 64
  %v3212 = vpop.permute.xlu0 %3211
  %3213 = vrot.lane.b32.xlu0 %v3076, 64
  %v3214 = vpop.permute.xlu0 %3213
  %3215 = vrot.lane.b32.xlu0 %v3077, 64
  %v3216 = vpop.permute.xlu0 %3215
  %3217 = vrot.lane.b32.xlu0 %v3078, 64
  %v3218 = vpop.permute.xlu0 %3217
  %3219 = vrot.lane.b32.xlu0 %v3079, 64
  %v3220 = vpop.permute.xlu0 %3219
  %3221 = vrot.lane.b32.xlu0 %v3080, 64
  %v3222 = vpop.permute.xlu0 %3221
  %3223 = vrot.lane.b32.xlu0 %v3081, 64
  %v3224 = vpop.permute.xlu0 %3223
  %3225 = vrot.lane.b32.xlu0 %v3082, 64
  %v3226 = vpop.permute.xlu0 %3225
  %3227 = vrot.lane.b32.xlu0 %v3083, 64
  %v3228 = vpop.permute.xlu0 %3227
  %3229 = vrot.lane.b32.xlu0 %v3084, 64
  %v3230 = vpop.permute.xlu0 %3229
  %3231 = vrot.lane.b32.xlu0 %v3085, 64
  %v3232 = vpop.permute.xlu0 %3231
  %3233 = vrot.lane.b32.xlu0 %v3086, 64
  %v3234 = vpop.permute.xlu0 %3233
  %3235 = vrot.lane.b32.xlu0 %v3087, 64
  %v3236 = vpop.permute.xlu0 %3235
  %3237 = vrot.lane.b32.xlu0 %v3088, 64
  %v3238 = vpop.permute.xlu0 %3237
  %3239 = vrot.lane.b32.xlu0 %v3089, 64
  %v3240 = vpop.permute.xlu0 %3239
  %3241 = vrot.lane.b32.xlu0 %v3090, 64
  %v3242 = vpop.permute.xlu0 %3241
  %3243 = vrot.lane.b32.xlu0 %v3091, 64
  %v3244 = vpop.permute.xlu0 %3243
  %3245 = vrot.lane.b32.xlu0 %v3092, 64
  %v3246 = vpop.permute.xlu0 %3245
  %3247 = vrot.lane.b32.xlu0 %v3093, 64
  %v3248 = vpop.permute.xlu0 %3247
  %3249 = vrot.lane.b32.xlu0 %v3094, 64
  %v3250 = vpop.permute.xlu0 %3249
  %3251 = vrot.lane.b32.xlu0 %v3095, 64
  %v3252 = vpop.permute.xlu0 %3251
  %3253 = vrot.lane.b32.xlu0 %v3096, 64
  %v3254 = vpop.permute.xlu0 %3253
  %3255 = vrot.lane.b32.xlu0 %v3097, 64
  %v3256 = vpop.permute.xlu0 %3255
  %3257 = vrot.lane.b32.xlu0 %v3098, 64
  %v3258 = vpop.permute.xlu0 %3257
  %3259 = vrot.lane.b32.xlu0 %v3099, 64
  %v3260 = vpop.permute.xlu0 %3259
  %3261 = vrot.lane.b32.xlu0 %v3100, 64
  %v3262 = vpop.permute.xlu0 %3261
  %3263 = vrot.lane.b32.xlu0 %v3101, 64
  %v3264 = vpop.permute.xlu0 %3263
  %3265 = vrot.lane.b32.xlu0 %v3102, 64
  %v3266 = vpop.permute.xlu0 %3265
  %3267 = vrot.lane.b32.xlu0 %v3103, 64
  %v3268 = vpop.permute.xlu0 %3267
  %3269 = vrot.lane.b32.xlu0 %v3104, 64
  %v3270 = vpop.permute.xlu0 %3269
  %3271 = vrot.lane.b32.xlu0 %v3105, 64
  %v3272 = vpop.permute.xlu0 %3271
  %3273 = vrot.lane.b32.xlu0 %v3106, 64
  %v3274 = vpop.permute.xlu0 %3273
  %3275 = vrot.lane.b32.xlu0 %v3107, 64
  %v3276 = vpop.permute.xlu0 %3275
  %3277 = vrot.lane.b32.xlu0 %v3108, 64
  %v3278 = vpop.permute.xlu0 %3277
  %3279 = vrot.lane.b32.xlu0 %v3109, 64
  %v3280 = vpop.permute.xlu0 %3279
  %3281 = vrot.lane.b32.xlu0 %v3110, 64
  %v3282 = vpop.permute.xlu0 %3281
  %3283 = vrot.lane.b32.xlu0 %v3111, 64
  %v3284 = vpop.permute.xlu0 %3283
  %3285 = vrot.lane.b32.xlu0 %v3112, 64
  %v3286 = vpop.permute.xlu0 %3285
  %3287 = vrot.lane.b32.xlu0 %v3113, 64
  %v3288 = vpop.permute.xlu0 %3287
  %3289 = vrot.lane.b32.xlu0 %v3114, 64
  %v3290 = vpop.permute.xlu0 %3289
  %3291 = vrot.lane.b32.xlu0 %v3115, 64
  %v3292 = vpop.permute.xlu0 %3291
  %3293 = vrot.lane.b32.xlu0 %v3116, 64
  %v3294 = vpop.permute.xlu0 %3293
  %3295 = vrot.lane.b32.xlu0 %v3117, 64
  %v3296 = vpop.permute.xlu0 %3295
  %3297 = vrot.lane.b32.xlu0 %v3118, 64
  %v3298 = vpop.permute.xlu0 %3297
  %3299 = vrot.lane.b32.xlu0 %v3119, 64
  %v3300 = vpop.permute.xlu0 %3299
  %3301 = vrot.lane.b32.xlu0 %v3120, 64
  %v3302 = vpop.permute.xlu0 %3301
  %3303 = vrot.lane.b32.xlu0 %v3121, 64
  %v3304 = vpop.permute.xlu0 %3303
  %3305 = vrot.lane.b32.xlu0 %v3122, 64
  %v3306 = vpop.permute.xlu0 %3305
  %3307 = vrot.lane.b32.xlu0 %v3123, 64
  %v3308 = vpop.permute.xlu0 %3307
  %3309 = vrot.lane.b32.xlu0 %v3124, 64
  %v3310 = vpop.permute.xlu0 %3309
  %3311 = vrot.lane.b32.xlu0 %v3125, 64
  %v3312 = vpop.permute.xlu0 %3311
  %3313 = vrot.lane.b32.xlu0 %v3126, 64
  %v3314 = vpop.permute.xlu0 %3313
  %3315 = vrot.lane.b32.xlu0 %v3127, 64
  %v3316 = vpop.permute.xlu0 %3315
  %3317 = vrot.lane.b32.xlu0 %v3128, 64
  %v3318 = vpop.permute.xlu0 %3317
  %3319 = vrot.lane.b32.xlu0 %v3129, 64
  %v3320 = vpop.permute.xlu0 %3319
  %3321 = vrot.lane.b32.xlu0 %v3130, 64
  %v3322 = vpop.permute.xlu0 %3321
  %vm3387 = vcmask 589312
  %3388 = vst.msk [vmem:[#allocation3] sm:$0xff] %vm3387, %v3196
  %3389 = vst.msk [vmem:[#allocation3 + $0x8] sm:$0xff] %vm3387, %v3198
  %3390 = vst.msk [vmem:[#allocation3 + $0x10] sm:$0xff] %vm3387, %v3200
  %3391 = vst.msk [vmem:[#allocation3 + $0x18] sm:$0xff] %vm3387, %v3202
  %3392 = vst.msk [vmem:[#allocation3 + $0x20] sm:$0xff] %vm3387, %v3204
  %3393 = vst.msk [vmem:[#allocation3 + $0x28] sm:$0xff] %vm3387, %v3206
  %3394 = vst.msk [vmem:[#allocation3 + $0x30] sm:$0xff] %vm3387, %v3208
  %3395 = vst.msk [vmem:[#allocation3 + $0x38] sm:$0xff] %vm3387, %v3210
  %3396 = vst.msk [vmem:[#allocation3 + $0x40] sm:$0xff] %vm3387, %v3212
  %3397 = vst.msk [vmem:[#allocation3 + $0x48] sm:$0xff] %vm3387, %v3214
  %3398 = vst.msk [vmem:[#allocation3 + $0x50] sm:$0xff] %vm3387, %v3216
  %3399 = vst.msk [vmem:[#allocation3 + $0x58] sm:$0xff] %vm3387, %v3218
  %3400 = vst.msk [vmem:[#allocation3 + $0x60] sm:$0xff] %vm3387, %v3220
  %3401 = vst.msk [vmem:[#allocation3 + $0x68] sm:$0xff] %vm3387, %v3222
  %3402 = vst.msk [vmem:[#allocation3 + $0x70] sm:$0xff] %vm3387, %v3224
  %3403 = vst.msk [vmem:[#allocation3 + $0x78] sm:$0xff] %vm3387, %v3226
  %3404 = vst.msk [vmem:[#allocation3 + $0x80] sm:$0xff] %vm3387, %v3228
  %3405 = vst.msk [vmem:[#allocation3 + $0x88] sm:$0xff] %vm3387, %v3230
  %3406 = vst.msk [vmem:[#allocation3 + $0x90] sm:$0xff] %vm3387, %v3232
  %3407 = vst.msk [vmem:[#allocation3 + $0x98] sm:$0xff] %vm3387, %v3234
  %3408 = vst.msk [vmem:[#allocation3 + $0xa0] sm:$0xff] %vm3387, %v3236
  %3409 = vst.msk [vmem:[#allocation3 + $0xa8] sm:$0xff] %vm3387, %v3238
  %3410 = vst.msk [vmem:[#allocation3 + $0xb0] sm:$0xff] %vm3387, %v3240
  %3411 = vst.msk [vmem:[#allocation3 + $0xb8] sm:$0xff] %vm3387, %v3242
  %3412 = vst.msk [vmem:[#allocation3 + $0xc0] sm:$0xff] %vm3387, %v3244
  %3413 = vst.msk [vmem:[#allocation3 + $0xc8] sm:$0xff] %vm3387, %v3246
  %3414 = vst.msk [vmem:[#allocation3 + $0xd0] sm:$0xff] %vm3387, %v3248
  %3415 = vst.msk [vmem:[#allocation3 + $0xd8] sm:$0xff] %vm3387, %v3250
  %3416 = vst.msk [vmem:[#allocation3 + $0xe0] sm:$0xff] %vm3387, %v3252
  %3417 = vst.msk [vmem:[#allocation3 + $0xe8] sm:$0xff] %vm3387, %v3254
  %3418 = vst.msk [vmem:[#allocation3 + $0xf0] sm:$0xff] %vm3387, %v3256
  %3419 = vst.msk [vmem:[#allocation3 + $0xf8] sm:$0xff] %vm3387, %v3258
  %3420 = vst.msk [vmem:[#allocation3 + $0x100] sm:$0xff] %vm3387, %v3260
  %3421 = vst.msk [vmem:[#allocation3 + $0x108] sm:$0xff] %vm3387, %v3262
  %3422 = vst.msk [vmem:[#allocation3 + $0x110] sm:$0xff] %vm3387, %v3264
  %3423 = vst.msk [vmem:[#allocation3 + $0x118] sm:$0xff] %vm3387, %v3266
  %3424 = vst.msk [vmem:[#allocation3 + $0x120] sm:$0xff] %vm3387, %v3268
  %3425 = vst.msk [vmem:[#allocation3 + $0x128] sm:$0xff] %vm3387, %v3270
  %3426 = vst.msk [vmem:[#allocation3 + $0x130] sm:$0xff] %vm3387, %v3272
  %3427 = vst.msk [vmem:[#allocation3 + $0x138] sm:$0xff] %vm3387, %v3274
  %3428 = vst.msk [vmem:[#allocation3 + $0x140] sm:$0xff] %vm3387, %v3276
  %3429 = vst.msk [vmem:[#allocation3 + $0x148] sm:$0xff] %vm3387, %v3278
  %3430 = vst.msk [vmem:[#allocation3 + $0x150] sm:$0xff] %vm3387, %v3280
  %3431 = vst.msk [vmem:[#allocation3 + $0x158] sm:$0xff] %vm3387, %v3282
  %3432 = vst.msk [vmem:[#allocation3 + $0x160] sm:$0xff] %vm3387, %v3284
  %3433 = vst.msk [vmem:[#allocation3 + $0x168] sm:$0xff] %vm3387, %v3286
  %3434 = vst.msk [vmem:[#allocation3 + $0x170] sm:$0xff] %vm3387, %v3288
  %3435 = vst.msk [vmem:[#allocation3 + $0x178] sm:$0xff] %vm3387, %v3290
  %3436 = vst.msk [vmem:[#allocation3 + $0x180] sm:$0xff] %vm3387, %v3292
  %3437 = vst.msk [vmem:[#allocation3 + $0x188] sm:$0xff] %vm3387, %v3294
  %3438 = vst.msk [vmem:[#allocation3 + $0x190] sm:$0xff] %vm3387, %v3296
  %3439 = vst.msk [vmem:[#allocation3 + $0x198] sm:$0xff] %vm3387, %v3298
  %3440 = vst.msk [vmem:[#allocation3 + $0x1a0] sm:$0xff] %vm3387, %v3300
  %3441 = vst.msk [vmem:[#allocation3 + $0x1a8] sm:$0xff] %vm3387, %v3302
  %3442 = vst.msk [vmem:[#allocation3 + $0x1b0] sm:$0xff] %vm3387, %v3304
  %3443 = vst.msk [vmem:[#allocation3 + $0x1b8] sm:$0xff] %vm3387, %v3306
  %3444 = vst.msk [vmem:[#allocation3 + $0x1c0] sm:$0xff] %vm3387, %v3308
  %3445 = vst.msk [vmem:[#allocation3 + $0x1c8] sm:$0xff] %vm3387, %v3310
  %3446 = vst.msk [vmem:[#allocation3 + $0x1d0] sm:$0xff] %vm3387, %v3312
  %3447 = vst.msk [vmem:[#allocation3 + $0x1d8] sm:$0xff] %vm3387, %v3314
  %3448 = vst.msk [vmem:[#allocation3 + $0x1e0] sm:$0xff] %vm3387, %v3316
  %3449 = vst.msk [vmem:[#allocation3 + $0x1e8] sm:$0xff] %vm3387, %v3318
  %3450 = vst.msk [vmem:[#allocation3 + $0x1f0] sm:$0xff] %vm3387, %v3320
  %3451 = vst.msk [vmem:[#allocation3 + $0x1f8] sm:$0xff] %vm3387, %v3322
  %v3452 = vld [vmem:[#allocation3] sm:$0xff]
  %v3453 = vld [vmem:[#allocation3 + $0x8] sm:$0xff]
  %v3454 = vld [vmem:[#allocation3 + $0x10] sm:$0xff]
  %v3455 = vld [vmem:[#allocation3 + $0x18] sm:$0xff]
  %v3456 = vld [vmem:[#allocation3 + $0x20] sm:$0xff]
  %v3457 = vld [vmem:[#allocation3 + $0x28] sm:$0xff]
  %v3458 = vld [vmem:[#allocation3 + $0x30] sm:$0xff]
  %v3459 = vld [vmem:[#allocation3 + $0x38] sm:$0xff]
  %v3460 = vld [vmem:[#allocation3 + $0x40] sm:$0xff]
  %v3461 = vld [vmem:[#allocation3 + $0x48] sm:$0xff]
  %v3462 = vld [vmem:[#allocation3 + $0x50] sm:$0xff]
  %v3463 = vld [vmem:[#allocation3 + $0x58] sm:$0xff]
  %v3464 = vld [vmem:[#allocation3 + $0x60] sm:$0xff]
  %v3465 = vld [vmem:[#allocation3 + $0x68] sm:$0xff]
  %v3466 = vld [vmem:[#allocation3 + $0x70] sm:$0xff]
  %v3467 = vld [vmem:[#allocation3 + $0x78] sm:$0xff]
  %v3468 = vld [vmem:[#allocation3 + $0x80] sm:$0xff]
  %v3469 = vld [vmem:[#allocation3 + $0x88] sm:$0xff]
  %v3470 = vld [vmem:[#allocation3 + $0x90] sm:$0xff]
  %v3471 = vld [vmem:[#allocation3 + $0x98] sm:$0xff]
  %v3472 = vld [vmem:[#allocation3 + $0xa0] sm:$0xff]
  %v3473 = vld [vmem:[#allocation3 + $0xa8] sm:$0xff]
  %v3474 = vld [vmem:[#allocation3 + $0xb0] sm:$0xff]
  %v3475 = vld [vmem:[#allocation3 + $0xb8] sm:$0xff]
  %v3476 = vld [vmem:[#allocation3 + $0xc0] sm:$0xff]
  %v3477 = vld [vmem:[#allocation3 + $0xc8] sm:$0xff]
  %v3478 = vld [vmem:[#allocation3 + $0xd0] sm:$0xff]
  %v3479 = vld [vmem:[#allocation3 + $0xd8] sm:$0xff]
  %v3480 = vld [vmem:[#allocation3 + $0xe0] sm:$0xff]
  %v3481 = vld [vmem:[#allocation3 + $0xe8] sm:$0xff]
  %v3482 = vld [vmem:[#allocation3 + $0xf0] sm:$0xff]
  %v3483 = vld [vmem:[#allocation3 + $0xf8] sm:$0xff]
  %v3484 = vld [vmem:[#allocation3 + $0x100] sm:$0xff]
  %v3485 = vld [vmem:[#allocation3 + $0x108] sm:$0xff]
  %v3486 = vld [vmem:[#allocation3 + $0x110] sm:$0xff]
  %v3487 = vld [vmem:[#allocation3 + $0x118] sm:$0xff]
  %v3488 = vld [vmem:[#allocation3 + $0x120] sm:$0xff]
  %v3489 = vld [vmem:[#allocation3 + $0x128] sm:$0xff]
  %v3490 = vld [vmem:[#allocation3 + $0x130] sm:$0xff]
  %v3491 = vld [vmem:[#allocation3 + $0x138] sm:$0xff]
  %v3492 = vld [vmem:[#allocation3 + $0x140] sm:$0xff]
  %v3493 = vld [vmem:[#allocation3 + $0x148] sm:$0xff]
  %v3494 = vld [vmem:[#allocation3 + $0x150] sm:$0xff]
  %v3495 = vld [vmem:[#allocation3 + $0x158] sm:$0xff]
  %v3496 = vld [vmem:[#allocation3 + $0x160] sm:$0xff]
  %v3497 = vld [vmem:[#allocation3 + $0x168] sm:$0xff]
  %v3498 = vld [vmem:[#allocation3 + $0x170] sm:$0xff]
  %v3499 = vld [vmem:[#allocation3 + $0x178] sm:$0xff]
  %v3500 = vld [vmem:[#allocation3 + $0x180] sm:$0xff]
  %v3501 = vld [vmem:[#allocation3 + $0x188] sm:$0xff]
  %v3502 = vld [vmem:[#allocation3 + $0x190] sm:$0xff]
  %v3503 = vld [vmem:[#allocation3 + $0x198] sm:$0xff]
  %v3504 = vld [vmem:[#allocation3 + $0x1a0] sm:$0xff]
  %v3505 = vld [vmem:[#allocation3 + $0x1a8] sm:$0xff]
  %v3506 = vld [vmem:[#allocation3 + $0x1b0] sm:$0xff]
  %v3507 = vld [vmem:[#allocation3 + $0x1b8] sm:$0xff]
  %v3508 = vld [vmem:[#allocation3 + $0x1c0] sm:$0xff]
  %v3509 = vld [vmem:[#allocation3 + $0x1c8] sm:$0xff]
  %v3510 = vld [vmem:[#allocation3 + $0x1d0] sm:$0xff]
  %v3511 = vld [vmem:[#allocation3 + $0x1d8] sm:$0xff]
  %v3512 = vld [vmem:[#allocation3 + $0x1e0] sm:$0xff]
  %v3513 = vld [vmem:[#allocation3 + $0x1e8] sm:$0xff]
  %v3514 = vld [vmem:[#allocation3 + $0x1f0] sm:$0xff]
  %v3515 = vld [vmem:[#allocation3 + $0x1f8] sm:$0xff]
  %v3516 = vld [vmem:[%s1] sm:$0xff]
  %v3517 = vld [vmem:[%s1 + $0x8] sm:$0xff]
  %v3518 = vld [vmem:[%s1 + $0x10] sm:$0xff]
  %v3519 = vld [vmem:[%s1 + $0x18] sm:$0xff]
  %v3520 = vld [vmem:[%s1 + $0x20] sm:$0xff]
  %v3521 = vld [vmem:[%s1 + $0x28] sm:$0xff]
  %v3522 = vld [vmem:[%s1 + $0x30] sm:$0xff]
  %v3523 = vld [vmem:[%s1 + $0x38] sm:$0xff]
  %v3524 = vld [vmem:[%s1 + $0x40] sm:$0xff]
  %vm3525 = vcmask 588800
  %v3527 = vsel %vm3525, %v3452, 0
  %v3530 = vsel %vm3525, %v3453, 0
  %v3533 = vsel %vm3525, %v3454, 0
  %v3536 = vsel %vm3525, %v3455, 0
  %v3539 = vsel %vm3525, %v3456, 0
  %v3542 = vsel %vm3525, %v3457, 0
  %v3545 = vsel %vm3525, %v3458, 0
  %v3548 = vsel %vm3525, %v3459, 0
  %v3551 = vsel %vm3525, %v3460, 0
  %v3554 = vsel %vm3525, %v3461, 0
  %v3557 = vsel %vm3525, %v3462, 0
  %v3560 = vsel %vm3525, %v3463, 0
  %v3563 = vsel %vm3525, %v3464, 0
  %v3566 = vsel %vm3525, %v3465, 0
  %v3569 = vsel %vm3525, %v3466, 0
  %v3572 = vsel %vm3525, %v3467, 0
  %v3575 = vsel %vm3525, %v3468, 0
  %v3578 = vsel %vm3525, %v3469, 0
  %v3581 = vsel %vm3525, %v3470, 0
  %v3584 = vsel %vm3525, %v3471, 0
  %v3587 = vsel %vm3525, %v3472, 0
  %v3590 = vsel %vm3525, %v3473, 0
  %v3593 = vsel %vm3525, %v3474, 0
  %v3596 = vsel %vm3525, %v3475, 0
  %v3599 = vsel %vm3525, %v3476, 0
  %v3602 = vsel %vm3525, %v3477, 0
  %v3605 = vsel %vm3525, %v3478, 0
  %v3608 = vsel %vm3525, %v3479, 0
  %v3611 = vsel %vm3525, %v3480, 0
  %v3614 = vsel %vm3525, %v3481, 0
  %v3617 = vsel %vm3525, %v3482, 0
  %v3620 = vsel %vm3525, %v3483, 0
  %v3623 = vsel %vm3525, %v3484, 0
  %v3626 = vsel %vm3525, %v3485, 0
  %v3629 = vsel %vm3525, %v3486, 0
  %v3632 = vsel %vm3525, %v3487, 0
  %v3635 = vsel %vm3525, %v3488, 0
  %v3638 = vsel %vm3525, %v3489, 0
  %v3641 = vsel %vm3525, %v3490, 0
  %v3644 = vsel %vm3525, %v3491, 0
  %v3647 = vsel %vm3525, %v3492, 0
  %v3650 = vsel %vm3525, %v3493, 0
  %v3653 = vsel %vm3525, %v3494, 0
  %v3656 = vsel %vm3525, %v3495, 0
  %v3659 = vsel %vm3525, %v3496, 0
  %v3662 = vsel %vm3525, %v3497, 0
  %v3665 = vsel %vm3525, %v3498, 0
  %v3668 = vsel %vm3525, %v3499, 0
  %v3671 = vsel %vm3525, %v3500, 0
  %v3674 = vsel %vm3525, %v3501, 0
  %v3677 = vsel %vm3525, %v3502, 0
  %v3680 = vsel %vm3525, %v3503, 0
  %v3683 = vsel %vm3525, %v3504, 0
  %v3686 = vsel %vm3525, %v3505, 0
  %v3689 = vsel %vm3525, %v3506, 0
  %v3692 = vsel %vm3525, %v3507, 0
  %v3695 = vsel %vm3525, %v3508, 0
  %v3698 = vsel %vm3525, %v3509, 0
  %v3701 = vsel %vm3525, %v3510, 0
  %v3704 = vsel %vm3525, %v3511, 0
  %v3707 = vsel %vm3525, %v3512, 0
  %v3710 = vsel %vm3525, %v3513, 0
  %v3713 = vsel %vm3525, %v3514, 0
  %v3716 = vsel %vm3525, %v3515, 0
  %3718 = vmatprep.subr.mxu0 0.0
  %3719 = vmatpush1.msra.mxu0 %v3516
  %3720 = vmatprep.subr.mxu0 0.0
  %3721 = vmatpush1.msra.mxu0 %v3517
  %3722 = vmatprep.subr.mxu0 0.0
  %3723 = vmatpush1.msra.mxu0 %v3518
  %3724 = vmatprep.subr.mxu0 0.0
  %3725 = vmatpush1.msra.mxu0 %v3519
  %3726 = vmatprep.subr.mxu0 0.0
  %3727 = vmatpush1.msra.mxu0 %v3520
  %3728 = vmatprep.subr.mxu0 0.0
  %3729 = vmatpush1.msra.mxu0 %v3521
  %3730 = vmatprep.subr.mxu0 0.0
  %3731 = vmatpush1.msra.mxu0 %v3522
  %3732 = vmatprep.subr.mxu0 0.0
  %3733 = vmatpush1.msra.mxu0 %v3523
  %3734 = vmatprep.subr.mxu0 0.0
  %3735 = vmatpush1.msra.mxu0 %v3524
  %3736 = vmatprep.subr.mxu0 0.0
  %3737 = vmatpush1.msra.mxu0 0.0
  %3738 = vmatprep.subr.mxu0 0.0
  %3739 = vmatpush1.msra.mxu0 0.0
  %3740 = vmatprep.subr.mxu0 0.0
  %3741 = vmatpush1.msra.mxu0 0.0
  %3742 = vmatprep.subr.mxu0 0.0
  %3743 = vmatpush1.msra.mxu0 0.0
  %3744 = vmatprep.subr.mxu0 0.0
  %3745 = vmatpush1.msra.mxu0 0.0
  %3746 = vmatprep.subr.mxu0 0.0
  %3747 = vmatpush1.msra.mxu0 0.0
  %3748 = vmatprep.subr.mxu0 0.0
  %3749 = vmatpush1.msra.mxu0 0.0
  %3750 = vmatprep.subr.mxu0 0.0
  %3751 = vmatpush1.msra.mxu0 0.0
  %3752 = vmatprep.subr.mxu0 0.0
  %3753 = vmatpush1.msra.mxu0 0.0
  %3754 = vmatprep.subr.mxu0 0.0
  %3755 = vmatpush1.msra.mxu0 0.0
  %3756 = vmatprep.subr.mxu0 0.0
  %3757 = vmatpush1.msra.mxu0 0.0
  %3758 = vmatprep.subr.mxu0 0.0
  %3759 = vmatpush1.msra.mxu0 0.0
  %3760 = vmatprep.subr.mxu0 0.0
  %3761 = vmatpush1.msra.mxu0 0.0
  %3762 = vmatprep.subr.mxu0 0.0
  %3763 = vmatpush1.msra.mxu0 0.0
  %3764 = vmatprep.subr.mxu0 0.0
  %3765 = vmatpush1.msra.mxu0 0.0
  %3766 = vmatprep.subr.mxu0 0.0
  %3767 = vmatpush1.msra.mxu0 0.0
  %3768 = vmatprep.subr.mxu0 0.0
  %3769 = vmatpush1.msra.mxu0 0.0
  %3770 = vmatprep.subr.mxu0 0.0
  %3771 = vmatpush1.msra.mxu0 0.0
  %3772 = vmatprep.subr.mxu0 0.0
  %3773 = vmatpush1.msra.mxu0 0.0
  %3774 = vmatprep.subr.mxu0 0.0
  %3775 = vmatpush1.msra.mxu0 0.0
  %3776 = vmatprep.subr.mxu0 0.0
  %3777 = vmatpush1.msra.mxu0 0.0
  %3778 = vmatprep.subr.mxu0 0.0
  %3779 = vmatpush1.msra.mxu0 0.0
  %3780 = vmatprep.subr.mxu0 0.0
  %3781 = vmatpush1.msra.mxu0 0.0
  %3782 = vmatprep.mubr.f32.mxu0 0.0
  %3783 = vmatmul.mubr.f32.gmra.mrb[0].mxu0 %v3527
  %v3784 = vpop.f32.mrb[0].mxu0
  %v3785 = vadd.f32 0.0, %v3784
  %v3786 = vpop.f32.mrb[0].mxu0
  %3787 = vmatprep.mubr.f32.mxu0 0.0
  %3788 = vmatmul.mubr.f32.gmra.mrb[0].mxu0 %v3530
  %v3789 = vpop.f32.mrb[0].mxu0
  %v3790 = vadd.f32 0.0, %v3789
  %v3791 = vpop.f32.mrb[0].mxu0
  %3792 = vmatprep.mubr.f32.mxu0 0.0
  %3793 = vmatmul.mubr.f32.gmra.mrb[0].mxu0 %v3533
  %v3794 = vpop.f32.mrb[0].mxu0
  %v3795 = vadd.f32 0.0, %v3794
  %v3796 = vpop.f32.mrb[0].mxu0
  %3797 = vmatprep.mubr.f32.mxu0 0.0
  %3798 = vmatmul.mubr.f32.gmra.mrb[0].mxu0 %v3536
  %v3799 = vpop.f32.mrb[0].mxu0
  %v3800 = vadd.f32 0.0, %v3799
  %v3801 = vpop.f32.mrb[0].mxu0
  %3802 = vmatprep.mubr.f32.mxu0 0.0
  %3803 = vmatmul.mubr.f32.gmra.mrb[0].mxu0 %v3539
  %v3804 = vpop.f32.mrb[0].mxu0
  %v3805 = vadd.f32 0.0, %v3804
  %v3806 = vpop.f32.mrb[0].mxu0
  %3807 = vmatprep.mubr.f32.mxu0 0.0
  %3808 = vmatmul.mubr.f32.gmra.mrb[0].mxu0 %v3542
  %v3809 = vpop.f32.mrb[0].mxu0
  %v3810 = vadd.f32 0.0, %v3809
  %v3811 = vpop.f32.mrb[0].mxu0
  %3812 = vmatprep.mubr.f32.mxu0 0.0
  %3813 = vmatmul.mubr.f32.gmra.mrb[0].mxu0 %v3545
  %v3814 = vpop.f32.mrb[0].mxu0
  %v3815 = vadd.f32 0.0, %v3814
  %v3816 = vpop.f32.mrb[0].mxu0
  %3817 = vmatprep.mubr.f32.mxu0 0.0
  %3818 = vmatmul.mubr.f32.gmra.mrb[0].mxu0 %v3548
  %v3819 = vpop.f32.mrb[0].mxu0
  %v3820 = vadd.f32 0.0, %v3819
  %v3821 = vpop.f32.mrb[0].mxu0
  %3822 = vmatprep.mubr.f32.mxu0 0.0
  %3823 = vmatmul.mubr.f32.gmra.mrb[0].mxu0 %v3551
  %v3824 = vpop.f32.mrb[0].mxu0
  %v3825 = vadd.f32 0.0, %v3824
  %v3826 = vpop.f32.mrb[0].mxu0
  %3827 = vmatprep.mubr.f32.mxu0 0.0
  %3828 = vmatmul.mubr.f32.gmra.mrb[0].mxu0 %v3554
  %v3829 = vpop.f32.mrb[0].mxu0
  %v3830 = vadd.f32 0.0, %v3829
  %v3831 = vpop.f32.mrb[0].mxu0
  %3832 = vmatprep.mubr.f32.mxu0 0.0
  %3833 = vmatmul.mubr.f32.gmra.mrb[0].mxu0 %v3557
  %v3834 = vpop.f32.mrb[0].mxu0
  %v3835 = vadd.f32 0.0, %v3834
  %v3836 = vpop.f32.mrb[0].mxu0
  %3837 = vmatprep.mubr.f32.mxu0 0.0
  %3838 = vmatmul.mubr.f32.gmra.mrb[0].mxu0 %v3560
  %v3839 = vpop.f32.mrb[0].mxu0
  %v3840 = vadd.f32 0.0, %v3839
  %v3841 = vpop.f32.mrb[0].mxu0
  %3842 = vmatprep.mubr.f32.mxu0 0.0
  %3843 = vmatmul.mubr.f32.gmra.mrb[0].mxu0 %v3563
  %v3844 = vpop.f32.mrb[0].mxu0
  %v3845 = vadd.f32 0.0, %v3844
  %v3846 = vpop.f32.mrb[0].mxu0
  %3847 = vmatprep.mubr.f32.mxu0 0.0
  %3848 = vmatmul.mubr.f32.gmra.mrb[0].mxu0 %v3566
  %v3849 = vpop.f32.mrb[0].mxu0
  %v3850 = vadd.f32 0.0, %v3849
  %v3851 = vpop.f32.mrb[0].mxu0
  %3852 = vmatprep.mubr.f32.mxu0 0.0
  %3853 = vmatmul.mubr.f32.gmra.mrb[0].mxu0 %v3569
  %v3854 = vpop.f32.mrb[0].mxu0
  %v3855 = vadd.f32 0.0, %v3854
  %v3856 = vpop.f32.mrb[0].mxu0
  %3857 = vmatprep.mubr.f32.mxu0 0.0
  %3858 = vmatmul.mubr.f32.gmra.mrb[0].mxu0 %v3572
  %v3859 = vpop.f32.mrb[0].mxu0
  %v3860 = vadd.f32 0.0, %v3859
  %v3861 = vpop.f32.mrb[0].mxu0
  %3862 = vmatprep.mubr.f32.mxu0 0.0
  %3863 = vmatmul.mubr.f32.gmra.mrb[0].mxu0 %v3575
  %v3864 = vpop.f32.mrb[0].mxu0
  %v3865 = vadd.f32 0.0, %v3864
  %v3866 = vpop.f32.mrb[0].mxu0
  %3867 = vmatprep.mubr.f32.mxu0 0.0
  %3868 = vmatmul.mubr.f32.gmra.mrb[0].mxu0 %v3578
  %v3869 = vpop.f32.mrb[0].mxu0
  %v3870 = vadd.f32 0.0, %v3869
  %v3871 = vpop.f32.mrb[0].mxu0
  %3872 = vmatprep.mubr.f32.mxu0 0.0
  %3873 = vmatmul.mubr.f32.gmra.mrb[0].mxu0 %v3581
  %v3874 = vpop.f32.mrb[0].mxu0
  %v3875 = vadd.f32 0.0, %v3874
  %v3876 = vpop.f32.mrb[0].mxu0
  %3877 = vmatprep.mubr.f32.mxu0 0.0
  %3878 = vmatmul.mubr.f32.gmra.mrb[0].mxu0 %v3584
  %v3879 = vpop.f32.mrb[0].mxu0
  %v3880 = vadd.f32 0.0, %v3879
  %v3881 = vpop.f32.mrb[0].mxu0
  %3882 = vmatprep.mubr.f32.mxu0 0.0
  %3883 = vmatmul.mubr.f32.gmra.mrb[0].mxu0 %v3587
  %v3884 = vpop.f32.mrb[0].mxu0
  %v3885 = vadd.f32 0.0, %v3884
  %v3886 = vpop.f32.mrb[0].mxu0
  %3887 = vmatprep.mubr.f32.mxu0 0.0
  %3888 = vmatmul.mubr.f32.gmra.mrb[0].mxu0 %v3590
  %v3889 = vpop.f32.mrb[0].mxu0
  %v3890 = vadd.f32 0.0, %v3889
  %v3891 = vpop.f32.mrb[0].mxu0
  %3892 = vmatprep.mubr.f32.mxu0 0.0
  %3893 = vmatmul.mubr.f32.gmra.mrb[0].mxu0 %v3593
  %v3894 = vpop.f32.mrb[0].mxu0
  %v3895 = vadd.f32 0.0, %v3894
  %v3896 = vpop.f32.mrb[0].mxu0
  %3897 = vmatprep.mubr.f32.mxu0 0.0
  %3898 = vmatmul.mubr.f32.gmra.mrb[0].mxu0 %v3596
  %v3899 = vpop.f32.mrb[0].mxu0
  %v3900 = vadd.f32 0.0, %v3899
  %v3901 = vpop.f32.mrb[0].mxu0
  %3902 = vmatprep.mubr.f32.mxu0 0.0
  %3903 = vmatmul.mubr.f32.gmra.mrb[0].mxu0 %v3599
  %v3904 = vpop.f32.mrb[0].mxu0
  %v3905 = vadd.f32 0.0, %v3904
  %v3906 = vpop.f32.mrb[0].mxu0
  %3907 = vmatprep.mubr.f32.mxu0 0.0
  %3908 = vmatmul.mubr.f32.gmra.mrb[0].mxu0 %v3602
  %v3909 = vpop.f32.mrb[0].mxu0
  %v3910 = vadd.f32 0.0, %v3909
  %v3911 = vpop.f32.mrb[0].mxu0
  %3912 = vmatprep.mubr.f32.mxu0 0.0
  %3913 = vmatmul.mubr.f32.gmra.mrb[0].mxu0 %v3605
  %v3914 = vpop.f32.mrb[0].mxu0
  %v3915 = vadd.f32 0.0, %v3914
  %v3916 = vpop.f32.mrb[0].mxu0
  %3917 = vmatprep.mubr.f32.mxu0 0.0
  %3918 = vmatmul.mubr.f32.gmra.mrb[0].mxu0 %v3608
  %v3919 = vpop.f32.mrb[0].mxu0
  %v3920 = vadd.f32 0.0, %v3919
  %v3921 = vpop.f32.mrb[0].mxu0
  %3922 = vmatprep.mubr.f32.mxu0 0.0
  %3923 = vmatmul.mubr.f32.gmra.mrb[0].mxu0 %v3611
  %v3924 = vpop.f32.mrb[0].mxu0
  %v3925 = vadd.f32 0.0, %v3924
  %v3926 = vpop.f32.mrb[0].mxu0
  %3927 = vmatprep.mubr.f32.mxu0 0.0
  %3928 = vmatmul.mubr.f32.gmra.mrb[0].mxu0 %v3614
  %v3929 = vpop.f32.mrb[0].mxu0
  %v3930 = vadd.f32 0.0, %v3929
  %v3931 = vpop.f32.mrb[0].mxu0
  %3932 = vmatprep.mubr.f32.mxu0 0.0
  %3933 = vmatmul.mubr.f32.gmra.mrb[0].mxu0 %v3617
  %v3934 = vpop.f32.mrb[0].mxu0
  %v3935 = vadd.f32 0.0, %v3934
  %v3936 = vpop.f32.mrb[0].mxu0
  %3937 = vmatprep.mubr.f32.mxu0 0.0
  %3938 = vmatmul.mubr.f32.gmra.mrb[0].mxu0 %v3620
  %v3939 = vpop.f32.mrb[0].mxu0
  %v3940 = vadd.f32 0.0, %v3939
  %v3941 = vpop.f32.mrb[0].mxu0
  %3942 = vmatprep.mubr.f32.mxu0 0.0
  %3943 = vmatmul.mubr.f32.gmra.mrb[0].mxu0 %v3623
  %v3944 = vpop.f32.mrb[0].mxu0
  %v3945 = vadd.f32 0.0, %v3944
  %v3946 = vpop.f32.mrb[0].mxu0
  %3947 = vmatprep.mubr.f32.mxu0 0.0
  %3948 = vmatmul.mubr.f32.gmra.mrb[0].mxu0 %v3626
  %v3949 = vpop.f32.mrb[0].mxu0
  %v3950 = vadd.f32 0.0, %v3949
  %v3951 = vpop.f32.mrb[0].mxu0
  %3952 = vmatprep.mubr.f32.mxu0 0.0
  %3953 = vmatmul.mubr.f32.gmra.mrb[0].mxu0 %v3629
  %v3954 = vpop.f32.mrb[0].mxu0
  %v3955 = vadd.f32 0.0, %v3954
  %v3956 = vpop.f32.mrb[0].mxu0
  %3957 = vmatprep.mubr.f32.mxu0 0.0
  %3958 = vmatmul.mubr.f32.gmra.mrb[0].mxu0 %v3632
  %v3959 = vpop.f32.mrb[0].mxu0
  %v3960 = vadd.f32 0.0, %v3959
  %v3961 = vpop.f32.mrb[0].mxu0
  %3962 = vmatprep.mubr.f32.mxu0 0.0
  %3963 = vmatmul.mubr.f32.gmra.mrb[0].mxu0 %v3635
  %v3964 = vpop.f32.mrb[0].mxu0
  %v3965 = vadd.f32 0.0, %v3964
  %v3966 = vpop.f32.mrb[0].mxu0
  %3967 = vmatprep.mubr.f32.mxu0 0.0
  %3968 = vmatmul.mubr.f32.gmra.mrb[0].mxu0 %v3638
  %v3969 = vpop.f32.mrb[0].mxu0
  %v3970 = vadd.f32 0.0, %v3969
  %v3971 = vpop.f32.mrb[0].mxu0
  %3972 = vmatprep.mubr.f32.mxu0 0.0
  %3973 = vmatmul.mubr.f32.gmra.mrb[0].mxu0 %v3641
  %v3974 = vpop.f32.mrb[0].mxu0
  %v3975 = vadd.f32 0.0, %v3974
  %v3976 = vpop.f32.mrb[0].mxu0
  %3977 = vmatprep.mubr.f32.mxu0 0.0
  %3978 = vmatmul.mubr.f32.gmra.mrb[0].mxu0 %v3644
  %v3979 = vpop.f32.mrb[0].mxu0
  %v3980 = vadd.f32 0.0, %v3979
  %v3981 = vpop.f32.mrb[0].mxu0
  %3982 = vmatprep.mubr.f32.mxu0 0.0
  %3983 = vmatmul.mubr.f32.gmra.mrb[0].mxu0 %v3647
  %v3984 = vpop.f32.mrb[0].mxu0
  %v3985 = vadd.f32 0.0, %v3984
  %v3986 = vpop.f32.mrb[0].mxu0
  %3987 = vmatprep.mubr.f32.mxu0 0.0
  %3988 = vmatmul.mubr.f32.gmra.mrb[0].mxu0 %v3650
  %v3989 = vpop.f32.mrb[0].mxu0
  %v3990 = vadd.f32 0.0, %v3989
  %v3991 = vpop.f32.mrb[0].mxu0
  %3992 = vmatprep.mubr.f32.mxu0 0.0
  %3993 = vmatmul.mubr.f32.gmra.mrb[0].mxu0 %v3653
  %v3994 = vpop.f32.mrb[0].mxu0
  %v3995 = vadd.f32 0.0, %v3994
  %v3996 = vpop.f32.mrb[0].mxu0
  %3997 = vmatprep.mubr.f32.mxu0 0.0
  %3998 = vmatmul.mubr.f32.gmra.mrb[0].mxu0 %v3656
  %v3999 = vpop.f32.mrb[0].mxu0
  %v4000 = vadd.f32 0.0, %v3999
  %v4001 = vpop.f32.mrb[0].mxu0
  %4002 = vmatprep.mubr.f32.mxu0 0.0
  %4003 = vmatmul.mubr.f32.gmra.mrb[0].mxu0 %v3659
  %v4004 = vpop.f32.mrb[0].mxu0
  %v4005 = vadd.f32 0.0, %v4004
  %v4006 = vpop.f32.mrb[0].mxu0
  %4007 = vmatprep.mubr.f32.mxu0 0.0
  %4008 = vmatmul.mubr.f32.gmra.mrb[0].mxu0 %v3662
  %v4009 = vpop.f32.mrb[0].mxu0
  %v4010 = vadd.f32 0.0, %v4009
  %v4011 = vpop.f32.mrb[0].mxu0
  %4012 = vmatprep.mubr.f32.mxu0 0.0
  %4013 = vmatmul.mubr.f32.gmra.mrb[0].mxu0 %v3665
  %v4014 = vpop.f32.mrb[0].mxu0
  %v4015 = vadd.f32 0.0, %v4014
  %v4016 = vpop.f32.mrb[0].mxu0
  %4017 = vmatprep.mubr.f32.mxu0 0.0
  %4018 = vmatmul.mubr.f32.gmra.mrb[0].mxu0 %v3668
  %v4019 = vpop.f32.mrb[0].mxu0
  %v4020 = vadd.f32 0.0, %v4019
  %v4021 = vpop.f32.mrb[0].mxu0
  %4022 = vmatprep.mubr.f32.mxu0 0.0
  %4023 = vmatmul.mubr.f32.gmra.mrb[0].mxu0 %v3671
  %v4024 = vpop.f32.mrb[0].mxu0
  %v4025 = vadd.f32 0.0, %v4024
  %v4026 = vpop.f32.mrb[0].mxu0
  %4027 = vmatprep.mubr.f32.mxu0 0.0
  %4028 = vmatmul.mubr.f32.gmra.mrb[0].mxu0 %v3674
  %v4029 = vpop.f32.mrb[0].mxu0
  %v4030 = vadd.f32 0.0, %v4029
  %v4031 = vpop.f32.mrb[0].mxu0
  %4032 = vmatprep.mubr.f32.mxu0 0.0
  %4033 = vmatmul.mubr.f32.gmra.mrb[0].mxu0 %v3677
  %v4034 = vpop.f32.mrb[0].mxu0
  %v4035 = vadd.f32 0.0, %v4034
  %v4036 = vpop.f32.mrb[0].mxu0
  %4037 = vmatprep.mubr.f32.mxu0 0.0
  %4038 = vmatmul.mubr.f32.gmra.mrb[0].mxu0 %v3680
  %v4039 = vpop.f32.mrb[0].mxu0
  %v4040 = vadd.f32 0.0, %v4039
  %v4041 = vpop.f32.mrb[0].mxu0
  %4042 = vmatprep.mubr.f32.mxu0 0.0
  %4043 = vmatmul.mubr.f32.gmra.mrb[0].mxu0 %v3683
  %v4044 = vpop.f32.mrb[0].mxu0
  %v4045 = vadd.f32 0.0, %v4044
  %v4046 = vpop.f32.mrb[0].mxu0
  %4047 = vmatprep.mubr.f32.mxu0 0.0
  %4048 = vmatmul.mubr.f32.gmra.mrb[0].mxu0 %v3686
  %v4049 = vpop.f32.mrb[0].mxu0
  %v4050 = vadd.f32 0.0, %v4049
  %v4051 = vpop.f32.mrb[0].mxu0
  %4052 = vmatprep.mubr.f32.mxu0 0.0
  %4053 = vmatmul.mubr.f32.gmra.mrb[0].mxu0 %v3689
  %v4054 = vpop.f32.mrb[0].mxu0
  %v4055 = vadd.f32 0.0, %v4054
  %v4056 = vpop.f32.mrb[0].mxu0
  %4057 = vmatprep.mubr.f32.mxu0 0.0
  %4058 = vmatmul.mubr.f32.gmra.mrb[0].mxu0 %v3692
  %v4059 = vpop.f32.mrb[0].mxu0
  %v4060 = vadd.f32 0.0, %v4059
  %v4061 = vpop.f32.mrb[0].mxu0
  %4062 = vmatprep.mubr.f32.mxu0 0.0
  %4063 = vmatmul.mubr.f32.gmra.mrb[0].mxu0 %v3695
  %v4064 = vpop.f32.mrb[0].mxu0
  %v4065 = vadd.f32 0.0, %v4064
  %v4066 = vpop.f32.mrb[0].mxu0
  %4067 = vmatprep.mubr.f32.mxu0 0.0
  %4068 = vmatmul.mubr.f32.gmra.mrb[0].mxu0 %v3698
  %v4069 = vpop.f32.mrb[0].mxu0
  %v4070 = vadd.f32 0.0, %v4069
  %v4071 = vpop.f32.mrb[0].mxu0
  %4072 = vmatprep.mubr.f32.mxu0 0.0
  %4073 = vmatmul.mubr.f32.gmra.mrb[0].mxu0 %v3701
  %v4074 = vpop.f32.mrb[0].mxu0
  %v4075 = vadd.f32 0.0, %v4074
  %v4076 = vpop.f32.mrb[0].mxu0
  %4077 = vmatprep.mubr.f32.mxu0 0.0
  %4078 = vmatmul.mubr.f32.gmra.mrb[0].mxu0 %v3704
  %v4079 = vpop.f32.mrb[0].mxu0
  %v4080 = vadd.f32 0.0, %v4079
  %v4081 = vpop.f32.mrb[0].mxu0
  %4082 = vmatprep.mubr.f32.mxu0 0.0
  %4083 = vmatmul.mubr.f32.gmra.mrb[0].mxu0 %v3707
  %v4084 = vpop.f32.mrb[0].mxu0
  %v4085 = vadd.f32 0.0, %v4084
  %v4086 = vpop.f32.mrb[0].mxu0
  %4087 = vmatprep.mubr.f32.mxu0 0.0
  %4088 = vmatmul.mubr.f32.gmra.mrb[0].mxu0 %v3710
  %v4089 = vpop.f32.mrb[0].mxu0
  %v4090 = vadd.f32 0.0, %v4089
  %v4091 = vpop.f32.mrb[0].mxu0
  %4092 = vmatprep.mubr.f32.mxu0 0.0
  %4093 = vmatmul.mubr.f32.gmra.mrb[0].mxu0 %v3713
  %v4094 = vpop.f32.mrb[0].mxu0
  %v4095 = vadd.f32 0.0, %v4094
  %v4096 = vpop.f32.mrb[0].mxu0
  %4097 = vmatprep.mubr.f32.mxu0 0.0
  %4098 = vmatmul.mubr.f32.gmra.mrb[0].mxu0 %v3716
  %v4099 = vpop.f32.mrb[0].mxu0
  %v4100 = vadd.f32 0.0, %v4099
  %v4101 = vpop.f32.mrb[0].mxu0
  %4102 = vdwg.mxu0
  %v4103 = vld [vmem:[%s2] sm:$0x1]
  %v4104 = vld [vmem:[%s3] sm:$0x1]
  %v4105 = vsel %vm26, %v3785, 0.0
  %v4106 = vsel %vm26, %v3790, 0.0
  %v4107 = vadd.f32 %v4105, %v4106
  %v4108 = vsel %vm26, %v3795, 0.0
  %v4109 = vadd.f32 %v4107, %v4108
  %v4110 = vsel %vm26, %v3800, 0.0
  %v4111 = vadd.f32 %v4109, %v4110
  %v4112 = vsel %vm26, %v3805, 0.0
  %v4113 = vadd.f32 %v4111, %v4112
  %v4114 = vsel %vm26, %v3810, 0.0
  %v4115 = vadd.f32 %v4113, %v4114
  %v4116 = vsel %vm26, %v3815, 0.0
  %v4117 = vadd.f32 %v4115, %v4116
  %v4118 = vsel %vm26, %v3820, 0.0
  %v4119 = vadd.f32 %v4117, %v4118
  %v4120 = vsel %vm26, %v3825, 0.0
  %v4121 = vadd.f32 %v4119, %v4120
  %v4122 = vsel %vm26, %v3830, 0.0
  %v4123 = vadd.f32 %v4121, %v4122
  %v4124 = vsel %vm26, %v3835, 0.0
  %v4125 = vadd.f32 %v4123, %v4124
  %v4126 = vsel %vm26, %v3840, 0.0
  %v4127 = vadd.f32 %v4125, %v4126
  %v4128 = vsel %vm26, %v3845, 0.0
  %v4129 = vadd.f32 %v4127, %v4128
  %v4130 = vsel %vm26, %v3850, 0.0
  %v4131 = vadd.f32 %v4129, %v4130
  %v4132 = vsel %vm26, %v3855, 0.0
  %v4133 = vadd.f32 %v4131, %v4132
  %v4134 = vsel %vm26, %v3860, 0.0
  %v4135 = vadd.f32 %v4133, %v4134
  %v4136 = vsel %vm26, %v3865, 0.0
  %v4137 = vadd.f32 %v4135, %v4136
  %v4138 = vsel %vm26, %v3870, 0.0
  %v4139 = vadd.f32 %v4137, %v4138
  %v4140 = vsel %vm26, %v3875, 0.0
  %v4141 = vadd.f32 %v4139, %v4140
  %v4142 = vsel %vm26, %v3880, 0.0
  %v4143 = vadd.f32 %v4141, %v4142
  %v4144 = vsel %vm26, %v3885, 0.0
  %v4145 = vadd.f32 %v4143, %v4144
  %v4146 = vsel %vm26, %v3890, 0.0
  %v4147 = vadd.f32 %v4145, %v4146
  %v4148 = vsel %vm26, %v3895, 0.0
  %v4149 = vadd.f32 %v4147, %v4148
  %v4150 = vsel %vm26, %v3900, 0.0
  %v4151 = vadd.f32 %v4149, %v4150
  %v4152 = vsel %vm26, %v3905, 0.0
  %v4153 = vadd.f32 %v4151, %v4152
  %v4154 = vsel %vm26, %v3910, 0.0
  %v4155 = vadd.f32 %v4153, %v4154
  %v4156 = vsel %vm26, %v3915, 0.0
  %v4157 = vadd.f32 %v4155, %v4156
  %v4158 = vsel %vm26, %v3920, 0.0
  %v4159 = vadd.f32 %v4157, %v4158
  %v4160 = vsel %vm26, %v3925, 0.0
  %v4161 = vadd.f32 %v4159, %v4160
  %v4162 = vsel %vm26, %v3930, 0.0
  %v4163 = vadd.f32 %v4161, %v4162
  %v4164 = vsel %vm26, %v3935, 0.0
  %v4165 = vadd.f32 %v4163, %v4164
  %v4166 = vsel %vm26, %v3940, 0.0
  %v4167 = vadd.f32 %v4165, %v4166
  %v4168 = vsel %vm26, %v3945, 0.0
  %v4169 = vadd.f32 %v4167, %v4168
  %v4170 = vsel %vm26, %v3950, 0.0
  %v4171 = vadd.f32 %v4169, %v4170
  %v4172 = vsel %vm26, %v3955, 0.0
  %v4173 = vadd.f32 %v4171, %v4172
  %v4174 = vsel %vm26, %v3960, 0.0
  %v4175 = vadd.f32 %v4173, %v4174
  %v4176 = vsel %vm26, %v3965, 0.0
  %v4177 = vadd.f32 %v4175, %v4176
  %v4178 = vsel %vm26, %v3970, 0.0
  %v4179 = vadd.f32 %v4177, %v4178
  %v4180 = vsel %vm26, %v3975, 0.0
  %v4181 = vadd.f32 %v4179, %v4180
  %v4182 = vsel %vm26, %v3980, 0.0
  %v4183 = vadd.f32 %v4181, %v4182
  %v4184 = vsel %vm26, %v3985, 0.0
  %v4185 = vadd.f32 %v4183, %v4184
  %v4186 = vsel %vm26, %v3990, 0.0
  %v4187 = vadd.f32 %v4185, %v4186
  %v4188 = vsel %vm26, %v3995, 0.0
  %v4189 = vadd.f32 %v4187, %v4188
  %v4190 = vsel %vm26, %v4000, 0.0
  %v4191 = vadd.f32 %v4189, %v4190
  %v4192 = vsel %vm26, %v4005, 0.0
  %v4193 = vadd.f32 %v4191, %v4192
  %v4194 = vsel %vm26, %v4010, 0.0
  %v4195 = vadd.f32 %v4193, %v4194
  %v4196 = vsel %vm26, %v4015, 0.0
  %v4197 = vadd.f32 %v4195, %v4196
  %v4198 = vsel %vm26, %v4020, 0.0
  %v4199 = vadd.f32 %v4197, %v4198
  %v4200 = vsel %vm26, %v4025, 0.0
  %v4201 = vadd.f32 %v4199, %v4200
  %v4202 = vsel %vm26, %v4030, 0.0
  %v4203 = vadd.f32 %v4201, %v4202
  %v4204 = vsel %vm26, %v4035, 0.0
  %v4205 = vadd.f32 %v4203, %v4204
  %v4206 = vsel %vm26, %v4040, 0.0
  %v4207 = vadd.f32 %v4205, %v4206
  %v4208 = vsel %vm26, %v4045, 0.0
  %v4209 = vadd.f32 %v4207, %v4208
  %v4210 = vsel %vm26, %v4050, 0.0
  %v4211 = vadd.f32 %v4209, %v4210
  %v4212 = vsel %vm26, %v4055, 0.0
  %v4213 = vadd.f32 %v4211, %v4212
  %v4214 = vsel %vm26, %v4060, 0.0
  %v4215 = vadd.f32 %v4213, %v4214
  %v4216 = vsel %vm26, %v4065, 0.0
  %v4217 = vadd.f32 %v4215, %v4216
  %v4218 = vsel %vm26, %v4070, 0.0
  %v4219 = vadd.f32 %v4217, %v4218
  %v4220 = vsel %vm26, %v4075, 0.0
  %v4221 = vadd.f32 %v4219, %v4220
  %v4222 = vsel %vm26, %v4080, 0.0
  %v4223 = vadd.f32 %v4221, %v4222
  %v4224 = vsel %vm26, %v4085, 0.0
  %v4225 = vadd.f32 %v4223, %v4224
  %v4226 = vsel %vm26, %v4090, 0.0
  %v4227 = vadd.f32 %v4225, %v4226
  %v4228 = vsel %vm26, %v4095, 0.0
  %v4229 = vadd.f32 %v4227, %v4228
  %v4230 = vsel %vm26, %v4100, 0.0
  %v4231 = vadd.f32 %v4229, %v4230
  %v4232 = vrot.slane %v4231, 4
  %v4233 = vadd.f32 %v4231, %v4232
  %v4234 = vrot.slane %v4233, 2
  %v4235 = vadd.f32 %v4233, %v4234
  %v4236 = vrot.slane %v4235, 1
  %v4237 = vadd.f32 %v4235, %v4236
  %v4238 = vmul.f32 %v3785, %v3785
  %v4239 = vmul.f32 %v3790, %v3790
  %v4240 = vmul.f32 %v3795, %v3795
  %v4241 = vmul.f32 %v3800, %v3800
  %v4242 = vmul.f32 %v3805, %v3805
  %v4243 = vmul.f32 %v3810, %v3810
  %v4244 = vmul.f32 %v3815, %v3815
  %v4245 = vmul.f32 %v3820, %v3820
  %v4246 = vmul.f32 %v3825, %v3825
  %v4247 = vmul.f32 %v3830, %v3830
  %v4248 = vmul.f32 %v3835, %v3835
  %v4249 = vmul.f32 %v3840, %v3840
  %v4250 = vmul.f32 %v3845, %v3845
  %v4251 = vmul.f32 %v3850, %v3850
  %v4252 = vmul.f32 %v3855, %v3855
  %v4253 = vmul.f32 %v3860, %v3860
  %v4254 = vmul.f32 %v3865, %v3865
  %v4255 = vmul.f32 %v3870, %v3870
  %v4256 = vmul.f32 %v3875, %v3875
  %v4257 = vmul.f32 %v3880, %v3880
  %v4258 = vmul.f32 %v3885, %v3885
  %v4259 = vmul.f32 %v3890, %v3890
  %v4260 = vmul.f32 %v3895, %v3895
  %v4261 = vmul.f32 %v3900, %v3900
  %v4262 = vmul.f32 %v3905, %v3905
  %v4263 = vmul.f32 %v3910, %v3910
  %v4264 = vmul.f32 %v3915, %v3915
  %v4265 = vmul.f32 %v3920, %v3920
  %v4266 = vmul.f32 %v3925, %v3925
  %v4267 = vmul.f32 %v3930, %v3930
  %v4268 = vmul.f32 %v3935, %v3935
  %v4269 = vmul.f32 %v3940, %v3940
  %v4270 = vmul.f32 %v3945, %v3945
  %v4271 = vmul.f32 %v3950, %v3950
  %v4272 = vmul.f32 %v3955, %v3955
  %v4273 = vmul.f32 %v3960, %v3960
  %v4274 = vmul.f32 %v3965, %v3965
  %v4275 = vmul.f32 %v3970, %v3970
  %v4276 = vmul.f32 %v3975, %v3975
  %v4277 = vmul.f32 %v3980, %v3980
  %v4278 = vmul.f32 %v3985, %v3985
  %v4279 = vmul.f32 %v3990, %v3990
  %v4280 = vmul.f32 %v3995, %v3995
  %v4281 = vmul.f32 %v4000, %v4000
  %v4282 = vmul.f32 %v4005, %v4005
  %v4283 = vmul.f32 %v4010, %v4010
  %v4284 = vmul.f32 %v4015, %v4015
  %v4285 = vmul.f32 %v4020, %v4020
  %v4286 = vmul.f32 %v4025, %v4025
  %v4287 = vmul.f32 %v4030, %v4030
  %v4288 = vmul.f32 %v4035, %v4035
  %v4289 = vmul.f32 %v4040, %v4040
  %v4290 = vmul.f32 %v4045, %v4045
  %v4291 = vmul.f32 %v4050, %v4050
  %v4292 = vmul.f32 %v4055, %v4055
  %v4293 = vmul.f32 %v4060, %v4060
  %v4294 = vmul.f32 %v4065, %v4065
  %v4295 = vmul.f32 %v4070, %v4070
  %v4296 = vmul.f32 %v4075, %v4075
  %v4297 = vmul.f32 %v4080, %v4080
  %v4298 = vmul.f32 %v4085, %v4085
  %v4299 = vmul.f32 %v4090, %v4090
  %v4300 = vmul.f32 %v4095, %v4095
  %v4301 = vmul.f32 %v4100, %v4100
  %v4302 = vsel %vm26, %v4238, 0.0
  %v4303 = vsel %vm26, %v4239, 0.0
  %v4304 = vadd.f32 %v4302, %v4303
  %v4305 = vsel %vm26, %v4240, 0.0
  %v4306 = vadd.f32 %v4304, %v4305
  %v4307 = vsel %vm26, %v4241, 0.0
  %v4308 = vadd.f32 %v4306, %v4307
  %v4309 = vsel %vm26, %v4242, 0.0
  %v4310 = vadd.f32 %v4308, %v4309
  %v4311 = vsel %vm26, %v4243, 0.0
  %v4312 = vadd.f32 %v4310, %v4311
  %v4313 = vsel %vm26, %v4244, 0.0
  %v4314 = vadd.f32 %v4312, %v4313
  %v4315 = vsel %vm26, %v4245, 0.0
  %v4316 = vadd.f32 %v4314, %v4315
  %v4317 = vsel %vm26, %v4246, 0.0
  %v4318 = vadd.f32 %v4316, %v4317
  %v4319 = vsel %vm26, %v4247, 0.0
  %v4320 = vadd.f32 %v4318, %v4319
  %v4321 = vsel %vm26, %v4248, 0.0
  %v4322 = vadd.f32 %v4320, %v4321
  %v4323 = vsel %vm26, %v4249, 0.0
  %v4324 = vadd.f32 %v4322, %v4323
  %v4325 = vsel %vm26, %v4250, 0.0
  %v4326 = vadd.f32 %v4324, %v4325
  %v4327 = vsel %vm26, %v4251, 0.0
  %v4328 = vadd.f32 %v4326, %v4327
  %v4329 = vsel %vm26, %v4252, 0.0
  %v4330 = vadd.f32 %v4328, %v4329
  %v4331 = vsel %vm26, %v4253, 0.0
  %v4332 = vadd.f32 %v4330, %v4331
  %v4333 = vsel %vm26, %v4254, 0.0
  %v4334 = vadd.f32 %v4332, %v4333
  %v4335 = vsel %vm26, %v4255, 0.0
  %v4336 = vadd.f32 %v4334, %v4335
  %v4337 = vsel %vm26, %v4256, 0.0
  %v4338 = vadd.f32 %v4336, %v4337
  %v4339 = vsel %vm26, %v4257, 0.0
  %v4340 = vadd.f32 %v4338, %v4339
  %v4341 = vsel %vm26, %v4258, 0.0
  %v4342 = vadd.f32 %v4340, %v4341
  %v4343 = vsel %vm26, %v4259, 0.0
  %v4344 = vadd.f32 %v4342, %v4343
  %v4345 = vsel %vm26, %v4260, 0.0
  %v4346 = vadd.f32 %v4344, %v4345
  %v4347 = vsel %vm26, %v4261, 0.0
  %v4348 = vadd.f32 %v4346, %v4347
  %v4349 = vsel %vm26, %v4262, 0.0
  %v4350 = vadd.f32 %v4348, %v4349
  %v4351 = vsel %vm26, %v4263, 0.0
  %v4352 = vadd.f32 %v4350, %v4351
  %v4353 = vsel %vm26, %v4264, 0.0
  %v4354 = vadd.f32 %v4352, %v4353
  %v4355 = vsel %vm26, %v4265, 0.0
  %v4356 = vadd.f32 %v4354, %v4355
  %v4357 = vsel %vm26, %v4266, 0.0
  %v4358 = vadd.f32 %v4356, %v4357
  %v4359 = vsel %vm26, %v4267, 0.0
  %v4360 = vadd.f32 %v4358, %v4359
  %v4361 = vsel %vm26, %v4268, 0.0
  %v4362 = vadd.f32 %v4360, %v4361
  %v4363 = vsel %vm26, %v4269, 0.0
  %v4364 = vadd.f32 %v4362, %v4363
  %v4365 = vsel %vm26, %v4270, 0.0
  %v4366 = vadd.f32 %v4364, %v4365
  %v4367 = vsel %vm26, %v4271, 0.0
  %v4368 = vadd.f32 %v4366, %v4367
  %v4369 = vsel %vm26, %v4272, 0.0
  %v4370 = vadd.f32 %v4368, %v4369
  %v4371 = vsel %vm26, %v4273, 0.0
  %v4372 = vadd.f32 %v4370, %v4371
  %v4373 = vsel %vm26, %v4274, 0.0
  %v4374 = vadd.f32 %v4372, %v4373
  %v4375 = vsel %vm26, %v4275, 0.0
  %v4376 = vadd.f32 %v4374, %v4375
  %v4377 = vsel %vm26, %v4276, 0.0
  %v4378 = vadd.f32 %v4376, %v4377
  %v4379 = vsel %vm26, %v4277, 0.0
  %v4380 = vadd.f32 %v4378, %v4379
  %v4381 = vsel %vm26, %v4278, 0.0
  %v4382 = vadd.f32 %v4380, %v4381
  %v4383 = vsel %vm26, %v4279, 0.0
  %v4384 = vadd.f32 %v4382, %v4383
  %v4385 = vsel %vm26, %v4280, 0.0
  %v4386 = vadd.f32 %v4384, %v4385
  %v4387 = vsel %vm26, %v4281, 0.0
  %v4388 = vadd.f32 %v4386, %v4387
  %v4389 = vsel %vm26, %v4282, 0.0
  %v4390 = vadd.f32 %v4388, %v4389
  %v4391 = vsel %vm26, %v4283, 0.0
  %v4392 = vadd.f32 %v4390, %v4391
  %v4393 = vsel %vm26, %v4284, 0.0
  %v4394 = vadd.f32 %v4392, %v4393
  %v4395 = vsel %vm26, %v4285, 0.0
  %v4396 = vadd.f32 %v4394, %v4395
  %v4397 = vsel %vm26, %v4286, 0.0
  %v4398 = vadd.f32 %v4396, %v4397
  %v4399 = vsel %vm26, %v4287, 0.0
  %v4400 = vadd.f32 %v4398, %v4399
  %v4401 = vsel %vm26, %v4288, 0.0
  %v4402 = vadd.f32 %v4400, %v4401
  %v4403 = vsel %vm26, %v4289, 0.0
  %v4404 = vadd.f32 %v4402, %v4403
  %v4405 = vsel %vm26, %v4290, 0.0
  %v4406 = vadd.f32 %v4404, %v4405
  %v4407 = vsel %vm26, %v4291, 0.0
  %v4408 = vadd.f32 %v4406, %v4407
  %v4409 = vsel %vm26, %v4292, 0.0
  %v4410 = vadd.f32 %v4408, %v4409
  %v4411 = vsel %vm26, %v4293, 0.0
  %v4412 = vadd.f32 %v4410, %v4411
  %v4413 = vsel %vm26, %v4294, 0.0
  %v4414 = vadd.f32 %v4412, %v4413
  %v4415 = vsel %vm26, %v4295, 0.0
  %v4416 = vadd.f32 %v4414, %v4415
  %v4417 = vsel %vm26, %v4296, 0.0
  %v4418 = vadd.f32 %v4416, %v4417
  %v4419 = vsel %vm26, %v4297, 0.0
  %v4420 = vadd.f32 %v4418, %v4419
  %v4421 = vsel %vm26, %v4298, 0.0
  %v4422 = vadd.f32 %v4420, %v4421
  %v4423 = vsel %vm26, %v4299, 0.0
  %v4424 = vadd.f32 %v4422, %v4423
  %v4425 = vsel %vm26, %v4300, 0.0
  %v4426 = vadd.f32 %v4424, %v4425
  %v4427 = vsel %vm26, %v4301, 0.0
  %v4428 = vadd.f32 %v4426, %v4427
  %v4429 = vrot.slane %v4428, 4
  %v4430 = vadd.f32 %v4428, %v4429
  %v4431 = vrot.slane %v4430, 2
  %v4432 = vadd.f32 %v4430, %v4431
  %v4433 = vrot.slane %v4432, 1
  %v4434 = vadd.f32 %v4432, %v4433
  %v4435 = vmul.f32 %v4237, 0.001953125
  %v4436 = vmul.f32 %v4434, 0.001953125
  %v4437 = vmul.f32 %v4435, %v4435
  %v4438 = vsub.f32 %v4436, %v4437
  %v4439 = vadd.f32 %v4438, 1e-05
  %v4440 = vrsqrt.pop %v4439
  %v4441 = vmul.f32 %v4103, %v4440
  %v4442 = vmul.f32 %v4435, %v4441
  %v4443 = vsub.f32 %v4104, %v4442
  %v4445 = vlaneseq
  %v4446 = vshrl.u32 %v4445, 7
  %v4447 = vsub.s32 0, %v4446
  %v4448 = vrot.slane %v4441, %v4447
  %v4450 = vmul.f32 %v3785, %v4448
  %v4451 = vmul.f32 %v3790, %v4448
  %v4452 = vmul.f32 %v3795, %v4448
  %v4453 = vmul.f32 %v3800, %v4448
  %v4454 = vmul.f32 %v3805, %v4448
  %v4455 = vmul.f32 %v3810, %v4448
  %v4456 = vmul.f32 %v3815, %v4448
  %v4457 = vmul.f32 %v3820, %v4448
  %v4458 = vmul.f32 %v3825, %v4448
  %v4459 = vmul.f32 %v3830, %v4448
  %v4460 = vmul.f32 %v3835, %v4448
  %v4461 = vmul.f32 %v3840, %v4448
  %v4462 = vmul.f32 %v3845, %v4448
  %v4463 = vmul.f32 %v3850, %v4448
  %v4464 = vmul.f32 %v3855, %v4448
  %v4465 = vmul.f32 %v3860, %v4448
  %v4466 = vmul.f32 %v3865, %v4448
  %v4467 = vmul.f32 %v3870, %v4448
  %v4468 = vmul.f32 %v3875, %v4448
  %v4469 = vmul.f32 %v3880, %v4448
  %v4470 = vmul.f32 %v3885, %v4448
  %v4471 = vmul.f32 %v3890, %v4448
  %v4472 = vmul.f32 %v3895, %v4448
  %v4473 = vmul.f32 %v3900, %v4448
  %v4474 = vmul.f32 %v3905, %v4448
  %v4475 = vmul.f32 %v3910, %v4448
  %v4476 = vmul.f32 %v3915, %v4448
  %v4477 = vmul.f32 %v3920, %v4448
  %v4478 = vmul.f32 %v3925, %v4448
  %v4479 = vmul.f32 %v3930, %v4448
  %v4480 = vmul.f32 %v3935, %v4448
  %v4481 = vmul.f32 %v3940, %v4448
  %v4482 = vmul.f32 %v3945, %v4448
  %v4483 = vmul.f32 %v3950, %v4448
  %v4484 = vmul.f32 %v3955, %v4448
  %v4485 = vmul.f32 %v3960, %v4448
  %v4486 = vmul.f32 %v3965, %v4448
  %v4487 = vmul.f32 %v3970, %v4448
  %v4488 = vmul.f32 %v3975, %v4448
  %v4489 = vmul.f32 %v3980, %v4448
  %v4490 = vmul.f32 %v3985, %v4448
  %v4491 = vmul.f32 %v3990, %v4448
  %v4492 = vmul.f32 %v3995, %v4448
  %v4493 = vmul.f32 %v4000, %v4448
  %v4494 = vmul.f32 %v4005, %v4448
  %v4495 = vmul.f32 %v4010, %v4448
  %v4496 = vmul.f32 %v4015, %v4448
  %v4497 = vmul.f32 %v4020, %v4448
  %v4498 = vmul.f32 %v4025, %v4448
  %v4499 = vmul.f32 %v4030, %v4448
  %v4500 = vmul.f32 %v4035, %v4448
  %v4501 = vmul.f32 %v4040, %v4448
  %v4502 = vmul.f32 %v4045, %v4448
  %v4503 = vmul.f32 %v4050, %v4448
  %v4504 = vmul.f32 %v4055, %v4448
  %v4505 = vmul.f32 %v4060, %v4448
  %v4506 = vmul.f32 %v4065, %v4448
  %v4507 = vmul.f32 %v4070, %v4448
  %v4508 = vmul.f32 %v4075, %v4448
  %v4509 = vmul.f32 %v4080, %v4448
  %v4510 = vmul.f32 %v4085, %v4448
  %v4511 = vmul.f32 %v4090, %v4448
  %v4512 = vmul.f32 %v4095, %v4448
  %v4513 = vmul.f32 %v4100, %v4448
  %v4515 = vlaneseq
  %v4516 = vshrl.u32 %v4515, 7
  %v4517 = vsub.s32 0, %v4516
  %v4518 = vrot.slane %v4443, %v4517
  %v4520 = vadd.f32 %v4450, %v4518
  %v4521 = vadd.f32 %v4451, %v4518
  %v4522 = vadd.f32 %v4452, %v4518
  %v4523 = vadd.f32 %v4453, %v4518
  %v4524 = vadd.f32 %v4454, %v4518
  %v4525 = vadd.f32 %v4455, %v4518
  %v4526 = vadd.f32 %v4456, %v4518
  %v4527 = vadd.f32 %v4457, %v4518
  %v4528 = vadd.f32 %v4458, %v4518
  %v4529 = vadd.f32 %v4459, %v4518
  %v4530 = vadd.f32 %v4460, %v4518
  %v4531 = vadd.f32 %v4461, %v4518
  %v4532 = vadd.f32 %v4462, %v4518
  %v4533 = vadd.f32 %v4463, %v4518
  %v4534 = vadd.f32 %v4464, %v4518
  %v4535 = vadd.f32 %v4465, %v4518
  %v4536 = vadd.f32 %v4466, %v4518
  %v4537 = vadd.f32 %v4467, %v4518
  %v4538 = vadd.f32 %v4468, %v4518
  %v4539 = vadd.f32 %v4469, %v4518
  %v4540 = vadd.f32 %v4470, %v4518
  %v4541 = vadd.f32 %v4471, %v4518
  %v4542 = vadd.f32 %v4472, %v4518
  %v4543 = vadd.f32 %v4473, %v4518
  %v4544 = vadd.f32 %v4474, %v4518
  %v4545 = vadd.f32 %v4475, %v4518
  %v4546 = vadd.f32 %v4476, %v4518
  %v4547 = vadd.f32 %v4477, %v4518
  %v4548 = vadd.f32 %v4478, %v4518
  %v4549 = vadd.f32 %v4479, %v4518
  %v4550 = vadd.f32 %v4480, %v4518
  %v4551 = vadd.f32 %v4481, %v4518
  %v4552 = vadd.f32 %v4482, %v4518
  %v4553 = vadd.f32 %v4483, %v4518
  %v4554 = vadd.f32 %v4484, %v4518
  %v4555 = vadd.f32 %v4485, %v4518
  %v4556 = vadd.f32 %v4486, %v4518
  %v4557 = vadd.f32 %v4487, %v4518
  %v4558 = vadd.f32 %v4488, %v4518
  %v4559 = vadd.f32 %v4489, %v4518
  %v4560 = vadd.f32 %v4490, %v4518
  %v4561 = vadd.f32 %v4491, %v4518
  %v4562 = vadd.f32 %v4492, %v4518
  %v4563 = vadd.f32 %v4493, %v4518
  %v4564 = vadd.f32 %v4494, %v4518
  %v4565 = vadd.f32 %v4495, %v4518
  %v4566 = vadd.f32 %v4496, %v4518
  %v4567 = vadd.f32 %v4497, %v4518
  %v4568 = vadd.f32 %v4498, %v4518
  %v4569 = vadd.f32 %v4499, %v4518
  %v4570 = vadd.f32 %v4500, %v4518
  %v4571 = vadd.f32 %v4501, %v4518
  %v4572 = vadd.f32 %v4502, %v4518
  %v4573 = vadd.f32 %v4503, %v4518
  %v4574 = vadd.f32 %v4504, %v4518
  %v4575 = vadd.f32 %v4505, %v4518
  %v4576 = vadd.f32 %v4506, %v4518
  %v4577 = vadd.f32 %v4507, %v4518
  %v4578 = vadd.f32 %v4508, %v4518
  %v4579 = vadd.f32 %v4509, %v4518
  %v4580 = vadd.f32 %v4510, %v4518
  %v4581 = vadd.f32 %v4511, %v4518
  %v4582 = vadd.f32 %v4512, %v4518
  %v4583 = vadd.f32 %v4513, %v4518
  %v4584 = vmax.f32 %v4520, 0.0
  %v4585 = vmax.f32 %v4521, 0.0
  %v4586 = vmax.f32 %v4522, 0.0
  %v4587 = vmax.f32 %v4523, 0.0
  %v4588 = vmax.f32 %v4524, 0.0
  %v4589 = vmax.f32 %v4525, 0.0
  %v4590 = vmax.f32 %v4526, 0.0
  %v4591 = vmax.f32 %v4527, 0.0
  %v4592 = vmax.f32 %v4528, 0.0
  %v4593 = vmax.f32 %v4529, 0.0
  %v4594 = vmax.f32 %v4530, 0.0
  %v4595 = vmax.f32 %v4531, 0.0
  %v4596 = vmax.f32 %v4532, 0.0
  %v4597 = vmax.f32 %v4533, 0.0
  %v4598 = vmax.f32 %v4534, 0.0
  %v4599 = vmax.f32 %v4535, 0.0
  %v4600 = vmax.f32 %v4536, 0.0
  %v4601 = vmax.f32 %v4537, 0.0
  %v4602 = vmax.f32 %v4538, 0.0
  %v4603 = vmax.f32 %v4539, 0.0
  %v4604 = vmax.f32 %v4540, 0.0
  %v4605 = vmax.f32 %v4541, 0.0
  %v4606 = vmax.f32 %v4542, 0.0
  %v4607 = vmax.f32 %v4543, 0.0
  %v4608 = vmax.f32 %v4544, 0.0
  %v4609 = vmax.f32 %v4545, 0.0
  %v4610 = vmax.f32 %v4546, 0.0
  %v4611 = vmax.f32 %v4547, 0.0
  %v4612 = vmax.f32 %v4548, 0.0
  %v4613 = vmax.f32 %v4549, 0.0
  %v4614 = vmax.f32 %v4550, 0.0
  %v4615 = vmax.f32 %v4551, 0.0
  %v4616 = vmax.f32 %v4552, 0.0
  %v4617 = vmax.f32 %v4553, 0.0
  %v4618 = vmax.f32 %v4554, 0.0
  %v4619 = vmax.f32 %v4555, 0.0
  %v4620 = vmax.f32 %v4556, 0.0
  %v4621 = vmax.f32 %v4557, 0.0
  %v4622 = vmax.f32 %v4558, 0.0
  %v4623 = vmax.f32 %v4559, 0.0
  %v4624 = vmax.f32 %v4560, 0.0
  %v4625 = vmax.f32 %v4561, 0.0
  %v4626 = vmax.f32 %v4562, 0.0
  %v4627 = vmax.f32 %v4563, 0.0
  %v4628 = vmax.f32 %v4564, 0.0
  %v4629 = vmax.f32 %v4565, 0.0
  %v4630 = vmax.f32 %v4566, 0.0
  %v4631 = vmax.f32 %v4567, 0.0
  %v4632 = vmax.f32 %v4568, 0.0
  %v4633 = vmax.f32 %v4569, 0.0
  %v4634 = vmax.f32 %v4570, 0.0
  %v4635 = vmax.f32 %v4571, 0.0
  %v4636 = vmax.f32 %v4572, 0.0
  %v4637 = vmax.f32 %v4573, 0.0
  %v4638 = vmax.f32 %v4574, 0.0
  %v4639 = vmax.f32 %v4575, 0.0
  %v4640 = vmax.f32 %v4576, 0.0
  %v4641 = vmax.f32 %v4577, 0.0
  %v4642 = vmax.f32 %v4578, 0.0
  %v4643 = vmax.f32 %v4579, 0.0
  %v4644 = vmax.f32 %v4580, 0.0
  %v4645 = vmax.f32 %v4581, 0.0
  %v4646 = vmax.f32 %v4582, 0.0
  %v4647 = vmax.f32 %v4583, 0.0
  %4648 = vst.msk [vmem:[%s178 + $0x1] sm:$0xff] %vm26, %v4584
  %4649 = vst.msk [vmem:[%s178 + $0x9] sm:$0xff] %vm26, %v4585
  %4650 = vst.msk [vmem:[%s178 + $0x19] sm:$0xff] %vm26, %v4586
  %4651 = vst.msk [vmem:[%s178 + $0x21] sm:$0xff] %vm26, %v4587
  %4652 = vst.msk [vmem:[%s178 + $0x31] sm:$0xff] %vm26, %v4588
  %4653 = vst.msk [vmem:[%s178 + $0x39] sm:$0xff] %vm26, %v4589
  %4654 = vst.msk [vmem:[%s178 + $0x49] sm:$0xff] %vm26, %v4590
  %4655 = vst.msk [vmem:[%s178 + $0x51] sm:$0xff] %vm26, %v4591
  %4656 = vst.msk [vmem:[%s178 + $0x61] sm:$0xff] %vm26, %v4592
  %4657 = vst.msk [vmem:[%s178 + $0x69] sm:$0xff] %vm26, %v4593
  %4658 = vst.msk [vmem:[%s178 + $0x79] sm:$0xff] %vm26, %v4594
  %4659 = vst.msk [vmem:[%s178 + $0x81] sm:$0xff] %vm26, %v4595
  %4660 = vst.msk [vmem:[%s178 + $0x91] sm:$0xff] %vm26, %v4596
  %4661 = vst.msk [vmem:[%s178 + $0x99] sm:$0xff] %vm26, %v4597
  %4662 = vst.msk [vmem:[%s178 + $0xa9] sm:$0xff] %vm26, %v4598
  %4663 = vst.msk [vmem:[%s178 + $0xb1] sm:$0xff] %vm26, %v4599
  %4664 = vst.msk [vmem:[%s178 + $0xc1] sm:$0xff] %vm26, %v4600
  %4665 = vst.msk [vmem:[%s178 + $0xc9] sm:$0xff] %vm26, %v4601
  %4666 = vst.msk [vmem:[%s178 + $0xd9] sm:$0xff] %vm26, %v4602
  %4667 = vst.msk [vmem:[%s178 + $0xe1] sm:$0xff] %vm26, %v4603
  %4668 = vst.msk [vmem:[%s178 + $0xf1] sm:$0xff] %vm26, %v4604
  %4669 = vst.msk [vmem:[%s178 + $0xf9] sm:$0xff] %vm26, %v4605
  %4670 = vst.msk [vmem:[%s178 + $0x109] sm:$0xff] %vm26, %v4606
  %4671 = vst.msk [vmem:[%s178 + $0x111] sm:$0xff] %vm26, %v4607
  %4672 = vst.msk [vmem:[%s178 + $0x121] sm:$0xff] %vm26, %v4608
  %4673 = vst.msk [vmem:[%s178 + $0x129] sm:$0xff] %vm26, %v4609
  %4674 = vst.msk [vmem:[%s178 + $0x139] sm:$0xff] %vm26, %v4610
  %4675 = vst.msk [vmem:[%s178 + $0x141] sm:$0xff] %vm26, %v4611
  %4676 = vst.msk [vmem:[%s178 + $0x151] sm:$0xff] %vm26, %v4612
  %4677 = vst.msk [vmem:[%s178 + $0x159] sm:$0xff] %vm26, %v4613
  %4678 = vst.msk [vmem:[%s178 + $0x169] sm:$0xff] %vm26, %v4614
  %4679 = vst.msk [vmem:[%s178 + $0x171] sm:$0xff] %vm26, %v4615
  %4680 = vst.msk [vmem:[%s178 + $0x1b1] sm:$0xff] %vm26, %v4616
  %4681 = vst.msk [vmem:[%s178 + $0x1b9] sm:$0xff] %vm26, %v4617
  %4682 = vst.msk [vmem:[%s178 + $0x1c9] sm:$0xff] %vm26, %v4618
  %4683 = vst.msk [vmem:[%s178 + $0x1d1] sm:$0xff] %vm26, %v4619
  %4684 = vst.msk [vmem:[%s178 + $0x1e1] sm:$0xff] %vm26, %v4620
  %4685 = vst.msk [vmem:[%s178 + $0x1e9] sm:$0xff] %vm26, %v4621
  %4686 = vst.msk [vmem:[%s178 + $0x1f9] sm:$0xff] %vm26, %v4622
  %4687 = vst.msk [vmem:[%s178 + $0x201] sm:$0xff] %vm26, %v4623
  %4688 = vst.msk [vmem:[%s178 + $0x211] sm:$0xff] %vm26, %v4624
  %4689 = vst.msk [vmem:[%s178 + $0x219] sm:$0xff] %vm26, %v4625
  %4690 = vst.msk [vmem:[%s178 + $0x229] sm:$0xff] %vm26, %v4626
  %4691 = vst.msk [vmem:[%s178 + $0x231] sm:$0xff] %vm26, %v4627
  %4692 = vst.msk [vmem:[%s178 + $0x241] sm:$0xff] %vm26, %v4628
  %4693 = vst.msk [vmem:[%s178 + $0x249] sm:$0xff] %vm26, %v4629
  %4694 = vst.msk [vmem:[%s178 + $0x259] sm:$0xff] %vm26, %v4630
  %4695 = vst.msk [vmem:[%s178 + $0x261] sm:$0xff] %vm26, %v4631
  %4696 = vst.msk [vmem:[%s178 + $0x271] sm:$0xff] %vm26, %v4632
  %4697 = vst.msk [vmem:[%s178 + $0x279] sm:$0xff] %vm26, %v4633
  %4698 = vst.msk [vmem:[%s178 + $0x289] sm:$0xff] %vm26, %v4634
  %4699 = vst.msk [vmem:[%s178 + $0x291] sm:$0xff] %vm26, %v4635
  %4700 = vst.msk [vmem:[%s178 + $0x2a1] sm:$0xff] %vm26, %v4636
  %4701 = vst.msk [vmem:[%s178 + $0x2a9] sm:$0xff] %vm26, %v4637
  %4702 = vst.msk [vmem:[%s178 + $0x2b9] sm:$0xff] %vm26, %v4638
  %4703 = vst.msk [vmem:[%s178 + $0x2c1] sm:$0xff] %vm26, %v4639
  %4704 = vst.msk [vmem:[%s178 + $0x2d1] sm:$0xff] %vm26, %v4640
  %4705 = vst.msk [vmem:[%s178 + $0x2d9] sm:$0xff] %vm26, %v4641
  %4706 = vst.msk [vmem:[%s178 + $0x2e9] sm:$0xff] %vm26, %v4642
  %4707 = vst.msk [vmem:[%s178 + $0x2f1] sm:$0xff] %vm26, %v4643
  %4708 = vst.msk [vmem:[%s178 + $0x301] sm:$0xff] %vm26, %v4644
  %4709 = vst.msk [vmem:[%s178 + $0x309] sm:$0xff] %vm26, %v4645
  %4710 = vst.msk [vmem:[%s178 + $0x319] sm:$0xff] %vm26, %v4646
  %4711 = vst.msk [vmem:[%s178 + $0x321] sm:$0xff] %vm26, %v4647
  %v4712 = vld [vmem:[#allocation2] sm:$0xff]
  %v4713 = vld [vmem:[#allocation2 + $0x8] sm:$0xff]
  %v4714 = vld [vmem:[#allocation2 + $0x18] sm:$0xff]
  %v4715 = vld [vmem:[#allocation2 + $0x20] sm:$0xff]
  %v4716 = vld [vmem:[#allocation2 + $0x30] sm:$0xff]
  %v4717 = vld [vmem:[#allocation2 + $0x38] sm:$0xff]
  %v4718 = vld [vmem:[#allocation2 + $0x48] sm:$0xff]
  %v4719 = vld [vmem:[#allocation2 + $0x50] sm:$0xff]
  %v4720 = vld [vmem:[#allocation2 + $0x60] sm:$0xff]
  %v4721 = vld [vmem:[#allocation2 + $0x68] sm:$0xff]
  %v4722 = vld [vmem:[#allocation2 + $0x78] sm:$0xff]
  %v4723 = vld [vmem:[#allocation2 + $0x80] sm:$0xff]
  %v4724 = vld [vmem:[#allocation2 + $0x90] sm:$0xff]
  %v4725 = vld [vmem:[#allocation2 + $0x98] sm:$0xff]
  %v4726 = vld [vmem:[#allocation2 + $0xa8] sm:$0xff]
  %v4727 = vld [vmem:[#allocation2 + $0xb0] sm:$0xff]
  %v4728 = vld [vmem:[#allocation2 + $0xc0] sm:$0xff]
  %v4729 = vld [vmem:[#allocation2 + $0xc8] sm:$0xff]
  %v4730 = vld [vmem:[#allocation2 + $0xd8] sm:$0xff]
  %v4731 = vld [vmem:[#allocation2 + $0xe0] sm:$0xff]
  %v4732 = vld [vmem:[#allocation2 + $0xf0] sm:$0xff]
  %v4733 = vld [vmem:[#allocation2 + $0xf8] sm:$0xff]
  %v4734 = vld [vmem:[#allocation2 + $0x108] sm:$0xff]
  %v4735 = vld [vmem:[#allocation2 + $0x110] sm:$0xff]
  %v4736 = vld [vmem:[#allocation2 + $0x120] sm:$0xff]
  %v4737 = vld [vmem:[#allocation2 + $0x128] sm:$0xff]
  %v4738 = vld [vmem:[#allocation2 + $0x138] sm:$0xff]
  %v4739 = vld [vmem:[#allocation2 + $0x140] sm:$0xff]
  %v4740 = vld [vmem:[#allocation2 + $0x150] sm:$0xff]
  %v4741 = vld [vmem:[#allocation2 + $0x158] sm:$0xff]
  %v4742 = vld [vmem:[#allocation2 + $0x168] sm:$0xff]
  %v4743 = vld [vmem:[#allocation2 + $0x170] sm:$0xff]
  %v4744 = vld [vmem:[#allocation2 + $0x1b0] sm:$0xff]
  %v4745 = vld [vmem:[#allocation2 + $0x1b8] sm:$0xff]
  %v4746 = vld [vmem:[#allocation2 + $0x1c8] sm:$0xff]
  %v4747 = vld [vmem:[#allocation2 + $0x1d0] sm:$0xff]
  %v4748 = vld [vmem:[#allocation2 + $0x1e0] sm:$0xff]
  %v4749 = vld [vmem:[#allocation2 + $0x1e8] sm:$0xff]
  %v4750 = vld [vmem:[#allocation2 + $0x1f8] sm:$0xff]
  %v4751 = vld [vmem:[#allocation2 + $0x200] sm:$0xff]
  %v4752 = vld [vmem:[#allocation2 + $0x210] sm:$0xff]
  %v4753 = vld [vmem:[#allocation2 + $0x218] sm:$0xff]
  %v4754 = vld [vmem:[#allocation2 + $0x228] sm:$0xff]
  %v4755 = vld [vmem:[#allocation2 + $0x230] sm:$0xff]
  %v4756 = vld [vmem:[#allocation2 + $0x240] sm:$0xff]
  %v4757 = vld [vmem:[#allocation2 + $0x248] sm:$0xff]
  %v4758 = vld [vmem:[#allocation2 + $0x258] sm:$0xff]
  %v4759 = vld [vmem:[#allocation2 + $0x260] sm:$0xff]
  %v4760 = vld [vmem:[#allocation2 + $0x270] sm:$0xff]
  %v4761 = vld [vmem:[#allocation2 + $0x278] sm:$0xff]
  %v4762 = vld [vmem:[#allocation2 + $0x288] sm:$0xff]
  %v4763 = vld [vmem:[#allocation2 + $0x290] sm:$0xff]
  %v4764 = vld [vmem:[#allocation2 + $0x2a0] sm:$0xff]
  %v4765 = vld [vmem:[#allocation2 + $0x2a8] sm:$0xff]
  %v4766 = vld [vmem:[#allocation2 + $0x2b8] sm:$0xff]
  %v4767 = vld [vmem:[#allocation2 + $0x2c0] sm:$0xff]
  %v4768 = vld [vmem:[#allocation2 + $0x2d0] sm:$0xff]
  %v4769 = vld [vmem:[#allocation2 + $0x2d8] sm:$0xff]
  %v4770 = vld [vmem:[#allocation2 + $0x2e8] sm:$0xff]
  %v4771 = vld [vmem:[#allocation2 + $0x2f0] sm:$0xff]
  %v4772 = vld [vmem:[#allocation2 + $0x300] sm:$0xff]
  %v4773 = vld [vmem:[#allocation2 + $0x308] sm:$0xff]
  %v4774 = vld [vmem:[#allocation2 + $0x318] sm:$0xff]
  %v4775 = vld [vmem:[#allocation2 + $0x320] sm:$0xff]
  %4776 = vst.msk [vmem:[#allocation3] sm:$0xff] %vm26, %v4712
  %4777 = vst.msk [vmem:[#allocation3 + $0x8] sm:$0xff] %vm26, %v4713
  %4778 = vst.msk [vmem:[#allocation3 + $0x10] sm:$0xff] %vm26, %v4714
  %4779 = vst.msk [vmem:[#allocation3 + $0x18] sm:$0xff] %vm26, %v4715
  %4780 = vst.msk [vmem:[#allocation3 + $0x20] sm:$0xff] %vm26, %v4716
  %4781 = vst.msk [vmem:[#allocation3 + $0x28] sm:$0xff] %vm26, %v4717
  %4782 = vst.msk [vmem:[#allocation3 + $0x30] sm:$0xff] %vm26, %v4718
  %4783 = vst.msk [vmem:[#allocation3 + $0x38] sm:$0xff] %vm26, %v4719
  %4784 = vst.msk [vmem:[#allocation3 + $0x40] sm:$0xff] %vm26, %v4720
  %4785 = vst.msk [vmem:[#allocation3 + $0x48] sm:$0xff] %vm26, %v4721
  %4786 = vst.msk [vmem:[#allocation3 + $0x50] sm:$0xff] %vm26, %v4722
  %4787 = vst.msk [vmem:[#allocation3 + $0x58] sm:$0xff] %vm26, %v4723
  %4788 = vst.msk [vmem:[#allocation3 + $0x60] sm:$0xff] %vm26, %v4724
  %4789 = vst.msk [vmem:[#allocation3 + $0x68] sm:$0xff] %vm26, %v4725
  %4790 = vst.msk [vmem:[#allocation3 + $0x70] sm:$0xff] %vm26, %v4726
  %4791 = vst.msk [vmem:[#allocation3 + $0x78] sm:$0xff] %vm26, %v4727
  %4792 = vst.msk [vmem:[#allocation3 + $0x80] sm:$0xff] %vm26, %v4728
  %4793 = vst.msk [vmem:[#allocation3 + $0x88] sm:$0xff] %vm26, %v4729
  %4794 = vst.msk [vmem:[#allocation3 + $0x90] sm:$0xff] %vm26, %v4730
  %4795 = vst.msk [vmem:[#allocation3 + $0x98] sm:$0xff] %vm26, %v4731
  %4796 = vst.msk [vmem:[#allocation3 + $0xa0] sm:$0xff] %vm26, %v4732
  %4797 = vst.msk [vmem:[#allocation3 + $0xa8] sm:$0xff] %vm26, %v4733
  %4798 = vst.msk [vmem:[#allocation3 + $0xb0] sm:$0xff] %vm26, %v4734
  %4799 = vst.msk [vmem:[#allocation3 + $0xb8] sm:$0xff] %vm26, %v4735
  %4800 = vst.msk [vmem:[#allocation3 + $0xc0] sm:$0xff] %vm26, %v4736
  %4801 = vst.msk [vmem:[#allocation3 + $0xc8] sm:$0xff] %vm26, %v4737
  %4802 = vst.msk [vmem:[#allocation3 + $0xd0] sm:$0xff] %vm26, %v4738
  %4803 = vst.msk [vmem:[#allocation3 + $0xd8] sm:$0xff] %vm26, %v4739
  %4804 = vst.msk [vmem:[#allocation3 + $0xe0] sm:$0xff] %vm26, %v4740
  %4805 = vst.msk [vmem:[#allocation3 + $0xe8] sm:$0xff] %vm26, %v4741
  %4806 = vst.msk [vmem:[#allocation3 + $0xf0] sm:$0xff] %vm26, %v4742
  %4807 = vst.msk [vmem:[#allocation3 + $0xf8] sm:$0xff] %vm26, %v4743
  %4808 = vst.msk [vmem:[#allocation3 + $0x100] sm:$0xff] %vm26, %v4744
  %4809 = vst.msk [vmem:[#allocation3 + $0x108] sm:$0xff] %vm26, %v4745
  %4810 = vst.msk [vmem:[#allocation3 + $0x110] sm:$0xff] %vm26, %v4746
  %4811 = vst.msk [vmem:[#allocation3 + $0x118] sm:$0xff] %vm26, %v4747
  %4812 = vst.msk [vmem:[#allocation3 + $0x120] sm:$0xff] %vm26, %v4748
  %4813 = vst.msk [vmem:[#allocation3 + $0x128] sm:$0xff] %vm26, %v4749
  %4814 = vst.msk [vmem:[#allocation3 + $0x130] sm:$0xff] %vm26, %v4750
  %4815 = vst.msk [vmem:[#allocation3 + $0x138] sm:$0xff] %vm26, %v4751
  %4816 = vst.msk [vmem:[#allocation3 + $0x140] sm:$0xff] %vm26, %v4752
  %4817 = vst.msk [vmem:[#allocation3 + $0x148] sm:$0xff] %vm26, %v4753
  %4818 = vst.msk [vmem:[#allocation3 + $0x150] sm:$0xff] %vm26, %v4754
  %4819 = vst.msk [vmem:[#allocation3 + $0x158] sm:$0xff] %vm26, %v4755
  %4820 = vst.msk [vmem:[#allocation3 + $0x160] sm:$0xff] %vm26, %v4756
  %4821 = vst.msk [vmem:[#allocation3 + $0x168] sm:$0xff] %vm26, %v4757
  %4822 = vst.msk [vmem:[#allocation3 + $0x170] sm:$0xff] %vm26, %v4758
  %4823 = vst.msk [vmem:[#allocation3 + $0x178] sm:$0xff] %vm26, %v4759
  %4824 = vst.msk [vmem:[#allocation3 + $0x180] sm:$0xff] %vm26, %v4760
  %4825 = vst.msk [vmem:[#allocation3 + $0x188] sm:$0xff] %vm26, %v4761
  %4826 = vst.msk [vmem:[#allocation3 + $0x190] sm:$0xff] %vm26, %v4762
  %4827 = vst.msk [vmem:[#allocation3 + $0x198] sm:$0xff] %vm26, %v4763
  %4828 = vst.msk [vmem:[#allocation3 + $0x1a0] sm:$0xff] %vm26, %v4764
  %4829 = vst.msk [vmem:[#allocation3 + $0x1a8] sm:$0xff] %vm26, %v4765
  %4830 = vst.msk [vmem:[#allocation3 + $0x1b0] sm:$0xff] %vm26, %v4766
  %4831 = vst.msk [vmem:[#allocation3 + $0x1b8] sm:$0xff] %vm26, %v4767
  %4832 = vst.msk [vmem:[#allocation3 + $0x1c0] sm:$0xff] %vm26, %v4768
  %4833 = vst.msk [vmem:[#allocation3 + $0x1c8] sm:$0xff] %vm26, %v4769
  %4834 = vst.msk [vmem:[#allocation3 + $0x1d0] sm:$0xff] %vm26, %v4770
  %4835 = vst.msk [vmem:[#allocation3 + $0x1d8] sm:$0xff] %vm26, %v4771
  %4836 = vst.msk [vmem:[#allocation3 + $0x1e0] sm:$0xff] %vm26, %v4772
  %4837 = vst.msk [vmem:[#allocation3 + $0x1e8] sm:$0xff] %vm26, %v4773
  %4838 = vst.msk [vmem:[#allocation3 + $0x1f0] sm:$0xff] %vm26, %v4774
  %4839 = vst.msk [vmem:[#allocation3 + $0x1f8] sm:$0xff] %vm26, %v4775
  %v4840 = vld [vmem:[#allocation2 + $0x1] sm:$0xff]
  %v4841 = vld [vmem:[#allocation2 + $0x9] sm:$0xff]
  %v4842 = vld [vmem:[#allocation2 + $0x19] sm:$0xff]
  %v4843 = vld [vmem:[#allocation2 + $0x21] sm:$0xff]
  %v4844 = vld [vmem:[#allocation2 + $0x31] sm:$0xff]
  %v4845 = vld [vmem:[#allocation2 + $0x39] sm:$0xff]
  %v4846 = vld [vmem:[#allocation2 + $0x49] sm:$0xff]
  %v4847 = vld [vmem:[#allocation2 + $0x51] sm:$0xff]
  %v4848 = vld [vmem:[#allocation2 + $0x61] sm:$0xff]
  %v4849 = vld [vmem:[#allocation2 + $0x69] sm:$0xff]
  %v4850 = vld [vmem:[#allocation2 + $0x79] sm:$0xff]
  %v4851 = vld [vmem:[#allocation2 + $0x81] sm:$0xff]
  %v4852 = vld [vmem:[#allocation2 + $0x91] sm:$0xff]
  %v4853 = vld [vmem:[#allocation2 + $0x99] sm:$0xff]
  %v4854 = vld [vmem:[#allocation2 + $0xa9] sm:$0xff]
  %v4855 = vld [vmem:[#allocation2 + $0xb1] sm:$0xff]
  %v4856 = vld [vmem:[#allocation2 + $0xc1] sm:$0xff]
  %v4857 = vld [vmem:[#allocation2 + $0xc9] sm:$0xff]
  %v4858 = vld [vmem:[#allocation2 + $0xd9] sm:$0xff]
  %v4859 = vld [vmem:[#allocation2 + $0xe1] sm:$0xff]
  %v4860 = vld [vmem:[#allocation2 + $0xf1] sm:$0xff]
  %v4861 = vld [vmem:[#allocation2 + $0xf9] sm:$0xff]
  %v4862 = vld [vmem:[#allocation2 + $0x109] sm:$0xff]
  %v4863 = vld [vmem:[#allocation2 + $0x111] sm:$0xff]
  %v4864 = vld [vmem:[#allocation2 + $0x121] sm:$0xff]
  %v4865 = vld [vmem:[#allocation2 + $0x129] sm:$0xff]
  %v4866 = vld [vmem:[#allocation2 + $0x139] sm:$0xff]
  %v4867 = vld [vmem:[#allocation2 + $0x141] sm:$0xff]
  %v4868 = vld [vmem:[#allocation2 + $0x151] sm:$0xff]
  %v4869 = vld [vmem:[#allocation2 + $0x159] sm:$0xff]
  %v4870 = vld [vmem:[#allocation2 + $0x169] sm:$0xff]
  %v4871 = vld [vmem:[#allocation2 + $0x171] sm:$0xff]
  %v4872 = vld [vmem:[#allocation2 + $0x1b1] sm:$0xff]
  %v4873 = vld [vmem:[#allocation2 + $0x1b9] sm:$0xff]
  %v4874 = vld [vmem:[#allocation2 + $0x1c9] sm:$0xff]
  %v4875 = vld [vmem:[#allocation2 + $0x1d1] sm:$0xff]
  %v4876 = vld [vmem:[#allocation2 + $0x1e1] sm:$0xff]
  %v4877 = vld [vmem:[#allocation2 + $0x1e9] sm:$0xff]
  %v4878 = vld [vmem:[#allocation2 + $0x1f9] sm:$0xff]
  %v4879 = vld [vmem:[#allocation2 + $0x201] sm:$0xff]
  %v4880 = vld [vmem:[#allocation2 + $0x211] sm:$0xff]
  %v4881 = vld [vmem:[#allocation2 + $0x219] sm:$0xff]
  %v4882 = vld [vmem:[#allocation2 + $0x229] sm:$0xff]
  %v4883 = vld [vmem:[#allocation2 + $0x231] sm:$0xff]
  %v4884 = vld [vmem:[#allocation2 + $0x241] sm:$0xff]
  %v4885 = vld [vmem:[#allocation2 + $0x249] sm:$0xff]
  %v4886 = vld [vmem:[#allocation2 + $0x259] sm:$0xff]
  %v4887 = vld [vmem:[#allocation2 + $0x261] sm:$0xff]
  %v4888 = vld [vmem:[#allocation2 + $0x271] sm:$0xff]
  %v4889 = vld [vmem:[#allocation2 + $0x279] sm:$0xff]
  %v4890 = vld [vmem:[#allocation2 + $0x289] sm:$0xff]
  %v4891 = vld [vmem:[#allocation2 + $0x291] sm:$0xff]
  %v4892 = vld [vmem:[#allocation2 + $0x2a1] sm:$0xff]
  %v4893 = vld [vmem:[#allocation2 + $0x2a9] sm:$0xff]
  %v4894 = vld [vmem:[#allocation2 + $0x2b9] sm:$0xff]
  %v4895 = vld [vmem:[#allocation2 + $0x2c1] sm:$0xff]
  %v4896 = vld [vmem:[#allocation2 + $0x2d1] sm:$0xff]
  %v4897 = vld [vmem:[#allocation2 + $0x2d9] sm:$0xff]
  %v4898 = vld [vmem:[#allocation2 + $0x2e9] sm:$0xff]
  %v4899 = vld [vmem:[#allocation2 + $0x2f1] sm:$0xff]
  %v4900 = vld [vmem:[#allocation2 + $0x301] sm:$0xff]
  %v4901 = vld [vmem:[#allocation2 + $0x309] sm:$0xff]
  %v4902 = vld [vmem:[#allocation2 + $0x319] sm:$0xff]
  %v4903 = vld [vmem:[#allocation2 + $0x321] sm:$0xff]
  %4968 = vrot.lane.b32.xlu0 %v4840, 8
  %v4969 = vpop.permute.xlu0 %4968
  %4970 = vrot.lane.b32.xlu0 %v4841, 8
  %v4971 = vpop.permute.xlu0 %4970
  %4972 = vrot.lane.b32.xlu0 %v4842, 8
  %v4973 = vpop.permute.xlu0 %4972
  %4974 = vrot.lane.b32.xlu0 %v4843, 8
  %v4975 = vpop.permute.xlu0 %4974
  %4976 = vrot.lane.b32.xlu0 %v4844, 8
  %v4977 = vpop.permute.xlu0 %4976
  %4978 = vrot.lane.b32.xlu0 %v4845, 8
  %v4979 = vpop.permute.xlu0 %4978
  %4980 = vrot.lane.b32.xlu0 %v4846, 8
  %v4981 = vpop.permute.xlu0 %4980
  %4982 = vrot.lane.b32.xlu0 %v4847, 8
  %v4983 = vpop.permute.xlu0 %4982
  %4984 = vrot.lane.b32.xlu0 %v4848, 8
  %v4985 = vpop.permute.xlu0 %4984
  %4986 = vrot.lane.b32.xlu0 %v4849, 8
  %v4987 = vpop.permute.xlu0 %4986
  %4988 = vrot.lane.b32.xlu0 %v4850, 8
  %v4989 = vpop.permute.xlu0 %4988
  %4990 = vrot.lane.b32.xlu0 %v4851, 8
  %v4991 = vpop.permute.xlu0 %4990
  %4992 = vrot.lane.b32.xlu0 %v4852, 8
  %v4993 = vpop.permute.xlu0 %4992
  %4994 = vrot.lane.b32.xlu0 %v4853, 8
  %v4995 = vpop.permute.xlu0 %4994
  %4996 = vrot.lane.b32.xlu0 %v4854, 8
  %v4997 = vpop.permute.xlu0 %4996
  %4998 = vrot.lane.b32.xlu0 %v4855, 8
  %v4999 = vpop.permute.xlu0 %4998
  %5000 = vrot.lane.b32.xlu0 %v4856, 8
  %v5001 = vpop.permute.xlu0 %5000
  %5002 = vrot.lane.b32.xlu0 %v4857, 8
  %v5003 = vpop.permute.xlu0 %5002
  %5004 = vrot.lane.b32.xlu0 %v4858, 8
  %v5005 = vpop.permute.xlu0 %5004
  %5006 = vrot.lane.b32.xlu0 %v4859, 8
  %v5007 = vpop.permute.xlu0 %5006
  %5008 = vrot.lane.b32.xlu0 %v4860, 8
  %v5009 = vpop.permute.xlu0 %5008
  %5010 = vrot.lane.b32.xlu0 %v4861, 8
  %v5011 = vpop.permute.xlu0 %5010
  %5012 = vrot.lane.b32.xlu0 %v4862, 8
  %v5013 = vpop.permute.xlu0 %5012
  %5014 = vrot.lane.b32.xlu0 %v4863, 8
  %v5015 = vpop.permute.xlu0 %5014
  %5016 = vrot.lane.b32.xlu0 %v4864, 8
  %v5017 = vpop.permute.xlu0 %5016
  %5018 = vrot.lane.b32.xlu0 %v4865, 8
  %v5019 = vpop.permute.xlu0 %5018
  %5020 = vrot.lane.b32.xlu0 %v4866, 8
  %v5021 = vpop.permute.xlu0 %5020
  %5022 = vrot.lane.b32.xlu0 %v4867, 8
  %v5023 = vpop.permute.xlu0 %5022
  %5024 = vrot.lane.b32.xlu0 %v4868, 8
  %v5025 = vpop.permute.xlu0 %5024
  %5026 = vrot.lane.b32.xlu0 %v4869, 8
  %v5027 = vpop.permute.xlu0 %5026
  %5028 = vrot.lane.b32.xlu0 %v4870, 8
  %v5029 = vpop.permute.xlu0 %5028
  %5030 = vrot.lane.b32.xlu0 %v4871, 8
  %v5031 = vpop.permute.xlu0 %5030
  %5032 = vrot.lane.b32.xlu0 %v4872, 8
  %v5033 = vpop.permute.xlu0 %5032
  %5034 = vrot.lane.b32.xlu0 %v4873, 8
  %v5035 = vpop.permute.xlu0 %5034
  %5036 = vrot.lane.b32.xlu0 %v4874, 8
  %v5037 = vpop.permute.xlu0 %5036
  %5038 = vrot.lane.b32.xlu0 %v4875, 8
  %v5039 = vpop.permute.xlu0 %5038
  %5040 = vrot.lane.b32.xlu0 %v4876, 8
  %v5041 = vpop.permute.xlu0 %5040
  %5042 = vrot.lane.b32.xlu0 %v4877, 8
  %v5043 = vpop.permute.xlu0 %5042
  %5044 = vrot.lane.b32.xlu0 %v4878, 8
  %v5045 = vpop.permute.xlu0 %5044
  %5046 = vrot.lane.b32.xlu0 %v4879, 8
  %v5047 = vpop.permute.xlu0 %5046
  %5048 = vrot.lane.b32.xlu0 %v4880, 8
  %v5049 = vpop.permute.xlu0 %5048
  %5050 = vrot.lane.b32.xlu0 %v4881, 8
  %v5051 = vpop.permute.xlu0 %5050
  %5052 = vrot.lane.b32.xlu0 %v4882, 8
  %v5053 = vpop.permute.xlu0 %5052
  %5054 = vrot.lane.b32.xlu0 %v4883, 8
  %v5055 = vpop.permute.xlu0 %5054
  %5056 = vrot.lane.b32.xlu0 %v4884, 8
  %v5057 = vpop.permute.xlu0 %5056
  %5058 = vrot.lane.b32.xlu0 %v4885, 8
  %v5059 = vpop.permute.xlu0 %5058
  %5060 = vrot.lane.b32.xlu0 %v4886, 8
  %v5061 = vpop.permute.xlu0 %5060
  %5062 = vrot.lane.b32.xlu0 %v4887, 8
  %v5063 = vpop.permute.xlu0 %5062
  %5064 = vrot.lane.b32.xlu0 %v4888, 8
  %v5065 = vpop.permute.xlu0 %5064
  %5066 = vrot.lane.b32.xlu0 %v4889, 8
  %v5067 = vpop.permute.xlu0 %5066
  %5068 = vrot.lane.b32.xlu0 %v4890, 8
  %v5069 = vpop.permute.xlu0 %5068
  %5070 = vrot.lane.b32.xlu0 %v4891, 8
  %v5071 = vpop.permute.xlu0 %5070
  %5072 = vrot.lane.b32.xlu0 %v4892, 8
  %v5073 = vpop.permute.xlu0 %5072
  %5074 = vrot.lane.b32.xlu0 %v4893, 8
  %v5075 = vpop.permute.xlu0 %5074
  %5076 = vrot.lane.b32.xlu0 %v4894, 8
  %v5077 = vpop.permute.xlu0 %5076
  %5078 = vrot.lane.b32.xlu0 %v4895, 8
  %v5079 = vpop.permute.xlu0 %5078
  %5080 = vrot.lane.b32.xlu0 %v4896, 8
  %v5081 = vpop.permute.xlu0 %5080
  %5082 = vrot.lane.b32.xlu0 %v4897, 8
  %v5083 = vpop.permute.xlu0 %5082
  %5084 = vrot.lane.b32.xlu0 %v4898, 8
  %v5085 = vpop.permute.xlu0 %5084
  %5086 = vrot.lane.b32.xlu0 %v4899, 8
  %v5087 = vpop.permute.xlu0 %5086
  %5088 = vrot.lane.b32.xlu0 %v4900, 8
  %v5089 = vpop.permute.xlu0 %5088
  %5090 = vrot.lane.b32.xlu0 %v4901, 8
  %v5091 = vpop.permute.xlu0 %5090
  %5092 = vrot.lane.b32.xlu0 %v4902, 8
  %v5093 = vpop.permute.xlu0 %5092
  %5094 = vrot.lane.b32.xlu0 %v4903, 8
  %v5095 = vpop.permute.xlu0 %5094
  %5160 = vst.msk [vmem:[#allocation3] sm:$0xff] %vm691, %v4969
  %5161 = vst.msk [vmem:[#allocation3 + $0x8] sm:$0xff] %vm691, %v4971
  %5162 = vst.msk [vmem:[#allocation3 + $0x10] sm:$0xff] %vm691, %v4973
  %5163 = vst.msk [vmem:[#allocation3 + $0x18] sm:$0xff] %vm691, %v4975
  %5164 = vst.msk [vmem:[#allocation3 + $0x20] sm:$0xff] %vm691, %v4977
  %5165 = vst.msk [vmem:[#allocation3 + $0x28] sm:$0xff] %vm691, %v4979
  %5166 = vst.msk [vmem:[#allocation3 + $0x30] sm:$0xff] %vm691, %v4981
  %5167 = vst.msk [vmem:[#allocation3 + $0x38] sm:$0xff] %vm691, %v4983
  %5168 = vst.msk [vmem:[#allocation3 + $0x40] sm:$0xff] %vm691, %v4985
  %5169 = vst.msk [vmem:[#allocation3 + $0x48] sm:$0xff] %vm691, %v4987
  %5170 = vst.msk [vmem:[#allocation3 + $0x50] sm:$0xff] %vm691, %v4989
  %5171 = vst.msk [vmem:[#allocation3 + $0x58] sm:$0xff] %vm691, %v4991
  %5172 = vst.msk [vmem:[#allocation3 + $0x60] sm:$0xff] %vm691, %v4993
  %5173 = vst.msk [vmem:[#allocation3 + $0x68] sm:$0xff] %vm691, %v4995
  %5174 = vst.msk [vmem:[#allocation3 + $0x70] sm:$0xff] %vm691, %v4997
  %5175 = vst.msk [vmem:[#allocation3 + $0x78] sm:$0xff] %vm691, %v4999
  %5176 = vst.msk [vmem:[#allocation3 + $0x80] sm:$0xff] %vm691, %v5001
  %5177 = vst.msk [vmem:[#allocation3 + $0x88] sm:$0xff] %vm691, %v5003
  %5178 = vst.msk [vmem:[#allocation3 + $0x90] sm:$0xff] %vm691, %v5005
  %5179 = vst.msk [vmem:[#allocation3 + $0x98] sm:$0xff] %vm691, %v5007
  %5180 = vst.msk [vmem:[#allocation3 + $0xa0] sm:$0xff] %vm691, %v5009
  %5181 = vst.msk [vmem:[#allocation3 + $0xa8] sm:$0xff] %vm691, %v5011
  %5182 = vst.msk [vmem:[#allocation3 + $0xb0] sm:$0xff] %vm691, %v5013
  %5183 = vst.msk [vmem:[#allocation3 + $0xb8] sm:$0xff] %vm691, %v5015
  %5184 = vst.msk [vmem:[#allocation3 + $0xc0] sm:$0xff] %vm691, %v5017
  %5185 = vst.msk [vmem:[#allocation3 + $0xc8] sm:$0xff] %vm691, %v5019
  %5186 = vst.msk [vmem:[#allocation3 + $0xd0] sm:$0xff] %vm691, %v5021
  %5187 = vst.msk [vmem:[#allocation3 + $0xd8] sm:$0xff] %vm691, %v5023
  %5188 = vst.msk [vmem:[#allocation3 + $0xe0] sm:$0xff] %vm691, %v5025
  %5189 = vst.msk [vmem:[#allocation3 + $0xe8] sm:$0xff] %vm691, %v5027
  %5190 = vst.msk [vmem:[#allocation3 + $0xf0] sm:$0xff] %vm691, %v5029
  %5191 = vst.msk [vmem:[#allocation3 + $0xf8] sm:$0xff] %vm691, %v5031
  %5192 = vst.msk [vmem:[#allocation3 + $0x100] sm:$0xff] %vm691, %v5033
  %5193 = vst.msk [vmem:[#allocation3 + $0x108] sm:$0xff] %vm691, %v5035
  %5194 = vst.msk [vmem:[#allocation3 + $0x110] sm:$0xff] %vm691, %v5037
  %5195 = vst.msk [vmem:[#allocation3 + $0x118] sm:$0xff] %vm691, %v5039
  %5196 = vst.msk [vmem:[#allocation3 + $0x120] sm:$0xff] %vm691, %v5041
  %5197 = vst.msk [vmem:[#allocation3 + $0x128] sm:$0xff] %vm691, %v5043
  %5198 = vst.msk [vmem:[#allocation3 + $0x130] sm:$0xff] %vm691, %v5045
  %5199 = vst.msk [vmem:[#allocation3 + $0x138] sm:$0xff] %vm691, %v5047
  %5200 = vst.msk [vmem:[#allocation3 + $0x140] sm:$0xff] %vm691, %v5049
  %5201 = vst.msk [vmem:[#allocation3 + $0x148] sm:$0xff] %vm691, %v5051
  %5202 = vst.msk [vmem:[#allocation3 + $0x150] sm:$0xff] %vm691, %v5053
  %5203 = vst.msk [vmem:[#allocation3 + $0x158] sm:$0xff] %vm691, %v5055
  %5204 = vst.msk [vmem:[#allocation3 + $0x160] sm:$0xff] %vm691, %v5057
  %5205 = vst.msk [vmem:[#allocation3 + $0x168] sm:$0xff] %vm691, %v5059
  %5206 = vst.msk [vmem:[#allocation3 + $0x170] sm:$0xff] %vm691, %v5061
  %5207 = vst.msk [vmem:[#allocation3 + $0x178] sm:$0xff] %vm691, %v5063
  %5208 = vst.msk [vmem:[#allocation3 + $0x180] sm:$0xff] %vm691, %v5065
  %5209 = vst.msk [vmem:[#allocation3 + $0x188] sm:$0xff] %vm691, %v5067
  %5210 = vst.msk [vmem:[#allocation3 + $0x190] sm:$0xff] %vm691, %v5069
  %5211 = vst.msk [vmem:[#allocation3 + $0x198] sm:$0xff] %vm691, %v5071
  %5212 = vst.msk [vmem:[#allocation3 + $0x1a0] sm:$0xff] %vm691, %v5073
  %5213 = vst.msk [vmem:[#allocation3 + $0x1a8] sm:$0xff] %vm691, %v5075
  %5214 = vst.msk [vmem:[#allocation3 + $0x1b0] sm:$0xff] %vm691, %v5077
  %5215 = vst.msk [vmem:[#allocation3 + $0x1b8] sm:$0xff] %vm691, %v5079
  %5216 = vst.msk [vmem:[#allocation3 + $0x1c0] sm:$0xff] %vm691, %v5081
  %5217 = vst.msk [vmem:[#allocation3 + $0x1c8] sm:$0xff] %vm691, %v5083
  %5218 = vst.msk [vmem:[#allocation3 + $0x1d0] sm:$0xff] %vm691, %v5085
  %5219 = vst.msk [vmem:[#allocation3 + $0x1d8] sm:$0xff] %vm691, %v5087
  %5220 = vst.msk [vmem:[#allocation3 + $0x1e0] sm:$0xff] %vm691, %v5089
  %5221 = vst.msk [vmem:[#allocation3 + $0x1e8] sm:$0xff] %vm691, %v5091
  %5222 = vst.msk [vmem:[#allocation3 + $0x1f0] sm:$0xff] %vm691, %v5093
  %5223 = vst.msk [vmem:[#allocation3 + $0x1f8] sm:$0xff] %vm691, %v5095
  %v5224 = vld [vmem:[#allocation2 + $0x2] sm:$0xff]
  %v5225 = vld [vmem:[#allocation2 + $0xa] sm:$0xff]
  %v5226 = vld [vmem:[#allocation2 + $0x1a] sm:$0xff]
  %v5227 = vld [vmem:[#allocation2 + $0x22] sm:$0xff]
  %v5228 = vld [vmem:[#allocation2 + $0x32] sm:$0xff]
  %v5229 = vld [vmem:[#allocation2 + $0x3a] sm:$0xff]
  %v5230 = vld [vmem:[#allocation2 + $0x4a] sm:$0xff]
  %v5231 = vld [vmem:[#allocation2 + $0x52] sm:$0xff]
  %v5232 = vld [vmem:[#allocation2 + $0x62] sm:$0xff]
  %v5233 = vld [vmem:[#allocation2 + $0x6a] sm:$0xff]
  %v5234 = vld [vmem:[#allocation2 + $0x7a] sm:$0xff]
  %v5235 = vld [vmem:[#allocation2 + $0x82] sm:$0xff]
  %v5236 = vld [vmem:[#allocation2 + $0x92] sm:$0xff]
  %v5237 = vld [vmem:[#allocation2 + $0x9a] sm:$0xff]
  %v5238 = vld [vmem:[#allocation2 + $0xaa] sm:$0xff]
  %v5239 = vld [vmem:[#allocation2 + $0xb2] sm:$0xff]
  %v5240 = vld [vmem:[#allocation2 + $0xc2] sm:$0xff]
  %v5241 = vld [vmem:[#allocation2 + $0xca] sm:$0xff]
  %v5242 = vld [vmem:[#allocation2 + $0xda] sm:$0xff]
  %v5243 = vld [vmem:[#allocation2 + $0xe2] sm:$0xff]
  %v5244 = vld [vmem:[#allocation2 + $0xf2] sm:$0xff]
  %v5245 = vld [vmem:[#allocation2 + $0xfa] sm:$0xff]
  %v5246 = vld [vmem:[#allocation2 + $0x10a] sm:$0xff]
  %v5247 = vld [vmem:[#allocation2 + $0x112] sm:$0xff]
  %v5248 = vld [vmem:[#allocation2 + $0x122] sm:$0xff]
  %v5249 = vld [vmem:[#allocation2 + $0x12a] sm:$0xff]
  %v5250 = vld [vmem:[#allocation2 + $0x13a] sm:$0xff]
  %v5251 = vld [vmem:[#allocation2 + $0x142] sm:$0xff]
  %v5252 = vld [vmem:[#allocation2 + $0x152] sm:$0xff]
  %v5253 = vld [vmem:[#allocation2 + $0x15a] sm:$0xff]
  %v5254 = vld [vmem:[#allocation2 + $0x16a] sm:$0xff]
  %v5255 = vld [vmem:[#allocation2 + $0x172] sm:$0xff]
  %v5256 = vld [vmem:[#allocation2 + $0x1b2] sm:$0xff]
  %v5257 = vld [vmem:[#allocation2 + $0x1ba] sm:$0xff]
  %v5258 = vld [vmem:[#allocation2 + $0x1ca] sm:$0xff]
  %v5259 = vld [vmem:[#allocation2 + $0x1d2] sm:$0xff]
  %v5260 = vld [vmem:[#allocation2 + $0x1e2] sm:$0xff]
  %v5261 = vld [vmem:[#allocation2 + $0x1ea] sm:$0xff]
  %v5262 = vld [vmem:[#allocation2 + $0x1fa] sm:$0xff]
  %v5263 = vld [vmem:[#allocation2 + $0x202] sm:$0xff]
  %v5264 = vld [vmem:[#allocation2 + $0x212] sm:$0xff]
  %v5265 = vld [vmem:[#allocation2 + $0x21a] sm:$0xff]
  %v5266 = vld [vmem:[#allocation2 + $0x22a] sm:$0xff]
  %v5267 = vld [vmem:[#allocation2 + $0x232] sm:$0xff]
  %v5268 = vld [vmem:[#allocation2 + $0x242] sm:$0xff]
  %v5269 = vld [vmem:[#allocation2 + $0x24a] sm:$0xff]
  %v5270 = vld [vmem:[#allocation2 + $0x25a] sm:$0xff]
  %v5271 = vld [vmem:[#allocation2 + $0x262] sm:$0xff]
  %v5272 = vld [vmem:[#allocation2 + $0x272] sm:$0xff]
  %v5273 = vld [vmem:[#allocation2 + $0x27a] sm:$0xff]
  %v5274 = vld [vmem:[#allocation2 + $0x28a] sm:$0xff]
  %v5275 = vld [vmem:[#allocation2 + $0x292] sm:$0xff]
  %v5276 = vld [vmem:[#allocation2 + $0x2a2] sm:$0xff]
  %v5277 = vld [vmem:[#allocation2 + $0x2aa] sm:$0xff]
  %v5278 = vld [vmem:[#allocation2 + $0x2ba] sm:$0xff]
  %v5279 = vld [vmem:[#allocation2 + $0x2c2] sm:$0xff]
  %v5280 = vld [vmem:[#allocation2 + $0x2d2] sm:$0xff]
  %v5281 = vld [vmem:[#allocation2 + $0x2da] sm:$0xff]
  %v5282 = vld [vmem:[#allocation2 + $0x2ea] sm:$0xff]
  %v5283 = vld [vmem:[#allocation2 + $0x2f2] sm:$0xff]
  %v5284 = vld [vmem:[#allocation2 + $0x302] sm:$0xff]
  %v5285 = vld [vmem:[#allocation2 + $0x30a] sm:$0xff]
  %v5286 = vld [vmem:[#allocation2 + $0x31a] sm:$0xff]
  %v5287 = vld [vmem:[#allocation2 + $0x322] sm:$0xff]
  %5352 = vrot.lane.b32.xlu0 %v5224, 16
  %v5353 = vpop.permute.xlu0 %5352
  %5354 = vrot.lane.b32.xlu0 %v5225, 16
  %v5355 = vpop.permute.xlu0 %5354
  %5356 = vrot.lane.b32.xlu0 %v5226, 16
  %v5357 = vpop.permute.xlu0 %5356
  %5358 = vrot.lane.b32.xlu0 %v5227, 16
  %v5359 = vpop.permute.xlu0 %5358
  %5360 = vrot.lane.b32.xlu0 %v5228, 16
  %v5361 = vpop.permute.xlu0 %5360
  %5362 = vrot.lane.b32.xlu0 %v5229, 16
  %v5363 = vpop.permute.xlu0 %5362
  %5364 = vrot.lane.b32.xlu0 %v5230, 16
  %v5365 = vpop.permute.xlu0 %5364
  %5366 = vrot.lane.b32.xlu0 %v5231, 16
  %v5367 = vpop.permute.xlu0 %5366
  %5368 = vrot.lane.b32.xlu0 %v5232, 16
  %v5369 = vpop.permute.xlu0 %5368
  %5370 = vrot.lane.b32.xlu0 %v5233, 16
  %v5371 = vpop.permute.xlu0 %5370
  %5372 = vrot.lane.b32.xlu0 %v5234, 16
  %v5373 = vpop.permute.xlu0 %5372
  %5374 = vrot.lane.b32.xlu0 %v5235, 16
  %v5375 = vpop.permute.xlu0 %5374
  %5376 = vrot.lane.b32.xlu0 %v5236, 16
  %v5377 = vpop.permute.xlu0 %5376
  %5378 = vrot.lane.b32.xlu0 %v5237, 16
  %v5379 = vpop.permute.xlu0 %5378
  %5380 = vrot.lane.b32.xlu0 %v5238, 16
  %v5381 = vpop.permute.xlu0 %5380
  %5382 = vrot.lane.b32.xlu0 %v5239, 16
  %v5383 = vpop.permute.xlu0 %5382
  %5384 = vrot.lane.b32.xlu0 %v5240, 16
  %v5385 = vpop.permute.xlu0 %5384
  %5386 = vrot.lane.b32.xlu0 %v5241, 16
  %v5387 = vpop.permute.xlu0 %5386
  %5388 = vrot.lane.b32.xlu0 %v5242, 16
  %v5389 = vpop.permute.xlu0 %5388
  %5390 = vrot.lane.b32.xlu0 %v5243, 16
  %v5391 = vpop.permute.xlu0 %5390
  %5392 = vrot.lane.b32.xlu0 %v5244, 16
  %v5393 = vpop.permute.xlu0 %5392
  %5394 = vrot.lane.b32.xlu0 %v5245, 16
  %v5395 = vpop.permute.xlu0 %5394
  %5396 = vrot.lane.b32.xlu0 %v5246, 16
  %v5397 = vpop.permute.xlu0 %5396
  %5398 = vrot.lane.b32.xlu0 %v5247, 16
  %v5399 = vpop.permute.xlu0 %5398
  %5400 = vrot.lane.b32.xlu0 %v5248, 16
  %v5401 = vpop.permute.xlu0 %5400
  %5402 = vrot.lane.b32.xlu0 %v5249, 16
  %v5403 = vpop.permute.xlu0 %5402
  %5404 = vrot.lane.b32.xlu0 %v5250, 16
  %v5405 = vpop.permute.xlu0 %5404
  %5406 = vrot.lane.b32.xlu0 %v5251, 16
  %v5407 = vpop.permute.xlu0 %5406
  %5408 = vrot.lane.b32.xlu0 %v5252, 16
  %v5409 = vpop.permute.xlu0 %5408
  %5410 = vrot.lane.b32.xlu0 %v5253, 16
  %v5411 = vpop.permute.xlu0 %5410
  %5412 = vrot.lane.b32.xlu0 %v5254, 16
  %v5413 = vpop.permute.xlu0 %5412
  %5414 = vrot.lane.b32.xlu0 %v5255, 16
  %v5415 = vpop.permute.xlu0 %5414
  %5416 = vrot.lane.b32.xlu0 %v5256, 16
  %v5417 = vpop.permute.xlu0 %5416
  %5418 = vrot.lane.b32.xlu0 %v5257, 16
  %v5419 = vpop.permute.xlu0 %5418
  %5420 = vrot.lane.b32.xlu0 %v5258, 16
  %v5421 = vpop.permute.xlu0 %5420
  %5422 = vrot.lane.b32.xlu0 %v5259, 16
  %v5423 = vpop.permute.xlu0 %5422
  %5424 = vrot.lane.b32.xlu0 %v5260, 16
  %v5425 = vpop.permute.xlu0 %5424
  %5426 = vrot.lane.b32.xlu0 %v5261, 16
  %v5427 = vpop.permute.xlu0 %5426
  %5428 = vrot.lane.b32.xlu0 %v5262, 16
  %v5429 = vpop.permute.xlu0 %5428
  %5430 = vrot.lane.b32.xlu0 %v5263, 16
  %v5431 = vpop.permute.xlu0 %5430
  %5432 = vrot.lane.b32.xlu0 %v5264, 16
  %v5433 = vpop.permute.xlu0 %5432
  %5434 = vrot.lane.b32.xlu0 %v5265, 16
  %v5435 = vpop.permute.xlu0 %5434
  %5436 = vrot.lane.b32.xlu0 %v5266, 16
  %v5437 = vpop.permute.xlu0 %5436
  %5438 = vrot.lane.b32.xlu0 %v5267, 16
  %v5439 = vpop.permute.xlu0 %5438
  %5440 = vrot.lane.b32.xlu0 %v5268, 16
  %v5441 = vpop.permute.xlu0 %5440
  %5442 = vrot.lane.b32.xlu0 %v5269, 16
  %v5443 = vpop.permute.xlu0 %5442
  %5444 = vrot.lane.b32.xlu0 %v5270, 16
  %v5445 = vpop.permute.xlu0 %5444
  %5446 = vrot.lane.b32.xlu0 %v5271, 16
  %v5447 = vpop.permute.xlu0 %5446
  %5448 = vrot.lane.b32.xlu0 %v5272, 16
  %v5449 = vpop.permute.xlu0 %5448
  %5450 = vrot.lane.b32.xlu0 %v5273, 16
  %v5451 = vpop.permute.xlu0 %5450
  %5452 = vrot.lane.b32.xlu0 %v5274, 16
  %v5453 = vpop.permute.xlu0 %5452
  %5454 = vrot.lane.b32.xlu0 %v5275, 16
  %v5455 = vpop.permute.xlu0 %5454
  %5456 = vrot.lane.b32.xlu0 %v5276, 16
  %v5457 = vpop.permute.xlu0 %5456
  %5458 = vrot.lane.b32.xlu0 %v5277, 16
  %v5459 = vpop.permute.xlu0 %5458
  %5460 = vrot.lane.b32.xlu0 %v5278, 16
  %v5461 = vpop.permute.xlu0 %5460
  %5462 = vrot.lane.b32.xlu0 %v5279, 16
  %v5463 = vpop.permute.xlu0 %5462
  %5464 = vrot.lane.b32.xlu0 %v5280, 16
  %v5465 = vpop.permute.xlu0 %5464
  %5466 = vrot.lane.b32.xlu0 %v5281, 16
  %v5467 = vpop.permute.xlu0 %5466
  %5468 = vrot.lane.b32.xlu0 %v5282, 16
  %v5469 = vpop.permute.xlu0 %5468
  %5470 = vrot.lane.b32.xlu0 %v5283, 16
  %v5471 = vpop.permute.xlu0 %5470
  %5472 = vrot.lane.b32.xlu0 %v5284, 16
  %v5473 = vpop.permute.xlu0 %5472
  %5474 = vrot.lane.b32.xlu0 %v5285, 16
  %v5475 = vpop.permute.xlu0 %5474
  %5476 = vrot.lane.b32.xlu0 %v5286, 16
  %v5477 = vpop.permute.xlu0 %5476
  %5478 = vrot.lane.b32.xlu0 %v5287, 16
  %v5479 = vpop.permute.xlu0 %5478
  %5544 = vst.msk [vmem:[#allocation3] sm:$0xff] %vm1076, %v5353
  %5545 = vst.msk [vmem:[#allocation3 + $0x8] sm:$0xff] %vm1076, %v5355
  %5546 = vst.msk [vmem:[#allocation3 + $0x10] sm:$0xff] %vm1076, %v5357
  %5547 = vst.msk [vmem:[#allocation3 + $0x18] sm:$0xff] %vm1076, %v5359
  %5548 = vst.msk [vmem:[#allocation3 + $0x20] sm:$0xff] %vm1076, %v5361
  %5549 = vst.msk [vmem:[#allocation3 + $0x28] sm:$0xff] %vm1076, %v5363
  %5550 = vst.msk [vmem:[#allocation3 + $0x30] sm:$0xff] %vm1076, %v5365
  %5551 = vst.msk [vmem:[#allocation3 + $0x38] sm:$0xff] %vm1076, %v5367
  %5552 = vst.msk [vmem:[#allocation3 + $0x40] sm:$0xff] %vm1076, %v5369
  %5553 = vst.msk [vmem:[#allocation3 + $0x48] sm:$0xff] %vm1076, %v5371
  %5554 = vst.msk [vmem:[#allocation3 + $0x50] sm:$0xff] %vm1076, %v5373
  %5555 = vst.msk [vmem:[#allocation3 + $0x58] sm:$0xff] %vm1076, %v5375
  %5556 = vst.msk [vmem:[#allocation3 + $0x60] sm:$0xff] %vm1076, %v5377
  %5557 = vst.msk [vmem:[#allocation3 + $0x68] sm:$0xff] %vm1076, %v5379
  %5558 = vst.msk [vmem:[#allocation3 + $0x70] sm:$0xff] %vm1076, %v5381
  %5559 = vst.msk [vmem:[#allocation3 + $0x78] sm:$0xff] %vm1076, %v5383
  %5560 = vst.msk [vmem:[#allocation3 + $0x80] sm:$0xff] %vm1076, %v5385
  %5561 = vst.msk [vmem:[#allocation3 + $0x88] sm:$0xff] %vm1076, %v5387
  %5562 = vst.msk [vmem:[#allocation3 + $0x90] sm:$0xff] %vm1076, %v5389
  %5563 = vst.msk [vmem:[#allocation3 + $0x98] sm:$0xff] %vm1076, %v5391
  %5564 = vst.msk [vmem:[#allocation3 + $0xa0] sm:$0xff] %vm1076, %v5393
  %5565 = vst.msk [vmem:[#allocation3 + $0xa8] sm:$0xff] %vm1076, %v5395
  %5566 = vst.msk [vmem:[#allocation3 + $0xb0] sm:$0xff] %vm1076, %v5397
  %5567 = vst.msk [vmem:[#allocation3 + $0xb8] sm:$0xff] %vm1076, %v5399
  %5568 = vst.msk [vmem:[#allocation3 + $0xc0] sm:$0xff] %vm1076, %v5401
  %5569 = vst.msk [vmem:[#allocation3 + $0xc8] sm:$0xff] %vm1076, %v5403
  %5570 = vst.msk [vmem:[#allocation3 + $0xd0] sm:$0xff] %vm1076, %v5405
  %5571 = vst.msk [vmem:[#allocation3 + $0xd8] sm:$0xff] %vm1076, %v5407
  %5572 = vst.msk [vmem:[#allocation3 + $0xe0] sm:$0xff] %vm1076, %v5409
  %5573 = vst.msk [vmem:[#allocation3 + $0xe8] sm:$0xff] %vm1076, %v5411
  %5574 = vst.msk [vmem:[#allocation3 + $0xf0] sm:$0xff] %vm1076, %v5413
  %5575 = vst.msk [vmem:[#allocation3 + $0xf8] sm:$0xff] %vm1076, %v5415
  %5576 = vst.msk [vmem:[#allocation3 + $0x100] sm:$0xff] %vm1076, %v5417
  %5577 = vst.msk [vmem:[#allocation3 + $0x108] sm:$0xff] %vm1076, %v5419
  %5578 = vst.msk [vmem:[#allocation3 + $0x110] sm:$0xff] %vm1076, %v5421
  %5579 = vst.msk [vmem:[#allocation3 + $0x118] sm:$0xff] %vm1076, %v5423
  %5580 = vst.msk [vmem:[#allocation3 + $0x120] sm:$0xff] %vm1076, %v5425
  %5581 = vst.msk [vmem:[#allocation3 + $0x128] sm:$0xff] %vm1076, %v5427
  %5582 = vst.msk [vmem:[#allocation3 + $0x130] sm:$0xff] %vm1076, %v5429
  %5583 = vst.msk [vmem:[#allocation3 + $0x138] sm:$0xff] %vm1076, %v5431
  %5584 = vst.msk [vmem:[#allocation3 + $0x140] sm:$0xff] %vm1076, %v5433
  %5585 = vst.msk [vmem:[#allocation3 + $0x148] sm:$0xff] %vm1076, %v5435
  %5586 = vst.msk [vmem:[#allocation3 + $0x150] sm:$0xff] %vm1076, %v5437
  %5587 = vst.msk [vmem:[#allocation3 + $0x158] sm:$0xff] %vm1076, %v5439
  %5588 = vst.msk [vmem:[#allocation3 + $0x160] sm:$0xff] %vm1076, %v5441
  %5589 = vst.msk [vmem:[#allocation3 + $0x168] sm:$0xff] %vm1076, %v5443
  %5590 = vst.msk [vmem:[#allocation3 + $0x170] sm:$0xff] %vm1076, %v5445
  %5591 = vst.msk [vmem:[#allocation3 + $0x178] sm:$0xff] %vm1076, %v5447
  %5592 = vst.msk [vmem:[#allocation3 + $0x180] sm:$0xff] %vm1076, %v5449
  %5593 = vst.msk [vmem:[#allocation3 + $0x188] sm:$0xff] %vm1076, %v5451
  %5594 = vst.msk [vmem:[#allocation3 + $0x190] sm:$0xff] %vm1076, %v5453
  %5595 = vst.msk [vmem:[#allocation3 + $0x198] sm:$0xff] %vm1076, %v5455
  %5596 = vst.msk [vmem:[#allocation3 + $0x1a0] sm:$0xff] %vm1076, %v5457
  %5597 = vst.msk [vmem:[#allocation3 + $0x1a8] sm:$0xff] %vm1076, %v5459
  %5598 = vst.msk [vmem:[#allocation3 + $0x1b0] sm:$0xff] %vm1076, %v5461
  %5599 = vst.msk [vmem:[#allocation3 + $0x1b8] sm:$0xff] %vm1076, %v5463
  %5600 = vst.msk [vmem:[#allocation3 + $0x1c0] sm:$0xff] %vm1076, %v5465
  %5601 = vst.msk [vmem:[#allocation3 + $0x1c8] sm:$0xff] %vm1076, %v5467
  %5602 = vst.msk [vmem:[#allocation3 + $0x1d0] sm:$0xff] %vm1076, %v5469
  %5603 = vst.msk [vmem:[#allocation3 + $0x1d8] sm:$0xff] %vm1076, %v5471
  %5604 = vst.msk [vmem:[#allocation3 + $0x1e0] sm:$0xff] %vm1076, %v5473
  %5605 = vst.msk [vmem:[#allocation3 + $0x1e8] sm:$0xff] %vm1076, %v5475
  %5606 = vst.msk [vmem:[#allocation3 + $0x1f0] sm:$0xff] %vm1076, %v5477
  %5607 = vst.msk [vmem:[#allocation3 + $0x1f8] sm:$0xff] %vm1076, %v5479
  %v5608 = vld [vmem:[%s178] sm:$0xff]
  %v5609 = vld [vmem:[%s178 + $0x8] sm:$0xff]
  %v5610 = vld [vmem:[%s178 + $0x18] sm:$0xff]
  %v5611 = vld [vmem:[%s178 + $0x20] sm:$0xff]
  %v5612 = vld [vmem:[%s178 + $0x30] sm:$0xff]
  %v5613 = vld [vmem:[%s178 + $0x38] sm:$0xff]
  %v5614 = vld [vmem:[%s178 + $0x48] sm:$0xff]
  %v5615 = vld [vmem:[%s178 + $0x50] sm:$0xff]
  %v5616 = vld [vmem:[%s178 + $0x60] sm:$0xff]
  %v5617 = vld [vmem:[%s178 + $0x68] sm:$0xff]
  %v5618 = vld [vmem:[%s178 + $0x78] sm:$0xff]
  %v5619 = vld [vmem:[%s178 + $0x80] sm:$0xff]
  %v5620 = vld [vmem:[%s178 + $0x90] sm:$0xff]
  %v5621 = vld [vmem:[%s178 + $0x98] sm:$0xff]
  %v5622 = vld [vmem:[%s178 + $0xa8] sm:$0xff]
  %v5623 = vld [vmem:[%s178 + $0xb0] sm:$0xff]
  %v5624 = vld [vmem:[%s178 + $0xc0] sm:$0xff]
  %v5625 = vld [vmem:[%s178 + $0xc8] sm:$0xff]
  %v5626 = vld [vmem:[%s178 + $0xd8] sm:$0xff]
  %v5627 = vld [vmem:[%s178 + $0xe0] sm:$0xff]
  %v5628 = vld [vmem:[%s178 + $0xf0] sm:$0xff]
  %v5629 = vld [vmem:[%s178 + $0xf8] sm:$0xff]
  %v5630 = vld [vmem:[%s178 + $0x108] sm:$0xff]
  %v5631 = vld [vmem:[%s178 + $0x110] sm:$0xff]
  %v5632 = vld [vmem:[%s178 + $0x120] sm:$0xff]
  %v5633 = vld [vmem:[%s178 + $0x128] sm:$0xff]
  %v5634 = vld [vmem:[%s178 + $0x138] sm:$0xff]
  %v5635 = vld [vmem:[%s178 + $0x140] sm:$0xff]
  %v5636 = vld [vmem:[%s178 + $0x150] sm:$0xff]
  %v5637 = vld [vmem:[%s178 + $0x158] sm:$0xff]
  %v5638 = vld [vmem:[%s178 + $0x168] sm:$0xff]
  %v5639 = vld [vmem:[%s178 + $0x170] sm:$0xff]
  %v5640 = vld [vmem:[%s178 + $0x1b0] sm:$0xff]
  %v5641 = vld [vmem:[%s178 + $0x1b8] sm:$0xff]
  %v5642 = vld [vmem:[%s178 + $0x1c8] sm:$0xff]
  %v5643 = vld [vmem:[%s178 + $0x1d0] sm:$0xff]
  %v5644 = vld [vmem:[%s178 + $0x1e0] sm:$0xff]
  %v5645 = vld [vmem:[%s178 + $0x1e8] sm:$0xff]
  %v5646 = vld [vmem:[%s178 + $0x1f8] sm:$0xff]
  %v5647 = vld [vmem:[%s178 + $0x200] sm:$0xff]
  %v5648 = vld [vmem:[%s178 + $0x210] sm:$0xff]
  %v5649 = vld [vmem:[%s178 + $0x218] sm:$0xff]
  %v5650 = vld [vmem:[%s178 + $0x228] sm:$0xff]
  %v5651 = vld [vmem:[%s178 + $0x230] sm:$0xff]
  %v5652 = vld [vmem:[%s178 + $0x240] sm:$0xff]
  %v5653 = vld [vmem:[%s178 + $0x248] sm:$0xff]
  %v5654 = vld [vmem:[%s178 + $0x258] sm:$0xff]
  %v5655 = vld [vmem:[%s178 + $0x260] sm:$0xff]
  %v5656 = vld [vmem:[%s178 + $0x270] sm:$0xff]
  %v5657 = vld [vmem:[%s178 + $0x278] sm:$0xff]
  %v5658 = vld [vmem:[%s178 + $0x288] sm:$0xff]
  %v5659 = vld [vmem:[%s178 + $0x290] sm:$0xff]
  %v5660 = vld [vmem:[%s178 + $0x2a0] sm:$0xff]
  %v5661 = vld [vmem:[%s178 + $0x2a8] sm:$0xff]
  %v5662 = vld [vmem:[%s178 + $0x2b8] sm:$0xff]
  %v5663 = vld [vmem:[%s178 + $0x2c0] sm:$0xff]
  %v5664 = vld [vmem:[%s178 + $0x2d0] sm:$0xff]
  %v5665 = vld [vmem:[%s178 + $0x2d8] sm:$0xff]
  %v5666 = vld [vmem:[%s178 + $0x2e8] sm:$0xff]
  %v5667 = vld [vmem:[%s178 + $0x2f0] sm:$0xff]
  %v5668 = vld [vmem:[%s178 + $0x300] sm:$0xff]
  %v5669 = vld [vmem:[%s178 + $0x308] sm:$0xff]
  %v5670 = vld [vmem:[%s178 + $0x318] sm:$0xff]
  %v5671 = vld [vmem:[%s178 + $0x320] sm:$0xff]
  %5736 = vrot.lane.b32.xlu0 %v5608, 24
  %v5737 = vpop.permute.xlu0 %5736
  %5738 = vrot.lane.b32.xlu0 %v5609, 24
  %v5739 = vpop.permute.xlu0 %5738
  %5740 = vrot.lane.b32.xlu0 %v5610, 24
  %v5741 = vpop.permute.xlu0 %5740
  %5742 = vrot.lane.b32.xlu0 %v5611, 24
  %v5743 = vpop.permute.xlu0 %5742
  %5744 = vrot.lane.b32.xlu0 %v5612, 24
  %v5745 = vpop.permute.xlu0 %5744
  %5746 = vrot.lane.b32.xlu0 %v5613, 24
  %v5747 = vpop.permute.xlu0 %5746
  %5748 = vrot.lane.b32.xlu0 %v5614, 24
  %v5749 = vpop.permute.xlu0 %5748
  %5750 = vrot.lane.b32.xlu0 %v5615, 24
  %v5751 = vpop.permute.xlu0 %5750
  %5752 = vrot.lane.b32.xlu0 %v5616, 24
  %v5753 = vpop.permute.xlu0 %5752
  %5754 = vrot.lane.b32.xlu0 %v5617, 24
  %v5755 = vpop.permute.xlu0 %5754
  %5756 = vrot.lane.b32.xlu0 %v5618, 24
  %v5757 = vpop.permute.xlu0 %5756
  %5758 = vrot.lane.b32.xlu0 %v5619, 24
  %v5759 = vpop.permute.xlu0 %5758
  %5760 = vrot.lane.b32.xlu0 %v5620, 24
  %v5761 = vpop.permute.xlu0 %5760
  %5762 = vrot.lane.b32.xlu0 %v5621, 24
  %v5763 = vpop.permute.xlu0 %5762
  %5764 = vrot.lane.b32.xlu0 %v5622, 24
  %v5765 = vpop.permute.xlu0 %5764
  %5766 = vrot.lane.b32.xlu0 %v5623, 24
  %v5767 = vpop.permute.xlu0 %5766
  %5768 = vrot.lane.b32.xlu0 %v5624, 24
  %v5769 = vpop.permute.xlu0 %5768
  %5770 = vrot.lane.b32.xlu0 %v5625, 24
  %v5771 = vpop.permute.xlu0 %5770
  %5772 = vrot.lane.b32.xlu0 %v5626, 24
  %v5773 = vpop.permute.xlu0 %5772
  %5774 = vrot.lane.b32.xlu0 %v5627, 24
  %v5775 = vpop.permute.xlu0 %5774
  %5776 = vrot.lane.b32.xlu0 %v5628, 24
  %v5777 = vpop.permute.xlu0 %5776
  %5778 = vrot.lane.b32.xlu0 %v5629, 24
  %v5779 = vpop.permute.xlu0 %5778
  %5780 = vrot.lane.b32.xlu0 %v5630, 24
  %v5781 = vpop.permute.xlu0 %5780
  %5782 = vrot.lane.b32.xlu0 %v5631, 24
  %v5783 = vpop.permute.xlu0 %5782
  %5784 = vrot.lane.b32.xlu0 %v5632, 24
  %v5785 = vpop.permute.xlu0 %5784
  %5786 = vrot.lane.b32.xlu0 %v5633, 24
  %v5787 = vpop.permute.xlu0 %5786
  %5788 = vrot.lane.b32.xlu0 %v5634, 24
  %v5789 = vpop.permute.xlu0 %5788
  %5790 = vrot.lane.b32.xlu0 %v5635, 24
  %v5791 = vpop.permute.xlu0 %5790
  %5792 = vrot.lane.b32.xlu0 %v5636, 24
  %v5793 = vpop.permute.xlu0 %5792
  %5794 = vrot.lane.b32.xlu0 %v5637, 24
  %v5795 = vpop.permute.xlu0 %5794
  %5796 = vrot.lane.b32.xlu0 %v5638, 24
  %v5797 = vpop.permute.xlu0 %5796
  %5798 = vrot.lane.b32.xlu0 %v5639, 24
  %v5799 = vpop.permute.xlu0 %5798
  %5800 = vrot.lane.b32.xlu0 %v5640, 24
  %v5801 = vpop.permute.xlu0 %5800
  %5802 = vrot.lane.b32.xlu0 %v5641, 24
  %v5803 = vpop.permute.xlu0 %5802
  %5804 = vrot.lane.b32.xlu0 %v5642, 24
  %v5805 = vpop.permute.xlu0 %5804
  %5806 = vrot.lane.b32.xlu0 %v5643, 24
  %v5807 = vpop.permute.xlu0 %5806
  %5808 = vrot.lane.b32.xlu0 %v5644, 24
  %v5809 = vpop.permute.xlu0 %5808
  %5810 = vrot.lane.b32.xlu0 %v5645, 24
  %v5811 = vpop.permute.xlu0 %5810
  %5812 = vrot.lane.b32.xlu0 %v5646, 24
  %v5813 = vpop.permute.xlu0 %5812
  %5814 = vrot.lane.b32.xlu0 %v5647, 24
  %v5815 = vpop.permute.xlu0 %5814
  %5816 = vrot.lane.b32.xlu0 %v5648, 24
  %v5817 = vpop.permute.xlu0 %5816
  %5818 = vrot.lane.b32.xlu0 %v5649, 24
  %v5819 = vpop.permute.xlu0 %5818
  %5820 = vrot.lane.b32.xlu0 %v5650, 24
  %v5821 = vpop.permute.xlu0 %5820
  %5822 = vrot.lane.b32.xlu0 %v5651, 24
  %v5823 = vpop.permute.xlu0 %5822
  %5824 = vrot.lane.b32.xlu0 %v5652, 24
  %v5825 = vpop.permute.xlu0 %5824
  %5826 = vrot.lane.b32.xlu0 %v5653, 24
  %v5827 = vpop.permute.xlu0 %5826
  %5828 = vrot.lane.b32.xlu0 %v5654, 24
  %v5829 = vpop.permute.xlu0 %5828
  %5830 = vrot.lane.b32.xlu0 %v5655, 24
  %v5831 = vpop.permute.xlu0 %5830
  %5832 = vrot.lane.b32.xlu0 %v5656, 24
  %v5833 = vpop.permute.xlu0 %5832
  %5834 = vrot.lane.b32.xlu0 %v5657, 24
  %v5835 = vpop.permute.xlu0 %5834
  %5836 = vrot.lane.b32.xlu0 %v5658, 24
  %v5837 = vpop.permute.xlu0 %5836
  %5838 = vrot.lane.b32.xlu0 %v5659, 24
  %v5839 = vpop.permute.xlu0 %5838
  %5840 = vrot.lane.b32.xlu0 %v5660, 24
  %v5841 = vpop.permute.xlu0 %5840
  %5842 = vrot.lane.b32.xlu0 %v5661, 24
  %v5843 = vpop.permute.xlu0 %5842
  %5844 = vrot.lane.b32.xlu0 %v5662, 24
  %v5845 = vpop.permute.xlu0 %5844
  %5846 = vrot.lane.b32.xlu0 %v5663, 24
  %v5847 = vpop.permute.xlu0 %5846
  %5848 = vrot.lane.b32.xlu0 %v5664, 24
  %v5849 = vpop.permute.xlu0 %5848
  %5850 = vrot.lane.b32.xlu0 %v5665, 24
  %v5851 = vpop.permute.xlu0 %5850
  %5852 = vrot.lane.b32.xlu0 %v5666, 24
  %v5853 = vpop.permute.xlu0 %5852
  %5854 = vrot.lane.b32.xlu0 %v5667, 24
  %v5855 = vpop.permute.xlu0 %5854
  %5856 = vrot.lane.b32.xlu0 %v5668, 24
  %v5857 = vpop.permute.xlu0 %5856
  %5858 = vrot.lane.b32.xlu0 %v5669, 24
  %v5859 = vpop.permute.xlu0 %5858
  %5860 = vrot.lane.b32.xlu0 %v5670, 24
  %v5861 = vpop.permute.xlu0 %5860
  %5862 = vrot.lane.b32.xlu0 %v5671, 24
  %v5863 = vpop.permute.xlu0 %5862
  %5928 = vst.msk [vmem:[#allocation3] sm:$0xff] %vm1461, %v5737
  %5929 = vst.msk [vmem:[#allocation3 + $0x8] sm:$0xff] %vm1461, %v5739
  %5930 = vst.msk [vmem:[#allocation3 + $0x10] sm:$0xff] %vm1461, %v5741
  %5931 = vst.msk [vmem:[#allocation3 + $0x18] sm:$0xff] %vm1461, %v5743
  %5932 = vst.msk [vmem:[#allocation3 + $0x20] sm:$0xff] %vm1461, %v5745
  %5933 = vst.msk [vmem:[#allocation3 + $0x28] sm:$0xff] %vm1461, %v5747
  %5934 = vst.msk [vmem:[#allocation3 + $0x30] sm:$0xff] %vm1461, %v5749
  %5935 = vst.msk [vmem:[#allocation3 + $0x38] sm:$0xff] %vm1461, %v5751
  %5936 = vst.msk [vmem:[#allocation3 + $0x40] sm:$0xff] %vm1461, %v5753
  %5937 = vst.msk [vmem:[#allocation3 + $0x48] sm:$0xff] %vm1461, %v5755
  %5938 = vst.msk [vmem:[#allocation3 + $0x50] sm:$0xff] %vm1461, %v5757
  %5939 = vst.msk [vmem:[#allocation3 + $0x58] sm:$0xff] %vm1461, %v5759
  %5940 = vst.msk [vmem:[#allocation3 + $0x60] sm:$0xff] %vm1461, %v5761
  %5941 = vst.msk [vmem:[#allocation3 + $0x68] sm:$0xff] %vm1461, %v5763
  %5942 = vst.msk [vmem:[#allocation3 + $0x70] sm:$0xff] %vm1461, %v5765
  %5943 = vst.msk [vmem:[#allocation3 + $0x78] sm:$0xff] %vm1461, %v5767
  %5944 = vst.msk [vmem:[#allocation3 + $0x80] sm:$0xff] %vm1461, %v5769
  %5945 = vst.msk [vmem:[#allocation3 + $0x88] sm:$0xff] %vm1461, %v5771
  %5946 = vst.msk [vmem:[#allocation3 + $0x90] sm:$0xff] %vm1461, %v5773
  %5947 = vst.msk [vmem:[#allocation3 + $0x98] sm:$0xff] %vm1461, %v5775
  %5948 = vst.msk [vmem:[#allocation3 + $0xa0] sm:$0xff] %vm1461, %v5777
  %5949 = vst.msk [vmem:[#allocation3 + $0xa8] sm:$0xff] %vm1461, %v5779
  %5950 = vst.msk [vmem:[#allocation3 + $0xb0] sm:$0xff] %vm1461, %v5781
  %5951 = vst.msk [vmem:[#allocation3 + $0xb8] sm:$0xff] %vm1461, %v5783
  %5952 = vst.msk [vmem:[#allocation3 + $0xc0] sm:$0xff] %vm1461, %v5785
  %5953 = vst.msk [vmem:[#allocation3 + $0xc8] sm:$0xff] %vm1461, %v5787
  %5954 = vst.msk [vmem:[#allocation3 + $0xd0] sm:$0xff] %vm1461, %v5789
  %5955 = vst.msk [vmem:[#allocation3 + $0xd8] sm:$0xff] %vm1461, %v5791
  %5956 = vst.msk [vmem:[#allocation3 + $0xe0] sm:$0xff] %vm1461, %v5793
  %5957 = vst.msk [vmem:[#allocation3 + $0xe8] sm:$0xff] %vm1461, %v5795
  %5958 = vst.msk [vmem:[#allocation3 + $0xf0] sm:$0xff] %vm1461, %v5797
  %5959 = vst.msk [vmem:[#allocation3 + $0xf8] sm:$0xff] %vm1461, %v5799
  %5960 = vst.msk [vmem:[#allocation3 + $0x100] sm:$0xff] %vm1461, %v5801
  %5961 = vst.msk [vmem:[#allocation3 + $0x108] sm:$0xff] %vm1461, %v5803
  %5962 = vst.msk [vmem:[#allocation3 + $0x110] sm:$0xff] %vm1461, %v5805
  %5963 = vst.msk [vmem:[#allocation3 + $0x118] sm:$0xff] %vm1461, %v5807
  %5964 = vst.msk [vmem:[#allocation3 + $0x120] sm:$0xff] %vm1461, %v5809
  %5965 = vst.msk [vmem:[#allocation3 + $0x128] sm:$0xff] %vm1461, %v5811
  %5966 = vst.msk [vmem:[#allocation3 + $0x130] sm:$0xff] %vm1461, %v5813
  %5967 = vst.msk [vmem:[#allocation3 + $0x138] sm:$0xff] %vm1461, %v5815
  %5968 = vst.msk [vmem:[#allocation3 + $0x140] sm:$0xff] %vm1461, %v5817
  %5969 = vst.msk [vmem:[#allocation3 + $0x148] sm:$0xff] %vm1461, %v5819
  %5970 = vst.msk [vmem:[#allocation3 + $0x150] sm:$0xff] %vm1461, %v5821
  %5971 = vst.msk [vmem:[#allocation3 + $0x158] sm:$0xff] %vm1461, %v5823
  %5972 = vst.msk [vmem:[#allocation3 + $0x160] sm:$0xff] %vm1461, %v5825
  %5973 = vst.msk [vmem:[#allocation3 + $0x168] sm:$0xff] %vm1461, %v5827
  %5974 = vst.msk [vmem:[#allocation3 + $0x170] sm:$0xff] %vm1461, %v5829
  %5975 = vst.msk [vmem:[#allocation3 + $0x178] sm:$0xff] %vm1461, %v5831
  %5976 = vst.msk [vmem:[#allocation3 + $0x180] sm:$0xff] %vm1461, %v5833
  %5977 = vst.msk [vmem:[#allocation3 + $0x188] sm:$0xff] %vm1461, %v5835
  %5978 = vst.msk [vmem:[#allocation3 + $0x190] sm:$0xff] %vm1461, %v5837
  %5979 = vst.msk [vmem:[#allocation3 + $0x198] sm:$0xff] %vm1461, %v5839
  %5980 = vst.msk [vmem:[#allocation3 + $0x1a0] sm:$0xff] %vm1461, %v5841
  %5981 = vst.msk [vmem:[#allocation3 + $0x1a8] sm:$0xff] %vm1461, %v5843
  %5982 = vst.msk [vmem:[#allocation3 + $0x1b0] sm:$0xff] %vm1461, %v5845
  %5983 = vst.msk [vmem:[#allocation3 + $0x1b8] sm:$0xff] %vm1461, %v5847
  %5984 = vst.msk [vmem:[#allocation3 + $0x1c0] sm:$0xff] %vm1461, %v5849
  %5985 = vst.msk [vmem:[#allocation3 + $0x1c8] sm:$0xff] %vm1461, %v5851
  %5986 = vst.msk [vmem:[#allocation3 + $0x1d0] sm:$0xff] %vm1461, %v5853
  %5987 = vst.msk [vmem:[#allocation3 + $0x1d8] sm:$0xff] %vm1461, %v5855
  %5988 = vst.msk [vmem:[#allocation3 + $0x1e0] sm:$0xff] %vm1461, %v5857
  %5989 = vst.msk [vmem:[#allocation3 + $0x1e8] sm:$0xff] %vm1461, %v5859
  %5990 = vst.msk [vmem:[#allocation3 + $0x1f0] sm:$0xff] %vm1461, %v5861
  %5991 = vst.msk [vmem:[#allocation3 + $0x1f8] sm:$0xff] %vm1461, %v5863
  %v5992 = vld [vmem:[%s178 + $0x1] sm:$0xff]
  %v5993 = vld [vmem:[%s178 + $0x9] sm:$0xff]
  %v5994 = vld [vmem:[%s178 + $0x19] sm:$0xff]
  %v5995 = vld [vmem:[%s178 + $0x21] sm:$0xff]
  %v5996 = vld [vmem:[%s178 + $0x31] sm:$0xff]
  %v5997 = vld [vmem:[%s178 + $0x39] sm:$0xff]
  %v5998 = vld [vmem:[%s178 + $0x49] sm:$0xff]
  %v5999 = vld [vmem:[%s178 + $0x51] sm:$0xff]
  %v6000 = vld [vmem:[%s178 + $0x61] sm:$0xff]
  %v6001 = vld [vmem:[%s178 + $0x69] sm:$0xff]
  %v6002 = vld [vmem:[%s178 + $0x79] sm:$0xff]
  %v6003 = vld [vmem:[%s178 + $0x81] sm:$0xff]
  %v6004 = vld [vmem:[%s178 + $0x91] sm:$0xff]
  %v6005 = vld [vmem:[%s178 + $0x99] sm:$0xff]
  %v6006 = vld [vmem:[%s178 + $0xa9] sm:$0xff]
  %v6007 = vld [vmem:[%s178 + $0xb1] sm:$0xff]
  %v6008 = vld [vmem:[%s178 + $0xc1] sm:$0xff]
  %v6009 = vld [vmem:[%s178 + $0xc9] sm:$0xff]
  %v6010 = vld [vmem:[%s178 + $0xd9] sm:$0xff]
  %v6011 = vld [vmem:[%s178 + $0xe1] sm:$0xff]
  %v6012 = vld [vmem:[%s178 + $0xf1] sm:$0xff]
  %v6013 = vld [vmem:[%s178 + $0xf9] sm:$0xff]
  %v6014 = vld [vmem:[%s178 + $0x109] sm:$0xff]
  %v6015 = vld [vmem:[%s178 + $0x111] sm:$0xff]
  %v6016 = vld [vmem:[%s178 + $0x121] sm:$0xff]
  %v6017 = vld [vmem:[%s178 + $0x129] sm:$0xff]
  %v6018 = vld [vmem:[%s178 + $0x139] sm:$0xff]
  %v6019 = vld [vmem:[%s178 + $0x141] sm:$0xff]
  %v6020 = vld [vmem:[%s178 + $0x151] sm:$0xff]
  %v6021 = vld [vmem:[%s178 + $0x159] sm:$0xff]
  %v6022 = vld [vmem:[%s178 + $0x169] sm:$0xff]
  %v6023 = vld [vmem:[%s178 + $0x171] sm:$0xff]
  %v6024 = vld [vmem:[%s178 + $0x1b1] sm:$0xff]
  %v6025 = vld [vmem:[%s178 + $0x1b9] sm:$0xff]
  %v6026 = vld [vmem:[%s178 + $0x1c9] sm:$0xff]
  %v6027 = vld [vmem:[%s178 + $0x1d1] sm:$0xff]
  %v6028 = vld [vmem:[%s178 + $0x1e1] sm:$0xff]
  %v6029 = vld [vmem:[%s178 + $0x1e9] sm:$0xff]
  %v6030 = vld [vmem:[%s178 + $0x1f9] sm:$0xff]
  %v6031 = vld [vmem:[%s178 + $0x201] sm:$0xff]
  %v6032 = vld [vmem:[%s178 + $0x211] sm:$0xff]
  %v6033 = vld [vmem:[%s178 + $0x219] sm:$0xff]
  %v6034 = vld [vmem:[%s178 + $0x229] sm:$0xff]
  %v6035 = vld [vmem:[%s178 + $0x231] sm:$0xff]
  %v6036 = vld [vmem:[%s178 + $0x241] sm:$0xff]
  %v6037 = vld [vmem:[%s178 + $0x249] sm:$0xff]
  %v6038 = vld [vmem:[%s178 + $0x259] sm:$0xff]
  %v6039 = vld [vmem:[%s178 + $0x261] sm:$0xff]
  %v6040 = vld [vmem:[%s178 + $0x271] sm:$0xff]
  %v6041 = vld [vmem:[%s178 + $0x279] sm:$0xff]
  %v6042 = vld [vmem:[%s178 + $0x289] sm:$0xff]
  %v6043 = vld [vmem:[%s178 + $0x291] sm:$0xff]
  %v6044 = vld [vmem:[%s178 + $0x2a1] sm:$0xff]
  %v6045 = vld [vmem:[%s178 + $0x2a9] sm:$0xff]
  %v6046 = vld [vmem:[%s178 + $0x2b9] sm:$0xff]
  %v6047 = vld [vmem:[%s178 + $0x2c1] sm:$0xff]
  %v6048 = vld [vmem:[%s178 + $0x2d1] sm:$0xff]
  %v6049 = vld [vmem:[%s178 + $0x2d9] sm:$0xff]
  %v6050 = vld [vmem:[%s178 + $0x2e9] sm:$0xff]
  %v6051 = vld [vmem:[%s178 + $0x2f1] sm:$0xff]
  %v6052 = vld [vmem:[%s178 + $0x301] sm:$0xff]
  %v6053 = vld [vmem:[%s178 + $0x309] sm:$0xff]
  %v6054 = vld [vmem:[%s178 + $0x319] sm:$0xff]
  %v6055 = vld [vmem:[%s178 + $0x321] sm:$0xff]
  %6120 = vrot.lane.b32.xlu0 %v5992, 32
  %v6121 = vpop.permute.xlu0 %6120
  %6122 = vrot.lane.b32.xlu0 %v5993, 32
  %v6123 = vpop.permute.xlu0 %6122
  %6124 = vrot.lane.b32.xlu0 %v5994, 32
  %v6125 = vpop.permute.xlu0 %6124
  %6126 = vrot.lane.b32.xlu0 %v5995, 32
  %v6127 = vpop.permute.xlu0 %6126
  %6128 = vrot.lane.b32.xlu0 %v5996, 32
  %v6129 = vpop.permute.xlu0 %6128
  %6130 = vrot.lane.b32.xlu0 %v5997, 32
  %v6131 = vpop.permute.xlu0 %6130
  %6132 = vrot.lane.b32.xlu0 %v5998, 32
  %v6133 = vpop.permute.xlu0 %6132
  %6134 = vrot.lane.b32.xlu0 %v5999, 32
  %v6135 = vpop.permute.xlu0 %6134
  %6136 = vrot.lane.b32.xlu0 %v6000, 32
  %v6137 = vpop.permute.xlu0 %6136
  %6138 = vrot.lane.b32.xlu0 %v6001, 32
  %v6139 = vpop.permute.xlu0 %6138
  %6140 = vrot.lane.b32.xlu0 %v6002, 32
  %v6141 = vpop.permute.xlu0 %6140
  %6142 = vrot.lane.b32.xlu0 %v6003, 32
  %v6143 = vpop.permute.xlu0 %6142
  %6144 = vrot.lane.b32.xlu0 %v6004, 32
  %v6145 = vpop.permute.xlu0 %6144
  %6146 = vrot.lane.b32.xlu0 %v6005, 32
  %v6147 = vpop.permute.xlu0 %6146
  %6148 = vrot.lane.b32.xlu0 %v6006, 32
  %v6149 = vpop.permute.xlu0 %6148
  %6150 = vrot.lane.b32.xlu0 %v6007, 32
  %v6151 = vpop.permute.xlu0 %6150
  %6152 = vrot.lane.b32.xlu0 %v6008, 32
  %v6153 = vpop.permute.xlu0 %6152
  %6154 = vrot.lane.b32.xlu0 %v6009, 32
  %v6155 = vpop.permute.xlu0 %6154
  %6156 = vrot.lane.b32.xlu0 %v6010, 32
  %v6157 = vpop.permute.xlu0 %6156
  %6158 = vrot.lane.b32.xlu0 %v6011, 32
  %v6159 = vpop.permute.xlu0 %6158
  %6160 = vrot.lane.b32.xlu0 %v6012, 32
  %v6161 = vpop.permute.xlu0 %6160
  %6162 = vrot.lane.b32.xlu0 %v6013, 32
  %v6163 = vpop.permute.xlu0 %6162
  %6164 = vrot.lane.b32.xlu0 %v6014, 32
  %v6165 = vpop.permute.xlu0 %6164
  %6166 = vrot.lane.b32.xlu0 %v6015, 32
  %v6167 = vpop.permute.xlu0 %6166
  %6168 = vrot.lane.b32.xlu0 %v6016, 32
  %v6169 = vpop.permute.xlu0 %6168
  %6170 = vrot.lane.b32.xlu0 %v6017, 32
  %v6171 = vpop.permute.xlu0 %6170
  %6172 = vrot.lane.b32.xlu0 %v6018, 32
  %v6173 = vpop.permute.xlu0 %6172
  %6174 = vrot.lane.b32.xlu0 %v6019, 32
  %v6175 = vpop.permute.xlu0 %6174
  %6176 = vrot.lane.b32.xlu0 %v6020, 32
  %v6177 = vpop.permute.xlu0 %6176
  %6178 = vrot.lane.b32.xlu0 %v6021, 32
  %v6179 = vpop.permute.xlu0 %6178
  %6180 = vrot.lane.b32.xlu0 %v6022, 32
  %v6181 = vpop.permute.xlu0 %6180
  %6182 = vrot.lane.b32.xlu0 %v6023, 32
  %v6183 = vpop.permute.xlu0 %6182
  %6184 = vrot.lane.b32.xlu0 %v6024, 32
  %v6185 = vpop.permute.xlu0 %6184
  %6186 = vrot.lane.b32.xlu0 %v6025, 32
  %v6187 = vpop.permute.xlu0 %6186
  %6188 = vrot.lane.b32.xlu0 %v6026, 32
  %v6189 = vpop.permute.xlu0 %6188
  %6190 = vrot.lane.b32.xlu0 %v6027, 32
  %v6191 = vpop.permute.xlu0 %6190
  %6192 = vrot.lane.b32.xlu0 %v6028, 32
  %v6193 = vpop.permute.xlu0 %6192
  %6194 = vrot.lane.b32.xlu0 %v6029, 32
  %v6195 = vpop.permute.xlu0 %6194
  %6196 = vrot.lane.b32.xlu0 %v6030, 32
  %v6197 = vpop.permute.xlu0 %6196
  %6198 = vrot.lane.b32.xlu0 %v6031, 32
  %v6199 = vpop.permute.xlu0 %6198
  %6200 = vrot.lane.b32.xlu0 %v6032, 32
  %v6201 = vpop.permute.xlu0 %6200
  %6202 = vrot.lane.b32.xlu0 %v6033, 32
  %v6203 = vpop.permute.xlu0 %6202
  %6204 = vrot.lane.b32.xlu0 %v6034, 32
  %v6205 = vpop.permute.xlu0 %6204
  %6206 = vrot.lane.b32.xlu0 %v6035, 32
  %v6207 = vpop.permute.xlu0 %6206
  %6208 = vrot.lane.b32.xlu0 %v6036, 32
  %v6209 = vpop.permute.xlu0 %6208
  %6210 = vrot.lane.b32.xlu0 %v6037, 32
  %v6211 = vpop.permute.xlu0 %6210
  %6212 = vrot.lane.b32.xlu0 %v6038, 32
  %v6213 = vpop.permute.xlu0 %6212
  %6214 = vrot.lane.b32.xlu0 %v6039, 32
  %v6215 = vpop.permute.xlu0 %6214
  %6216 = vrot.lane.b32.xlu0 %v6040, 32
  %v6217 = vpop.permute.xlu0 %6216
  %6218 = vrot.lane.b32.xlu0 %v6041, 32
  %v6219 = vpop.permute.xlu0 %6218
  %6220 = vrot.lane.b32.xlu0 %v6042, 32
  %v6221 = vpop.permute.xlu0 %6220
  %6222 = vrot.lane.b32.xlu0 %v6043, 32
  %v6223 = vpop.permute.xlu0 %6222
  %6224 = vrot.lane.b32.xlu0 %v6044, 32
  %v6225 = vpop.permute.xlu0 %6224
  %6226 = vrot.lane.b32.xlu0 %v6045, 32
  %v6227 = vpop.permute.xlu0 %6226
  %6228 = vrot.lane.b32.xlu0 %v6046, 32
  %v6229 = vpop.permute.xlu0 %6228
  %6230 = vrot.lane.b32.xlu0 %v6047, 32
  %v6231 = vpop.permute.xlu0 %6230
  %6232 = vrot.lane.b32.xlu0 %v6048, 32
  %v6233 = vpop.permute.xlu0 %6232
  %6234 = vrot.lane.b32.xlu0 %v6049, 32
  %v6235 = vpop.permute.xlu0 %6234
  %6236 = vrot.lane.b32.xlu0 %v6050, 32
  %v6237 = vpop.permute.xlu0 %6236
  %6238 = vrot.lane.b32.xlu0 %v6051, 32
  %v6239 = vpop.permute.xlu0 %6238
  %6240 = vrot.lane.b32.xlu0 %v6052, 32
  %v6241 = vpop.permute.xlu0 %6240
  %6242 = vrot.lane.b32.xlu0 %v6053, 32
  %v6243 = vpop.permute.xlu0 %6242
  %6244 = vrot.lane.b32.xlu0 %v6054, 32
  %v6245 = vpop.permute.xlu0 %6244
  %6246 = vrot.lane.b32.xlu0 %v6055, 32
  %v6247 = vpop.permute.xlu0 %6246
  %6312 = vst.msk [vmem:[#allocation3] sm:$0xff] %vm1846, %v6121
  %6313 = vst.msk [vmem:[#allocation3 + $0x8] sm:$0xff] %vm1846, %v6123
  %6314 = vst.msk [vmem:[#allocation3 + $0x10] sm:$0xff] %vm1846, %v6125
  %6315 = vst.msk [vmem:[#allocation3 + $0x18] sm:$0xff] %vm1846, %v6127
  %6316 = vst.msk [vmem:[#allocation3 + $0x20] sm:$0xff] %vm1846, %v6129
  %6317 = vst.msk [vmem:[#allocation3 + $0x28] sm:$0xff] %vm1846, %v6131
  %6318 = vst.msk [vmem:[#allocation3 + $0x30] sm:$0xff] %vm1846, %v6133
  %6319 = vst.msk [vmem:[#allocation3 + $0x38] sm:$0xff] %vm1846, %v6135
  %6320 = vst.msk [vmem:[#allocation3 + $0x40] sm:$0xff] %vm1846, %v6137
  %6321 = vst.msk [vmem:[#allocation3 + $0x48] sm:$0xff] %vm1846, %v6139
  %6322 = vst.msk [vmem:[#allocation3 + $0x50] sm:$0xff] %vm1846, %v6141
  %6323 = vst.msk [vmem:[#allocation3 + $0x58] sm:$0xff] %vm1846, %v6143
  %6324 = vst.msk [vmem:[#allocation3 + $0x60] sm:$0xff] %vm1846, %v6145
  %6325 = vst.msk [vmem:[#allocation3 + $0x68] sm:$0xff] %vm1846, %v6147
  %6326 = vst.msk [vmem:[#allocation3 + $0x70] sm:$0xff] %vm1846, %v6149
  %6327 = vst.msk [vmem:[#allocation3 + $0x78] sm:$0xff] %vm1846, %v6151
  %6328 = vst.msk [vmem:[#allocation3 + $0x80] sm:$0xff] %vm1846, %v6153
  %6329 = vst.msk [vmem:[#allocation3 + $0x88] sm:$0xff] %vm1846, %v6155
  %6330 = vst.msk [vmem:[#allocation3 + $0x90] sm:$0xff] %vm1846, %v6157
  %6331 = vst.msk [vmem:[#allocation3 + $0x98] sm:$0xff] %vm1846, %v6159
  %6332 = vst.msk [vmem:[#allocation3 + $0xa0] sm:$0xff] %vm1846, %v6161
  %6333 = vst.msk [vmem:[#allocation3 + $0xa8] sm:$0xff] %vm1846, %v6163
  %6334 = vst.msk [vmem:[#allocation3 + $0xb0] sm:$0xff] %vm1846, %v6165
  %6335 = vst.msk [vmem:[#allocation3 + $0xb8] sm:$0xff] %vm1846, %v6167
  %6336 = vst.msk [vmem:[#allocation3 + $0xc0] sm:$0xff] %vm1846, %v6169
  %6337 = vst.msk [vmem:[#allocation3 + $0xc8] sm:$0xff] %vm1846, %v6171
  %6338 = vst.msk [vmem:[#allocation3 + $0xd0] sm:$0xff] %vm1846, %v6173
  %6339 = vst.msk [vmem:[#allocation3 + $0xd8] sm:$0xff] %vm1846, %v6175
  %6340 = vst.msk [vmem:[#allocation3 + $0xe0] sm:$0xff] %vm1846, %v6177
  %6341 = vst.msk [vmem:[#allocation3 + $0xe8] sm:$0xff] %vm1846, %v6179
  %6342 = vst.msk [vmem:[#allocation3 + $0xf0] sm:$0xff] %vm1846, %v6181
  %6343 = vst.msk [vmem:[#allocation3 + $0xf8] sm:$0xff] %vm1846, %v6183
  %6344 = vst.msk [vmem:[#allocation3 + $0x100] sm:$0xff] %vm1846, %v6185
  %6345 = vst.msk [vmem:[#allocation3 + $0x108] sm:$0xff] %vm1846, %v6187
  %6346 = vst.msk [vmem:[#allocation3 + $0x110] sm:$0xff] %vm1846, %v6189
  %6347 = vst.msk [vmem:[#allocation3 + $0x118] sm:$0xff] %vm1846, %v6191
  %6348 = vst.msk [vmem:[#allocation3 + $0x120] sm:$0xff] %vm1846, %v6193
  %6349 = vst.msk [vmem:[#allocation3 + $0x128] sm:$0xff] %vm1846, %v6195
  %6350 = vst.msk [vmem:[#allocation3 + $0x130] sm:$0xff] %vm1846, %v6197
  %6351 = vst.msk [vmem:[#allocation3 + $0x138] sm:$0xff] %vm1846, %v6199
  %6352 = vst.msk [vmem:[#allocation3 + $0x140] sm:$0xff] %vm1846, %v6201
  %6353 = vst.msk [vmem:[#allocation3 + $0x148] sm:$0xff] %vm1846, %v6203
  %6354 = vst.msk [vmem:[#allocation3 + $0x150] sm:$0xff] %vm1846, %v6205
  %6355 = vst.msk [vmem:[#allocation3 + $0x158] sm:$0xff] %vm1846, %v6207
  %6356 = vst.msk [vmem:[#allocation3 + $0x160] sm:$0xff] %vm1846, %v6209
  %6357 = vst.msk [vmem:[#allocation3 + $0x168] sm:$0xff] %vm1846, %v6211
  %6358 = vst.msk [vmem:[#allocation3 + $0x170] sm:$0xff] %vm1846, %v6213
  %6359 = vst.msk [vmem:[#allocation3 + $0x178] sm:$0xff] %vm1846, %v6215
  %6360 = vst.msk [vmem:[#allocation3 + $0x180] sm:$0xff] %vm1846, %v6217
  %6361 = vst.msk [vmem:[#allocation3 + $0x188] sm:$0xff] %vm1846, %v6219
  %6362 = vst.msk [vmem:[#allocation3 + $0x190] sm:$0xff] %vm1846, %v6221
  %6363 = vst.msk [vmem:[#allocation3 + $0x198] sm:$0xff] %vm1846, %v6223
  %6364 = vst.msk [vmem:[#allocation3 + $0x1a0] sm:$0xff] %vm1846, %v6225
  %6365 = vst.msk [vmem:[#allocation3 + $0x1a8] sm:$0xff] %vm1846, %v6227
  %6366 = vst.msk [vmem:[#allocation3 + $0x1b0] sm:$0xff] %vm1846, %v6229
  %6367 = vst.msk [vmem:[#allocation3 + $0x1b8] sm:$0xff] %vm1846, %v6231
  %6368 = vst.msk [vmem:[#allocation3 + $0x1c0] sm:$0xff] %vm1846, %v6233
  %6369 = vst.msk [vmem:[#allocation3 + $0x1c8] sm:$0xff] %vm1846, %v6235
  %6370 = vst.msk [vmem:[#allocation3 + $0x1d0] sm:$0xff] %vm1846, %v6237
  %6371 = vst.msk [vmem:[#allocation3 + $0x1d8] sm:$0xff] %vm1846, %v6239
  %6372 = vst.msk [vmem:[#allocation3 + $0x1e0] sm:$0xff] %vm1846, %v6241
  %6373 = vst.msk [vmem:[#allocation3 + $0x1e8] sm:$0xff] %vm1846, %v6243
  %6374 = vst.msk [vmem:[#allocation3 + $0x1f0] sm:$0xff] %vm1846, %v6245
  %6375 = vst.msk [vmem:[#allocation3 + $0x1f8] sm:$0xff] %vm1846, %v6247
  %v6376 = vld [vmem:[%s178 + $0x2] sm:$0xff]
  %v6377 = vld [vmem:[%s178 + $0xa] sm:$0xff]
  %v6378 = vld [vmem:[%s178 + $0x1a] sm:$0xff]
  %v6379 = vld [vmem:[%s178 + $0x22] sm:$0xff]
  %v6380 = vld [vmem:[%s178 + $0x32] sm:$0xff]
  %v6381 = vld [vmem:[%s178 + $0x3a] sm:$0xff]
  %v6382 = vld [vmem:[%s178 + $0x4a] sm:$0xff]
  %v6383 = vld [vmem:[%s178 + $0x52] sm:$0xff]
  %v6384 = vld [vmem:[%s178 + $0x62] sm:$0xff]
  %v6385 = vld [vmem:[%s178 + $0x6a] sm:$0xff]
  %v6386 = vld [vmem:[%s178 + $0x7a] sm:$0xff]
  %v6387 = vld [vmem:[%s178 + $0x82] sm:$0xff]
  %v6388 = vld [vmem:[%s178 + $0x92] sm:$0xff]
  %v6389 = vld [vmem:[%s178 + $0x9a] sm:$0xff]
  %v6390 = vld [vmem:[%s178 + $0xaa] sm:$0xff]
  %v6391 = vld [vmem:[%s178 + $0xb2] sm:$0xff]
  %v6392 = vld [vmem:[%s178 + $0xc2] sm:$0xff]
  %v6393 = vld [vmem:[%s178 + $0xca] sm:$0xff]
  %v6394 = vld [vmem:[%s178 + $0xda] sm:$0xff]
  %v6395 = vld [vmem:[%s178 + $0xe2] sm:$0xff]
  %v6396 = vld [vmem:[%s178 + $0xf2] sm:$0xff]
  %v6397 = vld [vmem:[%s178 + $0xfa] sm:$0xff]
  %v6398 = vld [vmem:[%s178 + $0x10a] sm:$0xff]
  %v6399 = vld [vmem:[%s178 + $0x112] sm:$0xff]
  %v6400 = vld [vmem:[%s178 + $0x122] sm:$0xff]
  %v6401 = vld [vmem:[%s178 + $0x12a] sm:$0xff]
  %v6402 = vld [vmem:[%s178 + $0x13a] sm:$0xff]
  %v6403 = vld [vmem:[%s178 + $0x142] sm:$0xff]
  %v6404 = vld [vmem:[%s178 + $0x152] sm:$0xff]
  %v6405 = vld [vmem:[%s178 + $0x15a] sm:$0xff]
  %v6406 = vld [vmem:[%s178 + $0x16a] sm:$0xff]
  %v6407 = vld [vmem:[%s178 + $0x172] sm:$0xff]
  %v6408 = vld [vmem:[%s178 + $0x1b2] sm:$0xff]
  %v6409 = vld [vmem:[%s178 + $0x1ba] sm:$0xff]
  %v6410 = vld [vmem:[%s178 + $0x1ca] sm:$0xff]
  %v6411 = vld [vmem:[%s178 + $0x1d2] sm:$0xff]
  %v6412 = vld [vmem:[%s178 + $0x1e2] sm:$0xff]
  %v6413 = vld [vmem:[%s178 + $0x1ea] sm:$0xff]
  %v6414 = vld [vmem:[%s178 + $0x1fa] sm:$0xff]
  %v6415 = vld [vmem:[%s178 + $0x202] sm:$0xff]
  %v6416 = vld [vmem:[%s178 + $0x212] sm:$0xff]
  %v6417 = vld [vmem:[%s178 + $0x21a] sm:$0xff]
  %v6418 = vld [vmem:[%s178 + $0x22a] sm:$0xff]
  %v6419 = vld [vmem:[%s178 + $0x232] sm:$0xff]
  %v6420 = vld [vmem:[%s178 + $0x242] sm:$0xff]
  %v6421 = vld [vmem:[%s178 + $0x24a] sm:$0xff]
  %v6422 = vld [vmem:[%s178 + $0x25a] sm:$0xff]
  %v6423 = vld [vmem:[%s178 + $0x262] sm:$0xff]
  %v6424 = vld [vmem:[%s178 + $0x272] sm:$0xff]
  %v6425 = vld [vmem:[%s178 + $0x27a] sm:$0xff]
  %v6426 = vld [vmem:[%s178 + $0x28a] sm:$0xff]
  %v6427 = vld [vmem:[%s178 + $0x292] sm:$0xff]
  %v6428 = vld [vmem:[%s178 + $0x2a2] sm:$0xff]
  %v6429 = vld [vmem:[%s178 + $0x2aa] sm:$0xff]
  %v6430 = vld [vmem:[%s178 + $0x2ba] sm:$0xff]
  %v6431 = vld [vmem:[%s178 + $0x2c2] sm:$0xff]
  %v6432 = vld [vmem:[%s178 + $0x2d2] sm:$0xff]
  %v6433 = vld [vmem:[%s178 + $0x2da] sm:$0xff]
  %v6434 = vld [vmem:[%s178 + $0x2ea] sm:$0xff]
  %v6435 = vld [vmem:[%s178 + $0x2f2] sm:$0xff]
  %v6436 = vld [vmem:[%s178 + $0x302] sm:$0xff]
  %v6437 = vld [vmem:[%s178 + $0x30a] sm:$0xff]
  %v6438 = vld [vmem:[%s178 + $0x31a] sm:$0xff]
  %v6439 = vld [vmem:[%s178 + $0x322] sm:$0xff]
  %6504 = vrot.lane.b32.xlu0 %v6376, 40
  %v6505 = vpop.permute.xlu0 %6504
  %6506 = vrot.lane.b32.xlu0 %v6377, 40
  %v6507 = vpop.permute.xlu0 %6506
  %6508 = vrot.lane.b32.xlu0 %v6378, 40
  %v6509 = vpop.permute.xlu0 %6508
  %6510 = vrot.lane.b32.xlu0 %v6379, 40
  %v6511 = vpop.permute.xlu0 %6510
  %6512 = vrot.lane.b32.xlu0 %v6380, 40
  %v6513 = vpop.permute.xlu0 %6512
  %6514 = vrot.lane.b32.xlu0 %v6381, 40
  %v6515 = vpop.permute.xlu0 %6514
  %6516 = vrot.lane.b32.xlu0 %v6382, 40
  %v6517 = vpop.permute.xlu0 %6516
  %6518 = vrot.lane.b32.xlu0 %v6383, 40
  %v6519 = vpop.permute.xlu0 %6518
  %6520 = vrot.lane.b32.xlu0 %v6384, 40
  %v6521 = vpop.permute.xlu0 %6520
  %6522 = vrot.lane.b32.xlu0 %v6385, 40
  %v6523 = vpop.permute.xlu0 %6522
  %6524 = vrot.lane.b32.xlu0 %v6386, 40
  %v6525 = vpop.permute.xlu0 %6524
  %6526 = vrot.lane.b32.xlu0 %v6387, 40
  %v6527 = vpop.permute.xlu0 %6526
  %6528 = vrot.lane.b32.xlu0 %v6388, 40
  %v6529 = vpop.permute.xlu0 %6528
  %6530 = vrot.lane.b32.xlu0 %v6389, 40
  %v6531 = vpop.permute.xlu0 %6530
  %6532 = vrot.lane.b32.xlu0 %v6390, 40
  %v6533 = vpop.permute.xlu0 %6532
  %6534 = vrot.lane.b32.xlu0 %v6391, 40
  %v6535 = vpop.permute.xlu0 %6534
  %6536 = vrot.lane.b32.xlu0 %v6392, 40
  %v6537 = vpop.permute.xlu0 %6536
  %6538 = vrot.lane.b32.xlu0 %v6393, 40
  %v6539 = vpop.permute.xlu0 %6538
  %6540 = vrot.lane.b32.xlu0 %v6394, 40
  %v6541 = vpop.permute.xlu0 %6540
  %6542 = vrot.lane.b32.xlu0 %v6395, 40
  %v6543 = vpop.permute.xlu0 %6542
  %6544 = vrot.lane.b32.xlu0 %v6396, 40
  %v6545 = vpop.permute.xlu0 %6544
  %6546 = vrot.lane.b32.xlu0 %v6397, 40
  %v6547 = vpop.permute.xlu0 %6546
  %6548 = vrot.lane.b32.xlu0 %v6398, 40
  %v6549 = vpop.permute.xlu0 %6548
  %6550 = vrot.lane.b32.xlu0 %v6399, 40
  %v6551 = vpop.permute.xlu0 %6550
  %6552 = vrot.lane.b32.xlu0 %v6400, 40
  %v6553 = vpop.permute.xlu0 %6552
  %6554 = vrot.lane.b32.xlu0 %v6401, 40
  %v6555 = vpop.permute.xlu0 %6554
  %6556 = vrot.lane.b32.xlu0 %v6402, 40
  %v6557 = vpop.permute.xlu0 %6556
  %6558 = vrot.lane.b32.xlu0 %v6403, 40
  %v6559 = vpop.permute.xlu0 %6558
  %6560 = vrot.lane.b32.xlu0 %v6404, 40
  %v6561 = vpop.permute.xlu0 %6560
  %6562 = vrot.lane.b32.xlu0 %v6405, 40
  %v6563 = vpop.permute.xlu0 %6562
  %6564 = vrot.lane.b32.xlu0 %v6406, 40
  %v6565 = vpop.permute.xlu0 %6564
  %6566 = vrot.lane.b32.xlu0 %v6407, 40
  %v6567 = vpop.permute.xlu0 %6566
  %6568 = vrot.lane.b32.xlu0 %v6408, 40
  %v6569 = vpop.permute.xlu0 %6568
  %6570 = vrot.lane.b32.xlu0 %v6409, 40
  %v6571 = vpop.permute.xlu0 %6570
  %6572 = vrot.lane.b32.xlu0 %v6410, 40
  %v6573 = vpop.permute.xlu0 %6572
  %6574 = vrot.lane.b32.xlu0 %v6411, 40
  %v6575 = vpop.permute.xlu0 %6574
  %6576 = vrot.lane.b32.xlu0 %v6412, 40
  %v6577 = vpop.permute.xlu0 %6576
  %6578 = vrot.lane.b32.xlu0 %v6413, 40
  %v6579 = vpop.permute.xlu0 %6578
  %6580 = vrot.lane.b32.xlu0 %v6414, 40
  %v6581 = vpop.permute.xlu0 %6580
  %6582 = vrot.lane.b32.xlu0 %v6415, 40
  %v6583 = vpop.permute.xlu0 %6582
  %6584 = vrot.lane.b32.xlu0 %v6416, 40
  %v6585 = vpop.permute.xlu0 %6584
  %6586 = vrot.lane.b32.xlu0 %v6417, 40
  %v6587 = vpop.permute.xlu0 %6586
  %6588 = vrot.lane.b32.xlu0 %v6418, 40
  %v6589 = vpop.permute.xlu0 %6588
  %6590 = vrot.lane.b32.xlu0 %v6419, 40
  %v6591 = vpop.permute.xlu0 %6590
  %6592 = vrot.lane.b32.xlu0 %v6420, 40
  %v6593 = vpop.permute.xlu0 %6592
  %6594 = vrot.lane.b32.xlu0 %v6421, 40
  %v6595 = vpop.permute.xlu0 %6594
  %6596 = vrot.lane.b32.xlu0 %v6422, 40
  %v6597 = vpop.permute.xlu0 %6596
  %6598 = vrot.lane.b32.xlu0 %v6423, 40
  %v6599 = vpop.permute.xlu0 %6598
  %6600 = vrot.lane.b32.xlu0 %v6424, 40
  %v6601 = vpop.permute.xlu0 %6600
  %6602 = vrot.lane.b32.xlu0 %v6425, 40
  %v6603 = vpop.permute.xlu0 %6602
  %6604 = vrot.lane.b32.xlu0 %v6426, 40
  %v6605 = vpop.permute.xlu0 %6604
  %6606 = vrot.lane.b32.xlu0 %v6427, 40
  %v6607 = vpop.permute.xlu0 %6606
  %6608 = vrot.lane.b32.xlu0 %v6428, 40
  %v6609 = vpop.permute.xlu0 %6608
  %6610 = vrot.lane.b32.xlu0 %v6429, 40
  %v6611 = vpop.permute.xlu0 %6610
  %6612 = vrot.lane.b32.xlu0 %v6430, 40
  %v6613 = vpop.permute.xlu0 %6612
  %6614 = vrot.lane.b32.xlu0 %v6431, 40
  %v6615 = vpop.permute.xlu0 %6614
  %6616 = vrot.lane.b32.xlu0 %v6432, 40
  %v6617 = vpop.permute.xlu0 %6616
  %6618 = vrot.lane.b32.xlu0 %v6433, 40
  %v6619 = vpop.permute.xlu0 %6618
  %6620 = vrot.lane.b32.xlu0 %v6434, 40
  %v6621 = vpop.permute.xlu0 %6620
  %6622 = vrot.lane.b32.xlu0 %v6435, 40
  %v6623 = vpop.permute.xlu0 %6622
  %6624 = vrot.lane.b32.xlu0 %v6436, 40
  %v6625 = vpop.permute.xlu0 %6624
  %6626 = vrot.lane.b32.xlu0 %v6437, 40
  %v6627 = vpop.permute.xlu0 %6626
  %6628 = vrot.lane.b32.xlu0 %v6438, 40
  %v6629 = vpop.permute.xlu0 %6628
  %6630 = vrot.lane.b32.xlu0 %v6439, 40
  %v6631 = vpop.permute.xlu0 %6630
  %6696 = vst.msk [vmem:[#allocation3] sm:$0xff] %vm2231, %v6505
  %6697 = vst.msk [vmem:[#allocation3 + $0x8] sm:$0xff] %vm2231, %v6507
  %6698 = vst.msk [vmem:[#allocation3 + $0x10] sm:$0xff] %vm2231, %v6509
  %6699 = vst.msk [vmem:[#allocation3 + $0x18] sm:$0xff] %vm2231, %v6511
  %6700 = vst.msk [vmem:[#allocation3 + $0x20] sm:$0xff] %vm2231, %v6513
  %6701 = vst.msk [vmem:[#allocation3 + $0x28] sm:$0xff] %vm2231, %v6515
  %6702 = vst.msk [vmem:[#allocation3 + $0x30] sm:$0xff] %vm2231, %v6517
  %6703 = vst.msk [vmem:[#allocation3 + $0x38] sm:$0xff] %vm2231, %v6519
  %6704 = vst.msk [vmem:[#allocation3 + $0x40] sm:$0xff] %vm2231, %v6521
  %6705 = vst.msk [vmem:[#allocation3 + $0x48] sm:$0xff] %vm2231, %v6523
  %6706 = vst.msk [vmem:[#allocation3 + $0x50] sm:$0xff] %vm2231, %v6525
  %6707 = vst.msk [vmem:[#allocation3 + $0x58] sm:$0xff] %vm2231, %v6527
  %6708 = vst.msk [vmem:[#allocation3 + $0x60] sm:$0xff] %vm2231, %v6529
  %6709 = vst.msk [vmem:[#allocation3 + $0x68] sm:$0xff] %vm2231, %v6531
  %6710 = vst.msk [vmem:[#allocation3 + $0x70] sm:$0xff] %vm2231, %v6533
  %6711 = vst.msk [vmem:[#allocation3 + $0x78] sm:$0xff] %vm2231, %v6535
  %6712 = vst.msk [vmem:[#allocation3 + $0x80] sm:$0xff] %vm2231, %v6537
  %6713 = vst.msk [vmem:[#allocation3 + $0x88] sm:$0xff] %vm2231, %v6539
  %6714 = vst.msk [vmem:[#allocation3 + $0x90] sm:$0xff] %vm2231, %v6541
  %6715 = vst.msk [vmem:[#allocation3 + $0x98] sm:$0xff] %vm2231, %v6543
  %6716 = vst.msk [vmem:[#allocation3 + $0xa0] sm:$0xff] %vm2231, %v6545
  %6717 = vst.msk [vmem:[#allocation3 + $0xa8] sm:$0xff] %vm2231, %v6547
  %6718 = vst.msk [vmem:[#allocation3 + $0xb0] sm:$0xff] %vm2231, %v6549
  %6719 = vst.msk [vmem:[#allocation3 + $0xb8] sm:$0xff] %vm2231, %v6551
  %6720 = vst.msk [vmem:[#allocation3 + $0xc0] sm:$0xff] %vm2231, %v6553
  %6721 = vst.msk [vmem:[#allocation3 + $0xc8] sm:$0xff] %vm2231, %v6555
  %6722 = vst.msk [vmem:[#allocation3 + $0xd0] sm:$0xff] %vm2231, %v6557
  %6723 = vst.msk [vmem:[#allocation3 + $0xd8] sm:$0xff] %vm2231, %v6559
  %6724 = vst.msk [vmem:[#allocation3 + $0xe0] sm:$0xff] %vm2231, %v6561
  %6725 = vst.msk [vmem:[#allocation3 + $0xe8] sm:$0xff] %vm2231, %v6563
  %6726 = vst.msk [vmem:[#allocation3 + $0xf0] sm:$0xff] %vm2231, %v6565
  %6727 = vst.msk [vmem:[#allocation3 + $0xf8] sm:$0xff] %vm2231, %v6567
  %6728 = vst.msk [vmem:[#allocation3 + $0x100] sm:$0xff] %vm2231, %v6569
  %6729 = vst.msk [vmem:[#allocation3 + $0x108] sm:$0xff] %vm2231, %v6571
  %6730 = vst.msk [vmem:[#allocation3 + $0x110] sm:$0xff] %vm2231, %v6573
  %6731 = vst.msk [vmem:[#allocation3 + $0x118] sm:$0xff] %vm2231, %v6575
  %6732 = vst.msk [vmem:[#allocation3 + $0x120] sm:$0xff] %vm2231, %v6577
  %6733 = vst.msk [vmem:[#allocation3 + $0x128] sm:$0xff] %vm2231, %v6579
  %6734 = vst.msk [vmem:[#allocation3 + $0x130] sm:$0xff] %vm2231, %v6581
  %6735 = vst.msk [vmem:[#allocation3 + $0x138] sm:$0xff] %vm2231, %v6583
  %6736 = vst.msk [vmem:[#allocation3 + $0x140] sm:$0xff] %vm2231, %v6585
  %6737 = vst.msk [vmem:[#allocation3 + $0x148] sm:$0xff] %vm2231, %v6587
  %6738 = vst.msk [vmem:[#allocation3 + $0x150] sm:$0xff] %vm2231, %v6589
  %6739 = vst.msk [vmem:[#allocation3 + $0x158] sm:$0xff] %vm2231, %v6591
  %6740 = vst.msk [vmem:[#allocation3 + $0x160] sm:$0xff] %vm2231, %v6593
  %6741 = vst.msk [vmem:[#allocation3 + $0x168] sm:$0xff] %vm2231, %v6595
  %6742 = vst.msk [vmem:[#allocation3 + $0x170] sm:$0xff] %vm2231, %v6597
  %6743 = vst.msk [vmem:[#allocation3 + $0x178] sm:$0xff] %vm2231, %v6599
  %6744 = vst.msk [vmem:[#allocation3 + $0x180] sm:$0xff] %vm2231, %v6601
  %6745 = vst.msk [vmem:[#allocation3 + $0x188] sm:$0xff] %vm2231, %v6603
  %6746 = vst.msk [vmem:[#allocation3 + $0x190] sm:$0xff] %vm2231, %v6605
  %6747 = vst.msk [vmem:[#allocation3 + $0x198] sm:$0xff] %vm2231, %v6607
  %6748 = vst.msk [vmem:[#allocation3 + $0x1a0] sm:$0xff] %vm2231, %v6609
  %6749 = vst.msk [vmem:[#allocation3 + $0x1a8] sm:$0xff] %vm2231, %v6611
  %6750 = vst.msk [vmem:[#allocation3 + $0x1b0] sm:$0xff] %vm2231, %v6613
  %6751 = vst.msk [vmem:[#allocation3 + $0x1b8] sm:$0xff] %vm2231, %v6615
  %6752 = vst.msk [vmem:[#allocation3 + $0x1c0] sm:$0xff] %vm2231, %v6617
  %6753 = vst.msk [vmem:[#allocation3 + $0x1c8] sm:$0xff] %vm2231, %v6619
  %6754 = vst.msk [vmem:[#allocation3 + $0x1d0] sm:$0xff] %vm2231, %v6621
  %6755 = vst.msk [vmem:[#allocation3 + $0x1d8] sm:$0xff] %vm2231, %v6623
  %6756 = vst.msk [vmem:[#allocation3 + $0x1e0] sm:$0xff] %vm2231, %v6625
  %6757 = vst.msk [vmem:[#allocation3 + $0x1e8] sm:$0xff] %vm2231, %v6627
  %6758 = vst.msk [vmem:[#allocation3 + $0x1f0] sm:$0xff] %vm2231, %v6629
  %6759 = vst.msk [vmem:[#allocation3 + $0x1f8] sm:$0xff] %vm2231, %v6631
  %v6760 = vld [vmem:[%s2296] sm:$0xff]
  %v6761 = vld [vmem:[%s2296 + $0x8] sm:$0xff]
  %v6762 = vld [vmem:[%s2296 + $0x18] sm:$0xff]
  %v6763 = vld [vmem:[%s2296 + $0x20] sm:$0xff]
  %v6764 = vld [vmem:[%s2296 + $0x30] sm:$0xff]
  %v6765 = vld [vmem:[%s2296 + $0x38] sm:$0xff]
  %v6766 = vld [vmem:[%s2296 + $0x48] sm:$0xff]
  %v6767 = vld [vmem:[%s2296 + $0x50] sm:$0xff]
  %v6768 = vld [vmem:[%s2296 + $0x60] sm:$0xff]
  %v6769 = vld [vmem:[%s2296 + $0x68] sm:$0xff]
  %v6770 = vld [vmem:[%s2296 + $0x78] sm:$0xff]
  %v6771 = vld [vmem:[%s2296 + $0x80] sm:$0xff]
  %v6772 = vld [vmem:[%s2296 + $0x90] sm:$0xff]
  %v6773 = vld [vmem:[%s2296 + $0x98] sm:$0xff]
  %v6774 = vld [vmem:[%s2296 + $0xa8] sm:$0xff]
  %v6775 = vld [vmem:[%s2296 + $0xb0] sm:$0xff]
  %v6776 = vld [vmem:[%s2296 + $0xc0] sm:$0xff]
  %v6777 = vld [vmem:[%s2296 + $0xc8] sm:$0xff]
  %v6778 = vld [vmem:[%s2296 + $0xd8] sm:$0xff]
  %v6779 = vld [vmem:[%s2296 + $0xe0] sm:$0xff]
  %v6780 = vld [vmem:[%s2296 + $0xf0] sm:$0xff]
  %v6781 = vld [vmem:[%s2296 + $0xf8] sm:$0xff]
  %v6782 = vld [vmem:[%s2296 + $0x108] sm:$0xff]
  %v6783 = vld [vmem:[%s2296 + $0x110] sm:$0xff]
  %v6784 = vld [vmem:[%s2296 + $0x120] sm:$0xff]
  %v6785 = vld [vmem:[%s2296 + $0x128] sm:$0xff]
  %v6786 = vld [vmem:[%s2296 + $0x138] sm:$0xff]
  %v6787 = vld [vmem:[%s2296 + $0x140] sm:$0xff]
  %v6788 = vld [vmem:[%s2296 + $0x150] sm:$0xff]
  %v6789 = vld [vmem:[%s2296 + $0x158] sm:$0xff]
  %v6790 = vld [vmem:[%s2296 + $0x168] sm:$0xff]
  %v6791 = vld [vmem:[%s2296 + $0x170] sm:$0xff]
  %v6792 = vld [vmem:[%s2296 + $0x1b0] sm:$0xff]
  %v6793 = vld [vmem:[%s2296 + $0x1b8] sm:$0xff]
  %v6794 = vld [vmem:[%s2296 + $0x1c8] sm:$0xff]
  %v6795 = vld [vmem:[%s2296 + $0x1d0] sm:$0xff]
  %v6796 = vld [vmem:[%s2296 + $0x1e0] sm:$0xff]
  %v6797 = vld [vmem:[%s2296 + $0x1e8] sm:$0xff]
  %v6798 = vld [vmem:[%s2296 + $0x1f8] sm:$0xff]
  %v6799 = vld [vmem:[%s2296 + $0x200] sm:$0xff]
  %v6800 = vld [vmem:[%s2296 + $0x210] sm:$0xff]
  %v6801 = vld [vmem:[%s2296 + $0x218] sm:$0xff]
  %v6802 = vld [vmem:[%s2296 + $0x228] sm:$0xff]
  %v6803 = vld [vmem:[%s2296 + $0x230] sm:$0xff]
  %v6804 = vld [vmem:[%s2296 + $0x240] sm:$0xff]
  %v6805 = vld [vmem:[%s2296 + $0x248] sm:$0xff]
  %v6806 = vld [vmem:[%s2296 + $0x258] sm:$0xff]
  %v6807 = vld [vmem:[%s2296 + $0x260] sm:$0xff]
  %v6808 = vld [vmem:[%s2296 + $0x270] sm:$0xff]
  %v6809 = vld [vmem:[%s2296 + $0x278] sm:$0xff]
  %v6810 = vld [vmem:[%s2296 + $0x288] sm:$0xff]
  %v6811 = vld [vmem:[%s2296 + $0x290] sm:$0xff]
  %v6812 = vld [vmem:[%s2296 + $0x2a0] sm:$0xff]
  %v6813 = vld [vmem:[%s2296 + $0x2a8] sm:$0xff]
  %v6814 = vld [vmem:[%s2296 + $0x2b8] sm:$0xff]
  %v6815 = vld [vmem:[%s2296 + $0x2c0] sm:$0xff]
  %v6816 = vld [vmem:[%s2296 + $0x2d0] sm:$0xff]
  %v6817 = vld [vmem:[%s2296 + $0x2d8] sm:$0xff]
  %v6818 = vld [vmem:[%s2296 + $0x2e8] sm:$0xff]
  %v6819 = vld [vmem:[%s2296 + $0x2f0] sm:$0xff]
  %v6820 = vld [vmem:[%s2296 + $0x300] sm:$0xff]
  %v6821 = vld [vmem:[%s2296 + $0x308] sm:$0xff]
  %v6822 = vld [vmem:[%s2296 + $0x318] sm:$0xff]
  %v6823 = vld [vmem:[%s2296 + $0x320] sm:$0xff]
  %6888 = vrot.lane.b32.xlu0 %v6760, 48
  %v6889 = vpop.permute.xlu0 %6888
  %6890 = vrot.lane.b32.xlu0 %v6761, 48
  %v6891 = vpop.permute.xlu0 %6890
  %6892 = vrot.lane.b32.xlu0 %v6762, 48
  %v6893 = vpop.permute.xlu0 %6892
  %6894 = vrot.lane.b32.xlu0 %v6763, 48
  %v6895 = vpop.permute.xlu0 %6894
  %6896 = vrot.lane.b32.xlu0 %v6764, 48
  %v6897 = vpop.permute.xlu0 %6896
  %6898 = vrot.lane.b32.xlu0 %v6765, 48
  %v6899 = vpop.permute.xlu0 %6898
  %6900 = vrot.lane.b32.xlu0 %v6766, 48
  %v6901 = vpop.permute.xlu0 %6900
  %6902 = vrot.lane.b32.xlu0 %v6767, 48
  %v6903 = vpop.permute.xlu0 %6902
  %6904 = vrot.lane.b32.xlu0 %v6768, 48
  %v6905 = vpop.permute.xlu0 %6904
  %6906 = vrot.lane.b32.xlu0 %v6769, 48
  %v6907 = vpop.permute.xlu0 %6906
  %6908 = vrot.lane.b32.xlu0 %v6770, 48
  %v6909 = vpop.permute.xlu0 %6908
  %6910 = vrot.lane.b32.xlu0 %v6771, 48
  %v6911 = vpop.permute.xlu0 %6910
  %6912 = vrot.lane.b32.xlu0 %v6772, 48
  %v6913 = vpop.permute.xlu0 %6912
  %6914 = vrot.lane.b32.xlu0 %v6773, 48
  %v6915 = vpop.permute.xlu0 %6914
  %6916 = vrot.lane.b32.xlu0 %v6774, 48
  %v6917 = vpop.permute.xlu0 %6916
  %6918 = vrot.lane.b32.xlu0 %v6775, 48
  %v6919 = vpop.permute.xlu0 %6918
  %6920 = vrot.lane.b32.xlu0 %v6776, 48
  %v6921 = vpop.permute.xlu0 %6920
  %6922 = vrot.lane.b32.xlu0 %v6777, 48
  %v6923 = vpop.permute.xlu0 %6922
  %6924 = vrot.lane.b32.xlu0 %v6778, 48
  %v6925 = vpop.permute.xlu0 %6924
  %6926 = vrot.lane.b32.xlu0 %v6779, 48
  %v6927 = vpop.permute.xlu0 %6926
  %6928 = vrot.lane.b32.xlu0 %v6780, 48
  %v6929 = vpop.permute.xlu0 %6928
  %6930 = vrot.lane.b32.xlu0 %v6781, 48
  %v6931 = vpop.permute.xlu0 %6930
  %6932 = vrot.lane.b32.xlu0 %v6782, 48
  %v6933 = vpop.permute.xlu0 %6932
  %6934 = vrot.lane.b32.xlu0 %v6783, 48
  %v6935 = vpop.permute.xlu0 %6934
  %6936 = vrot.lane.b32.xlu0 %v6784, 48
  %v6937 = vpop.permute.xlu0 %6936
  %6938 = vrot.lane.b32.xlu0 %v6785, 48
  %v6939 = vpop.permute.xlu0 %6938
  %6940 = vrot.lane.b32.xlu0 %v6786, 48
  %v6941 = vpop.permute.xlu0 %6940
  %6942 = vrot.lane.b32.xlu0 %v6787, 48
  %v6943 = vpop.permute.xlu0 %6942
  %6944 = vrot.lane.b32.xlu0 %v6788, 48
  %v6945 = vpop.permute.xlu0 %6944
  %6946 = vrot.lane.b32.xlu0 %v6789, 48
  %v6947 = vpop.permute.xlu0 %6946
  %6948 = vrot.lane.b32.xlu0 %v6790, 48
  %v6949 = vpop.permute.xlu0 %6948
  %6950 = vrot.lane.b32.xlu0 %v6791, 48
  %v6951 = vpop.permute.xlu0 %6950
  %6952 = vrot.lane.b32.xlu0 %v6792, 48
  %v6953 = vpop.permute.xlu0 %6952
  %6954 = vrot.lane.b32.xlu0 %v6793, 48
  %v6955 = vpop.permute.xlu0 %6954
  %6956 = vrot.lane.b32.xlu0 %v6794, 48
  %v6957 = vpop.permute.xlu0 %6956
  %6958 = vrot.lane.b32.xlu0 %v6795, 48
  %v6959 = vpop.permute.xlu0 %6958
  %6960 = vrot.lane.b32.xlu0 %v6796, 48
  %v6961 = vpop.permute.xlu0 %6960
  %6962 = vrot.lane.b32.xlu0 %v6797, 48
  %v6963 = vpop.permute.xlu0 %6962
  %6964 = vrot.lane.b32.xlu0 %v6798, 48
  %v6965 = vpop.permute.xlu0 %6964
  %6966 = vrot.lane.b32.xlu0 %v6799, 48
  %v6967 = vpop.permute.xlu0 %6966
  %6968 = vrot.lane.b32.xlu0 %v6800, 48
  %v6969 = vpop.permute.xlu0 %6968
  %6970 = vrot.lane.b32.xlu0 %v6801, 48
  %v6971 = vpop.permute.xlu0 %6970
  %6972 = vrot.lane.b32.xlu0 %v6802, 48
  %v6973 = vpop.permute.xlu0 %6972
  %6974 = vrot.lane.b32.xlu0 %v6803, 48
  %v6975 = vpop.permute.xlu0 %6974
  %6976 = vrot.lane.b32.xlu0 %v6804, 48
  %v6977 = vpop.permute.xlu0 %6976
  %6978 = vrot.lane.b32.xlu0 %v6805, 48
  %v6979 = vpop.permute.xlu0 %6978
  %6980 = vrot.lane.b32.xlu0 %v6806, 48
  %v6981 = vpop.permute.xlu0 %6980
  %6982 = vrot.lane.b32.xlu0 %v6807, 48
  %v6983 = vpop.permute.xlu0 %6982
  %6984 = vrot.lane.b32.xlu0 %v6808, 48
  %v6985 = vpop.permute.xlu0 %6984
  %6986 = vrot.lane.b32.xlu0 %v6809, 48
  %v6987 = vpop.permute.xlu0 %6986
  %6988 = vrot.lane.b32.xlu0 %v6810, 48
  %v6989 = vpop.permute.xlu0 %6988
  %6990 = vrot.lane.b32.xlu0 %v6811, 48
  %v6991 = vpop.permute.xlu0 %6990
  %6992 = vrot.lane.b32.xlu0 %v6812, 48
  %v6993 = vpop.permute.xlu0 %6992
  %6994 = vrot.lane.b32.xlu0 %v6813, 48
  %v6995 = vpop.permute.xlu0 %6994
  %6996 = vrot.lane.b32.xlu0 %v6814, 48
  %v6997 = vpop.permute.xlu0 %6996
  %6998 = vrot.lane.b32.xlu0 %v6815, 48
  %v6999 = vpop.permute.xlu0 %6998
  %7000 = vrot.lane.b32.xlu0 %v6816, 48
  %v7001 = vpop.permute.xlu0 %7000
  %7002 = vrot.lane.b32.xlu0 %v6817, 48
  %v7003 = vpop.permute.xlu0 %7002
  %7004 = vrot.lane.b32.xlu0 %v6818, 48
  %v7005 = vpop.permute.xlu0 %7004
  %7006 = vrot.lane.b32.xlu0 %v6819, 48
  %v7007 = vpop.permute.xlu0 %7006
  %7008 = vrot.lane.b32.xlu0 %v6820, 48
  %v7009 = vpop.permute.xlu0 %7008
  %7010 = vrot.lane.b32.xlu0 %v6821, 48
  %v7011 = vpop.permute.xlu0 %7010
  %7012 = vrot.lane.b32.xlu0 %v6822, 48
  %v7013 = vpop.permute.xlu0 %7012
  %7014 = vrot.lane.b32.xlu0 %v6823, 48
  %v7015 = vpop.permute.xlu0 %7014
  %7080 = vst.msk [vmem:[#allocation3] sm:$0xff] %vm2617, %v6889
  %7081 = vst.msk [vmem:[#allocation3 + $0x8] sm:$0xff] %vm2617, %v6891
  %7082 = vst.msk [vmem:[#allocation3 + $0x10] sm:$0xff] %vm2617, %v6893
  %7083 = vst.msk [vmem:[#allocation3 + $0x18] sm:$0xff] %vm2617, %v6895
  %7084 = vst.msk [vmem:[#allocation3 + $0x20] sm:$0xff] %vm2617, %v6897
  %7085 = vst.msk [vmem:[#allocation3 + $0x28] sm:$0xff] %vm2617, %v6899
  %7086 = vst.msk [vmem:[#allocation3 + $0x30] sm:$0xff] %vm2617, %v6901
  %7087 = vst.msk [vmem:[#allocation3 + $0x38] sm:$0xff] %vm2617, %v6903
  %7088 = vst.msk [vmem:[#allocation3 + $0x40] sm:$0xff] %vm2617, %v6905
  %7089 = vst.msk [vmem:[#allocation3 + $0x48] sm:$0xff] %vm2617, %v6907
  %7090 = vst.msk [vmem:[#allocation3 + $0x50] sm:$0xff] %vm2617, %v6909
  %7091 = vst.msk [vmem:[#allocation3 + $0x58] sm:$0xff] %vm2617, %v6911
  %7092 = vst.msk [vmem:[#allocation3 + $0x60] sm:$0xff] %vm2617, %v6913
  %7093 = vst.msk [vmem:[#allocation3 + $0x68] sm:$0xff] %vm2617, %v6915
  %7094 = vst.msk [vmem:[#allocation3 + $0x70] sm:$0xff] %vm2617, %v6917
  %7095 = vst.msk [vmem:[#allocation3 + $0x78] sm:$0xff] %vm2617, %v6919
  %7096 = vst.msk [vmem:[#allocation3 + $0x80] sm:$0xff] %vm2617, %v6921
  %7097 = vst.msk [vmem:[#allocation3 + $0x88] sm:$0xff] %vm2617, %v6923
  %7098 = vst.msk [vmem:[#allocation3 + $0x90] sm:$0xff] %vm2617, %v6925
  %7099 = vst.msk [vmem:[#allocation3 + $0x98] sm:$0xff] %vm2617, %v6927
  %7100 = vst.msk [vmem:[#allocation3 + $0xa0] sm:$0xff] %vm2617, %v6929
  %7101 = vst.msk [vmem:[#allocation3 + $0xa8] sm:$0xff] %vm2617, %v6931
  %7102 = vst.msk [vmem:[#allocation3 + $0xb0] sm:$0xff] %vm2617, %v6933
  %7103 = vst.msk [vmem:[#allocation3 + $0xb8] sm:$0xff] %vm2617, %v6935
  %7104 = vst.msk [vmem:[#allocation3 + $0xc0] sm:$0xff] %vm2617, %v6937
  %7105 = vst.msk [vmem:[#allocation3 + $0xc8] sm:$0xff] %vm2617, %v6939
  %7106 = vst.msk [vmem:[#allocation3 + $0xd0] sm:$0xff] %vm2617, %v6941
  %7107 = vst.msk [vmem:[#allocation3 + $0xd8] sm:$0xff] %vm2617, %v6943
  %7108 = vst.msk [vmem:[#allocation3 + $0xe0] sm:$0xff] %vm2617, %v6945
  %7109 = vst.msk [vmem:[#allocation3 + $0xe8] sm:$0xff] %vm2617, %v6947
  %7110 = vst.msk [vmem:[#allocation3 + $0xf0] sm:$0xff] %vm2617, %v6949
  %7111 = vst.msk [vmem:[#allocation3 + $0xf8] sm:$0xff] %vm2617, %v6951
  %7112 = vst.msk [vmem:[#allocation3 + $0x100] sm:$0xff] %vm2617, %v6953
  %7113 = vst.msk [vmem:[#allocation3 + $0x108] sm:$0xff] %vm2617, %v6955
  %7114 = vst.msk [vmem:[#allocation3 + $0x110] sm:$0xff] %vm2617, %v6957
  %7115 = vst.msk [vmem:[#allocation3 + $0x118] sm:$0xff] %vm2617, %v6959
  %7116 = vst.msk [vmem:[#allocation3 + $0x120] sm:$0xff] %vm2617, %v6961
  %7117 = vst.msk [vmem:[#allocation3 + $0x128] sm:$0xff] %vm2617, %v6963
  %7118 = vst.msk [vmem:[#allocation3 + $0x130] sm:$0xff] %vm2617, %v6965
  %7119 = vst.msk [vmem:[#allocation3 + $0x138] sm:$0xff] %vm2617, %v6967
  %7120 = vst.msk [vmem:[#allocation3 + $0x140] sm:$0xff] %vm2617, %v6969
  %7121 = vst.msk [vmem:[#allocation3 + $0x148] sm:$0xff] %vm2617, %v6971
  %7122 = vst.msk [vmem:[#allocation3 + $0x150] sm:$0xff] %vm2617, %v6973
  %7123 = vst.msk [vmem:[#allocation3 + $0x158] sm:$0xff] %vm2617, %v6975
  %7124 = vst.msk [vmem:[#allocation3 + $0x160] sm:$0xff] %vm2617, %v6977
  %7125 = vst.msk [vmem:[#allocation3 + $0x168] sm:$0xff] %vm2617, %v6979
  %7126 = vst.msk [vmem:[#allocation3 + $0x170] sm:$0xff] %vm2617, %v6981
  %7127 = vst.msk [vmem:[#allocation3 + $0x178] sm:$0xff] %vm2617, %v6983
  %7128 = vst.msk [vmem:[#allocation3 + $0x180] sm:$0xff] %vm2617, %v6985
  %7129 = vst.msk [vmem:[#allocation3 + $0x188] sm:$0xff] %vm2617, %v6987
  %7130 = vst.msk [vmem:[#allocation3 + $0x190] sm:$0xff] %vm2617, %v6989
  %7131 = vst.msk [vmem:[#allocation3 + $0x198] sm:$0xff] %vm2617, %v6991
  %7132 = vst.msk [vmem:[#allocation3 + $0x1a0] sm:$0xff] %vm2617, %v6993
  %7133 = vst.msk [vmem:[#allocation3 + $0x1a8] sm:$0xff] %vm2617, %v6995
  %7134 = vst.msk [vmem:[#allocation3 + $0x1b0] sm:$0xff] %vm2617, %v6997
  %7135 = vst.msk [vmem:[#allocation3 + $0x1b8] sm:$0xff] %vm2617, %v6999
  %7136 = vst.msk [vmem:[#allocation3 + $0x1c0] sm:$0xff] %vm2617, %v7001
  %7137 = vst.msk [vmem:[#allocation3 + $0x1c8] sm:$0xff] %vm2617, %v7003
  %7138 = vst.msk [vmem:[#allocation3 + $0x1d0] sm:$0xff] %vm2617, %v7005
  %7139 = vst.msk [vmem:[#allocation3 + $0x1d8] sm:$0xff] %vm2617, %v7007
  %7140 = vst.msk [vmem:[#allocation3 + $0x1e0] sm:$0xff] %vm2617, %v7009
  %7141 = vst.msk [vmem:[#allocation3 + $0x1e8] sm:$0xff] %vm2617, %v7011
  %7142 = vst.msk [vmem:[#allocation3 + $0x1f0] sm:$0xff] %vm2617, %v7013
  %7143 = vst.msk [vmem:[#allocation3 + $0x1f8] sm:$0xff] %vm2617, %v7015
  %v7144 = vld [vmem:[%s2296 + $0x1] sm:$0xff]
  %v7145 = vld [vmem:[%s2296 + $0x9] sm:$0xff]
  %v7146 = vld [vmem:[%s2296 + $0x19] sm:$0xff]
  %v7147 = vld [vmem:[%s2296 + $0x21] sm:$0xff]
  %v7148 = vld [vmem:[%s2296 + $0x31] sm:$0xff]
  %v7149 = vld [vmem:[%s2296 + $0x39] sm:$0xff]
  %v7150 = vld [vmem:[%s2296 + $0x49] sm:$0xff]
  %v7151 = vld [vmem:[%s2296 + $0x51] sm:$0xff]
  %v7152 = vld [vmem:[%s2296 + $0x61] sm:$0xff]
  %v7153 = vld [vmem:[%s2296 + $0x69] sm:$0xff]
  %v7154 = vld [vmem:[%s2296 + $0x79] sm:$0xff]
  %v7155 = vld [vmem:[%s2296 + $0x81] sm:$0xff]
  %v7156 = vld [vmem:[%s2296 + $0x91] sm:$0xff]
  %v7157 = vld [vmem:[%s2296 + $0x99] sm:$0xff]
  %v7158 = vld [vmem:[%s2296 + $0xa9] sm:$0xff]
  %v7159 = vld [vmem:[%s2296 + $0xb1] sm:$0xff]
  %v7160 = vld [vmem:[%s2296 + $0xc1] sm:$0xff]
  %v7161 = vld [vmem:[%s2296 + $0xc9] sm:$0xff]
  %v7162 = vld [vmem:[%s2296 + $0xd9] sm:$0xff]
  %v7163 = vld [vmem:[%s2296 + $0xe1] sm:$0xff]
  %v7164 = vld [vmem:[%s2296 + $0xf1] sm:$0xff]
  %v7165 = vld [vmem:[%s2296 + $0xf9] sm:$0xff]
  %v7166 = vld [vmem:[%s2296 + $0x109] sm:$0xff]
  %v7167 = vld [vmem:[%s2296 + $0x111] sm:$0xff]
  %v7168 = vld [vmem:[%s2296 + $0x121] sm:$0xff]
  %v7169 = vld [vmem:[%s2296 + $0x129] sm:$0xff]
  %v7170 = vld [vmem:[%s2296 + $0x139] sm:$0xff]
  %v7171 = vld [vmem:[%s2296 + $0x141] sm:$0xff]
  %v7172 = vld [vmem:[%s2296 + $0x151] sm:$0xff]
  %v7173 = vld [vmem:[%s2296 + $0x159] sm:$0xff]
  %v7174 = vld [vmem:[%s2296 + $0x169] sm:$0xff]
  %v7175 = vld [vmem:[%s2296 + $0x171] sm:$0xff]
  %v7176 = vld [vmem:[%s2296 + $0x1b1] sm:$0xff]
  %v7177 = vld [vmem:[%s2296 + $0x1b9] sm:$0xff]
  %v7178 = vld [vmem:[%s2296 + $0x1c9] sm:$0xff]
  %v7179 = vld [vmem:[%s2296 + $0x1d1] sm:$0xff]
  %v7180 = vld [vmem:[%s2296 + $0x1e1] sm:$0xff]
  %v7181 = vld [vmem:[%s2296 + $0x1e9] sm:$0xff]
  %v7182 = vld [vmem:[%s2296 + $0x1f9] sm:$0xff]
  %v7183 = vld [vmem:[%s2296 + $0x201] sm:$0xff]
  %v7184 = vld [vmem:[%s2296 + $0x211] sm:$0xff]
  %v7185 = vld [vmem:[%s2296 + $0x219] sm:$0xff]
  %v7186 = vld [vmem:[%s2296 + $0x229] sm:$0xff]
  %v7187 = vld [vmem:[%s2296 + $0x231] sm:$0xff]
  %v7188 = vld [vmem:[%s2296 + $0x241] sm:$0xff]
  %v7189 = vld [vmem:[%s2296 + $0x249] sm:$0xff]
  %v7190 = vld [vmem:[%s2296 + $0x259] sm:$0xff]
  %v7191 = vld [vmem:[%s2296 + $0x261] sm:$0xff]
  %v7192 = vld [vmem:[%s2296 + $0x271] sm:$0xff]
  %v7193 = vld [vmem:[%s2296 + $0x279] sm:$0xff]
  %v7194 = vld [vmem:[%s2296 + $0x289] sm:$0xff]
  %v7195 = vld [vmem:[%s2296 + $0x291] sm:$0xff]
  %v7196 = vld [vmem:[%s2296 + $0x2a1] sm:$0xff]
  %v7197 = vld [vmem:[%s2296 + $0x2a9] sm:$0xff]
  %v7198 = vld [vmem:[%s2296 + $0x2b9] sm:$0xff]
  %v7199 = vld [vmem:[%s2296 + $0x2c1] sm:$0xff]
  %v7200 = vld [vmem:[%s2296 + $0x2d1] sm:$0xff]
  %v7201 = vld [vmem:[%s2296 + $0x2d9] sm:$0xff]
  %v7202 = vld [vmem:[%s2296 + $0x2e9] sm:$0xff]
  %v7203 = vld [vmem:[%s2296 + $0x2f1] sm:$0xff]
  %v7204 = vld [vmem:[%s2296 + $0x301] sm:$0xff]
  %v7205 = vld [vmem:[%s2296 + $0x309] sm:$0xff]
  %v7206 = vld [vmem:[%s2296 + $0x319] sm:$0xff]
  %v7207 = vld [vmem:[%s2296 + $0x321] sm:$0xff]
  %7272 = vrot.lane.b32.xlu0 %v7144, 56
  %v7273 = vpop.permute.xlu0 %7272
  %7274 = vrot.lane.b32.xlu0 %v7145, 56
  %v7275 = vpop.permute.xlu0 %7274
  %7276 = vrot.lane.b32.xlu0 %v7146, 56
  %v7277 = vpop.permute.xlu0 %7276
  %7278 = vrot.lane.b32.xlu0 %v7147, 56
  %v7279 = vpop.permute.xlu0 %7278
  %7280 = vrot.lane.b32.xlu0 %v7148, 56
  %v7281 = vpop.permute.xlu0 %7280
  %7282 = vrot.lane.b32.xlu0 %v7149, 56
  %v7283 = vpop.permute.xlu0 %7282
  %7284 = vrot.lane.b32.xlu0 %v7150, 56
  %v7285 = vpop.permute.xlu0 %7284
  %7286 = vrot.lane.b32.xlu0 %v7151, 56
  %v7287 = vpop.permute.xlu0 %7286
  %7288 = vrot.lane.b32.xlu0 %v7152, 56
  %v7289 = vpop.permute.xlu0 %7288
  %7290 = vrot.lane.b32.xlu0 %v7153, 56
  %v7291 = vpop.permute.xlu0 %7290
  %7292 = vrot.lane.b32.xlu0 %v7154, 56
  %v7293 = vpop.permute.xlu0 %7292
  %7294 = vrot.lane.b32.xlu0 %v7155, 56
  %v7295 = vpop.permute.xlu0 %7294
  %7296 = vrot.lane.b32.xlu0 %v7156, 56
  %v7297 = vpop.permute.xlu0 %7296
  %7298 = vrot.lane.b32.xlu0 %v7157, 56
  %v7299 = vpop.permute.xlu0 %7298
  %7300 = vrot.lane.b32.xlu0 %v7158, 56
  %v7301 = vpop.permute.xlu0 %7300
  %7302 = vrot.lane.b32.xlu0 %v7159, 56
  %v7303 = vpop.permute.xlu0 %7302
  %7304 = vrot.lane.b32.xlu0 %v7160, 56
  %v7305 = vpop.permute.xlu0 %7304
  %7306 = vrot.lane.b32.xlu0 %v7161, 56
  %v7307 = vpop.permute.xlu0 %7306
  %7308 = vrot.lane.b32.xlu0 %v7162, 56
  %v7309 = vpop.permute.xlu0 %7308
  %7310 = vrot.lane.b32.xlu0 %v7163, 56
  %v7311 = vpop.permute.xlu0 %7310
  %7312 = vrot.lane.b32.xlu0 %v7164, 56
  %v7313 = vpop.permute.xlu0 %7312
  %7314 = vrot.lane.b32.xlu0 %v7165, 56
  %v7315 = vpop.permute.xlu0 %7314
  %7316 = vrot.lane.b32.xlu0 %v7166, 56
  %v7317 = vpop.permute.xlu0 %7316
  %7318 = vrot.lane.b32.xlu0 %v7167, 56
  %v7319 = vpop.permute.xlu0 %7318
  %7320 = vrot.lane.b32.xlu0 %v7168, 56
  %v7321 = vpop.permute.xlu0 %7320
  %7322 = vrot.lane.b32.xlu0 %v7169, 56
  %v7323 = vpop.permute.xlu0 %7322
  %7324 = vrot.lane.b32.xlu0 %v7170, 56
  %v7325 = vpop.permute.xlu0 %7324
  %7326 = vrot.lane.b32.xlu0 %v7171, 56
  %v7327 = vpop.permute.xlu0 %7326
  %7328 = vrot.lane.b32.xlu0 %v7172, 56
  %v7329 = vpop.permute.xlu0 %7328
  %7330 = vrot.lane.b32.xlu0 %v7173, 56
  %v7331 = vpop.permute.xlu0 %7330
  %7332 = vrot.lane.b32.xlu0 %v7174, 56
  %v7333 = vpop.permute.xlu0 %7332
  %7334 = vrot.lane.b32.xlu0 %v7175, 56
  %v7335 = vpop.permute.xlu0 %7334
  %7336 = vrot.lane.b32.xlu0 %v7176, 56
  %v7337 = vpop.permute.xlu0 %7336
  %7338 = vrot.lane.b32.xlu0 %v7177, 56
  %v7339 = vpop.permute.xlu0 %7338
  %7340 = vrot.lane.b32.xlu0 %v7178, 56
  %v7341 = vpop.permute.xlu0 %7340
  %7342 = vrot.lane.b32.xlu0 %v7179, 56
  %v7343 = vpop.permute.xlu0 %7342
  %7344 = vrot.lane.b32.xlu0 %v7180, 56
  %v7345 = vpop.permute.xlu0 %7344
  %7346 = vrot.lane.b32.xlu0 %v7181, 56
  %v7347 = vpop.permute.xlu0 %7346
  %7348 = vrot.lane.b32.xlu0 %v7182, 56
  %v7349 = vpop.permute.xlu0 %7348
  %7350 = vrot.lane.b32.xlu0 %v7183, 56
  %v7351 = vpop.permute.xlu0 %7350
  %7352 = vrot.lane.b32.xlu0 %v7184, 56
  %v7353 = vpop.permute.xlu0 %7352
  %7354 = vrot.lane.b32.xlu0 %v7185, 56
  %v7355 = vpop.permute.xlu0 %7354
  %7356 = vrot.lane.b32.xlu0 %v7186, 56
  %v7357 = vpop.permute.xlu0 %7356
  %7358 = vrot.lane.b32.xlu0 %v7187, 56
  %v7359 = vpop.permute.xlu0 %7358
  %7360 = vrot.lane.b32.xlu0 %v7188, 56
  %v7361 = vpop.permute.xlu0 %7360
  %7362 = vrot.lane.b32.xlu0 %v7189, 56
  %v7363 = vpop.permute.xlu0 %7362
  %7364 = vrot.lane.b32.xlu0 %v7190, 56
  %v7365 = vpop.permute.xlu0 %7364
  %7366 = vrot.lane.b32.xlu0 %v7191, 56
  %v7367 = vpop.permute.xlu0 %7366
  %7368 = vrot.lane.b32.xlu0 %v7192, 56
  %v7369 = vpop.permute.xlu0 %7368
  %7370 = vrot.lane.b32.xlu0 %v7193, 56
  %v7371 = vpop.permute.xlu0 %7370
  %7372 = vrot.lane.b32.xlu0 %v7194, 56
  %v7373 = vpop.permute.xlu0 %7372
  %7374 = vrot.lane.b32.xlu0 %v7195, 56
  %v7375 = vpop.permute.xlu0 %7374
  %7376 = vrot.lane.b32.xlu0 %v7196, 56
  %v7377 = vpop.permute.xlu0 %7376
  %7378 = vrot.lane.b32.xlu0 %v7197, 56
  %v7379 = vpop.permute.xlu0 %7378
  %7380 = vrot.lane.b32.xlu0 %v7198, 56
  %v7381 = vpop.permute.xlu0 %7380
  %7382 = vrot.lane.b32.xlu0 %v7199, 56
  %v7383 = vpop.permute.xlu0 %7382
  %7384 = vrot.lane.b32.xlu0 %v7200, 56
  %v7385 = vpop.permute.xlu0 %7384
  %7386 = vrot.lane.b32.xlu0 %v7201, 56
  %v7387 = vpop.permute.xlu0 %7386
  %7388 = vrot.lane.b32.xlu0 %v7202, 56
  %v7389 = vpop.permute.xlu0 %7388
  %7390 = vrot.lane.b32.xlu0 %v7203, 56
  %v7391 = vpop.permute.xlu0 %7390
  %7392 = vrot.lane.b32.xlu0 %v7204, 56
  %v7393 = vpop.permute.xlu0 %7392
  %7394 = vrot.lane.b32.xlu0 %v7205, 56
  %v7395 = vpop.permute.xlu0 %7394
  %7396 = vrot.lane.b32.xlu0 %v7206, 56
  %v7397 = vpop.permute.xlu0 %7396
  %7398 = vrot.lane.b32.xlu0 %v7207, 56
  %v7399 = vpop.permute.xlu0 %7398
  %7464 = vst.msk [vmem:[#allocation3] sm:$0xff] %vm3002, %v7273
  %7465 = vst.msk [vmem:[#allocation3 + $0x8] sm:$0xff] %vm3002, %v7275
  %7466 = vst.msk [vmem:[#allocation3 + $0x10] sm:$0xff] %vm3002, %v7277
  %7467 = vst.msk [vmem:[#allocation3 + $0x18] sm:$0xff] %vm3002, %v7279
  %7468 = vst.msk [vmem:[#allocation3 + $0x20] sm:$0xff] %vm3002, %v7281
  %7469 = vst.msk [vmem:[#allocation3 + $0x28] sm:$0xff] %vm3002, %v7283
  %7470 = vst.msk [vmem:[#allocation3 + $0x30] sm:$0xff] %vm3002, %v7285
  %7471 = vst.msk [vmem:[#allocation3 + $0x38] sm:$0xff] %vm3002, %v7287
  %7472 = vst.msk [vmem:[#allocation3 + $0x40] sm:$0xff] %vm3002, %v7289
  %7473 = vst.msk [vmem:[#allocation3 + $0x48] sm:$0xff] %vm3002, %v7291
  %7474 = vst.msk [vmem:[#allocation3 + $0x50] sm:$0xff] %vm3002, %v7293
  %7475 = vst.msk [vmem:[#allocation3 + $0x58] sm:$0xff] %vm3002, %v7295
  %7476 = vst.msk [vmem:[#allocation3 + $0x60] sm:$0xff] %vm3002, %v7297
  %7477 = vst.msk [vmem:[#allocation3 + $0x68] sm:$0xff] %vm3002, %v7299
  %7478 = vst.msk [vmem:[#allocation3 + $0x70] sm:$0xff] %vm3002, %v7301
  %7479 = vst.msk [vmem:[#allocation3 + $0x78] sm:$0xff] %vm3002, %v7303
  %7480 = vst.msk [vmem:[#allocation3 + $0x80] sm:$0xff] %vm3002, %v7305
  %7481 = vst.msk [vmem:[#allocation3 + $0x88] sm:$0xff] %vm3002, %v7307
  %7482 = vst.msk [vmem:[#allocation3 + $0x90] sm:$0xff] %vm3002, %v7309
  %7483 = vst.msk [vmem:[#allocation3 + $0x98] sm:$0xff] %vm3002, %v7311
  %7484 = vst.msk [vmem:[#allocation3 + $0xa0] sm:$0xff] %vm3002, %v7313
  %7485 = vst.msk [vmem:[#allocation3 + $0xa8] sm:$0xff] %vm3002, %v7315
  %7486 = vst.msk [vmem:[#allocation3 + $0xb0] sm:$0xff] %vm3002, %v7317
  %7487 = vst.msk [vmem:[#allocation3 + $0xb8] sm:$0xff] %vm3002, %v7319
  %7488 = vst.msk [vmem:[#allocation3 + $0xc0] sm:$0xff] %vm3002, %v7321
  %7489 = vst.msk [vmem:[#allocation3 + $0xc8] sm:$0xff] %vm3002, %v7323
  %7490 = vst.msk [vmem:[#allocation3 + $0xd0] sm:$0xff] %vm3002, %v7325
  %7491 = vst.msk [vmem:[#allocation3 + $0xd8] sm:$0xff] %vm3002, %v7327
  %7492 = vst.msk [vmem:[#allocation3 + $0xe0] sm:$0xff] %vm3002, %v7329
  %7493 = vst.msk [vmem:[#allocation3 + $0xe8] sm:$0xff] %vm3002, %v7331
  %7494 = vst.msk [vmem:[#allocation3 + $0xf0] sm:$0xff] %vm3002, %v7333
  %7495 = vst.msk [vmem:[#allocation3 + $0xf8] sm:$0xff] %vm3002, %v7335
  %7496 = vst.msk [vmem:[#allocation3 + $0x100] sm:$0xff] %vm3002, %v7337
  %7497 = vst.msk [vmem:[#allocation3 + $0x108] sm:$0xff] %vm3002, %v7339
  %7498 = vst.msk [vmem:[#allocation3 + $0x110] sm:$0xff] %vm3002, %v7341
  %7499 = vst.msk [vmem:[#allocation3 + $0x118] sm:$0xff] %vm3002, %v7343
  %7500 = vst.msk [vmem:[#allocation3 + $0x120] sm:$0xff] %vm3002, %v7345
  %7501 = vst.msk [vmem:[#allocation3 + $0x128] sm:$0xff] %vm3002, %v7347
  %7502 = vst.msk [vmem:[#allocation3 + $0x130] sm:$0xff] %vm3002, %v7349
  %7503 = vst.msk [vmem:[#allocation3 + $0x138] sm:$0xff] %vm3002, %v7351
  %7504 = vst.msk [vmem:[#allocation3 + $0x140] sm:$0xff] %vm3002, %v7353
  %7505 = vst.msk [vmem:[#allocation3 + $0x148] sm:$0xff] %vm3002, %v7355
  %7506 = vst.msk [vmem:[#allocation3 + $0x150] sm:$0xff] %vm3002, %v7357
  %7507 = vst.msk [vmem:[#allocation3 + $0x158] sm:$0xff] %vm3002, %v7359
  %7508 = vst.msk [vmem:[#allocation3 + $0x160] sm:$0xff] %vm3002, %v7361
  %7509 = vst.msk [vmem:[#allocation3 + $0x168] sm:$0xff] %vm3002, %v7363
  %7510 = vst.msk [vmem:[#allocation3 + $0x170] sm:$0xff] %vm3002, %v7365
  %7511 = vst.msk [vmem:[#allocation3 + $0x178] sm:$0xff] %vm3002, %v7367
  %7512 = vst.msk [vmem:[#allocation3 + $0x180] sm:$0xff] %vm3002, %v7369
  %7513 = vst.msk [vmem:[#allocation3 + $0x188] sm:$0xff] %vm3002, %v7371
  %7514 = vst.msk [vmem:[#allocation3 + $0x190] sm:$0xff] %vm3002, %v7373
  %7515 = vst.msk [vmem:[#allocation3 + $0x198] sm:$0xff] %vm3002, %v7375
  %7516 = vst.msk [vmem:[#allocation3 + $0x1a0] sm:$0xff] %vm3002, %v7377
  %7517 = vst.msk [vmem:[#allocation3 + $0x1a8] sm:$0xff] %vm3002, %v7379
  %7518 = vst.msk [vmem:[#allocation3 + $0x1b0] sm:$0xff] %vm3002, %v7381
  %7519 = vst.msk [vmem:[#allocation3 + $0x1b8] sm:$0xff] %vm3002, %v7383
  %7520 = vst.msk [vmem:[#allocation3 + $0x1c0] sm:$0xff] %vm3002, %v7385
  %7521 = vst.msk [vmem:[#allocation3 + $0x1c8] sm:$0xff] %vm3002, %v7387
  %7522 = vst.msk [vmem:[#allocation3 + $0x1d0] sm:$0xff] %vm3002, %v7389
  %7523 = vst.msk [vmem:[#allocation3 + $0x1d8] sm:$0xff] %vm3002, %v7391
  %7524 = vst.msk [vmem:[#allocation3 + $0x1e0] sm:$0xff] %vm3002, %v7393
  %7525 = vst.msk [vmem:[#allocation3 + $0x1e8] sm:$0xff] %vm3002, %v7395
  %7526 = vst.msk [vmem:[#allocation3 + $0x1f0] sm:$0xff] %vm3002, %v7397
  %7527 = vst.msk [vmem:[#allocation3 + $0x1f8] sm:$0xff] %vm3002, %v7399
  %v7528 = vld [vmem:[%s2296 + $0x2] sm:$0xff]
  %v7529 = vld [vmem:[%s2296 + $0xa] sm:$0xff]
  %v7530 = vld [vmem:[%s2296 + $0x1a] sm:$0xff]
  %v7531 = vld [vmem:[%s2296 + $0x22] sm:$0xff]
  %v7532 = vld [vmem:[%s2296 + $0x32] sm:$0xff]
  %v7533 = vld [vmem:[%s2296 + $0x3a] sm:$0xff]
  %v7534 = vld [vmem:[%s2296 + $0x4a] sm:$0xff]
  %v7535 = vld [vmem:[%s2296 + $0x52] sm:$0xff]
  %v7536 = vld [vmem:[%s2296 + $0x62] sm:$0xff]
  %v7537 = vld [vmem:[%s2296 + $0x6a] sm:$0xff]
  %v7538 = vld [vmem:[%s2296 + $0x7a] sm:$0xff]
  %v7539 = vld [vmem:[%s2296 + $0x82] sm:$0xff]
  %v7540 = vld [vmem:[%s2296 + $0x92] sm:$0xff]
  %v7541 = vld [vmem:[%s2296 + $0x9a] sm:$0xff]
  %v7542 = vld [vmem:[%s2296 + $0xaa] sm:$0xff]
  %v7543 = vld [vmem:[%s2296 + $0xb2] sm:$0xff]
  %v7544 = vld [vmem:[%s2296 + $0xc2] sm:$0xff]
  %v7545 = vld [vmem:[%s2296 + $0xca] sm:$0xff]
  %v7546 = vld [vmem:[%s2296 + $0xda] sm:$0xff]
  %v7547 = vld [vmem:[%s2296 + $0xe2] sm:$0xff]
  %v7548 = vld [vmem:[%s2296 + $0xf2] sm:$0xff]
  %v7549 = vld [vmem:[%s2296 + $0xfa] sm:$0xff]
  %v7550 = vld [vmem:[%s2296 + $0x10a] sm:$0xff]
  %v7551 = vld [vmem:[%s2296 + $0x112] sm:$0xff]
  %v7552 = vld [vmem:[%s2296 + $0x122] sm:$0xff]
  %v7553 = vld [vmem:[%s2296 + $0x12a] sm:$0xff]
  %v7554 = vld [vmem:[%s2296 + $0x13a] sm:$0xff]
  %v7555 = vld [vmem:[%s2296 + $0x142] sm:$0xff]
  %v7556 = vld [vmem:[%s2296 + $0x152] sm:$0xff]
  %v7557 = vld [vmem:[%s2296 + $0x15a] sm:$0xff]
  %v7558 = vld [vmem:[%s2296 + $0x16a] sm:$0xff]
  %v7559 = vld [vmem:[%s2296 + $0x172] sm:$0xff]
  %v7560 = vld [vmem:[%s2296 + $0x1b2] sm:$0xff]
  %v7561 = vld [vmem:[%s2296 + $0x1ba] sm:$0xff]
  %v7562 = vld [vmem:[%s2296 + $0x1ca] sm:$0xff]
  %v7563 = vld [vmem:[%s2296 + $0x1d2] sm:$0xff]
  %v7564 = vld [vmem:[%s2296 + $0x1e2] sm:$0xff]
  %v7565 = vld [vmem:[%s2296 + $0x1ea] sm:$0xff]
  %v7566 = vld [vmem:[%s2296 + $0x1fa] sm:$0xff]
  %v7567 = vld [vmem:[%s2296 + $0x202] sm:$0xff]
  %v7568 = vld [vmem:[%s2296 + $0x212] sm:$0xff]
  %v7569 = vld [vmem:[%s2296 + $0x21a] sm:$0xff]
  %v7570 = vld [vmem:[%s2296 + $0x22a] sm:$0xff]
  %v7571 = vld [vmem:[%s2296 + $0x232] sm:$0xff]
  %v7572 = vld [vmem:[%s2296 + $0x242] sm:$0xff]
  %v7573 = vld [vmem:[%s2296 + $0x24a] sm:$0xff]
  %v7574 = vld [vmem:[%s2296 + $0x25a] sm:$0xff]
  %v7575 = vld [vmem:[%s2296 + $0x262] sm:$0xff]
  %v7576 = vld [vmem:[%s2296 + $0x272] sm:$0xff]
  %v7577 = vld [vmem:[%s2296 + $0x27a] sm:$0xff]
  %v7578 = vld [vmem:[%s2296 + $0x28a] sm:$0xff]
  %v7579 = vld [vmem:[%s2296 + $0x292] sm:$0xff]
  %v7580 = vld [vmem:[%s2296 + $0x2a2] sm:$0xff]
  %v7581 = vld [vmem:[%s2296 + $0x2aa] sm:$0xff]
  %v7582 = vld [vmem:[%s2296 + $0x2ba] sm:$0xff]
  %v7583 = vld [vmem:[%s2296 + $0x2c2] sm:$0xff]
  %v7584 = vld [vmem:[%s2296 + $0x2d2] sm:$0xff]
  %v7585 = vld [vmem:[%s2296 + $0x2da] sm:$0xff]
  %v7586 = vld [vmem:[%s2296 + $0x2ea] sm:$0xff]
  %v7587 = vld [vmem:[%s2296 + $0x2f2] sm:$0xff]
  %v7588 = vld [vmem:[%s2296 + $0x302] sm:$0xff]
  %v7589 = vld [vmem:[%s2296 + $0x30a] sm:$0xff]
  %v7590 = vld [vmem:[%s2296 + $0x31a] sm:$0xff]
  %v7591 = vld [vmem:[%s2296 + $0x322] sm:$0xff]
  %7656 = vrot.lane.b32.xlu0 %v7528, 64
  %v7657 = vpop.permute.xlu0 %7656
  %7658 = vrot.lane.b32.xlu0 %v7529, 64
  %v7659 = vpop.permute.xlu0 %7658
  %7660 = vrot.lane.b32.xlu0 %v7530, 64
  %v7661 = vpop.permute.xlu0 %7660
  %7662 = vrot.lane.b32.xlu0 %v7531, 64
  %v7663 = vpop.permute.xlu0 %7662
  %7664 = vrot.lane.b32.xlu0 %v7532, 64
  %v7665 = vpop.permute.xlu0 %7664
  %7666 = vrot.lane.b32.xlu0 %v7533, 64
  %v7667 = vpop.permute.xlu0 %7666
  %7668 = vrot.lane.b32.xlu0 %v7534, 64
  %v7669 = vpop.permute.xlu0 %7668
  %7670 = vrot.lane.b32.xlu0 %v7535, 64
  %v7671 = vpop.permute.xlu0 %7670
  %7672 = vrot.lane.b32.xlu0 %v7536, 64
  %v7673 = vpop.permute.xlu0 %7672
  %7674 = vrot.lane.b32.xlu0 %v7537, 64
  %v7675 = vpop.permute.xlu0 %7674
  %7676 = vrot.lane.b32.xlu0 %v7538, 64
  %v7677 = vpop.permute.xlu0 %7676
  %7678 = vrot.lane.b32.xlu0 %v7539, 64
  %v7679 = vpop.permute.xlu0 %7678
  %7680 = vrot.lane.b32.xlu0 %v7540, 64
  %v7681 = vpop.permute.xlu0 %7680
  %7682 = vrot.lane.b32.xlu0 %v7541, 64
  %v7683 = vpop.permute.xlu0 %7682
  %7684 = vrot.lane.b32.xlu0 %v7542, 64
  %v7685 = vpop.permute.xlu0 %7684
  %7686 = vrot.lane.b32.xlu0 %v7543, 64
  %v7687 = vpop.permute.xlu0 %7686
  %7688 = vrot.lane.b32.xlu0 %v7544, 64
  %v7689 = vpop.permute.xlu0 %7688
  %7690 = vrot.lane.b32.xlu0 %v7545, 64
  %v7691 = vpop.permute.xlu0 %7690
  %7692 = vrot.lane.b32.xlu0 %v7546, 64
  %v7693 = vpop.permute.xlu0 %7692
  %7694 = vrot.lane.b32.xlu0 %v7547, 64
  %v7695 = vpop.permute.xlu0 %7694
  %7696 = vrot.lane.b32.xlu0 %v7548, 64
  %v7697 = vpop.permute.xlu0 %7696
  %7698 = vrot.lane.b32.xlu0 %v7549, 64
  %v7699 = vpop.permute.xlu0 %7698
  %7700 = vrot.lane.b32.xlu0 %v7550, 64
  %v7701 = vpop.permute.xlu0 %7700
  %7702 = vrot.lane.b32.xlu0 %v7551, 64
  %v7703 = vpop.permute.xlu0 %7702
  %7704 = vrot.lane.b32.xlu0 %v7552, 64
  %v7705 = vpop.permute.xlu0 %7704
  %7706 = vrot.lane.b32.xlu0 %v7553, 64
  %v7707 = vpop.permute.xlu0 %7706
  %7708 = vrot.lane.b32.xlu0 %v7554, 64
  %v7709 = vpop.permute.xlu0 %7708
  %7710 = vrot.lane.b32.xlu0 %v7555, 64
  %v7711 = vpop.permute.xlu0 %7710
  %7712 = vrot.lane.b32.xlu0 %v7556, 64
  %v7713 = vpop.permute.xlu0 %7712
  %7714 = vrot.lane.b32.xlu0 %v7557, 64
  %v7715 = vpop.permute.xlu0 %7714
  %7716 = vrot.lane.b32.xlu0 %v7558, 64
  %v7717 = vpop.permute.xlu0 %7716
  %7718 = vrot.lane.b32.xlu0 %v7559, 64
  %v7719 = vpop.permute.xlu0 %7718
  %7720 = vrot.lane.b32.xlu0 %v7560, 64
  %v7721 = vpop.permute.xlu0 %7720
  %7722 = vrot.lane.b32.xlu0 %v7561, 64
  %v7723 = vpop.permute.xlu0 %7722
  %7724 = vrot.lane.b32.xlu0 %v7562, 64
  %v7725 = vpop.permute.xlu0 %7724
  %7726 = vrot.lane.b32.xlu0 %v7563, 64
  %v7727 = vpop.permute.xlu0 %7726
  %7728 = vrot.lane.b32.xlu0 %v7564, 64
  %v7729 = vpop.permute.xlu0 %7728
  %7730 = vrot.lane.b32.xlu0 %v7565, 64
  %v7731 = vpop.permute.xlu0 %7730
  %7732 = vrot.lane.b32.xlu0 %v7566, 64
  %v7733 = vpop.permute.xlu0 %7732
  %7734 = vrot.lane.b32.xlu0 %v7567, 64
  %v7735 = vpop.permute.xlu0 %7734
  %7736 = vrot.lane.b32.xlu0 %v7568, 64
  %v7737 = vpop.permute.xlu0 %7736
  %7738 = vrot.lane.b32.xlu0 %v7569, 64
  %v7739 = vpop.permute.xlu0 %7738
  %7740 = vrot.lane.b32.xlu0 %v7570, 64
  %v7741 = vpop.permute.xlu0 %7740
  %7742 = vrot.lane.b32.xlu0 %v7571, 64
  %v7743 = vpop.permute.xlu0 %7742
  %7744 = vrot.lane.b32.xlu0 %v7572, 64
  %v7745 = vpop.permute.xlu0 %7744
  %7746 = vrot.lane.b32.xlu0 %v7573, 64
  %v7747 = vpop.permute.xlu0 %7746
  %7748 = vrot.lane.b32.xlu0 %v7574, 64
  %v7749 = vpop.permute.xlu0 %7748
  %7750 = vrot.lane.b32.xlu0 %v7575, 64
  %v7751 = vpop.permute.xlu0 %7750
  %7752 = vrot.lane.b32.xlu0 %v7576, 64
  %v7753 = vpop.permute.xlu0 %7752
  %7754 = vrot.lane.b32.xlu0 %v7577, 64
  %v7755 = vpop.permute.xlu0 %7754
  %7756 = vrot.lane.b32.xlu0 %v7578, 64
  %v7757 = vpop.permute.xlu0 %7756
  %7758 = vrot.lane.b32.xlu0 %v7579, 64
  %v7759 = vpop.permute.xlu0 %7758
  %7760 = vrot.lane.b32.xlu0 %v7580, 64
  %v7761 = vpop.permute.xlu0 %7760
  %7762 = vrot.lane.b32.xlu0 %v7581, 64
  %v7763 = vpop.permute.xlu0 %7762
  %7764 = vrot.lane.b32.xlu0 %v7582, 64
  %v7765 = vpop.permute.xlu0 %7764
  %7766 = vrot.lane.b32.xlu0 %v7583, 64
  %v7767 = vpop.permute.xlu0 %7766
  %7768 = vrot.lane.b32.xlu0 %v7584, 64
  %v7769 = vpop.permute.xlu0 %7768
  %7770 = vrot.lane.b32.xlu0 %v7585, 64
  %v7771 = vpop.permute.xlu0 %7770
  %7772 = vrot.lane.b32.xlu0 %v7586, 64
  %v7773 = vpop.permute.xlu0 %7772
  %7774 = vrot.lane.b32.xlu0 %v7587, 64
  %v7775 = vpop.permute.xlu0 %7774
  %7776 = vrot.lane.b32.xlu0 %v7588, 64
  %v7777 = vpop.permute.xlu0 %7776
  %7778 = vrot.lane.b32.xlu0 %v7589, 64
  %v7779 = vpop.permute.xlu0 %7778
  %7780 = vrot.lane.b32.xlu0 %v7590, 64
  %v7781 = vpop.permute.xlu0 %7780
  %7782 = vrot.lane.b32.xlu0 %v7591, 64
  %v7783 = vpop.permute.xlu0 %7782
  %7848 = vst.msk [vmem:[#allocation3] sm:$0xff] %vm3387, %v7657
  %7849 = vst.msk [vmem:[#allocation3 + $0x8] sm:$0xff] %vm3387, %v7659
  %7850 = vst.msk [vmem:[#allocation3 + $0x10] sm:$0xff] %vm3387, %v7661
  %7851 = vst.msk [vmem:[#allocation3 + $0x18] sm:$0xff] %vm3387, %v7663
  %7852 = vst.msk [vmem:[#allocation3 + $0x20] sm:$0xff] %vm3387, %v7665
  %7853 = vst.msk [vmem:[#allocation3 + $0x28] sm:$0xff] %vm3387, %v7667
  %7854 = vst.msk [vmem:[#allocation3 + $0x30] sm:$0xff] %vm3387, %v7669
  %7855 = vst.msk [vmem:[#allocation3 + $0x38] sm:$0xff] %vm3387, %v7671
  %7856 = vst.msk [vmem:[#allocation3 + $0x40] sm:$0xff] %vm3387, %v7673
  %7857 = vst.msk [vmem:[#allocation3 + $0x48] sm:$0xff] %vm3387, %v7675
  %7858 = vst.msk [vmem:[#allocation3 + $0x50] sm:$0xff] %vm3387, %v7677
  %7859 = vst.msk [vmem:[#allocation3 + $0x58] sm:$0xff] %vm3387, %v7679
  %7860 = vst.msk [vmem:[#allocation3 + $0x60] sm:$0xff] %vm3387, %v7681
  %7861 = vst.msk [vmem:[#allocation3 + $0x68] sm:$0xff] %vm3387, %v7683
  %7862 = vst.msk [vmem:[#allocation3 + $0x70] sm:$0xff] %vm3387, %v7685
  %7863 = vst.msk [vmem:[#allocation3 + $0x78] sm:$0xff] %vm3387, %v7687
  %7864 = vst.msk [vmem:[#allocation3 + $0x80] sm:$0xff] %vm3387, %v7689
  %7865 = vst.msk [vmem:[#allocation3 + $0x88] sm:$0xff] %vm3387, %v7691
  %7866 = vst.msk [vmem:[#allocation3 + $0x90] sm:$0xff] %vm3387, %v7693
  %7867 = vst.msk [vmem:[#allocation3 + $0x98] sm:$0xff] %vm3387, %v7695
  %7868 = vst.msk [vmem:[#allocation3 + $0xa0] sm:$0xff] %vm3387, %v7697
  %7869 = vst.msk [vmem:[#allocation3 + $0xa8] sm:$0xff] %vm3387, %v7699
  %7870 = vst.msk [vmem:[#allocation3 + $0xb0] sm:$0xff] %vm3387, %v7701
  %7871 = vst.msk [vmem:[#allocation3 + $0xb8] sm:$0xff] %vm3387, %v7703
  %7872 = vst.msk [vmem:[#allocation3 + $0xc0] sm:$0xff] %vm3387, %v7705
  %7873 = vst.msk [vmem:[#allocation3 + $0xc8] sm:$0xff] %vm3387, %v7707
  %7874 = vst.msk [vmem:[#allocation3 + $0xd0] sm:$0xff] %vm3387, %v7709
  %7875 = vst.msk [vmem:[#allocation3 + $0xd8] sm:$0xff] %vm3387, %v7711
  %7876 = vst.msk [vmem:[#allocation3 + $0xe0] sm:$0xff] %vm3387, %v7713
  %7877 = vst.msk [vmem:[#allocation3 + $0xe8] sm:$0xff] %vm3387, %v7715
  %7878 = vst.msk [vmem:[#allocation3 + $0xf0] sm:$0xff] %vm3387, %v7717
  %7879 = vst.msk [vmem:[#allocation3 + $0xf8] sm:$0xff] %vm3387, %v7719
  %7880 = vst.msk [vmem:[#allocation3 + $0x100] sm:$0xff] %vm3387, %v7721
  %7881 = vst.msk [vmem:[#allocation3 + $0x108] sm:$0xff] %vm3387, %v7723
  %7882 = vst.msk [vmem:[#allocation3 + $0x110] sm:$0xff] %vm3387, %v7725
  %7883 = vst.msk [vmem:[#allocation3 + $0x118] sm:$0xff] %vm3387, %v7727
  %7884 = vst.msk [vmem:[#allocation3 + $0x120] sm:$0xff] %vm3387, %v7729
  %7885 = vst.msk [vmem:[#allocation3 + $0x128] sm:$0xff] %vm3387, %v7731
  %7886 = vst.msk [vmem:[#allocation3 + $0x130] sm:$0xff] %vm3387, %v7733
  %7887 = vst.msk [vmem:[#allocation3 + $0x138] sm:$0xff] %vm3387, %v7735
  %7888 = vst.msk [vmem:[#allocation3 + $0x140] sm:$0xff] %vm3387, %v7737
  %7889 = vst.msk [vmem:[#allocation3 + $0x148] sm:$0xff] %vm3387, %v7739
  %7890 = vst.msk [vmem:[#allocation3 + $0x150] sm:$0xff] %vm3387, %v7741
  %7891 = vst.msk [vmem:[#allocation3 + $0x158] sm:$0xff] %vm3387, %v7743
  %7892 = vst.msk [vmem:[#allocation3 + $0x160] sm:$0xff] %vm3387, %v7745
  %7893 = vst.msk [vmem:[#allocation3 + $0x168] sm:$0xff] %vm3387, %v7747
  %7894 = vst.msk [vmem:[#allocation3 + $0x170] sm:$0xff] %vm3387, %v7749
  %7895 = vst.msk [vmem:[#allocation3 + $0x178] sm:$0xff] %vm3387, %v7751
  %7896 = vst.msk [vmem:[#allocation3 + $0x180] sm:$0xff] %vm3387, %v7753
  %7897 = vst.msk [vmem:[#allocation3 + $0x188] sm:$0xff] %vm3387, %v7755
  %7898 = vst.msk [vmem:[#allocation3 + $0x190] sm:$0xff] %vm3387, %v7757
  %7899 = vst.msk [vmem:[#allocation3 + $0x198] sm:$0xff] %vm3387, %v7759
  %7900 = vst.msk [vmem:[#allocation3 + $0x1a0] sm:$0xff] %vm3387, %v7761
  %7901 = vst.msk [vmem:[#allocation3 + $0x1a8] sm:$0xff] %vm3387, %v7763
  %7902 = vst.msk [vmem:[#allocation3 + $0x1b0] sm:$0xff] %vm3387, %v7765
  %7903 = vst.msk [vmem:[#allocation3 + $0x1b8] sm:$0xff] %vm3387, %v7767
  %7904 = vst.msk [vmem:[#allocation3 + $0x1c0] sm:$0xff] %vm3387, %v7769
  %7905 = vst.msk [vmem:[#allocation3 + $0x1c8] sm:$0xff] %vm3387, %v7771
  %7906 = vst.msk [vmem:[#allocation3 + $0x1d0] sm:$0xff] %vm3387, %v7773
  %7907 = vst.msk [vmem:[#allocation3 + $0x1d8] sm:$0xff] %vm3387, %v7775
  %7908 = vst.msk [vmem:[#allocation3 + $0x1e0] sm:$0xff] %vm3387, %v7777
  %7909 = vst.msk [vmem:[#allocation3 + $0x1e8] sm:$0xff] %vm3387, %v7779
  %7910 = vst.msk [vmem:[#allocation3 + $0x1f0] sm:$0xff] %vm3387, %v7781
  %7911 = vst.msk [vmem:[#allocation3 + $0x1f8] sm:$0xff] %vm3387, %v7783
  %v7912 = vld [vmem:[#allocation3] sm:$0xff]
  %v7913 = vld [vmem:[#allocation3 + $0x8] sm:$0xff]
  %v7914 = vld [vmem:[#allocation3 + $0x10] sm:$0xff]
  %v7915 = vld [vmem:[#allocation3 + $0x18] sm:$0xff]
  %v7916 = vld [vmem:[#allocation3 + $0x20] sm:$0xff]
  %v7917 = vld [vmem:[#allocation3 + $0x28] sm:$0xff]
  %v7918 = vld [vmem:[#allocation3 + $0x30] sm:$0xff]
  %v7919 = vld [vmem:[#allocation3 + $0x38] sm:$0xff]
  %v7920 = vld [vmem:[#allocation3 + $0x40] sm:$0xff]
  %v7921 = vld [vmem:[#allocation3 + $0x48] sm:$0xff]
  %v7922 = vld [vmem:[#allocation3 + $0x50] sm:$0xff]
  %v7923 = vld [vmem:[#allocation3 + $0x58] sm:$0xff]
  %v7924 = vld [vmem:[#allocation3 + $0x60] sm:$0xff]
  %v7925 = vld [vmem:[#allocation3 + $0x68] sm:$0xff]
  %v7926 = vld [vmem:[#allocation3 + $0x70] sm:$0xff]
  %v7927 = vld [vmem:[#allocation3 + $0x78] sm:$0xff]
  %v7928 = vld [vmem:[#allocation3 + $0x80] sm:$0xff]
  %v7929 = vld [vmem:[#allocation3 + $0x88] sm:$0xff]
  %v7930 = vld [vmem:[#allocation3 + $0x90] sm:$0xff]
  %v7931 = vld [vmem:[#allocation3 + $0x98] sm:$0xff]
  %v7932 = vld [vmem:[#allocation3 + $0xa0] sm:$0xff]
  %v7933 = vld [vmem:[#allocation3 + $0xa8] sm:$0xff]
  %v7934 = vld [vmem:[#allocation3 + $0xb0] sm:$0xff]
  %v7935 = vld [vmem:[#allocation3 + $0xb8] sm:$0xff]
  %v7936 = vld [vmem:[#allocation3 + $0xc0] sm:$0xff]
  %v7937 = vld [vmem:[#allocation3 + $0xc8] sm:$0xff]
  %v7938 = vld [vmem:[#allocation3 + $0xd0] sm:$0xff]
  %v7939 = vld [vmem:[#allocation3 + $0xd8] sm:$0xff]
  %v7940 = vld [vmem:[#allocation3 + $0xe0] sm:$0xff]
  %v7941 = vld [vmem:[#allocation3 + $0xe8] sm:$0xff]
  %v7942 = vld [vmem:[#allocation3 + $0xf0] sm:$0xff]
  %v7943 = vld [vmem:[#allocation3 + $0xf8] sm:$0xff]
  %v7944 = vld [vmem:[#allocation3 + $0x100] sm:$0xff]
  %v7945 = vld [vmem:[#allocation3 + $0x108] sm:$0xff]
  %v7946 = vld [vmem:[#allocation3 + $0x110] sm:$0xff]
  %v7947 = vld [vmem:[#allocation3 + $0x118] sm:$0xff]
  %v7948 = vld [vmem:[#allocation3 + $0x120] sm:$0xff]
  %v7949 = vld [vmem:[#allocation3 + $0x128] sm:$0xff]
  %v7950 = vld [vmem:[#allocation3 + $0x130] sm:$0xff]
  %v7951 = vld [vmem:[#allocation3 + $0x138] sm:$0xff]
  %v7952 = vld [vmem:[#allocation3 + $0x140] sm:$0xff]
  %v7953 = vld [vmem:[#allocation3 + $0x148] sm:$0xff]
  %v7954 = vld [vmem:[#allocation3 + $0x150] sm:$0xff]
  %v7955 = vld [vmem:[#allocation3 + $0x158] sm:$0xff]
  %v7956 = vld [vmem:[#allocation3 + $0x160] sm:$0xff]
  %v7957 = vld [vmem:[#allocation3 + $0x168] sm:$0xff]
  %v7958 = vld [vmem:[#allocation3 + $0x170] sm:$0xff]
  %v7959 = vld [vmem:[#allocation3 + $0x178] sm:$0xff]
  %v7960 = vld [vmem:[#allocation3 + $0x180] sm:$0xff]
  %v7961 = vld [vmem:[#allocation3 + $0x188] sm:$0xff]
  %v7962 = vld [vmem:[#allocation3 + $0x190] sm:$0xff]
  %v7963 = vld [vmem:[#allocation3 + $0x198] sm:$0xff]
  %v7964 = vld [vmem:[#allocation3 + $0x1a0] sm:$0xff]
  %v7965 = vld [vmem:[#allocation3 + $0x1a8] sm:$0xff]
  %v7966 = vld [vmem:[#allocation3 + $0x1b0] sm:$0xff]
  %v7967 = vld [vmem:[#allocation3 + $0x1b8] sm:$0xff]
  %v7968 = vld [vmem:[#allocation3 + $0x1c0] sm:$0xff]
  %v7969 = vld [vmem:[#allocation3 + $0x1c8] sm:$0xff]
  %v7970 = vld [vmem:[#allocation3 + $0x1d0] sm:$0xff]
  %v7971 = vld [vmem:[#allocation3 + $0x1d8] sm:$0xff]
  %v7972 = vld [vmem:[#allocation3 + $0x1e0] sm:$0xff]
  %v7973 = vld [vmem:[#allocation3 + $0x1e8] sm:$0xff]
  %v7974 = vld [vmem:[#allocation3 + $0x1f0] sm:$0xff]
  %v7975 = vld [vmem:[#allocation3 + $0x1f8] sm:$0xff]
  %v7976 = vld [vmem:[%s4] sm:$0xff]
  %v7977 = vld [vmem:[%s4 + $0x8] sm:$0xff]
  %v7978 = vld [vmem:[%s4 + $0x10] sm:$0xff]
  %v7979 = vld [vmem:[%s4 + $0x18] sm:$0xff]
  %v7980 = vld [vmem:[%s4 + $0x20] sm:$0xff]
  %v7981 = vld [vmem:[%s4 + $0x28] sm:$0xff]
  %v7982 = vld [vmem:[%s4 + $0x30] sm:$0xff]
  %v7983 = vld [vmem:[%s4 + $0x38] sm:$0xff]
  %v7984 = vld [vmem:[%s4 + $0x40] sm:$0xff]
  %v7986 = vsel %vm3525, %v7912, 0
  %v7989 = vsel %vm3525, %v7913, 0
  %v7992 = vsel %vm3525, %v7914, 0
  %v7995 = vsel %vm3525, %v7915, 0
  %v7998 = vsel %vm3525, %v7916, 0
  %v8001 = vsel %vm3525, %v7917, 0
  %v8004 = vsel %vm3525, %v7918, 0
  %v8007 = vsel %vm3525, %v7919, 0
  %v8010 = vsel %vm3525, %v7920, 0
  %v8013 = vsel %vm3525, %v7921, 0
  %v8016 = vsel %vm3525, %v7922, 0
  %v8019 = vsel %vm3525, %v7923, 0
  %v8022 = vsel %vm3525, %v7924, 0
  %v8025 = vsel %vm3525, %v7925, 0
  %v8028 = vsel %vm3525, %v7926, 0
  %v8031 = vsel %vm3525, %v7927, 0
  %v8034 = vsel %vm3525, %v7928, 0
  %v8037 = vsel %vm3525, %v7929, 0
  %v8040 = vsel %vm3525, %v7930, 0
  %v8043 = vsel %vm3525, %v7931, 0
  %v8046 = vsel %vm3525, %v7932, 0
  %v8049 = vsel %vm3525, %v7933, 0
  %v8052 = vsel %vm3525, %v7934, 0
  %v8055 = vsel %vm3525, %v7935, 0
  %v8058 = vsel %vm3525, %v7936, 0
  %v8061 = vsel %vm3525, %v7937, 0
  %v8064 = vsel %vm3525, %v7938, 0
  %v8067 = vsel %vm3525, %v7939, 0
  %v8070 = vsel %vm3525, %v7940, 0
  %v8073 = vsel %vm3525, %v7941, 0
  %v8076 = vsel %vm3525, %v7942, 0
  %v8079 = vsel %vm3525, %v7943, 0
  %v8082 = vsel %vm3525, %v7944, 0
  %v8085 = vsel %vm3525, %v7945, 0
  %v8088 = vsel %vm3525, %v7946, 0
  %v8091 = vsel %vm3525, %v7947, 0
  %v8094 = vsel %vm3525, %v7948, 0
  %v8097 = vsel %vm3525, %v7949, 0
  %v8100 = vsel %vm3525, %v7950, 0
  %v8103 = vsel %vm3525, %v7951, 0
  %v8106 = vsel %vm3525, %v7952, 0
  %v8109 = vsel %vm3525, %v7953, 0
  %v8112 = vsel %vm3525, %v7954, 0
  %v8115 = vsel %vm3525, %v7955, 0
  %v8118 = vsel %vm3525, %v7956, 0
  %v8121 = vsel %vm3525, %v7957, 0
  %v8124 = vsel %vm3525, %v7958, 0
  %v8127 = vsel %vm3525, %v7959, 0
  %v8130 = vsel %vm3525, %v7960, 0
  %v8133 = vsel %vm3525, %v7961, 0
  %v8136 = vsel %vm3525, %v7962, 0
  %v8139 = vsel %vm3525, %v7963, 0
  %v8142 = vsel %vm3525, %v7964, 0
  %v8145 = vsel %vm3525, %v7965, 0
  %v8148 = vsel %vm3525, %v7966, 0
  %v8151 = vsel %vm3525, %v7967, 0
  %v8154 = vsel %vm3525, %v7968, 0
  %v8157 = vsel %vm3525, %v7969, 0
  %v8160 = vsel %vm3525, %v7970, 0
  %v8163 = vsel %vm3525, %v7971, 0
  %v8166 = vsel %vm3525, %v7972, 0
  %v8169 = vsel %vm3525, %v7973, 0
  %v8172 = vsel %vm3525, %v7974, 0
  %v8175 = vsel %vm3525, %v7975, 0
  %8177 = vmatprep.subr.mxu0 0.0
  %8178 = vmatpush1.msra.mxu0 %v7976
  %8179 = vmatprep.subr.mxu0 0.0
  %8180 = vmatpush1.msra.mxu0 %v7977
  %8181 = vmatprep.subr.mxu0 0.0
  %8182 = vmatpush1.msra.mxu0 %v7978
  %8183 = vmatprep.subr.mxu0 0.0
  %8184 = vmatpush1.msra.mxu0 %v7979
  %8185 = vmatprep.subr.mxu0 0.0
  %8186 = vmatpush1.msra.mxu0 %v7980
  %8187 = vmatprep.subr.mxu0 0.0
  %8188 = vmatpush1.msra.mxu0 %v7981
  %8189 = vmatprep.subr.mxu0 0.0
  %8190 = vmatpush1.msra.mxu0 %v7982
  %8191 = vmatprep.subr.mxu0 0.0
  %8192 = vmatpush1.msra.mxu0 %v7983
  %8193 = vmatprep.subr.mxu0 0.0
  %8194 = vmatpush1.msra.mxu0 %v7984
  %8195 = vmatprep.subr.mxu0 0.0
  %8196 = vmatpush1.msra.mxu0 0.0
  %8197 = vmatprep.subr.mxu0 0.0
  %8198 = vmatpush1.msra.mxu0 0.0
  %8199 = vmatprep.subr.mxu0 0.0
  %8200 = vmatpush1.msra.mxu0 0.0
  %8201 = vmatprep.subr.mxu0 0.0
  %8202 = vmatpush1.msra.mxu0 0.0
  %8203 = vmatprep.subr.mxu0 0.0
  %8204 = vmatpush1.msra.mxu0 0.0
  %8205 = vmatprep.subr.mxu0 0.0
  %8206 = vmatpush1.msra.mxu0 0.0
  %8207 = vmatprep.subr.mxu0 0.0
  %8208 = vmatpush1.msra.mxu0 0.0
  %8209 = vmatprep.subr.mxu0 0.0
  %8210 = vmatpush1.msra.mxu0 0.0
  %8211 = vmatprep.subr.mxu0 0.0
  %8212 = vmatpush1.msra.mxu0 0.0
  %8213 = vmatprep.subr.mxu0 0.0
  %8214 = vmatpush1.msra.mxu0 0.0
  %8215 = vmatprep.subr.mxu0 0.0
  %8216 = vmatpush1.msra.mxu0 0.0
  %8217 = vmatprep.subr.mxu0 0.0
  %8218 = vmatpush1.msra.mxu0 0.0
  %8219 = vmatprep.subr.mxu0 0.0
  %8220 = vmatpush1.msra.mxu0 0.0
  %8221 = vmatprep.subr.mxu0 0.0
  %8222 = vmatpush1.msra.mxu0 0.0
  %8223 = vmatprep.subr.mxu0 0.0
  %8224 = vmatpush1.msra.mxu0 0.0
  %8225 = vmatprep.subr.mxu0 0.0
  %8226 = vmatpush1.msra.mxu0 0.0
  %8227 = vmatprep.subr.mxu0 0.0
  %8228 = vmatpush1.msra.mxu0 0.0
  %8229 = vmatprep.subr.mxu0 0.0
  %8230 = vmatpush1.msra.mxu0 0.0
  %8231 = vmatprep.subr.mxu0 0.0
  %8232 = vmatpush1.msra.mxu0 0.0
  %8233 = vmatprep.subr.mxu0 0.0
  %8234 = vmatpush1.msra.mxu0 0.0
  %8235 = vmatprep.subr.mxu0 0.0
  %8236 = vmatpush1.msra.mxu0 0.0
  %8237 = vmatprep.subr.mxu0 0.0
  %8238 = vmatpush1.msra.mxu0 0.0
  %8239 = vmatprep.subr.mxu0 0.0
  %8240 = vmatpush1.msra.mxu0 0.0
  %8241 = vmatprep.mubr.f32.mxu0 0.0
  %8242 = vmatmul.mubr.f32.gmra.mrb[0].mxu0 %v7986
  %v8243 = vpop.f32.mrb[0].mxu0
  %v8244 = vadd.f32 0.0, %v8243
  %v8245 = vpop.f32.mrb[0].mxu0
  %8246 = vmatprep.mubr.f32.mxu0 0.0
  %8247 = vmatmul.mubr.f32.gmra.mrb[0].mxu0 %v7989
  %v8248 = vpop.f32.mrb[0].mxu0
  %v8249 = vadd.f32 0.0, %v8248
  %v8250 = vpop.f32.mrb[0].mxu0
  %8251 = vmatprep.mubr.f32.mxu0 0.0
  %8252 = vmatmul.mubr.f32.gmra.mrb[0].mxu0 %v7992
  %v8253 = vpop.f32.mrb[0].mxu0
  %v8254 = vadd.f32 0.0, %v8253
  %v8255 = vpop.f32.mrb[0].mxu0
  %8256 = vmatprep.mubr.f32.mxu0 0.0
  %8257 = vmatmul.mubr.f32.gmra.mrb[0].mxu0 %v7995
  %v8258 = vpop.f32.mrb[0].mxu0
  %v8259 = vadd.f32 0.0, %v8258
  %v8260 = vpop.f32.mrb[0].mxu0
  %8261 = vmatprep.mubr.f32.mxu0 0.0
  %8262 = vmatmul.mubr.f32.gmra.mrb[0].mxu0 %v7998
  %v8263 = vpop.f32.mrb[0].mxu0
  %v8264 = vadd.f32 0.0, %v8263
  %v8265 = vpop.f32.mrb[0].mxu0
  %8266 = vmatprep.mubr.f32.mxu0 0.0
  %8267 = vmatmul.mubr.f32.gmra.mrb[0].mxu0 %v8001
  %v8268 = vpop.f32.mrb[0].mxu0
  %v8269 = vadd.f32 0.0, %v8268
  %v8270 = vpop.f32.mrb[0].mxu0
  %8271 = vmatprep.mubr.f32.mxu0 0.0
  %8272 = vmatmul.mubr.f32.gmra.mrb[0].mxu0 %v8004
  %v8273 = vpop.f32.mrb[0].mxu0
  %v8274 = vadd.f32 0.0, %v8273
  %v8275 = vpop.f32.mrb[0].mxu0
  %8276 = vmatprep.mubr.f32.mxu0 0.0
  %8277 = vmatmul.mubr.f32.gmra.mrb[0].mxu0 %v8007
  %v8278 = vpop.f32.mrb[0].mxu0
  %v8279 = vadd.f32 0.0, %v8278
  %v8280 = vpop.f32.mrb[0].mxu0
  %8281 = vmatprep.mubr.f32.mxu0 0.0
  %8282 = vmatmul.mubr.f32.gmra.mrb[0].mxu0 %v8010
  %v8283 = vpop.f32.mrb[0].mxu0
  %v8284 = vadd.f32 0.0, %v8283
  %v8285 = vpop.f32.mrb[0].mxu0
  %8286 = vmatprep.mubr.f32.mxu0 0.0
  %8287 = vmatmul.mubr.f32.gmra.mrb[0].mxu0 %v8013
  %v8288 = vpop.f32.mrb[0].mxu0
  %v8289 = vadd.f32 0.0, %v8288
  %v8290 = vpop.f32.mrb[0].mxu0
  %8291 = vmatprep.mubr.f32.mxu0 0.0
  %8292 = vmatmul.mubr.f32.gmra.mrb[0].mxu0 %v8016
  %v8293 = vpop.f32.mrb[0].mxu0
  %v8294 = vadd.f32 0.0, %v8293
  %v8295 = vpop.f32.mrb[0].mxu0
  %8296 = vmatprep.mubr.f32.mxu0 0.0
  %8297 = vmatmul.mubr.f32.gmra.mrb[0].mxu0 %v8019
  %v8298 = vpop.f32.mrb[0].mxu0
  %v8299 = vadd.f32 0.0, %v8298
  %v8300 = vpop.f32.mrb[0].mxu0
  %8301 = vmatprep.mubr.f32.mxu0 0.0
  %8302 = vmatmul.mubr.f32.gmra.mrb[0].mxu0 %v8022
  %v8303 = vpop.f32.mrb[0].mxu0
  %v8304 = vadd.f32 0.0, %v8303
  %v8305 = vpop.f32.mrb[0].mxu0
  %8306 = vmatprep.mubr.f32.mxu0 0.0
  %8307 = vmatmul.mubr.f32.gmra.mrb[0].mxu0 %v8025
  %v8308 = vpop.f32.mrb[0].mxu0
  %v8309 = vadd.f32 0.0, %v8308
  %v8310 = vpop.f32.mrb[0].mxu0
  %8311 = vmatprep.mubr.f32.mxu0 0.0
  %8312 = vmatmul.mubr.f32.gmra.mrb[0].mxu0 %v8028
  %v8313 = vpop.f32.mrb[0].mxu0
  %v8314 = vadd.f32 0.0, %v8313
  %v8315 = vpop.f32.mrb[0].mxu0
  %8316 = vmatprep.mubr.f32.mxu0 0.0
  %8317 = vmatmul.mubr.f32.gmra.mrb[0].mxu0 %v8031
  %v8318 = vpop.f32.mrb[0].mxu0
  %v8319 = vadd.f32 0.0, %v8318
  %v8320 = vpop.f32.mrb[0].mxu0
  %8321 = vmatprep.mubr.f32.mxu0 0.0
  %8322 = vmatmul.mubr.f32.gmra.mrb[0].mxu0 %v8034
  %v8323 = vpop.f32.mrb[0].mxu0
  %v8324 = vadd.f32 0.0, %v8323
  %v8325 = vpop.f32.mrb[0].mxu0
  %8326 = vmatprep.mubr.f32.mxu0 0.0
  %8327 = vmatmul.mubr.f32.gmra.mrb[0].mxu0 %v8037
  %v8328 = vpop.f32.mrb[0].mxu0
  %v8329 = vadd.f32 0.0, %v8328
  %v8330 = vpop.f32.mrb[0].mxu0
  %8331 = vmatprep.mubr.f32.mxu0 0.0
  %8332 = vmatmul.mubr.f32.gmra.mrb[0].mxu0 %v8040
  %v8333 = vpop.f32.mrb[0].mxu0
  %v8334 = vadd.f32 0.0, %v8333
  %v8335 = vpop.f32.mrb[0].mxu0
  %8336 = vmatprep.mubr.f32.mxu0 0.0
  %8337 = vmatmul.mubr.f32.gmra.mrb[0].mxu0 %v8043
  %v8338 = vpop.f32.mrb[0].mxu0
  %v8339 = vadd.f32 0.0, %v8338
  %v8340 = vpop.f32.mrb[0].mxu0
  %8341 = vmatprep.mubr.f32.mxu0 0.0
  %8342 = vmatmul.mubr.f32.gmra.mrb[0].mxu0 %v8046
  %v8343 = vpop.f32.mrb[0].mxu0
  %v8344 = vadd.f32 0.0, %v8343
  %v8345 = vpop.f32.mrb[0].mxu0
  %8346 = vmatprep.mubr.f32.mxu0 0.0
  %8347 = vmatmul.mubr.f32.gmra.mrb[0].mxu0 %v8049
  %v8348 = vpop.f32.mrb[0].mxu0
  %v8349 = vadd.f32 0.0, %v8348
  %v8350 = vpop.f32.mrb[0].mxu0
  %8351 = vmatprep.mubr.f32.mxu0 0.0
  %8352 = vmatmul.mubr.f32.gmra.mrb[0].mxu0 %v8052
  %v8353 = vpop.f32.mrb[0].mxu0
  %v8354 = vadd.f32 0.0, %v8353
  %v8355 = vpop.f32.mrb[0].mxu0
  %8356 = vmatprep.mubr.f32.mxu0 0.0
  %8357 = vmatmul.mubr.f32.gmra.mrb[0].mxu0 %v8055
  %v8358 = vpop.f32.mrb[0].mxu0
  %v8359 = vadd.f32 0.0, %v8358
  %v8360 = vpop.f32.mrb[0].mxu0
  %8361 = vmatprep.mubr.f32.mxu0 0.0
  %8362 = vmatmul.mubr.f32.gmra.mrb[0].mxu0 %v8058
  %v8363 = vpop.f32.mrb[0].mxu0
  %v8364 = vadd.f32 0.0, %v8363
  %v8365 = vpop.f32.mrb[0].mxu0
  %8366 = vmatprep.mubr.f32.mxu0 0.0
  %8367 = vmatmul.mubr.f32.gmra.mrb[0].mxu0 %v8061
  %v8368 = vpop.f32.mrb[0].mxu0
  %v8369 = vadd.f32 0.0, %v8368
  %v8370 = vpop.f32.mrb[0].mxu0
  %8371 = vmatprep.mubr.f32.mxu0 0.0
  %8372 = vmatmul.mubr.f32.gmra.mrb[0].mxu0 %v8064
  %v8373 = vpop.f32.mrb[0].mxu0
  %v8374 = vadd.f32 0.0, %v8373
  %v8375 = vpop.f32.mrb[0].mxu0
  %8376 = vmatprep.mubr.f32.mxu0 0.0
  %8377 = vmatmul.mubr.f32.gmra.mrb[0].mxu0 %v8067
  %v8378 = vpop.f32.mrb[0].mxu0
  %v8379 = vadd.f32 0.0, %v8378
  %v8380 = vpop.f32.mrb[0].mxu0
  %8381 = vmatprep.mubr.f32.mxu0 0.0
  %8382 = vmatmul.mubr.f32.gmra.mrb[0].mxu0 %v8070
  %v8383 = vpop.f32.mrb[0].mxu0
  %v8384 = vadd.f32 0.0, %v8383
  %v8385 = vpop.f32.mrb[0].mxu0
  %8386 = vmatprep.mubr.f32.mxu0 0.0
  %8387 = vmatmul.mubr.f32.gmra.mrb[0].mxu0 %v8073
  %v8388 = vpop.f32.mrb[0].mxu0
  %v8389 = vadd.f32 0.0, %v8388
  %v8390 = vpop.f32.mrb[0].mxu0
  %8391 = vmatprep.mubr.f32.mxu0 0.0
  %8392 = vmatmul.mubr.f32.gmra.mrb[0].mxu0 %v8076
  %v8393 = vpop.f32.mrb[0].mxu0
  %v8394 = vadd.f32 0.0, %v8393
  %v8395 = vpop.f32.mrb[0].mxu0
  %8396 = vmatprep.mubr.f32.mxu0 0.0
  %8397 = vmatmul.mubr.f32.gmra.mrb[0].mxu0 %v8079
  %v8398 = vpop.f32.mrb[0].mxu0
  %v8399 = vadd.f32 0.0, %v8398
  %v8400 = vpop.f32.mrb[0].mxu0
  %8401 = vmatprep.mubr.f32.mxu0 0.0
  %8402 = vmatmul.mubr.f32.gmra.mrb[0].mxu0 %v8082
  %v8403 = vpop.f32.mrb[0].mxu0
  %v8404 = vadd.f32 0.0, %v8403
  %v8405 = vpop.f32.mrb[0].mxu0
  %8406 = vmatprep.mubr.f32.mxu0 0.0
  %8407 = vmatmul.mubr.f32.gmra.mrb[0].mxu0 %v8085
  %v8408 = vpop.f32.mrb[0].mxu0
  %v8409 = vadd.f32 0.0, %v8408
  %v8410 = vpop.f32.mrb[0].mxu0
  %8411 = vmatprep.mubr.f32.mxu0 0.0
  %8412 = vmatmul.mubr.f32.gmra.mrb[0].mxu0 %v8088
  %v8413 = vpop.f32.mrb[0].mxu0
  %v8414 = vadd.f32 0.0, %v8413
  %v8415 = vpop.f32.mrb[0].mxu0
  %8416 = vmatprep.mubr.f32.mxu0 0.0
  %8417 = vmatmul.mubr.f32.gmra.mrb[0].mxu0 %v8091
  %v8418 = vpop.f32.mrb[0].mxu0
  %v8419 = vadd.f32 0.0, %v8418
  %v8420 = vpop.f32.mrb[0].mxu0
  %8421 = vmatprep.mubr.f32.mxu0 0.0
  %8422 = vmatmul.mubr.f32.gmra.mrb[0].mxu0 %v8094
  %v8423 = vpop.f32.mrb[0].mxu0
  %v8424 = vadd.f32 0.0, %v8423
  %v8425 = vpop.f32.mrb[0].mxu0
  %8426 = vmatprep.mubr.f32.mxu0 0.0
  %8427 = vmatmul.mubr.f32.gmra.mrb[0].mxu0 %v8097
  %v8428 = vpop.f32.mrb[0].mxu0
  %v8429 = vadd.f32 0.0, %v8428
  %v8430 = vpop.f32.mrb[0].mxu0
  %8431 = vmatprep.mubr.f32.mxu0 0.0
  %8432 = vmatmul.mubr.f32.gmra.mrb[0].mxu0 %v8100
  %v8433 = vpop.f32.mrb[0].mxu0
  %v8434 = vadd.f32 0.0, %v8433
  %v8435 = vpop.f32.mrb[0].mxu0
  %8436 = vmatprep.mubr.f32.mxu0 0.0
  %8437 = vmatmul.mubr.f32.gmra.mrb[0].mxu0 %v8103
  %v8438 = vpop.f32.mrb[0].mxu0
  %v8439 = vadd.f32 0.0, %v8438
  %v8440 = vpop.f32.mrb[0].mxu0
  %8441 = vmatprep.mubr.f32.mxu0 0.0
  %8442 = vmatmul.mubr.f32.gmra.mrb[0].mxu0 %v8106
  %v8443 = vpop.f32.mrb[0].mxu0
  %v8444 = vadd.f32 0.0, %v8443
  %v8445 = vpop.f32.mrb[0].mxu0
  %8446 = vmatprep.mubr.f32.mxu0 0.0
  %8447 = vmatmul.mubr.f32.gmra.mrb[0].mxu0 %v8109
  %v8448 = vpop.f32.mrb[0].mxu0
  %v8449 = vadd.f32 0.0, %v8448
  %v8450 = vpop.f32.mrb[0].mxu0
  %8451 = vmatprep.mubr.f32.mxu0 0.0
  %8452 = vmatmul.mubr.f32.gmra.mrb[0].mxu0 %v8112
  %v8453 = vpop.f32.mrb[0].mxu0
  %v8454 = vadd.f32 0.0, %v8453
  %v8455 = vpop.f32.mrb[0].mxu0
  %8456 = vmatprep.mubr.f32.mxu0 0.0
  %8457 = vmatmul.mubr.f32.gmra.mrb[0].mxu0 %v8115
  %v8458 = vpop.f32.mrb[0].mxu0
  %v8459 = vadd.f32 0.0, %v8458
  %v8460 = vpop.f32.mrb[0].mxu0
  %8461 = vmatprep.mubr.f32.mxu0 0.0
  %8462 = vmatmul.mubr.f32.gmra.mrb[0].mxu0 %v8118
  %v8463 = vpop.f32.mrb[0].mxu0
  %v8464 = vadd.f32 0.0, %v8463
  %v8465 = vpop.f32.mrb[0].mxu0
  %8466 = vmatprep.mubr.f32.mxu0 0.0
  %8467 = vmatmul.mubr.f32.gmra.mrb[0].mxu0 %v8121
  %v8468 = vpop.f32.mrb[0].mxu0
  %v8469 = vadd.f32 0.0, %v8468
  %v8470 = vpop.f32.mrb[0].mxu0
  %8471 = vmatprep.mubr.f32.mxu0 0.0
  %8472 = vmatmul.mubr.f32.gmra.mrb[0].mxu0 %v8124
  %v8473 = vpop.f32.mrb[0].mxu0
  %v8474 = vadd.f32 0.0, %v8473
  %v8475 = vpop.f32.mrb[0].mxu0
  %8476 = vmatprep.mubr.f32.mxu0 0.0
  %8477 = vmatmul.mubr.f32.gmra.mrb[0].mxu0 %v8127
  %v8478 = vpop.f32.mrb[0].mxu0
  %v8479 = vadd.f32 0.0, %v8478
  %v8480 = vpop.f32.mrb[0].mxu0
  %8481 = vmatprep.mubr.f32.mxu0 0.0
  %8482 = vmatmul.mubr.f32.gmra.mrb[0].mxu0 %v8130
  %v8483 = vpop.f32.mrb[0].mxu0
  %v8484 = vadd.f32 0.0, %v8483
  %v8485 = vpop.f32.mrb[0].mxu0
  %8486 = vmatprep.mubr.f32.mxu0 0.0
  %8487 = vmatmul.mubr.f32.gmra.mrb[0].mxu0 %v8133
  %v8488 = vpop.f32.mrb[0].mxu0
  %v8489 = vadd.f32 0.0, %v8488
  %v8490 = vpop.f32.mrb[0].mxu0
  %8491 = vmatprep.mubr.f32.mxu0 0.0
  %8492 = vmatmul.mubr.f32.gmra.mrb[0].mxu0 %v8136
  %v8493 = vpop.f32.mrb[0].mxu0
  %v8494 = vadd.f32 0.0, %v8493
  %v8495 = vpop.f32.mrb[0].mxu0
  %8496 = vmatprep.mubr.f32.mxu0 0.0
  %8497 = vmatmul.mubr.f32.gmra.mrb[0].mxu0 %v8139
  %v8498 = vpop.f32.mrb[0].mxu0
  %v8499 = vadd.f32 0.0, %v8498
  %v8500 = vpop.f32.mrb[0].mxu0
  %8501 = vmatprep.mubr.f32.mxu0 0.0
  %8502 = vmatmul.mubr.f32.gmra.mrb[0].mxu0 %v8142
  %v8503 = vpop.f32.mrb[0].mxu0
  %v8504 = vadd.f32 0.0, %v8503
  %v8505 = vpop.f32.mrb[0].mxu0
  %8506 = vmatprep.mubr.f32.mxu0 0.0
  %8507 = vmatmul.mubr.f32.gmra.mrb[0].mxu0 %v8145
  %v8508 = vpop.f32.mrb[0].mxu0
  %v8509 = vadd.f32 0.0, %v8508
  %v8510 = vpop.f32.mrb[0].mxu0
  %8511 = vmatprep.mubr.f32.mxu0 0.0
  %8512 = vmatmul.mubr.f32.gmra.mrb[0].mxu0 %v8148
  %v8513 = vpop.f32.mrb[0].mxu0
  %v8514 = vadd.f32 0.0, %v8513
  %v8515 = vpop.f32.mrb[0].mxu0
  %8516 = vmatprep.mubr.f32.mxu0 0.0
  %8517 = vmatmul.mubr.f32.gmra.mrb[0].mxu0 %v8151
  %v8518 = vpop.f32.mrb[0].mxu0
  %v8519 = vadd.f32 0.0, %v8518
  %v8520 = vpop.f32.mrb[0].mxu0
  %8521 = vmatprep.mubr.f32.mxu0 0.0
  %8522 = vmatmul.mubr.f32.gmra.mrb[0].mxu0 %v8154
  %v8523 = vpop.f32.mrb[0].mxu0
  %v8524 = vadd.f32 0.0, %v8523
  %v8525 = vpop.f32.mrb[0].mxu0
  %8526 = vmatprep.mubr.f32.mxu0 0.0
  %8527 = vmatmul.mubr.f32.gmra.mrb[0].mxu0 %v8157
  %v8528 = vpop.f32.mrb[0].mxu0
  %v8529 = vadd.f32 0.0, %v8528
  %v8530 = vpop.f32.mrb[0].mxu0
  %8531 = vmatprep.mubr.f32.mxu0 0.0
  %8532 = vmatmul.mubr.f32.gmra.mrb[0].mxu0 %v8160
  %v8533 = vpop.f32.mrb[0].mxu0
  %v8534 = vadd.f32 0.0, %v8533
  %v8535 = vpop.f32.mrb[0].mxu0
  %8536 = vmatprep.mubr.f32.mxu0 0.0
  %8537 = vmatmul.mubr.f32.gmra.mrb[0].mxu0 %v8163
  %v8538 = vpop.f32.mrb[0].mxu0
  %v8539 = vadd.f32 0.0, %v8538
  %v8540 = vpop.f32.mrb[0].mxu0
  %8541 = vmatprep.mubr.f32.mxu0 0.0
  %8542 = vmatmul.mubr.f32.gmra.mrb[0].mxu0 %v8166
  %v8543 = vpop.f32.mrb[0].mxu0
  %v8544 = vadd.f32 0.0, %v8543
  %v8545 = vpop.f32.mrb[0].mxu0
  %8546 = vmatprep.mubr.f32.mxu0 0.0
  %8547 = vmatmul.mubr.f32.gmra.mrb[0].mxu0 %v8169
  %v8548 = vpop.f32.mrb[0].mxu0
  %v8549 = vadd.f32 0.0, %v8548
  %v8550 = vpop.f32.mrb[0].mxu0
  %8551 = vmatprep.mubr.f32.mxu0 0.0
  %8552 = vmatmul.mubr.f32.gmra.mrb[0].mxu0 %v8172
  %v8553 = vpop.f32.mrb[0].mxu0
  %v8554 = vadd.f32 0.0, %v8553
  %v8555 = vpop.f32.mrb[0].mxu0
  %8556 = vmatprep.mubr.f32.mxu0 0.0
  %8557 = vmatmul.mubr.f32.gmra.mrb[0].mxu0 %v8175
  %v8558 = vpop.f32.mrb[0].mxu0
  %v8559 = vadd.f32 0.0, %v8558
  %v8560 = vpop.f32.mrb[0].mxu0
  %8561 = vdwg.mxu0
  %v8562 = vld [vmem:[%s5] sm:$0x1]
  %v8563 = vld [vmem:[%s6] sm:$0x1]
  %v8564 = vsel %vm26, %v8244, 0.0
  %v8565 = vsel %vm26, %v8249, 0.0
  %v8566 = vadd.f32 %v8564, %v8565
  %v8567 = vsel %vm26, %v8254, 0.0
  %v8568 = vadd.f32 %v8566, %v8567
  %v8569 = vsel %vm26, %v8259, 0.0
  %v8570 = vadd.f32 %v8568, %v8569
  %v8571 = vsel %vm26, %v8264, 0.0
  %v8572 = vadd.f32 %v8570, %v8571
  %v8573 = vsel %vm26, %v8269, 0.0
  %v8574 = vadd.f32 %v8572, %v8573
  %v8575 = vsel %vm26, %v8274, 0.0
  %v8576 = vadd.f32 %v8574, %v8575
  %v8577 = vsel %vm26, %v8279, 0.0
  %v8578 = vadd.f32 %v8576, %v8577
  %v8579 = vsel %vm26, %v8284, 0.0
  %v8580 = vadd.f32 %v8578, %v8579
  %v8581 = vsel %vm26, %v8289, 0.0
  %v8582 = vadd.f32 %v8580, %v8581
  %v8583 = vsel %vm26, %v8294, 0.0
  %v8584 = vadd.f32 %v8582, %v8583
  %v8585 = vsel %vm26, %v8299, 0.0
  %v8586 = vadd.f32 %v8584, %v8585
  %v8587 = vsel %vm26, %v8304, 0.0
  %v8588 = vadd.f32 %v8586, %v8587
  %v8589 = vsel %vm26, %v8309, 0.0
  %v8590 = vadd.f32 %v8588, %v8589
  %v8591 = vsel %vm26, %v8314, 0.0
  %v8592 = vadd.f32 %v8590, %v8591
  %v8593 = vsel %vm26, %v8319, 0.0
  %v8594 = vadd.f32 %v8592, %v8593
  %v8595 = vsel %vm26, %v8324, 0.0
  %v8596 = vadd.f32 %v8594, %v8595
  %v8597 = vsel %vm26, %v8329, 0.0
  %v8598 = vadd.f32 %v8596, %v8597
  %v8599 = vsel %vm26, %v8334, 0.0
  %v8600 = vadd.f32 %v8598, %v8599
  %v8601 = vsel %vm26, %v8339, 0.0
  %v8602 = vadd.f32 %v8600, %v8601
  %v8603 = vsel %vm26, %v8344, 0.0
  %v8604 = vadd.f32 %v8602, %v8603
  %v8605 = vsel %vm26, %v8349, 0.0
  %v8606 = vadd.f32 %v8604, %v8605
  %v8607 = vsel %vm26, %v8354, 0.0
  %v8608 = vadd.f32 %v8606, %v8607
  %v8609 = vsel %vm26, %v8359, 0.0
  %v8610 = vadd.f32 %v8608, %v8609
  %v8611 = vsel %vm26, %v8364, 0.0
  %v8612 = vadd.f32 %v8610, %v8611
  %v8613 = vsel %vm26, %v8369, 0.0
  %v8614 = vadd.f32 %v8612, %v8613
  %v8615 = vsel %vm26, %v8374, 0.0
  %v8616 = vadd.f32 %v8614, %v8615
  %v8617 = vsel %vm26, %v8379, 0.0
  %v8618 = vadd.f32 %v8616, %v8617
  %v8619 = vsel %vm26, %v8384, 0.0
  %v8620 = vadd.f32 %v8618, %v8619
  %v8621 = vsel %vm26, %v8389, 0.0
  %v8622 = vadd.f32 %v8620, %v8621
  %v8623 = vsel %vm26, %v8394, 0.0
  %v8624 = vadd.f32 %v8622, %v8623
  %v8625 = vsel %vm26, %v8399, 0.0
  %v8626 = vadd.f32 %v8624, %v8625
  %v8627 = vsel %vm26, %v8404, 0.0
  %v8628 = vadd.f32 %v8626, %v8627
  %v8629 = vsel %vm26, %v8409, 0.0
  %v8630 = vadd.f32 %v8628, %v8629
  %v8631 = vsel %vm26, %v8414, 0.0
  %v8632 = vadd.f32 %v8630, %v8631
  %v8633 = vsel %vm26, %v8419, 0.0
  %v8634 = vadd.f32 %v8632, %v8633
  %v8635 = vsel %vm26, %v8424, 0.0
  %v8636 = vadd.f32 %v8634, %v8635
  %v8637 = vsel %vm26, %v8429, 0.0
  %v8638 = vadd.f32 %v8636, %v8637
  %v8639 = vsel %vm26, %v8434, 0.0
  %v8640 = vadd.f32 %v8638, %v8639
  %v8641 = vsel %vm26, %v8439, 0.0
  %v8642 = vadd.f32 %v8640, %v8641
  %v8643 = vsel %vm26, %v8444, 0.0
  %v8644 = vadd.f32 %v8642, %v8643
  %v8645 = vsel %vm26, %v8449, 0.0
  %v8646 = vadd.f32 %v8644, %v8645
  %v8647 = vsel %vm26, %v8454, 0.0
  %v8648 = vadd.f32 %v8646, %v8647
  %v8649 = vsel %vm26, %v8459, 0.0
  %v8650 = vadd.f32 %v8648, %v8649
  %v8651 = vsel %vm26, %v8464, 0.0
  %v8652 = vadd.f32 %v8650, %v8651
  %v8653 = vsel %vm26, %v8469, 0.0
  %v8654 = vadd.f32 %v8652, %v8653
  %v8655 = vsel %vm26, %v8474, 0.0
  %v8656 = vadd.f32 %v8654, %v8655
  %v8657 = vsel %vm26, %v8479, 0.0
  %v8658 = vadd.f32 %v8656, %v8657
  %v8659 = vsel %vm26, %v8484, 0.0
  %v8660 = vadd.f32 %v8658, %v8659
  %v8661 = vsel %vm26, %v8489, 0.0
  %v8662 = vadd.f32 %v8660, %v8661
  %v8663 = vsel %vm26, %v8494, 0.0
  %v8664 = vadd.f32 %v8662, %v8663
  %v8665 = vsel %vm26, %v8499, 0.0
  %v8666 = vadd.f32 %v8664, %v8665
  %v8667 = vsel %vm26, %v8504, 0.0
  %v8668 = vadd.f32 %v8666, %v8667
  %v8669 = vsel %vm26, %v8509, 0.0
  %v8670 = vadd.f32 %v8668, %v8669
  %v8671 = vsel %vm26, %v8514, 0.0
  %v8672 = vadd.f32 %v8670, %v8671
  %v8673 = vsel %vm26, %v8519, 0.0
  %v8674 = vadd.f32 %v8672, %v8673
  %v8675 = vsel %vm26, %v8524, 0.0
  %v8676 = vadd.f32 %v8674, %v8675
  %v8677 = vsel %vm26, %v8529, 0.0
  %v8678 = vadd.f32 %v8676, %v8677
  %v8679 = vsel %vm26, %v8534, 0.0
  %v8680 = vadd.f32 %v8678, %v8679
  %v8681 = vsel %vm26, %v8539, 0.0
  %v8682 = vadd.f32 %v8680, %v8681
  %v8683 = vsel %vm26, %v8544, 0.0
  %v8684 = vadd.f32 %v8682, %v8683
  %v8685 = vsel %vm26, %v8549, 0.0
  %v8686 = vadd.f32 %v8684, %v8685
  %v8687 = vsel %vm26, %v8554, 0.0
  %v8688 = vadd.f32 %v8686, %v8687
  %v8689 = vsel %vm26, %v8559, 0.0
  %v8690 = vadd.f32 %v8688, %v8689
  %v8691 = vrot.slane %v8690, 4
  %v8692 = vadd.f32 %v8690, %v8691
  %v8693 = vrot.slane %v8692, 2
  %v8694 = vadd.f32 %v8692, %v8693
  %v8695 = vrot.slane %v8694, 1
  %v8696 = vadd.f32 %v8694, %v8695
  %v8697 = vmul.f32 %v8244, %v8244
  %v8698 = vmul.f32 %v8249, %v8249
  %v8699 = vmul.f32 %v8254, %v8254
  %v8700 = vmul.f32 %v8259, %v8259
  %v8701 = vmul.f32 %v8264, %v8264
  %v8702 = vmul.f32 %v8269, %v8269
  %v8703 = vmul.f32 %v8274, %v8274
  %v8704 = vmul.f32 %v8279, %v8279
  %v8705 = vmul.f32 %v8284, %v8284
  %v8706 = vmul.f32 %v8289, %v8289
  %v8707 = vmul.f32 %v8294, %v8294
  %v8708 = vmul.f32 %v8299, %v8299
  %v8709 = vmul.f32 %v8304, %v8304
  %v8710 = vmul.f32 %v8309, %v8309
  %v8711 = vmul.f32 %v8314, %v8314
  %v8712 = vmul.f32 %v8319, %v8319
  %v8713 = vmul.f32 %v8324, %v8324
  %v8714 = vmul.f32 %v8329, %v8329
  %v8715 = vmul.f32 %v8334, %v8334
  %v8716 = vmul.f32 %v8339, %v8339
  %v8717 = vmul.f32 %v8344, %v8344
  %v8718 = vmul.f32 %v8349, %v8349
  %v8719 = vmul.f32 %v8354, %v8354
  %v8720 = vmul.f32 %v8359, %v8359
  %v8721 = vmul.f32 %v8364, %v8364
  %v8722 = vmul.f32 %v8369, %v8369
  %v8723 = vmul.f32 %v8374, %v8374
  %v8724 = vmul.f32 %v8379, %v8379
  %v8725 = vmul.f32 %v8384, %v8384
  %v8726 = vmul.f32 %v8389, %v8389
  %v8727 = vmul.f32 %v8394, %v8394
  %v8728 = vmul.f32 %v8399, %v8399
  %v8729 = vmul.f32 %v8404, %v8404
  %v8730 = vmul.f32 %v8409, %v8409
  %v8731 = vmul.f32 %v8414, %v8414
  %v8732 = vmul.f32 %v8419, %v8419
  %v8733 = vmul.f32 %v8424, %v8424
  %v8734 = vmul.f32 %v8429, %v8429
  %v8735 = vmul.f32 %v8434, %v8434
  %v8736 = vmul.f32 %v8439, %v8439
  %v8737 = vmul.f32 %v8444, %v8444
  %v8738 = vmul.f32 %v8449, %v8449
  %v8739 = vmul.f32 %v8454, %v8454
  %v8740 = vmul.f32 %v8459, %v8459
  %v8741 = vmul.f32 %v8464, %v8464
  %v8742 = vmul.f32 %v8469, %v8469
  %v8743 = vmul.f32 %v8474, %v8474
  %v8744 = vmul.f32 %v8479, %v8479
  %v8745 = vmul.f32 %v8484, %v8484
  %v8746 = vmul.f32 %v8489, %v8489
  %v8747 = vmul.f32 %v8494, %v8494
  %v8748 = vmul.f32 %v8499, %v8499
  %v8749 = vmul.f32 %v8504, %v8504
  %v8750 = vmul.f32 %v8509, %v8509
  %v8751 = vmul.f32 %v8514, %v8514
  %v8752 = vmul.f32 %v8519, %v8519
  %v8753 = vmul.f32 %v8524, %v8524
  %v8754 = vmul.f32 %v8529, %v8529
  %v8755 = vmul.f32 %v8534, %v8534
  %v8756 = vmul.f32 %v8539, %v8539
  %v8757 = vmul.f32 %v8544, %v8544
  %v8758 = vmul.f32 %v8549, %v8549
  %v8759 = vmul.f32 %v8554, %v8554
  %v8760 = vmul.f32 %v8559, %v8559
  %v8761 = vsel %vm26, %v8697, 0.0
  %v8762 = vsel %vm26, %v8698, 0.0
  %v8763 = vadd.f32 %v8761, %v8762
  %v8764 = vsel %vm26, %v8699, 0.0
  %v8765 = vadd.f32 %v8763, %v8764
  %v8766 = vsel %vm26, %v8700, 0.0
  %v8767 = vadd.f32 %v8765, %v8766
  %v8768 = vsel %vm26, %v8701, 0.0
  %v8769 = vadd.f32 %v8767, %v8768
  %v8770 = vsel %vm26, %v8702, 0.0
  %v8771 = vadd.f32 %v8769, %v8770
  %v8772 = vsel %vm26, %v8703, 0.0
  %v8773 = vadd.f32 %v8771, %v8772
  %v8774 = vsel %vm26, %v8704, 0.0
  %v8775 = vadd.f32 %v8773, %v8774
  %v8776 = vsel %vm26, %v8705, 0.0
  %v8777 = vadd.f32 %v8775, %v8776
  %v8778 = vsel %vm26, %v8706, 0.0
  %v8779 = vadd.f32 %v8777, %v8778
  %v8780 = vsel %vm26, %v8707, 0.0
  %v8781 = vadd.f32 %v8779, %v8780
  %v8782 = vsel %vm26, %v8708, 0.0
  %v8783 = vadd.f32 %v8781, %v8782
  %v8784 = vsel %vm26, %v8709, 0.0
  %v8785 = vadd.f32 %v8783, %v8784
  %v8786 = vsel %vm26, %v8710, 0.0
  %v8787 = vadd.f32 %v8785, %v8786
  %v8788 = vsel %vm26, %v8711, 0.0
  %v8789 = vadd.f32 %v8787, %v8788
  %v8790 = vsel %vm26, %v8712, 0.0
  %v8791 = vadd.f32 %v8789, %v8790
  %v8792 = vsel %vm26, %v8713, 0.0
  %v8793 = vadd.f32 %v8791, %v8792
  %v8794 = vsel %vm26, %v8714, 0.0
  %v8795 = vadd.f32 %v8793, %v8794
  %v8796 = vsel %vm26, %v8715, 0.0
  %v8797 = vadd.f32 %v8795, %v8796
  %v8798 = vsel %vm26, %v8716, 0.0
  %v8799 = vadd.f32 %v8797, %v8798
  %v8800 = vsel %vm26, %v8717, 0.0
  %v8801 = vadd.f32 %v8799, %v8800
  %v8802 = vsel %vm26, %v8718, 0.0
  %v8803 = vadd.f32 %v8801, %v8802
  %v8804 = vsel %vm26, %v8719, 0.0
  %v8805 = vadd.f32 %v8803, %v8804
  %v8806 = vsel %vm26, %v8720, 0.0
  %v8807 = vadd.f32 %v8805, %v8806
  %v8808 = vsel %vm26, %v8721, 0.0
  %v8809 = vadd.f32 %v8807, %v8808
  %v8810 = vsel %vm26, %v8722, 0.0
  %v8811 = vadd.f32 %v8809, %v8810
  %v8812 = vsel %vm26, %v8723, 0.0
  %v8813 = vadd.f32 %v8811, %v8812
  %v8814 = vsel %vm26, %v8724, 0.0
  %v8815 = vadd.f32 %v8813, %v8814
  %v8816 = vsel %vm26, %v8725, 0.0
  %v8817 = vadd.f32 %v8815, %v8816
  %v8818 = vsel %vm26, %v8726, 0.0
  %v8819 = vadd.f32 %v8817, %v8818
  %v8820 = vsel %vm26, %v8727, 0.0
  %v8821 = vadd.f32 %v8819, %v8820
  %v8822 = vsel %vm26, %v8728, 0.0
  %v8823 = vadd.f32 %v8821, %v8822
  %v8824 = vsel %vm26, %v8729, 0.0
  %v8825 = vadd.f32 %v8823, %v8824
  %v8826 = vsel %vm26, %v8730, 0.0
  %v8827 = vadd.f32 %v8825, %v8826
  %v8828 = vsel %vm26, %v8731, 0.0
  %v8829 = vadd.f32 %v8827, %v8828
  %v8830 = vsel %vm26, %v8732, 0.0
  %v8831 = vadd.f32 %v8829, %v8830
  %v8832 = vsel %vm26, %v8733, 0.0
  %v8833 = vadd.f32 %v8831, %v8832
  %v8834 = vsel %vm26, %v8734, 0.0
  %v8835 = vadd.f32 %v8833, %v8834
  %v8836 = vsel %vm26, %v8735, 0.0
  %v8837 = vadd.f32 %v8835, %v8836
  %v8838 = vsel %vm26, %v8736, 0.0
  %v8839 = vadd.f32 %v8837, %v8838
  %v8840 = vsel %vm26, %v8737, 0.0
  %v8841 = vadd.f32 %v8839, %v8840
  %v8842 = vsel %vm26, %v8738, 0.0
  %v8843 = vadd.f32 %v8841, %v8842
  %v8844 = vsel %vm26, %v8739, 0.0
  %v8845 = vadd.f32 %v8843, %v8844
  %v8846 = vsel %vm26, %v8740, 0.0
  %v8847 = vadd.f32 %v8845, %v8846
  %v8848 = vsel %vm26, %v8741, 0.0
  %v8849 = vadd.f32 %v8847, %v8848
  %v8850 = vsel %vm26, %v8742, 0.0
  %v8851 = vadd.f32 %v8849, %v8850
  %v8852 = vsel %vm26, %v8743, 0.0
  %v8853 = vadd.f32 %v8851, %v8852
  %v8854 = vsel %vm26, %v8744, 0.0
  %v8855 = vadd.f32 %v8853, %v8854
  %v8856 = vsel %vm26, %v8745, 0.0
  %v8857 = vadd.f32 %v8855, %v8856
  %v8858 = vsel %vm26, %v8746, 0.0
  %v8859 = vadd.f32 %v8857, %v8858
  %v8860 = vsel %vm26, %v8747, 0.0
  %v8861 = vadd.f32 %v8859, %v8860
  %v8862 = vsel %vm26, %v8748, 0.0
  %v8863 = vadd.f32 %v8861, %v8862
  %v8864 = vsel %vm26, %v8749, 0.0
  %v8865 = vadd.f32 %v8863, %v8864
  %v8866 = vsel %vm26, %v8750, 0.0
  %v8867 = vadd.f32 %v8865, %v8866
  %v8868 = vsel %vm26, %v8751, 0.0
  %v8869 = vadd.f32 %v8867, %v8868
  %v8870 = vsel %vm26, %v8752, 0.0
  %v8871 = vadd.f32 %v8869, %v8870
  %v8872 = vsel %vm26, %v8753, 0.0
  %v8873 = vadd.f32 %v8871, %v8872
  %v8874 = vsel %vm26, %v8754, 0.0
  %v8875 = vadd.f32 %v8873, %v8874
  %v8876 = vsel %vm26, %v8755, 0.0
  %v8877 = vadd.f32 %v8875, %v8876
  %v8878 = vsel %vm26, %v8756, 0.0
  %v8879 = vadd.f32 %v8877, %v8878
  %v8880 = vsel %vm26, %v8757, 0.0
  %v8881 = vadd.f32 %v8879, %v8880
  %v8882 = vsel %vm26, %v8758, 0.0
  %v8883 = vadd.f32 %v8881, %v8882
  %v8884 = vsel %vm26, %v8759, 0.0
  %v8885 = vadd.f32 %v8883, %v8884
  %v8886 = vsel %vm26, %v8760, 0.0
  %v8887 = vadd.f32 %v8885, %v8886
  %v8888 = vrot.slane %v8887, 4
  %v8889 = vadd.f32 %v8887, %v8888
  %v8890 = vrot.slane %v8889, 2
  %v8891 = vadd.f32 %v8889, %v8890
  %v8892 = vrot.slane %v8891, 1
  %v8893 = vadd.f32 %v8891, %v8892
  %v8894 = vmul.f32 %v8696, 0.001953125
  %v8895 = vmul.f32 %v8893, 0.001953125
  %v8896 = vmul.f32 %v8894, %v8894
  %v8897 = vsub.f32 %v8895, %v8896
  %v8898 = vadd.f32 %v8897, 1e-05
  %v8899 = vrsqrt.pop %v8898
  %v8900 = vmul.f32 %v8562, %v8899
  %v8901 = vmul.f32 %v8894, %v8900
  %v8902 = vsub.f32 %v8563, %v8901
  %v8904 = vlaneseq
  %v8905 = vshrl.u32 %v8904, 7
  %v8906 = vsub.s32 0, %v8905
  %v8907 = vrot.slane %v8900, %v8906
  %v8909 = vmul.f32 %v8244, %v8907
  %v8910 = vmul.f32 %v8249, %v8907
  %v8911 = vmul.f32 %v8254, %v8907
  %v8912 = vmul.f32 %v8259, %v8907
  %v8913 = vmul.f32 %v8264, %v8907
  %v8914 = vmul.f32 %v8269, %v8907
  %v8915 = vmul.f32 %v8274, %v8907
  %v8916 = vmul.f32 %v8279, %v8907
  %v8917 = vmul.f32 %v8284, %v8907
  %v8918 = vmul.f32 %v8289, %v8907
  %v8919 = vmul.f32 %v8294, %v8907
  %v8920 = vmul.f32 %v8299, %v8907
  %v8921 = vmul.f32 %v8304, %v8907
  %v8922 = vmul.f32 %v8309, %v8907
  %v8923 = vmul.f32 %v8314, %v8907
  %v8924 = vmul.f32 %v8319, %v8907
  %v8925 = vmul.f32 %v8324, %v8907
  %v8926 = vmul.f32 %v8329, %v8907
  %v8927 = vmul.f32 %v8334, %v8907
  %v8928 = vmul.f32 %v8339, %v8907
  %v8929 = vmul.f32 %v8344, %v8907
  %v8930 = vmul.f32 %v8349, %v8907
  %v8931 = vmul.f32 %v8354, %v8907
  %v8932 = vmul.f32 %v8359, %v8907
  %v8933 = vmul.f32 %v8364, %v8907
  %v8934 = vmul.f32 %v8369, %v8907
  %v8935 = vmul.f32 %v8374, %v8907
  %v8936 = vmul.f32 %v8379, %v8907
  %v8937 = vmul.f32 %v8384, %v8907
  %v8938 = vmul.f32 %v8389, %v8907
  %v8939 = vmul.f32 %v8394, %v8907
  %v8940 = vmul.f32 %v8399, %v8907
  %v8941 = vmul.f32 %v8404, %v8907
  %v8942 = vmul.f32 %v8409, %v8907
  %v8943 = vmul.f32 %v8414, %v8907
  %v8944 = vmul.f32 %v8419, %v8907
  %v8945 = vmul.f32 %v8424, %v8907
  %v8946 = vmul.f32 %v8429, %v8907
  %v8947 = vmul.f32 %v8434, %v8907
  %v8948 = vmul.f32 %v8439, %v8907
  %v8949 = vmul.f32 %v8444, %v8907
  %v8950 = vmul.f32 %v8449, %v8907
  %v8951 = vmul.f32 %v8454, %v8907
  %v8952 = vmul.f32 %v8459, %v8907
  %v8953 = vmul.f32 %v8464, %v8907
  %v8954 = vmul.f32 %v8469, %v8907
  %v8955 = vmul.f32 %v8474, %v8907
  %v8956 = vmul.f32 %v8479, %v8907
  %v8957 = vmul.f32 %v8484, %v8907
  %v8958 = vmul.f32 %v8489, %v8907
  %v8959 = vmul.f32 %v8494, %v8907
  %v8960 = vmul.f32 %v8499, %v8907
  %v8961 = vmul.f32 %v8504, %v8907
  %v8962 = vmul.f32 %v8509, %v8907
  %v8963 = vmul.f32 %v8514, %v8907
  %v8964 = vmul.f32 %v8519, %v8907
  %v8965 = vmul.f32 %v8524, %v8907
  %v8966 = vmul.f32 %v8529, %v8907
  %v8967 = vmul.f32 %v8534, %v8907
  %v8968 = vmul.f32 %v8539, %v8907
  %v8969 = vmul.f32 %v8544, %v8907
  %v8970 = vmul.f32 %v8549, %v8907
  %v8971 = vmul.f32 %v8554, %v8907
  %v8972 = vmul.f32 %v8559, %v8907
  %v8974 = vlaneseq
  %v8975 = vshrl.u32 %v8974, 7
  %v8976 = vsub.s32 0, %v8975
  %v8977 = vrot.slane %v8902, %v8976
  %v8979 = vadd.f32 %v8909, %v8977
  %v8980 = vadd.f32 %v8910, %v8977
  %v8981 = vadd.f32 %v8911, %v8977
  %v8982 = vadd.f32 %v8912, %v8977
  %v8983 = vadd.f32 %v8913, %v8977
  %v8984 = vadd.f32 %v8914, %v8977
  %v8985 = vadd.f32 %v8915, %v8977
  %v8986 = vadd.f32 %v8916, %v8977
  %v8987 = vadd.f32 %v8917, %v8977
  %v8988 = vadd.f32 %v8918, %v8977
  %v8989 = vadd.f32 %v8919, %v8977
  %v8990 = vadd.f32 %v8920, %v8977
  %v8991 = vadd.f32 %v8921, %v8977
  %v8992 = vadd.f32 %v8922, %v8977
  %v8993 = vadd.f32 %v8923, %v8977
  %v8994 = vadd.f32 %v8924, %v8977
  %v8995 = vadd.f32 %v8925, %v8977
  %v8996 = vadd.f32 %v8926, %v8977
  %v8997 = vadd.f32 %v8927, %v8977
  %v8998 = vadd.f32 %v8928, %v8977
  %v8999 = vadd.f32 %v8929, %v8977
  %v9000 = vadd.f32 %v8930, %v8977
  %v9001 = vadd.f32 %v8931, %v8977
  %v9002 = vadd.f32 %v8932, %v8977
  %v9003 = vadd.f32 %v8933, %v8977
  %v9004 = vadd.f32 %v8934, %v8977
  %v9005 = vadd.f32 %v8935, %v8977
  %v9006 = vadd.f32 %v8936, %v8977
  %v9007 = vadd.f32 %v8937, %v8977
  %v9008 = vadd.f32 %v8938, %v8977
  %v9009 = vadd.f32 %v8939, %v8977
  %v9010 = vadd.f32 %v8940, %v8977
  %v9011 = vadd.f32 %v8941, %v8977
  %v9012 = vadd.f32 %v8942, %v8977
  %v9013 = vadd.f32 %v8943, %v8977
  %v9014 = vadd.f32 %v8944, %v8977
  %v9015 = vadd.f32 %v8945, %v8977
  %v9016 = vadd.f32 %v8946, %v8977
  %v9017 = vadd.f32 %v8947, %v8977
  %v9018 = vadd.f32 %v8948, %v8977
  %v9019 = vadd.f32 %v8949, %v8977
  %v9020 = vadd.f32 %v8950, %v8977
  %v9021 = vadd.f32 %v8951, %v8977
  %v9022 = vadd.f32 %v8952, %v8977
  %v9023 = vadd.f32 %v8953, %v8977
  %v9024 = vadd.f32 %v8954, %v8977
  %v9025 = vadd.f32 %v8955, %v8977
  %v9026 = vadd.f32 %v8956, %v8977
  %v9027 = vadd.f32 %v8957, %v8977
  %v9028 = vadd.f32 %v8958, %v8977
  %v9029 = vadd.f32 %v8959, %v8977
  %v9030 = vadd.f32 %v8960, %v8977
  %v9031 = vadd.f32 %v8961, %v8977
  %v9032 = vadd.f32 %v8962, %v8977
  %v9033 = vadd.f32 %v8963, %v8977
  %v9034 = vadd.f32 %v8964, %v8977
  %v9035 = vadd.f32 %v8965, %v8977
  %v9036 = vadd.f32 %v8966, %v8977
  %v9037 = vadd.f32 %v8967, %v8977
  %v9038 = vadd.f32 %v8968, %v8977
  %v9039 = vadd.f32 %v8969, %v8977
  %v9040 = vadd.f32 %v8970, %v8977
  %v9041 = vadd.f32 %v8971, %v8977
  %v9042 = vadd.f32 %v8972, %v8977
  %v9043 = vld [vmem:[%s0] sm:$0xff]
  %v9044 = vld [vmem:[%s0 + $0x8] sm:$0xff]
  %v9045 = vld [vmem:[%s0 + $0x10] sm:$0xff]
  %v9046 = vld [vmem:[%s0 + $0x18] sm:$0xff]
  %v9047 = vld [vmem:[%s0 + $0x20] sm:$0xff]
  %v9048 = vld [vmem:[%s0 + $0x28] sm:$0xff]
  %v9049 = vld [vmem:[%s0 + $0x30] sm:$0xff]
  %v9050 = vld [vmem:[%s0 + $0x38] sm:$0xff]
  %v9051 = vld [vmem:[%s0 + $0x40] sm:$0xff]
  %v9052 = vld [vmem:[%s0 + $0x48] sm:$0xff]
  %v9053 = vld [vmem:[%s0 + $0x50] sm:$0xff]
  %v9054 = vld [vmem:[%s0 + $0x58] sm:$0xff]
  %v9055 = vld [vmem:[%s0 + $0x60] sm:$0xff]
  %v9056 = vld [vmem:[%s0 + $0x68] sm:$0xff]
  %v9057 = vld [vmem:[%s0 + $0x70] sm:$0xff]
  %v9058 = vld [vmem:[%s0 + $0x78] sm:$0xff]
  %v9059 = vld [vmem:[%s0 + $0x80] sm:$0xff]
  %v9060 = vld [vmem:[%s0 + $0x88] sm:$0xff]
  %v9061 = vld [vmem:[%s0 + $0x90] sm:$0xff]
  %v9062 = vld [vmem:[%s0 + $0x98] sm:$0xff]
  %v9063 = vld [vmem:[%s0 + $0xa0] sm:$0xff]
  %v9064 = vld [vmem:[%s0 + $0xa8] sm:$0xff]
  %v9065 = vld [vmem:[%s0 + $0xb0] sm:$0xff]
  %v9066 = vld [vmem:[%s0 + $0xb8] sm:$0xff]
  %v9067 = vld [vmem:[%s0 + $0xc0] sm:$0xff]
  %v9068 = vld [vmem:[%s0 + $0xc8] sm:$0xff]
  %v9069 = vld [vmem:[%s0 + $0xd0] sm:$0xff]
  %v9070 = vld [vmem:[%s0 + $0xd8] sm:$0xff]
  %v9071 = vld [vmem:[%s0 + $0xe0] sm:$0xff]
  %v9072 = vld [vmem:[%s0 + $0xe8] sm:$0xff]
  %v9073 = vld [vmem:[%s0 + $0xf0] sm:$0xff]
  %v9074 = vld [vmem:[%s0 + $0xf8] sm:$0xff]
  %v9075 = vld [vmem:[%s0 + $0x100] sm:$0xff]
  %v9076 = vld [vmem:[%s0 + $0x108] sm:$0xff]
  %v9077 = vld [vmem:[%s0 + $0x110] sm:$0xff]
  %v9078 = vld [vmem:[%s0 + $0x118] sm:$0xff]
  %v9079 = vld [vmem:[%s0 + $0x120] sm:$0xff]
  %v9080 = vld [vmem:[%s0 + $0x128] sm:$0xff]
  %v9081 = vld [vmem:[%s0 + $0x130] sm:$0xff]
  %v9082 = vld [vmem:[%s0 + $0x138] sm:$0xff]
  %v9083 = vld [vmem:[%s0 + $0x140] sm:$0xff]
  %v9084 = vld [vmem:[%s0 + $0x148] sm:$0xff]
  %v9085 = vld [vmem:[%s0 + $0x150] sm:$0xff]
  %v9086 = vld [vmem:[%s0 + $0x158] sm:$0xff]
  %v9087 = vld [vmem:[%s0 + $0x160] sm:$0xff]
  %v9088 = vld [vmem:[%s0 + $0x168] sm:$0xff]
  %v9089 = vld [vmem:[%s0 + $0x170] sm:$0xff]
  %v9090 = vld [vmem:[%s0 + $0x178] sm:$0xff]
  %v9091 = vld [vmem:[%s0 + $0x180] sm:$0xff]
  %v9092 = vld [vmem:[%s0 + $0x188] sm:$0xff]
  %v9093 = vld [vmem:[%s0 + $0x190] sm:$0xff]
  %v9094 = vld [vmem:[%s0 + $0x198] sm:$0xff]
  %v9095 = vld [vmem:[%s0 + $0x1a0] sm:$0xff]
  %v9096 = vld [vmem:[%s0 + $0x1a8] sm:$0xff]
  %v9097 = vld [vmem:[%s0 + $0x1b0] sm:$0xff]
  %v9098 = vld [vmem:[%s0 + $0x1b8] sm:$0xff]
  %v9099 = vld [vmem:[%s0 + $0x1c0] sm:$0xff]
  %v9100 = vld [vmem:[%s0 + $0x1c8] sm:$0xff]
  %v9101 = vld [vmem:[%s0 + $0x1d0] sm:$0xff]
  %v9102 = vld [vmem:[%s0 + $0x1d8] sm:$0xff]
  %v9103 = vld [vmem:[%s0 + $0x1e0] sm:$0xff]
  %v9104 = vld [vmem:[%s0 + $0x1e8] sm:$0xff]
  %v9105 = vld [vmem:[%s0 + $0x1f0] sm:$0xff]
  %v9106 = vld [vmem:[%s0 + $0x1f8] sm:$0xff]
  %v9107 = vadd.f32 %v8979, %v9043
  %v9108 = vadd.f32 %v8980, %v9044
  %v9109 = vadd.f32 %v8981, %v9045
  %v9110 = vadd.f32 %v8982, %v9046
  %v9111 = vadd.f32 %v8983, %v9047
  %v9112 = vadd.f32 %v8984, %v9048
  %v9113 = vadd.f32 %v8985, %v9049
  %v9114 = vadd.f32 %v8986, %v9050
  %v9115 = vadd.f32 %v8987, %v9051
  %v9116 = vadd.f32 %v8988, %v9052
  %v9117 = vadd.f32 %v8989, %v9053
  %v9118 = vadd.f32 %v8990, %v9054
  %v9119 = vadd.f32 %v8991, %v9055
  %v9120 = vadd.f32 %v8992, %v9056
  %v9121 = vadd.f32 %v8993, %v9057
  %v9122 = vadd.f32 %v8994, %v9058
  %v9123 = vadd.f32 %v8995, %v9059
  %v9124 = vadd.f32 %v8996, %v9060
  %v9125 = vadd.f32 %v8997, %v9061
  %v9126 = vadd.f32 %v8998, %v9062
  %v9127 = vadd.f32 %v8999, %v9063
  %v9128 = vadd.f32 %v9000, %v9064
  %v9129 = vadd.f32 %v9001, %v9065
  %v9130 = vadd.f32 %v9002, %v9066
  %v9131 = vadd.f32 %v9003, %v9067
  %v9132 = vadd.f32 %v9004, %v9068
  %v9133 = vadd.f32 %v9005, %v9069
  %v9134 = vadd.f32 %v9006, %v9070
  %v9135 = vadd.f32 %v9007, %v9071
  %v9136 = vadd.f32 %v9008, %v9072
  %v9137 = vadd.f32 %v9009, %v9073
  %v9138 = vadd.f32 %v9010, %v9074
  %v9139 = vadd.f32 %v9011, %v9075
  %v9140 = vadd.f32 %v9012, %v9076
  %v9141 = vadd.f32 %v9013, %v9077
  %v9142 = vadd.f32 %v9014, %v9078
  %v9143 = vadd.f32 %v9015, %v9079
  %v9144 = vadd.f32 %v9016, %v9080
  %v9145 = vadd.f32 %v9017, %v9081
  %v9146 = vadd.f32 %v9018, %v9082
  %v9147 = vadd.f32 %v9019, %v9083
  %v9148 = vadd.f32 %v9020, %v9084
  %v9149 = vadd.f32 %v9021, %v9085
  %v9150 = vadd.f32 %v9022, %v9086
  %v9151 = vadd.f32 %v9023, %v9087
  %v9152 = vadd.f32 %v9024, %v9088
  %v9153 = vadd.f32 %v9025, %v9089
  %v9154 = vadd.f32 %v9026, %v9090
  %v9155 = vadd.f32 %v9027, %v9091
  %v9156 = vadd.f32 %v9028, %v9092
  %v9157 = vadd.f32 %v9029, %v9093
  %v9158 = vadd.f32 %v9030, %v9094
  %v9159 = vadd.f32 %v9031, %v9095
  %v9160 = vadd.f32 %v9032, %v9096
  %v9161 = vadd.f32 %v9033, %v9097
  %v9162 = vadd.f32 %v9034, %v9098
  %v9163 = vadd.f32 %v9035, %v9099
  %v9164 = vadd.f32 %v9036, %v9100
  %v9165 = vadd.f32 %v9037, %v9101
  %v9166 = vadd.f32 %v9038, %v9102
  %v9167 = vadd.f32 %v9039, %v9103
  %v9168 = vadd.f32 %v9040, %v9104
  %v9169 = vadd.f32 %v9041, %v9105
  %v9170 = vadd.f32 %v9042, %v9106
  %v9171 = vmax.f32 %v9107, 0.0
  %v9172 = vmax.f32 %v9108, 0.0
  %v9173 = vmax.f32 %v9109, 0.0
  %v9174 = vmax.f32 %v9110, 0.0
  %v9175 = vmax.f32 %v9111, 0.0
  %v9176 = vmax.f32 %v9112, 0.0
  %v9177 = vmax.f32 %v9113, 0.0
  %v9178 = vmax.f32 %v9114, 0.0
  %v9179 = vmax.f32 %v9115, 0.0
  %v9180 = vmax.f32 %v9116, 0.0
  %v9181 = vmax.f32 %v9117, 0.0
  %v9182 = vmax.f32 %v9118, 0.0
  %v9183 = vmax.f32 %v9119, 0.0
  %v9184 = vmax.f32 %v9120, 0.0
  %v9185 = vmax.f32 %v9121, 0.0
  %v9186 = vmax.f32 %v9122, 0.0
  %v9187 = vmax.f32 %v9123, 0.0
  %v9188 = vmax.f32 %v9124, 0.0
  %v9189 = vmax.f32 %v9125, 0.0
  %v9190 = vmax.f32 %v9126, 0.0
  %v9191 = vmax.f32 %v9127, 0.0
  %v9192 = vmax.f32 %v9128, 0.0
  %v9193 = vmax.f32 %v9129, 0.0
  %v9194 = vmax.f32 %v9130, 0.0
  %v9195 = vmax.f32 %v9131, 0.0
  %v9196 = vmax.f32 %v9132, 0.0
  %v9197 = vmax.f32 %v9133, 0.0
  %v9198 = vmax.f32 %v9134, 0.0
  %v9199 = vmax.f32 %v9135, 0.0
  %v9200 = vmax.f32 %v9136, 0.0
  %v9201 = vmax.f32 %v9137, 0.0
  %v9202 = vmax.f32 %v9138, 0.0
  %v9203 = vmax.f32 %v9139, 0.0
  %v9204 = vmax.f32 %v9140, 0.0
  %v9205 = vmax.f32 %v9141, 0.0
  %v9206 = vmax.f32 %v9142, 0.0
  %v9207 = vmax.f32 %v9143, 0.0
  %v9208 = vmax.f32 %v9144, 0.0
  %v9209 = vmax.f32 %v9145, 0.0
  %v9210 = vmax.f32 %v9146, 0.0
  %v9211 = vmax.f32 %v9147, 0.0
  %v9212 = vmax.f32 %v9148, 0.0
  %v9213 = vmax.f32 %v9149, 0.0
  %v9214 = vmax.f32 %v9150, 0.0
  %v9215 = vmax.f32 %v9151, 0.0
  %v9216 = vmax.f32 %v9152, 0.0
  %v9217 = vmax.f32 %v9153, 0.0
  %v9218 = vmax.f32 %v9154, 0.0
  %v9219 = vmax.f32 %v9155, 0.0
  %v9220 = vmax.f32 %v9156, 0.0
  %v9221 = vmax.f32 %v9157, 0.0
  %v9222 = vmax.f32 %v9158, 0.0
  %v9223 = vmax.f32 %v9159, 0.0
  %v9224 = vmax.f32 %v9160, 0.0
  %v9225 = vmax.f32 %v9161, 0.0
  %v9226 = vmax.f32 %v9162, 0.0
  %v9227 = vmax.f32 %v9163, 0.0
  %v9228 = vmax.f32 %v9164, 0.0
  %v9229 = vmax.f32 %v9165, 0.0
  %v9230 = vmax.f32 %v9166, 0.0
  %v9231 = vmax.f32 %v9167, 0.0
  %v9232 = vmax.f32 %v9168, 0.0
  %v9233 = vmax.f32 %v9169, 0.0
  %v9234 = vmax.f32 %v9170, 0.0
  %9235 = vst.msk [vmem:[%s7] sm:$0xff] %vm26, %v9171
  %9236 = vst.msk [vmem:[%s7 + $0x8] sm:$0xff] %vm26, %v9172
  %9237 = vst.msk [vmem:[%s7 + $0x10] sm:$0xff] %vm26, %v9173
  %9238 = vst.msk [vmem:[%s7 + $0x18] sm:$0xff] %vm26, %v9174
  %9239 = vst.msk [vmem:[%s7 + $0x20] sm:$0xff] %vm26, %v9175
  %9240 = vst.msk [vmem:[%s7 + $0x28] sm:$0xff] %vm26, %v9176
  %9241 = vst.msk [vmem:[%s7 + $0x30] sm:$0xff] %vm26, %v9177
  %9242 = vst.msk [vmem:[%s7 + $0x38] sm:$0xff] %vm26, %v9178
  %9243 = vst.msk [vmem:[%s7 + $0x40] sm:$0xff] %vm26, %v9179
  %9244 = vst.msk [vmem:[%s7 + $0x48] sm:$0xff] %vm26, %v9180
  %9245 = vst.msk [vmem:[%s7 + $0x50] sm:$0xff] %vm26, %v9181
  %9246 = vst.msk [vmem:[%s7 + $0x58] sm:$0xff] %vm26, %v9182
  %9247 = vst.msk [vmem:[%s7 + $0x60] sm:$0xff] %vm26, %v9183
  %9248 = vst.msk [vmem:[%s7 + $0x68] sm:$0xff] %vm26, %v9184
  %9249 = vst.msk [vmem:[%s7 + $0x70] sm:$0xff] %vm26, %v9185
  %9250 = vst.msk [vmem:[%s7 + $0x78] sm:$0xff] %vm26, %v9186
  %9251 = vst.msk [vmem:[%s7 + $0x80] sm:$0xff] %vm26, %v9187
  %9252 = vst.msk [vmem:[%s7 + $0x88] sm:$0xff] %vm26, %v9188
  %9253 = vst.msk [vmem:[%s7 + $0x90] sm:$0xff] %vm26, %v9189
  %9254 = vst.msk [vmem:[%s7 + $0x98] sm:$0xff] %vm26, %v9190
  %9255 = vst.msk [vmem:[%s7 + $0xa0] sm:$0xff] %vm26, %v9191
  %9256 = vst.msk [vmem:[%s7 + $0xa8] sm:$0xff] %vm26, %v9192
  %9257 = vst.msk [vmem:[%s7 + $0xb0] sm:$0xff] %vm26, %v9193
  %9258 = vst.msk [vmem:[%s7 + $0xb8] sm:$0xff] %vm26, %v9194
  %9259 = vst.msk [vmem:[%s7 + $0xc0] sm:$0xff] %vm26, %v9195
  %9260 = vst.msk [vmem:[%s7 + $0xc8] sm:$0xff] %vm26, %v9196
  %9261 = vst.msk [vmem:[%s7 + $0xd0] sm:$0xff] %vm26, %v9197
  %9262 = vst.msk [vmem:[%s7 + $0xd8] sm:$0xff] %vm26, %v9198
  %9263 = vst.msk [vmem:[%s7 + $0xe0] sm:$0xff] %vm26, %v9199
  %9264 = vst.msk [vmem:[%s7 + $0xe8] sm:$0xff] %vm26, %v9200
  %9265 = vst.msk [vmem:[%s7 + $0xf0] sm:$0xff] %vm26, %v9201
  %9266 = vst.msk [vmem:[%s7 + $0xf8] sm:$0xff] %vm26, %v9202
  %9267 = vst.msk [vmem:[%s7 + $0x100] sm:$0xff] %vm26, %v9203
  %9268 = vst.msk [vmem:[%s7 + $0x108] sm:$0xff] %vm26, %v9204
  %9269 = vst.msk [vmem:[%s7 + $0x110] sm:$0xff] %vm26, %v9205
  %9270 = vst.msk [vmem:[%s7 + $0x118] sm:$0xff] %vm26, %v9206
  %9271 = vst.msk [vmem:[%s7 + $0x120] sm:$0xff] %vm26, %v9207
  %9272 = vst.msk [vmem:[%s7 + $0x128] sm:$0xff] %vm26, %v9208
  %9273 = vst.msk [vmem:[%s7 + $0x130] sm:$0xff] %vm26, %v9209
  %9274 = vst.msk [vmem:[%s7 + $0x138] sm:$0xff] %vm26, %v9210
  %9275 = vst.msk [vmem:[%s7 + $0x140] sm:$0xff] %vm26, %v9211
  %9276 = vst.msk [vmem:[%s7 + $0x148] sm:$0xff] %vm26, %v9212
  %9277 = vst.msk [vmem:[%s7 + $0x150] sm:$0xff] %vm26, %v9213
  %9278 = vst.msk [vmem:[%s7 + $0x158] sm:$0xff] %vm26, %v9214
  %9279 = vst.msk [vmem:[%s7 + $0x160] sm:$0xff] %vm26, %v9215
  %9280 = vst.msk [vmem:[%s7 + $0x168] sm:$0xff] %vm26, %v9216
  %9281 = vst.msk [vmem:[%s7 + $0x170] sm:$0xff] %vm26, %v9217
  %9282 = vst.msk [vmem:[%s7 + $0x178] sm:$0xff] %vm26, %v9218
  %9283 = vst.msk [vmem:[%s7 + $0x180] sm:$0xff] %vm26, %v9219
  %9284 = vst.msk [vmem:[%s7 + $0x188] sm:$0xff] %vm26, %v9220
  %9285 = vst.msk [vmem:[%s7 + $0x190] sm:$0xff] %vm26, %v9221
  %9286 = vst.msk [vmem:[%s7 + $0x198] sm:$0xff] %vm26, %v9222
  %9287 = vst.msk [vmem:[%s7 + $0x1a0] sm:$0xff] %vm26, %v9223
  %9288 = vst.msk [vmem:[%s7 + $0x1a8] sm:$0xff] %vm26, %v9224
  %9289 = vst.msk [vmem:[%s7 + $0x1b0] sm:$0xff] %vm26, %v9225
  %9290 = vst.msk [vmem:[%s7 + $0x1b8] sm:$0xff] %vm26, %v9226
  %9291 = vst.msk [vmem:[%s7 + $0x1c0] sm:$0xff] %vm26, %v9227
  %9292 = vst.msk [vmem:[%s7 + $0x1c8] sm:$0xff] %vm26, %v9228
  %9293 = vst.msk [vmem:[%s7 + $0x1d0] sm:$0xff] %vm26, %v9229
  %9294 = vst.msk [vmem:[%s7 + $0x1d8] sm:$0xff] %vm26, %v9230
  %9295 = vst.msk [vmem:[%s7 + $0x1e0] sm:$0xff] %vm26, %v9231
  %9296 = vst.msk [vmem:[%s7 + $0x1e8] sm:$0xff] %vm26, %v9232
  %9297 = vst.msk [vmem:[%s7 + $0x1f0] sm:$0xff] %vm26, %v9233
  %9298 = vst.msk [vmem:[%s7 + $0x1f8] sm:$0xff] %vm26, %v9234
  // Predicated region
  $region30: #{basic_block.1} parent=0 // pred_check
    _
  $region31: #{basic_block.1} parent=0 // pred_check_branch
    %9300 = sbr.rel (0) target = $region33
  $region32: #{basic_block.1} parent=0 // pred_region
    _
  $region33: #{basic_block.1} parent=0 // pred_fallthru
    _
  // Predicated region
  $region34: #{basic_block.1} parent=0 // pred_check
    _
  $region35: #{basic_block.1} parent=0 // pred_check_branch
    %9302 = sbr.rel (0) target = $region37
  $region36: #{basic_block.1} parent=0 // pred_region
    _
  $region37: #{basic_block.1} parent=0 // pred_fallthru
    _

</llo_original>
